<compile_context>
chip_gen: v7x
topology: tpu7x:2x2x1
jax: 0.10.0
libtpu: 0.0.40
codegen_flags: <defaults>
</compile_context>

<pallas_src>
import functools
import math

import numpy as np

import jax
import jax.numpy as jnp
from jax import lax
from jax.experimental import pallas as pl
from jax.experimental.pallas import tpu as pltpu


# ----------------------------------------------------------------- helpers ---

def _const_spec(a):
    """Full-array block whose index never changes across the grid."""
    zeros = (0,) * a.ndim
    return pl.BlockSpec(a.shape, lambda *_: zeros)


def _gelu_exact(x):
    """Exact (erf-based) GELU via Abramowitz-Stegun 7.1.26 (|erf err| < 1.6e-7).

    Uses only exp / mul / add / where so it lowers cleanly in Mosaic while
    matching PyTorch nn.GELU() (erf form) to ~1e-7.
    """
    z = x * 0.7071067811865476
    az = jnp.abs(z)
    t = 1.0 / (1.0 + 0.3275911 * az)
    poly = t * (0.254829592 + t * (-0.284496736 + t * (1.421413741
               + t * (-1.453152027 + t * 1.061405429))))
    erf_abs = 1.0 - poly * jnp.exp(-az * az)
    erf = jnp.where(z >= 0.0, erf_abs, -erf_abs)
    return 0.5 * x * (1.0 + erf)


def _dw_geom(k, dil, pad, img_w):
    """Static tap geometry: per-row flat shifts dy*W and per-column shifts dx."""
    dys = [(i * dil - pad) * img_w for i in range(k)]
    dxs = [j * dil - pad for j in range(k)]
    return dys, dxs


def _dw_pack(w, img_h, img_w, k, dil, pad):
    """Depthwise weights as per-tap (C,1) scalars + k per-dx row masks (1,HW).

    w: (C, 1, k, k) PyTorch depthwise weight.  Out-of-row reads (horizontal)
    are handled by the per-dx mask; out-of-image reads (vertical) hit the zero
    halo of the in-kernel padded scratch.
    """
    ch = w.shape[0]
    wt = jnp.transpose(w[:, 0, :, :], (1, 2, 0)).reshape(k * k, ch, 1)
    xpos = np.arange(img_h * img_w) % img_w
    masks = np.stack(
        [((xpos + (j * dil - pad) >= 0) & (xpos + (j * dil - pad) < img_w))
         .astype(np.float32)[None, :] for j in range(k)], axis=0)
    return wt, jnp.asarray(masks)                   # (k*k, C, 1), (k, 1, HW)


# ------------------------------------------------------------ token stage ---

def _token_stage_kernel(patches_ref, pe_w_ref, pos_ref, wqkv_ref, bqkv_ref,
                        ao_w_ref, ao_b_ref, pr_w_ref, pr_b_ref, o_ref,
                        *, heads, hd, d, scale):
    f32, bf16 = jnp.float32, jnp.bfloat16

    # patch embedding (+ positions; conv bias folded into pos_ref host-side)
    x = jnp.dot(patches_ref[...].astype(bf16), pe_w_ref[...],
                preferred_element_type=f32) + pos_ref[...]            # (N, d)
    xb = x.astype(bf16)

    # one fused QKV matmul; columns pre-ordered (qkv, head, dh) host-side
    # (reference rearranges 'b n (h d qkv)', i.e. qkv fastest in the raw weight)
    qkv = jnp.dot(xb, wqkv_ref[...], preferred_element_type=f32) \
        + bqkv_ref[...]                                               # (N, 3d)

    heads_out = []
    for h in range(heads):
        q = qkv[:, 0 * d + h * hd:0 * d + (h + 1) * hd].astype(bf16)
        k = qkv[:, 1 * d + h * hd:1 * d + (h + 1) * hd].astype(bf16)
        v = qkv[:, 2 * d + h * hd:2 * d + (h + 1) * hd].astype(bf16)
        e = lax.dot_general(q, k, (((1,), (1,)), ((), ())),
                            preferred_element_type=f32)               # (N, N)
        m = jnp.max(e, axis=-1, keepdims=True)
        p = jnp.exp(e - m)
        inv = 1.0 / jnp.sum(p, axis=-1, keepdims=True)
        # reference applies the 1/sqrt(emb) scale AFTER the softmax
        att = (p * (inv * scale)).astype(bf16)
        heads_out.append(jnp.dot(att, v, preferred_element_type=f32))

    ho = jnp.concatenate(heads_out, axis=-1)                          # (N, d)
    ao = jnp.dot(ho.astype(bf16), ao_w_ref[...],
                 preferred_element_type=f32) + ao_b_ref[...]
    xa = (x + ao).astype(bf16)                       # residual: x + attn(x)
    o_ref[...] = (jnp.dot(xa, pr_w_ref[...], preferred_element_type=f32)
                  + pr_b_ref[...]).astype(o_ref.dtype)


def token_stage(patches, prep, *, b, heads, hd, d, scale):
    btot, ck = patches.shape
    nb = btot // b                          # tokens per batch element (s * n_patch)
    dout = prep['pr_w'].shape[1]
    kern = functools.partial(_token_stage_kernel, heads=heads, hd=hd, d=d,
                             scale=scale)
    return pl.pallas_call(
        kern,
        out_shape=jax.ShapeDtypeStruct((btot, dout), jnp.float32),
        grid=(b,),
        in_specs=[
            pl.BlockSpec((nb, ck), lambda i: (i, 0)),
            _const_spec(prep['pe_w']), _const_spec(prep['pos']),
            _const_spec(prep['wqkv']), _const_spec(prep['bqkv']),
            _const_spec(prep['ao_w']), _const_spec(prep['ao_b']),
            _const_spec(prep['pr_w']), _const_spec(prep['pr_b']),
        ],
        out_specs=pl.BlockSpec((nb, dout), lambda i: (i, 0)),
        compiler_params=pltpu.CompilerParams(dimension_semantics=("parallel",)),
    )(patches, prep['pe_w'], prep['pos'], prep['wqkv'], prep['bqkv'],
      prep['ao_w'], prep['ao_b'], prep['pr_w'], prep['pr_b'])


# ------------------------------------------------------------ pixel stage ---

def _dwconv(x, w_ref, mask_ref, pad_ref, dys, dxs, smax, hw):
    """Depthwise 'same' conv on flattened (C, H*W) data via lane-shifted loads.

    w_ref: (k*k, C, 1) per-tap per-channel scalars; mask_ref: (k, 1, HW) per-dx
    row masks (folded once per dx after summing taps that share dx).
    """
    cc = x.shape[0]
    halo = jnp.zeros((cc, smax), x.dtype)
    pad_ref[:, 0:smax] = halo
    pad_ref[:, smax + hw:2 * smax + hw] = halo
    pad_ref[:, smax:smax + hw] = x

    k = len(dxs)
    acc = None
    for j in range(k):
        dx = dxs[j]
        col = None
        for i in range(k):
            s = dys[i] + dx
            term = w_ref[i * k + j] * pad_ref[:, smax + s:smax + s + hw]
            col = term if col is None else col + term
        colm = mask_ref[j] * col
        acc = colm if acc is None else acc + colm
    return acc


def _pixel_stage_kernel(x_ref, vecc_ref, vec4_ref, wcc_ref, fc1_ref, fc2_ref,
                        m1w_ref, m2w_ref, wdw0_ref, wdwsp_ref, wdwm_ref,
                        mask0_ref, masksp_ref, maskm_ref,
                        o_ref, pad0_ref, padsp_ref, padm_ref,
                        *, hw, dys0, dxs0, dyssp, dxssp, dysm, dxsm,
                        s0, ssp, sm, eps):
    # vecc layout: 0 gn1_g 1 gn1_b 2 bn1_s 3 bn1_t 4 p1_b 5 c0_b 6 csp_b 7 c1_b
    #              8 p2_b 9 ls1 10 ls2 11 bn2_s 12 bn2_t 13 m2_b 14 gn2_g 15 gn2_b
    # vec4 layout: 0 mlp_fc1_b 1 mlp_dw_b ; wcc: 0 proj1^T 1 conv1^T 2 proj2^T
    f32, bf16 = jnp.float32, jnp.bfloat16
    x0 = x_ref[0]                                      # (C, HW)
    inv_n = 1.0 / float(x0.size)

    def gnorm(v, g, beta):                             # GroupNorm(1, C), two-pass
        mean = jnp.sum(v, keepdims=True) * inv_n
        cen = v - mean
        var = jnp.sum(cen * cen, keepdims=True) * inv_n
        return cen * lax.rsqrt(var + eps) * g + beta

    xn = gnorm(x0, vecc_ref[0], vecc_ref[1])           # norm_1

    # --------- TAU attention branch ---------
    z = xn * vecc_ref[2] + vecc_ref[3]                 # BatchNorm2d (eval) affine
    a = jnp.dot(wcc_ref[0], z.astype(bf16), preferred_element_type=f32) \
        + vecc_ref[4]
    a = _gelu_exact(a)                                 # u = a (TAM input)
    attn = _dwconv(a, wdw0_ref, mask0_ref, pad0_ref, dys0, dxs0, s0, hw) \
        + vecc_ref[5]
    attn = _dwconv(attn, wdwsp_ref, masksp_ref, padsp_ref, dyssp, dxssp,
                   ssp, hw) + vecc_ref[6]
    f_x = jnp.dot(wcc_ref[1], attn.astype(bf16), preferred_element_type=f32) \
        + vecc_ref[7]

    # SE branch on the VPU (no N=1 MXU matmuls)
    pooled = jnp.sum(a, axis=1, keepdims=True) * (1.0 / hw)           # (C, 1)
    hid = jnp.maximum(jnp.sum(fc1_ref[...] * pooled, axis=0, keepdims=True),
                      0.0)                                            # (1, r)
    se_pre = jnp.sum(fc2_ref[...] * hid, axis=1, keepdims=True)       # (C, 1)
    se = 1.0 / (1.0 + jnp.exp(-se_pre))                               # sigmoid

    sg = se * f_x * a
    attn_out = jnp.dot(wcc_ref[2], sg.astype(bf16),
                       preferred_element_type=f32) + vecc_ref[8] + z  # +shortcut
    t = xn + vecc_ref[9] * attn_out                    # layer_scale_1, drop_path=id

    # --------- MixMlp branch ---------
    z2 = t * vecc_ref[11] + vecc_ref[12]               # BatchNorm2d (eval) affine
    m = jnp.dot(m1w_ref[...], z2.astype(bf16), preferred_element_type=f32) \
        + vec4_ref[0]
    m = _dwconv(m, wdwm_ref, maskm_ref, padm_ref, dysm, dxsm, sm, hw) \
        + vec4_ref[1]
    m = _gelu_exact(m)
    m = jnp.dot(m2w_ref[...], m.astype(bf16), preferred_element_type=f32) \
        + vecc_ref[13]
    t = t + vecc_ref[10] * m                           # layer_scale_2

    # x + ff(x) = xn + (xn + TAU(xn)); TAU already carries one xn residual
    y = xn + xn + t
    o_ref[0] = gnorm(y, vecc_ref[14], vecc_ref[15]).astype(o_ref.dtype)  # norm_2


def pixel_stage(x2, prep, *, dys0, dxs0, dyssp, dxssp, dysm, dxsm, eps=1e-5):
    bs, c, hw = x2.shape
    c4 = prep['m1w'].shape[0]
    s0 = max(abs(v) for v in dys0) + max(abs(v) for v in dxs0)
    ssp = max(abs(v) for v in dyssp) + max(abs(v) for v in dxssp)
    sm = max(abs(v) for v in dysm) + max(abs(v) for v in dxsm)
    kern = functools.partial(_pixel_stage_kernel, hw=hw, dys0=dys0, dxs0=dxs0,
                             dyssp=dyssp, dxssp=dxssp, dysm=dysm, dxsm=dxsm,
                             s0=s0, ssp=ssp, sm=sm, eps=eps)
    return pl.pallas_call(
        kern,
        out_shape=jax.ShapeDtypeStruct((bs, c, hw), jnp.float32),
        grid=(bs,),
        in_specs=[
            pl.BlockSpec((1, c, hw), lambda i: (i, 0, 0)),
            _const_spec(prep['vecc']), _const_spec(prep['vec4']),
            _const_spec(prep['wcc']),
            _const_spec(prep['fc1c']), _const_spec(prep['fc2c']),
            _const_spec(prep['m1w']), _const_spec(prep['m2w']),
            _const_spec(prep['wdw0']), _const_spec(prep['wdwsp']),
            _const_spec(prep['wdwm']),
            _const_spec(prep['mask0']), _const_spec(prep['masksp']),
            _const_spec(prep['maskm']),
        ],
        out_specs=pl.BlockSpec((1, c, hw), lambda i: (i, 0, 0)),
        scratch_shapes=[
            pltpu.VMEM((c, hw + 2 * s0), jnp.float32),
            pltpu.VMEM((c, hw + 2 * ssp), jnp.float32),
            pltpu.VMEM((c4, hw + 2 * sm), jnp.float32),
        ],
        compiler_params=pltpu.CompilerParams(dimension_semantics=("parallel",)),
    )(x2, prep['vecc'], prep['vec4'], prep['wcc'], prep['fc1c'], prep['fc2c'],
      prep['m1w'], prep['m2w'], prep['wdw0'], prep['wdwsp'], prep['wdwm'],
      prep['mask0'], prep['masksp'], prep['maskm'])


# --------------------------------------------- one-time parameter packing ---

def prepare_params(params, *, heads, patch_size, img_size, seq_len):
    """Hoisted off the per-call path: run ONCE, pass the result to the jitted
    forward.  All transposes / BN folding / mask building live here."""
    h, w = img_size
    p = patch_size
    d = params['pe_w'].shape[1]
    hd = d // heads
    bf16 = jnp.bfloat16

    # token stage -------------------------------------------------------------
    pos = jnp.tile(params['positions'] + params['pe_b'][None, :], (seq_len, 1))
    # qkv Linear features factor as '(h d qkv)' (qkv fastest) per the reference
    wqkv = jnp.transpose(params['qkv_w'].reshape(d, heads, hd, 3),
                         (0, 3, 1, 2)).reshape(d, 3 * d).astype(bf16)
    bqkv = jnp.transpose(params['qkv_b'].reshape(heads, hd, 3),
                         (2, 0, 1)).reshape(1, 3 * d)

    tok = dict(
        pe_w=params['pe_w'].astype(bf16),
        pos=pos.astype(jnp.float32),
        wqkv=wqkv, bqkv=bqkv.astype(jnp.float32),
        ao_w=params['attnproj_w'].astype(bf16),
        ao_b=params['attnproj_b'].reshape(1, d).astype(jnp.float32),
        pr_w=params['proj_w'].astype(bf16),
        pr_b=params['proj_b'].reshape(1, p * p * d).astype(jnp.float32),
    )

    # pixel stage -------------------------------------------------------------
    tp = params['tau']

    def bnfold(wk, bk, rmk, rvk):            # eval-mode BatchNorm2d -> affine
        sc = tp[wk] / jnp.sqrt(tp[rvk] + 1e-5)
        return sc, tp[bk] - tp[rmk] * sc

    bn1_s, bn1_t = bnfold('bn1_w', 'bn1_b', 'bn1_rm', 'bn1_rv')
    bn2_s, bn2_t = bnfold('bn2_w', 'bn2_b', 'bn2_rm', 'bn2_rv')

    col = lambda v: v.reshape(-1, 1)
    vecc = jnp.stack([
        col(params['gn1_g']), col(params['gn1_b']),
        col(bn1_s), col(bn1_t),
        col(tp['proj1_b']), col(tp['conv0_b']), col(tp['convsp_b']),
        col(tp['conv1_b']), col(tp['proj2_b']),
        col(tp['ls1']), col(tp['ls2']),
        col(bn2_s), col(bn2_t), col(tp['mlp_fc2_b']),
        col(params['gn2_g']), col(params['gn2_b']),
    ], axis=0)                                             # (16, C, 1)
    vec4 = jnp.stack([col(tp['mlp_fc1_b']), col(tp['mlp_dw_b'])], axis=0)

    wcc = jnp.stack([tp['proj1_w'].T, tp['conv1_w'].T, tp['proj2_w'].T],
                    axis=0).astype(bf16)                   # 1x1 convs (Cout, Cin)
    fc1c = tp['fc1_w']                                     # (C, r) SE squeeze
    fc2c = tp['fc2_w'].T                                   # (C, r) SE expand
    m1w = tp['mlp_fc1_w'].T.astype(bf16)                   # (4C, C)
    m2w = tp['mlp_fc2_w'].T.astype(bf16)                   # (C, 4C)

    wdw0, mask0 = _dw_pack(tp['conv0_w'], h, w, 5, 1, 2)
    wdwsp, masksp = _dw_pack(tp['convsp_w'], h, w, 7, 3, 9)
    wdwm, maskm = _dw_pack(tp['mlp_dw_w'], h, w, 3, 1, 1)

    tok.update(dict(vecc=vecc, vec4=vec4, wcc=wcc, fc1c=fc1c, fc2c=fc2c,
                    m1w=m1w, m2w=m2w, wdw0=wdw0, wdwsp=wdwsp, wdwm=wdwm,
                    mask0=mask0, masksp=masksp, maskm=maskm))
    return tok


# ----------------------------------------------------------------- forward ---

def ciatt_patch_block_forward(x, prep, *, heads, patch_size):
    b, s, c, h, w = x.shape
    p = patch_size
    hp, wp = h // p, w // p
    n_patch = hp * wp
    d = c                                    # emb_size = d_model = c
    hd = d // heads
    bs = b * s
    hw_flat = h * w

    # TODO(synk): the im2col and inverse pixel-shuffle 6/7-D permutes stay as
    # XLA reshapes/transposes; they are not rectangular Pallas tiles.
    xr = x.reshape(bs, c, hp, p, wp, p).transpose(0, 2, 4, 1, 3, 5)
    patches = xr.reshape(bs * n_patch, c * p * p).astype(jnp.float32)

    proj_out = token_stage(patches, prep, b=b, heads=heads, hd=hd, d=d,
                           scale=1.0 / math.sqrt(d))

    x2 = proj_out.reshape(b, s, hp, wp, p, p, c).transpose(0, 1, 6, 2, 4, 3, 5)
    x2 = x2.reshape(bs, c, hw_flat)

    # static tap geometry (trace-time Python, zero runtime cost)
    dys0, dxs0 = _dw_geom(5, 1, 2, w)
    dyssp, dxssp = _dw_geom(7, 3, 9, w)
    dysm, dxsm = _dw_geom(3, 1, 1, w)

    out = pixel_stage(x2, prep, dys0=dys0, dxs0=dxs0, dyssp=dyssp,
                      dxssp=dxssp, dysm=dysm, dxsm=dxsm)
    return out.reshape(b, s, c, h, w)


# ------------------------------------------------------------------ params ---

def _norm(key, shape, scale=0.02):
    return scale * jax.random.normal(key, shape, dtype=jnp.float32)


def init_params(key, d, heads, p, img_size):
    hs, ws = img_size
    n_patch = (hs // p) * (ws // p)
    ks = iter(jax.random.split(key, 32))
    nxt = lambda: next(ks)
    red = max(d // 16, 4)
    r = d // red
    ones = lambda n: jnp.ones((n,), jnp.float32)
    zeros = lambda n: jnp.zeros((n,), jnp.float32)
    return dict(
        pe_w=_norm(nxt(), (d * p * p, d)), pe_b=_norm(nxt(), (d,)),
        positions=_norm(nxt(), (n_patch, d), scale=0.1),
        qkv_w=_norm(nxt(), (d, 3 * d)), qkv_b=_norm(nxt(), (3 * d,)),
        attnproj_w=_norm(nxt(), (d, d)), attnproj_b=_norm(nxt(), (d,)),
        proj_w=_norm(nxt(), (d, p * p * d)), proj_b=_norm(nxt(), (p * p * d,)),
        gn1_g=ones(d), gn1_b=zeros(d), gn2_g=ones(d), gn2_b=zeros(d),
        tau=dict(
            bn1_w=ones(d), bn1_b=zeros(d), bn1_rm=zeros(d), bn1_rv=ones(d),
            proj1_w=_norm(nxt(), (d, d)), proj1_b=_norm(nxt(), (d,)),
            conv0_w=_norm(nxt(), (d, 1, 5, 5)), conv0_b=_norm(nxt(), (d,)),
            convsp_w=_norm(nxt(), (d, 1, 7, 7)), convsp_b=_norm(nxt(), (d,)),
            conv1_w=_norm(nxt(), (d, d)), conv1_b=_norm(nxt(), (d,)),
            fc1_w=_norm(nxt(), (d, r)), fc2_w=_norm(nxt(), (r, d)),
            proj2_w=_norm(nxt(), (d, d)), proj2_b=_norm(nxt(), (d,)),
            ls1=1e-2 * ones(d), ls2=1e-2 * ones(d),
            bn2_w=ones(d), bn2_b=zeros(d), bn2_rm=zeros(d), bn2_rv=ones(d),
            mlp_fc1_w=_norm(nxt(), (d, 4 * d)), mlp_fc1_b=_norm(nxt(), (4 * d,)),
            mlp_dw_w=_norm(nxt(), (4 * d, 1, 3, 3)), mlp_dw_b=_norm(nxt(), (4 * d,)),
            mlp_fc2_w=_norm(nxt(), (4 * d, d)), mlp_fc2_b=_norm(nxt(), (d,)),
        ),
    )


# ------------------------------------------------------------------ main -----

if __name__ == "__main__":
    d_model, heads, patch_size = 8, 2, 4
    img_size = (16, 32)
    b, s = 2, 2

    key = jax.random.PRNGKey(0)
    kx, kp = jax.random.split(key)
    x = jax.random.normal(kx, (b, s, d_model, img_size[0], img_size[1]),
                          dtype=jnp.float32)
    params = init_params(kp, d_model, heads, patch_size, img_size)

    # one-time packing, hoisted off the per-call path
    prep = prepare_params(params, heads=heads, patch_size=patch_size,
                          img_size=img_size, seq_len=s)

    fwd = jax.jit(functools.partial(ciatt_patch_block_forward,
                                    heads=heads, patch_size=patch_size))
    out = fwd(x, prep)
    jax.block_until_ready(out)
    assert out.shape == (b, s, d_model, img_size[0], img_size[1])
    assert bool(jnp.all(jnp.isfinite(out)))
    # TODO(synk): train-mode Dropout/DropPath (stochastic) and BatchNorm2d batch
    # statistics are not modeled (inference semantics: identity / running stats).
    print("KERNEL_OK")
</pallas_src>

<mosaic_0001>
module attributes {stable_mosaic.version = 11 : i64} {
  func.func @_token_stage_kernel(%arg0: i32, %arg1: memref<64x128xf32, #tpu.memory_space<vmem>>, %arg2: memref<128x8xbf16, #tpu.memory_space<vmem>>, %arg3: memref<64x8xf32, #tpu.memory_space<vmem>>, %arg4: memref<8x24xbf16, #tpu.memory_space<vmem>>, %arg5: memref<1x24xf32, #tpu.memory_space<vmem>>, %arg6: memref<8x8xbf16, #tpu.memory_space<vmem>>, %arg7: memref<1x8xf32, #tpu.memory_space<vmem>>, %arg8: memref<8x128xbf16, #tpu.memory_space<vmem>>, %arg9: memref<1x128xf32, #tpu.memory_space<vmem>>, %arg10: memref<64x128xf32, #tpu.memory_space<vmem>>) attributes {dimension_semantics = [#tpu.dimension_semantics<parallel>], iteration_bounds = array<i64: 2>, scalar_prefetch = 0 : i64, scratch_operands = 0 : i64, tpu.core_type = #tpu.core_type<tc>, window_params = [{transform_indices = @transform_0, window_bounds = array<i64: 64, 128>}, {pipeline_mode = #tpu.pipeline_mode<synchronous>, transform_indices = @transform_1, window_bounds = array<i64: 128, 8>}, {pipeline_mode = #tpu.pipeline_mode<synchronous>, transform_indices = @transform_2, window_bounds = array<i64: 64, 8>}, {pipeline_mode = #tpu.pipeline_mode<synchronous>, transform_indices = @transform_3, window_bounds = array<i64: 8, 24>}, {pipeline_mode = #tpu.pipeline_mode<synchronous>, transform_indices = @transform_4, window_bounds = array<i64: 1, 24>}, {pipeline_mode = #tpu.pipeline_mode<synchronous>, transform_indices = @transform_5, window_bounds = array<i64: 8, 8>}, {pipeline_mode = #tpu.pipeline_mode<synchronous>, transform_indices = @transform_6, window_bounds = array<i64: 1, 8>}, {pipeline_mode = #tpu.pipeline_mode<synchronous>, transform_indices = @transform_7, window_bounds = array<i64: 8, 128>}, {pipeline_mode = #tpu.pipeline_mode<synchronous>, transform_indices = @transform_8, window_bounds = array<i64: 1, 128>}, {transform_indices = @transform_9, window_bounds = array<i64: 64, 128>}]} {
    %c0 = arith.constant 0 : index
    %c0_0 = arith.constant 0 : index
    %0 = vector.load %arg1[%c0, %c0_0] : memref<64x128xf32, #tpu.memory_space<vmem>>, vector<64x128xf32>
    %1 = arith.truncf %0 : vector<64x128xf32> to vector<64x128xbf16>
    %c0_1 = arith.constant 0 : index
    %c0_2 = arith.constant 0 : index
    %2 = vector.load %arg2[%c0_1, %c0_2] : memref<128x8xbf16, #tpu.memory_space<vmem>>, vector<128x8xbf16>
    %cst = arith.constant dense<0.000000e+00> : vector<64x8xf32>
    %3 = tpu.matmul %1, %2, %cst {dimension_numbers = #tpu.dot_dimension_numbers<[1], [0], [0], [1], [0, 0, 1, 1], [], []>} : vector<64x128xbf16>, vector<128x8xbf16>, vector<64x8xf32> -> vector<64x8xf32>
    %c0_3 = arith.constant 0 : index
    %c0_4 = arith.constant 0 : index
    %4 = vector.load %arg3[%c0_3, %c0_4] : memref<64x8xf32, #tpu.memory_space<vmem>>, vector<64x8xf32>
    %5 = arith.addf %3, %4 : vector<64x8xf32>
    %6 = arith.truncf %5 : vector<64x8xf32> to vector<64x8xbf16>
    %c0_5 = arith.constant 0 : index
    %c0_6 = arith.constant 0 : index
    %7 = vector.load %arg4[%c0_5, %c0_6] : memref<8x24xbf16, #tpu.memory_space<vmem>>, vector<8x24xbf16>
    %cst_7 = arith.constant dense<0.000000e+00> : vector<64x24xf32>
    %8 = tpu.matmul %6, %7, %cst_7 {dimension_numbers = #tpu.dot_dimension_numbers<[1], [0], [0], [1], [0, 0, 1, 1], [], []>} : vector<64x8xbf16>, vector<8x24xbf16>, vector<64x24xf32> -> vector<64x24xf32>
    %c0_8 = arith.constant 0 : index
    %c0_9 = arith.constant 0 : index
    %9 = vector.load %arg5[%c0_8, %c0_9] : memref<1x24xf32, #tpu.memory_space<vmem>>, vector<1x24xf32>
    %10 = vector.broadcast %9 : vector<1x24xf32> to vector<64x24xf32>
    %11 = arith.addf %8, %10 : vector<64x24xf32>
    %12 = vector.extract_strided_slice %11 {offsets = [0, 0], sizes = [64, 4], strides = [1, 1]} : vector<64x24xf32> to vector<64x4xf32>
    %13 = arith.truncf %12 : vector<64x4xf32> to vector<64x4xbf16>
    %14 = vector.extract_strided_slice %11 {offsets = [0, 8], sizes = [64, 4], strides = [1, 1]} : vector<64x24xf32> to vector<64x4xf32>
    %15 = arith.truncf %14 : vector<64x4xf32> to vector<64x4xbf16>
    %16 = vector.extract_strided_slice %11 {offsets = [0, 16], sizes = [64, 4], strides = [1, 1]} : vector<64x24xf32> to vector<64x4xf32>
    %17 = arith.truncf %16 : vector<64x4xf32> to vector<64x4xbf16>
    %cst_10 = arith.constant dense<0.000000e+00> : vector<64x64xf32>
    %18 = tpu.matmul %13, %15, %cst_10 {dimension_numbers = #tpu.dot_dimension_numbers<[1], [1], [0], [0], [0, 0, 1, 0], [], []>} : vector<64x4xbf16>, vector<64x4xbf16>, vector<64x64xf32> -> vector<64x64xf32>
    %cst_11 = arith.constant dense<0xFF800000> : vector<64xf32>
    %19 = vector.multi_reduction <maximumf>, %18, %cst_11 [1] : vector<64x64xf32> to vector<64xf32>
    %20 = vector.shape_cast %19 : vector<64xf32> to vector<64x1xf32>
    %21 = vector.broadcast %20 : vector<64x1xf32> to vector<64x64xf32>
    %22 = arith.subf %18, %21 : vector<64x64xf32>
    %23 = math.exp %22 : vector<64x64xf32>
    %cst_12 = arith.constant dense<0.000000e+00> : vector<64xf32>
    %24 = vector.multi_reduction <add>, %23, %cst_12 [1] : vector<64x64xf32> to vector<64xf32>
    %25 = vector.shape_cast %24 : vector<64xf32> to vector<64x1xf32>
    %cst_13 = arith.constant 1.000000e+00 : f32
    %26 = vector.broadcast %cst_13 : f32 to vector<64x1xf32>
    %27 = arith.divf %26, %25 : vector<64x1xf32>
    %cst_14 = arith.constant 0.353553385 : f32
    %28 = vector.broadcast %cst_14 : f32 to vector<64x1xf32>
    %29 = arith.mulf %27, %28 : vector<64x1xf32>
    %30 = vector.broadcast %29 : vector<64x1xf32> to vector<64x64xf32>
    %31 = arith.mulf %23, %30 : vector<64x64xf32>
    %32 = arith.truncf %31 : vector<64x64xf32> to vector<64x64xbf16>
    %cst_15 = arith.constant dense<0.000000e+00> : vector<64x4xf32>
    %33 = tpu.matmul %32, %17, %cst_15 {dimension_numbers = #tpu.dot_dimension_numbers<[1], [0], [0], [1], [0, 0, 1, 1], [], []>} : vector<64x64xbf16>, vector<64x4xbf16>, vector<64x4xf32> -> vector<64x4xf32>
    %34 = vector.extract_strided_slice %11 {offsets = [0, 4], sizes = [64, 4], strides = [1, 1]} : vector<64x24xf32> to vector<64x4xf32>
    %35 = arith.truncf %34 : vector<64x4xf32> to vector<64x4xbf16>
    %36 = vector.extract_strided_slice %11 {offsets = [0, 12], sizes = [64, 4], strides = [1, 1]} : vector<64x24xf32> to vector<64x4xf32>
    %37 = arith.truncf %36 : vector<64x4xf32> to vector<64x4xbf16>
    %38 = vector.extract_strided_slice %11 {offsets = [0, 20], sizes = [64, 4], strides = [1, 1]} : vector<64x24xf32> to vector<64x4xf32>
    %39 = arith.truncf %38 : vector<64x4xf32> to vector<64x4xbf16>
    %cst_16 = arith.constant dense<0.000000e+00> : vector<64x64xf32>
    %40 = tpu.matmul %35, %37, %cst_16 {dimension_numbers = #tpu.dot_dimension_numbers<[1], [1], [0], [0], [0, 0, 1, 0], [], []>} : vector<64x4xbf16>, vector<64x4xbf16>, vector<64x64xf32> -> vector<64x64xf32>
    %cst_17 = arith.constant dense<0xFF800000> : vector<64xf32>
    %41 = vector.multi_reduction <maximumf>, %40, %cst_17 [1] : vector<64x64xf32> to vector<64xf32>
    %42 = vector.shape_cast %41 : vector<64xf32> to vector<64x1xf32>
    %43 = vector.broadcast %42 : vector<64x1xf32> to vector<64x64xf32>
    %44 = arith.subf %40, %43 : vector<64x64xf32>
    %45 = math.exp %44 : vector<64x64xf32>
    %cst_18 = arith.constant dense<0.000000e+00> : vector<64xf32>
    %46 = vector.multi_reduction <add>, %45, %cst_18 [1] : vector<64x64xf32> to vector<64xf32>
    %47 = vector.shape_cast %46 : vector<64xf32> to vector<64x1xf32>
    %cst_19 = arith.constant 1.000000e+00 : f32
    %48 = vector.broadcast %cst_19 : f32 to vector<64x1xf32>
    %49 = arith.divf %48, %47 : vector<64x1xf32>
    %cst_20 = arith.constant 0.353553385 : f32
    %50 = vector.broadcast %cst_20 : f32 to vector<64x1xf32>
    %51 = arith.mulf %49, %50 : vector<64x1xf32>
    %52 = vector.broadcast %51 : vector<64x1xf32> to vector<64x64xf32>
    %53 = arith.mulf %45, %52 : vector<64x64xf32>
    %54 = arith.truncf %53 : vector<64x64xf32> to vector<64x64xbf16>
    %cst_21 = arith.constant dense<0.000000e+00> : vector<64x4xf32>
    %55 = tpu.matmul %54, %39, %cst_21 {dimension_numbers = #tpu.dot_dimension_numbers<[1], [0], [0], [1], [0, 0, 1, 1], [], []>} : vector<64x64xbf16>, vector<64x4xbf16>, vector<64x4xf32> -> vector<64x4xf32>
    %56 = tpu.concatenate %33, %55 in 1 : vector<64x4xf32>, vector<64x4xf32> -> vector<64x8xf32>
    %57 = arith.truncf %56 : vector<64x8xf32> to vector<64x8xbf16>
    %c0_22 = arith.constant 0 : index
    %c0_23 = arith.constant 0 : index
    %58 = vector.load %arg6[%c0_22, %c0_23] : memref<8x8xbf16, #tpu.memory_space<vmem>>, vector<8x8xbf16>
    %cst_24 = arith.constant dense<0.000000e+00> : vector<64x8xf32>
    %59 = tpu.matmul %57, %58, %cst_24 {dimension_numbers = #tpu.dot_dimension_numbers<[1], [0], [0], [1], [0, 0, 1, 1], [], []>} : vector<64x8xbf16>, vector<8x8xbf16>, vector<64x8xf32> -> vector<64x8xf32>
    %c0_25 = arith.constant 0 : index
    %c0_26 = arith.constant 0 : index
    %60 = vector.load %arg7[%c0_25, %c0_26] : memref<1x8xf32, #tpu.memory_space<vmem>>, vector<1x8xf32>
    %61 = vector.broadcast %60 : vector<1x8xf32> to vector<64x8xf32>
    %62 = arith.addf %59, %61 : vector<64x8xf32>
    %63 = arith.addf %5, %62 : vector<64x8xf32>
    %64 = arith.truncf %63 : vector<64x8xf32> to vector<64x8xbf16>
    %c0_27 = arith.constant 0 : index
    %c0_28 = arith.constant 0 : index
    %65 = vector.load %arg8[%c0_27, %c0_28] : memref<8x128xbf16, #tpu.memory_space<vmem>>, vector<8x128xbf16>
    %cst_29 = arith.constant dense<0.000000e+00> : vector<64x128xf32>
    %66 = tpu.matmul %64, %65, %cst_29 {dimension_numbers = #tpu.dot_dimension_numbers<[1], [0], [0], [1], [0, 0, 1, 1], [], []>} : vector<64x8xbf16>, vector<8x128xbf16>, vector<64x128xf32> -> vector<64x128xf32>
    %c0_30 = arith.constant 0 : index
    %c0_31 = arith.constant 0 : index
    %67 = vector.load %arg9[%c0_30, %c0_31] : memref<1x128xf32, #tpu.memory_space<vmem>>, vector<1x128xf32>
    %68 = vector.broadcast %67 : vector<1x128xf32> to vector<64x128xf32>
    %69 = arith.addf %66, %68 : vector<64x128xf32>
    %c0_32 = arith.constant 0 : index
    %c0_33 = arith.constant 0 : index
    %70 = vector.load %arg10[%c0_32, %c0_33] : memref<64x128xf32, #tpu.memory_space<vmem>>, vector<64x128xf32>
    tpu.vector_store %arg10[%c0_32, %c0_33], %69 {strides = array<i32>} : memref<64x128xf32, #tpu.memory_space<vmem>>, vector<64x128xf32>,
    return
  }
  func.func @transform_0(%arg0: i32) -> (i32, i32) {
    %c0_i32 = arith.constant 0 : i32
    %c0_i32_0 = arith.constant 0 : i32
    return %arg0, %c0_i32 : i32, i32
  }
  func.func @transform_1(%arg0: i32) -> (i32, i32) {
    %c0_i32 = arith.constant 0 : i32
    %c0_i32_0 = arith.constant 0 : i32
    %c0_i32_1 = arith.constant 0 : i32
    return %c0_i32, %c0_i32_0 : i32, i32
  }
  func.func @transform_2(%arg0: i32) -> (i32, i32) {
    %c0_i32 = arith.constant 0 : i32
    %c0_i32_0 = arith.constant 0 : i32
    %c0_i32_1 = arith.constant 0 : i32
    return %c0_i32, %c0_i32_0 : i32, i32
  }
  func.func @transform_3(%arg0: i32) -> (i32, i32) {
    %c0_i32 = arith.constant 0 : i32
    %c0_i32_0 = arith.constant 0 : i32
    %c0_i32_1 = arith.constant 0 : i32
    return %c0_i32, %c0_i32_0 : i32, i32
  }
  func.func @transform_4(%arg0: i32) -> (i32, i32) {
    %c0_i32 = arith.constant 0 : i32
    %c0_i32_0 = arith.constant 0 : i32
    %c0_i32_1 = arith.constant 0 : i32
    return %c0_i32, %c0_i32_0 : i32, i32
  }
  func.func @transform_5(%arg0: i32) -> (i32, i32) {
    %c0_i32 = arith.constant 0 : i32
    %c0_i32_0 = arith.constant 0 : i32
    %c0_i32_1 = arith.constant 0 : i32
    return %c0_i32, %c0_i32_0 : i32, i32
  }
  func.func @transform_6(%arg0: i32) -> (i32, i32) {
    %c0_i32 = arith.constant 0 : i32
    %c0_i32_0 = arith.constant 0 : i32
    %c0_i32_1 = arith.constant 0 : i32
    return %c0_i32, %c0_i32_0 : i32, i32
  }
  func.func @transform_7(%arg0: i32) -> (i32, i32) {
    %c0_i32 = arith.constant 0 : i32
    %c0_i32_0 = arith.constant 0 : i32
    %c0_i32_1 = arith.constant 0 : i32
    return %c0_i32, %c0_i32_0 : i32, i32
  }
  func.func @transform_8(%arg0: i32) -> (i32, i32) {
    %c0_i32 = arith.constant 0 : i32
    %c0_i32_0 = arith.constant 0 : i32
    %c0_i32_1 = arith.constant 0 : i32
    return %c0_i32, %c0_i32_0 : i32, i32
  }
  func.func @transform_9(%arg0: i32) -> (i32, i32) {
    %c0_i32 = arith.constant 0 : i32
    %c0_i32_0 = arith.constant 0 : i32
    return %arg0, %c0_i32 : i32, i32
  }
}

module attributes {stable_mosaic.version = 11 : i64} {
  func.func @_pixel_stage_kernel(%arg0: i32, %arg1: memref<1x8x512xf32, #tpu.memory_space<vmem>>, %arg2: memref<16x8x1xf32, #tpu.memory_space<vmem>>, %arg3: memref<2x32x1xf32, #tpu.memory_space<vmem>>, %arg4: memref<3x8x8xbf16, #tpu.memory_space<vmem>>, %arg5: memref<8x2xf32, #tpu.memory_space<vmem>>, %arg6: memref<8x2xf32, #tpu.memory_space<vmem>>, %arg7: memref<32x8xbf16, #tpu.memory_space<vmem>>, %arg8: memref<8x32xbf16, #tpu.memory_space<vmem>>, %arg9: memref<25x8x1xf32, #tpu.memory_space<vmem>>, %arg10: memref<49x8x1xf32, #tpu.memory_space<vmem>>, %arg11: memref<9x32x1xf32, #tpu.memory_space<vmem>>, %arg12: memref<5x1x512xf32, #tpu.memory_space<vmem>>, %arg13: memref<7x1x512xf32, #tpu.memory_space<vmem>>, %arg14: memref<3x1x512xf32, #tpu.memory_space<vmem>>, %arg15: memref<1x8x512xf32, #tpu.memory_space<vmem>>, %arg16: memref<8x644xf32, #tpu.memory_space<vmem>>, %arg17: memref<8x1106xf32, #tpu.memory_space<vmem>>, %arg18: memref<32x578xf32, #tpu.memory_space<vmem>>) attributes {dimension_semantics = [#tpu.dimension_semantics<parallel>], iteration_bounds = array<i64: 4>, scalar_prefetch = 0 : i64, scratch_operands = 3 : i64, tpu.core_type = #tpu.core_type<tc>, window_params = [{transform_indices = @transform_0, window_bounds = array<i64: 1, 8, 512>}, {pipeline_mode = #tpu.pipeline_mode<synchronous>, transform_indices = @transform_1, window_bounds = array<i64: 16, 8, 1>}, {pipeline_mode = #tpu.pipeline_mode<synchronous>, transform_indices = @transform_2, window_bounds = array<i64: 2, 32, 1>}, {pipeline_mode = #tpu.pipeline_mode<synchronous>, transform_indices = @transform_3, window_bounds = array<i64: 3, 8, 8>}, {pipeline_mode = #tpu.pipeline_mode<synchronous>, transform_indices = @transform_4, window_bounds = array<i64: 8, 2>}, {pipeline_mode = #tpu.pipeline_mode<synchronous>, transform_indices = @transform_5, window_bounds = array<i64: 8, 2>}, {pipeline_mode = #tpu.pipeline_mode<synchronous>, transform_indices = @transform_6, window_bounds = array<i64: 32, 8>}, {pipeline_mode = #tpu.pipeline_mode<synchronous>, transform_indices = @transform_7, window_bounds = array<i64: 8, 32>}, {pipeline_mode = #tpu.pipeline_mode<synchronous>, transform_indices = @transform_8, window_bounds = array<i64: 25, 8, 1>}, {pipeline_mode = #tpu.pipeline_mode<synchronous>, transform_indices = @transform_9, window_bounds = array<i64: 49, 8, 1>}, {pipeline_mode = #tpu.pipeline_mode<synchronous>, transform_indices = @transform_10, window_bounds = array<i64: 9, 32, 1>}, {pipeline_mode = #tpu.pipeline_mode<synchronous>, transform_indices = @transform_11, window_bounds = array<i64: 5, 1, 512>}, {pipeline_mode = #tpu.pipeline_mode<synchronous>, transform_indices = @transform_12, window_bounds = array<i64: 7, 1, 512>}, {pipeline_mode = #tpu.pipeline_mode<synchronous>, transform_indices = @transform_13, window_bounds = array<i64: 3, 1, 512>}, {transform_indices = @transform_14, window_bounds = array<i64: 1, 8, 512>}]} {
    %c0 = arith.constant 0 : index
    %c0_0 = arith.constant 0 : index
    %c0_1 = arith.constant 0 : index
    %0 = vector.load %arg1[%c0, %c0_0, %c0_1] : memref<1x8x512xf32, #tpu.memory_space<vmem>>, vector<1x8x512xf32>
    %1 = vector.shape_cast %0 : vector<1x8x512xf32> to vector<8x512xf32>
    %c0_2 = arith.constant 0 : index
    %c0_3 = arith.constant 0 : index
    %c0_4 = arith.constant 0 : index
    %2 = vector.load %arg2[%c0_2, %c0_3, %c0_4] : memref<16x8x1xf32, #tpu.memory_space<vmem>>, vector<1x8x1xf32>
    %3 = vector.shape_cast %2 : vector<1x8x1xf32> to vector<8x1xf32>
    %c1 = arith.constant 1 : index
    %c0_5 = arith.constant 0 : index
    %c0_6 = arith.constant 0 : index
    %4 = vector.load %arg2[%c1, %c0_5, %c0_6] : memref<16x8x1xf32, #tpu.memory_space<vmem>>, vector<1x8x1xf32>
    %5 = vector.shape_cast %4 : vector<1x8x1xf32> to vector<8x1xf32>
    %6 = vector.shape_cast %1 : vector<8x512xf32> to vector<1x8x512xf32>
    %cst = arith.constant dense<0.000000e+00> : vector<1xf32>
    %7 = vector.multi_reduction <add>, %6, %cst [1, 2] : vector<1x8x512xf32> to vector<1xf32>
    %8 = vector.shape_cast %7 : vector<1xf32> to vector<1x1x1xf32>
    %9 = vector.extract %8[0, 0, 0] : f32 from vector<1x1x1xf32>
    %10 = vector.broadcast %9 : f32 to vector<1x1xf32>
    %cst_7 = arith.constant 2.44140625E-4 : f32
    %11 = vector.broadcast %cst_7 : f32 to vector<1x1xf32>
    %12 = arith.mulf %10, %11 : vector<1x1xf32>
    %13 = vector.broadcast %12 : vector<1x1xf32> to vector<8x512xf32>
    %14 = arith.subf %1, %13 : vector<8x512xf32>
    %15 = arith.mulf %14, %14 : vector<8x512xf32>
    %16 = vector.shape_cast %15 : vector<8x512xf32> to vector<1x8x512xf32>
    %cst_8 = arith.constant dense<0.000000e+00> : vector<1xf32>
    %17 = vector.multi_reduction <add>, %16, %cst_8 [1, 2] : vector<1x8x512xf32> to vector<1xf32>
    %18 = vector.shape_cast %17 : vector<1xf32> to vector<1x1x1xf32>
    %19 = vector.extract %18[0, 0, 0] : f32 from vector<1x1x1xf32>
    %20 = vector.broadcast %19 : f32 to vector<1x1xf32>
    %cst_9 = arith.constant 2.44140625E-4 : f32
    %21 = vector.broadcast %cst_9 : f32 to vector<1x1xf32>
    %22 = arith.mulf %20, %21 : vector<1x1xf32>
    %cst_10 = arith.constant 9.99999974E-6 : f32
    %23 = vector.broadcast %cst_10 : f32 to vector<1x1xf32>
    %24 = arith.addf %22, %23 : vector<1x1xf32>
    %25 = math.rsqrt %24 : vector<1x1xf32>
    %26 = vector.broadcast %25 : vector<1x1xf32> to vector<8x512xf32>
    %27 = arith.mulf %14, %26 : vector<8x512xf32>
    %28 = vector.broadcast %3 : vector<8x1xf32> to vector<8x512xf32>
    %29 = arith.mulf %27, %28 : vector<8x512xf32>
    %30 = vector.broadcast %5 : vector<8x1xf32> to vector<8x512xf32>
    %31 = arith.addf %29, %30 : vector<8x512xf32>
    %c2 = arith.constant 2 : index
    %c0_11 = arith.constant 0 : index
    %c0_12 = arith.constant 0 : index
    %32 = vector.load %arg2[%c2, %c0_11, %c0_12] : memref<16x8x1xf32, #tpu.memory_space<vmem>>, vector<1x8x1xf32>
    %33 = vector.shape_cast %32 : vector<1x8x1xf32> to vector<8x1xf32>
    %34 = vector.broadcast %33 : vector<8x1xf32> to vector<8x512xf32>
    %35 = arith.mulf %31, %34 : vector<8x512xf32>
    %c3 = arith.constant 3 : index
    %c0_13 = arith.constant 0 : index
    %c0_14 = arith.constant 0 : index
    %36 = vector.load %arg2[%c3, %c0_13, %c0_14] : memref<16x8x1xf32, #tpu.memory_space<vmem>>, vector<1x8x1xf32>
    %37 = vector.shape_cast %36 : vector<1x8x1xf32> to vector<8x1xf32>
    %38 = vector.broadcast %37 : vector<8x1xf32> to vector<8x512xf32>
    %39 = arith.addf %35, %38 : vector<8x512xf32>
    %c0_15 = arith.constant 0 : index
    %c0_16 = arith.constant 0 : index
    %c0_17 = arith.constant 0 : index
    %40 = vector.load %arg4[%c0_15, %c0_16, %c0_17] : memref<3x8x8xbf16, #tpu.memory_space<vmem>>, vector<1x8x8xbf16>
    %41 = vector.shape_cast %40 : vector<1x8x8xbf16> to vector<8x8xbf16>
    %42 = arith.truncf %39 : vector<8x512xf32> to vector<8x512xbf16>
    %cst_18 = arith.constant dense<0.000000e+00> : vector<8x512xf32>
    %43 = tpu.matmul %41, %42, %cst_18 {dimension_numbers = #tpu.dot_dimension_numbers<[1], [0], [0], [1], [0, 0, 1, 1], [], []>} : vector<8x8xbf16>, vector<8x512xbf16>, vector<8x512xf32> -> vector<8x512xf32>
    %c4 = arith.constant 4 : index
    %c0_19 = arith.constant 0 : index
    %c0_20 = arith.constant 0 : index
    %44 = vector.load %arg2[%c4, %c0_19, %c0_20] : memref<16x8x1xf32, #tpu.memory_space<vmem>>, vector<1x8x1xf32>
    %45 = vector.shape_cast %44 : vector<1x8x1xf32> to vector<8x1xf32>
    %46 = vector.broadcast %45 : vector<8x1xf32> to vector<8x512xf32>
    %47 = arith.addf %43, %46 : vector<8x512xf32>
    %cst_21 = arith.constant 0.707106769 : f32
    %48 = vector.broadcast %cst_21 : f32 to vector<8x512xf32>
    %49 = arith.mulf %47, %48 : vector<8x512xf32>
    %50 = math.absf %49 : vector<8x512xf32>
    %cst_22 = arith.constant 0.327591091 : f32
    %51 = vector.broadcast %cst_22 : f32 to vector<8x512xf32>
    %52 = arith.mulf %51, %50 : vector<8x512xf32>
    %cst_23 = arith.constant 1.000000e+00 : f32
    %53 = vector.broadcast %cst_23 : f32 to vector<8x512xf32>
    %54 = arith.addf %53, %52 : vector<8x512xf32>
    %cst_24 = arith.constant 1.000000e+00 : f32
    %55 = vector.broadcast %cst_24 : f32 to vector<8x512xf32>
    %56 = arith.divf %55, %54 : vector<8x512xf32>
    %cst_25 = arith.constant 1.06140542 : f32
    %57 = vector.broadcast %cst_25 : f32 to vector<8x512xf32>
    %58 = arith.mulf %56, %57 : vector<8x512xf32>
    %cst_26 = arith.constant -1.45315206 : f32
    %59 = vector.broadcast %cst_26 : f32 to vector<8x512xf32>
    %60 = arith.addf %59, %58 : vector<8x512xf32>
    %61 = arith.mulf %56, %60 : vector<8x512xf32>
    %cst_27 = arith.constant 1.42141378 : f32
    %62 = vector.broadcast %cst_27 : f32 to vector<8x512xf32>
    %63 = arith.addf %62, %61 : vector<8x512xf32>
    %64 = arith.mulf %56, %63 : vector<8x512xf32>
    %cst_28 = arith.constant -0.284496725 : f32
    %65 = vector.broadcast %cst_28 : f32 to vector<8x512xf32>
    %66 = arith.addf %65, %64 : vector<8x512xf32>
    %67 = arith.mulf %56, %66 : vector<8x512xf32>
    %cst_29 = arith.constant 0.254829586 : f32
    %68 = vector.broadcast %cst_29 : f32 to vector<8x512xf32>
    %69 = arith.addf %68, %67 : vector<8x512xf32>
    %70 = arith.mulf %56, %69 : vector<8x512xf32>
    %cst_30 = arith.constant 0.000000e+00 : f32
    %71 = vector.broadcast %cst_30 : f32 to vector<8x512xf32>
    %72 = arith.subf %71, %50 : vector<8x512xf32>
    %73 = arith.mulf %72, %50 : vector<8x512xf32>
    %74 = math.exp %73 : vector<8x512xf32>
    %75 = arith.mulf %70, %74 : vector<8x512xf32>
    %cst_31 = arith.constant 1.000000e+00 : f32
    %76 = vector.broadcast %cst_31 : f32 to vector<8x512xf32>
    %77 = arith.subf %76, %75 : vector<8x512xf32>
    %cst_32 = arith.constant 0.000000e+00 : f32
    %78 = vector.broadcast %cst_32 : f32 to vector<8x512xf32>
    %79 = arith.cmpf oge, %49, %78 : vector<8x512xf32>
    %cst_33 = arith.constant 0.000000e+00 : f32
    %80 = vector.broadcast %cst_33 : f32 to vector<8x512xf32>
    %81 = arith.subf %80, %77 : vector<8x512xf32>
    %82 = arith.select %79, %77, %81 : vector<8x512xi1>, vector<8x512xf32>
    %cst_34 = arith.constant 5.000000e-01 : f32
    %83 = vector.broadcast %cst_34 : f32 to vector<8x512xf32>
    %84 = arith.mulf %83, %47 : vector<8x512xf32>
    %cst_35 = arith.constant 1.000000e+00 : f32
    %85 = vector.broadcast %cst_35 : f32 to vector<8x512xf32>
    %86 = arith.addf %85, %82 : vector<8x512xf32>
    %87 = arith.mulf %84, %86 : vector<8x512xf32>
    %cst_36 = arith.constant 0.000000e+00 : f32
    %88 = vector.broadcast %cst_36 : f32 to vector<8x66xf32>
    %c0_37 = arith.constant 0 : index
    %c0_38 = arith.constant 0 : index
    %89 = vector.load %arg16[%c0_37, %c0_38] : memref<8x644xf32, #tpu.memory_space<vmem>>, vector<8x66xf32>
    tpu.vector_store %arg16[%c0_37, %c0_38], %88 {strides = array<i32>} : memref<8x644xf32, #tpu.memory_space<vmem>>, vector<8x66xf32>,
    %c0_39 = arith.constant 0 : index
    %c578 = arith.constant 578 : index
    %90 = vector.load %arg16[%c0_39, %c578] : memref<8x644xf32, #tpu.memory_space<vmem>>, vector<8x66xf32>
    tpu.vector_store %arg16[%c0_39, %c578], %88 {strides = array<i32>} : memref<8x644xf32, #tpu.memory_space<vmem>>, vector<8x66xf32>,
    %c0_40 = arith.constant 0 : index
    %c66 = arith.constant 66 : index
    %91 = vector.load %arg16[%c0_40, %c66] : memref<8x644xf32, #tpu.memory_space<vmem>>, vector<8x512xf32>
    tpu.vector_store %arg16[%c0_40, %c66], %87 {strides = array<i32>} : memref<8x644xf32, #tpu.memory_space<vmem>>, vector<8x512xf32>,
    %c0_41 = arith.constant 0 : index
    %c0_42 = arith.constant 0 : index
    %c0_43 = arith.constant 0 : index
    %92 = vector.load %arg9[%c0_41, %c0_42, %c0_43] : memref<25x8x1xf32, #tpu.memory_space<vmem>>, vector<1x8x1xf32>
    %93 = vector.shape_cast %92 : vector<1x8x1xf32> to vector<8x1xf32>
    %c0_44 = arith.constant 0 : index
    %c0_45 = arith.constant 0 : index
    %94 = vector.load %arg16[%c0_44, %c0_45] : memref<8x644xf32, #tpu.memory_space<vmem>>, vector<8x512xf32>
    %95 = vector.broadcast %93 : vector<8x1xf32> to vector<8x512xf32>
    %96 = arith.mulf %95, %94 : vector<8x512xf32>
    %c5 = arith.constant 5 : index
    %c0_46 = arith.constant 0 : index
    %c0_47 = arith.constant 0 : index
    %97 = vector.load %arg9[%c5, %c0_46, %c0_47] : memref<25x8x1xf32, #tpu.memory_space<vmem>>, vector<1x8x1xf32>
    %98 = vector.shape_cast %97 : vector<1x8x1xf32> to vector<8x1xf32>
    %c0_48 = arith.constant 0 : index
    %c32 = arith.constant 32 : index
    %99 = vector.load %arg16[%c0_48, %c32] : memref<8x644xf32, #tpu.memory_space<vmem>>, vector<8x512xf32>
    %100 = vector.broadcast %98 : vector<8x1xf32> to vector<8x512xf32>
    %101 = arith.mulf %100, %99 : vector<8x512xf32>
    %102 = arith.addf %96, %101 : vector<8x512xf32>
    %c10 = arith.constant 10 : index
    %c0_49 = arith.constant 0 : index
    %c0_50 = arith.constant 0 : index
    %103 = vector.load %arg9[%c10, %c0_49, %c0_50] : memref<25x8x1xf32, #tpu.memory_space<vmem>>, vector<1x8x1xf32>
    %104 = vector.shape_cast %103 : vector<1x8x1xf32> to vector<8x1xf32>
    %c0_51 = arith.constant 0 : index
    %c64 = arith.constant 64 : index
    %105 = vector.load %arg16[%c0_51, %c64] : memref<8x644xf32, #tpu.memory_space<vmem>>, vector<8x512xf32>
    %106 = vector.broadcast %104 : vector<8x1xf32> to vector<8x512xf32>
    %107 = arith.mulf %106, %105 : vector<8x512xf32>
    %108 = arith.addf %102, %107 : vector<8x512xf32>
    %c15 = arith.constant 15 : index
    %c0_52 = arith.constant 0 : index
    %c0_53 = arith.constant 0 : index
    %109 = vector.load %arg9[%c15, %c0_52, %c0_53] : memref<25x8x1xf32, #tpu.memory_space<vmem>>, vector<1x8x1xf32>
    %110 = vector.shape_cast %109 : vector<1x8x1xf32> to vector<8x1xf32>
    %c0_54 = arith.constant 0 : index
    %c96 = arith.constant 96 : index
    %111 = vector.load %arg16[%c0_54, %c96] : memref<8x644xf32, #tpu.memory_space<vmem>>, vector<8x512xf32>
    %112 = vector.broadcast %110 : vector<8x1xf32> to vector<8x512xf32>
    %113 = arith.mulf %112, %111 : vector<8x512xf32>
    %114 = arith.addf %108, %113 : vector<8x512xf32>
    %c20 = arith.constant 20 : index
    %c0_55 = arith.constant 0 : index
    %c0_56 = arith.constant 0 : index
    %115 = vector.load %arg9[%c20, %c0_55, %c0_56] : memref<25x8x1xf32, #tpu.memory_space<vmem>>, vector<1x8x1xf32>
    %116 = vector.shape_cast %115 : vector<1x8x1xf32> to vector<8x1xf32>
    %c0_57 = arith.constant 0 : index
    %c128 = arith.constant 128 : index
    %117 = vector.load %arg16[%c0_57, %c128] : memref<8x644xf32, #tpu.memory_space<vmem>>, vector<8x512xf32>
    %118 = vector.broadcast %116 : vector<8x1xf32> to vector<8x512xf32>
    %119 = arith.mulf %118, %117 : vector<8x512xf32>
    %120 = arith.addf %114, %119 : vector<8x512xf32>
    %c0_58 = arith.constant 0 : index
    %c0_59 = arith.constant 0 : index
    %c0_60 = arith.constant 0 : index
    %121 = vector.load %arg12[%c0_58, %c0_59, %c0_60] : memref<5x1x512xf32, #tpu.memory_space<vmem>>, vector<1x1x512xf32>
    %122 = vector.shape_cast %121 : vector<1x1x512xf32> to vector<1x512xf32>
    %123 = vector.broadcast %122 : vector<1x512xf32> to vector<8x512xf32>
    %124 = arith.mulf %123, %120 : vector<8x512xf32>
    %c1_61 = arith.constant 1 : index
    %c0_62 = arith.constant 0 : index
    %c0_63 = arith.constant 0 : index
    %125 = vector.load %arg9[%c1_61, %c0_62, %c0_63] : memref<25x8x1xf32, #tpu.memory_space<vmem>>, vector<1x8x1xf32>
    %126 = vector.shape_cast %125 : vector<1x8x1xf32> to vector<8x1xf32>
    %c0_64 = arith.constant 0 : index
    %c1_65 = arith.constant 1 : index
    %127 = vector.load %arg16[%c0_64, %c1_65] : memref<8x644xf32, #tpu.memory_space<vmem>>, vector<8x512xf32>
    %128 = vector.broadcast %126 : vector<8x1xf32> to vector<8x512xf32>
    %129 = arith.mulf %128, %127 : vector<8x512xf32>
    %c6 = arith.constant 6 : index
    %c0_66 = arith.constant 0 : index
    %c0_67 = arith.constant 0 : index
    %130 = vector.load %arg9[%c6, %c0_66, %c0_67] : memref<25x8x1xf32, #tpu.memory_space<vmem>>, vector<1x8x1xf32>
    %131 = vector.shape_cast %130 : vector<1x8x1xf32> to vector<8x1xf32>
    %c0_68 = arith.constant 0 : index
    %c33 = arith.constant 33 : index
    %132 = vector.load %arg16[%c0_68, %c33] : memref<8x644xf32, #tpu.memory_space<vmem>>, vector<8x512xf32>
    %133 = vector.broadcast %131 : vector<8x1xf32> to vector<8x512xf32>
    %134 = arith.mulf %133, %132 : vector<8x512xf32>
    %135 = arith.addf %129, %134 : vector<8x512xf32>
    %c11 = arith.constant 11 : index
    %c0_69 = arith.constant 0 : index
    %c0_70 = arith.constant 0 : index
    %136 = vector.load %arg9[%c11, %c0_69, %c0_70] : memref<25x8x1xf32, #tpu.memory_space<vmem>>, vector<1x8x1xf32>
    %137 = vector.shape_cast %136 : vector<1x8x1xf32> to vector<8x1xf32>
    %c0_71 = arith.constant 0 : index
    %c65 = arith.constant 65 : index
    %138 = vector.load %arg16[%c0_71, %c65] : memref<8x644xf32, #tpu.memory_space<vmem>>, vector<8x512xf32>
    %139 = vector.broadcast %137 : vector<8x1xf32> to vector<8x512xf32>
    %140 = arith.mulf %139, %138 : vector<8x512xf32>
    %141 = arith.addf %135, %140 : vector<8x512xf32>
    %c16 = arith.constant 16 : index
    %c0_72 = arith.constant 0 : index
    %c0_73 = arith.constant 0 : index
    %142 = vector.load %arg9[%c16, %c0_72, %c0_73] : memref<25x8x1xf32, #tpu.memory_space<vmem>>, vector<1x8x1xf32>
    %143 = vector.shape_cast %142 : vector<1x8x1xf32> to vector<8x1xf32>
    %c0_74 = arith.constant 0 : index
    %c97 = arith.constant 97 : index
    %144 = vector.load %arg16[%c0_74, %c97] : memref<8x644xf32, #tpu.memory_space<vmem>>, vector<8x512xf32>
    %145 = vector.broadcast %143 : vector<8x1xf32> to vector<8x512xf32>
    %146 = arith.mulf %145, %144 : vector<8x512xf32>
    %147 = arith.addf %141, %146 : vector<8x512xf32>
    %c21 = arith.constant 21 : index
    %c0_75 = arith.constant 0 : index
    %c0_76 = arith.constant 0 : index
    %148 = vector.load %arg9[%c21, %c0_75, %c0_76] : memref<25x8x1xf32, #tpu.memory_space<vmem>>, vector<1x8x1xf32>
    %149 = vector.shape_cast %148 : vector<1x8x1xf32> to vector<8x1xf32>
    %c0_77 = arith.constant 0 : index
    %c129 = arith.constant 129 : index
    %150 = vector.load %arg16[%c0_77, %c129] : memref<8x644xf32, #tpu.memory_space<vmem>>, vector<8x512xf32>
    %151 = vector.broadcast %149 : vector<8x1xf32> to vector<8x512xf32>
    %152 = arith.mulf %151, %150 : vector<8x512xf32>
    %153 = arith.addf %147, %152 : vector<8x512xf32>
    %c1_78 = arith.constant 1 : index
    %c0_79 = arith.constant 0 : index
    %c0_80 = arith.constant 0 : index
    %154 = vector.load %arg12[%c1_78, %c0_79, %c0_80] : memref<5x1x512xf32, #tpu.memory_space<vmem>>, vector<1x1x512xf32>
    %155 = vector.shape_cast %154 : vector<1x1x512xf32> to vector<1x512xf32>
    %156 = vector.broadcast %155 : vector<1x512xf32> to vector<8x512xf32>
    %157 = arith.mulf %156, %153 : vector<8x512xf32>
    %158 = arith.addf %124, %157 : vector<8x512xf32>
    %c2_81 = arith.constant 2 : index
    %c0_82 = arith.constant 0 : index
    %c0_83 = arith.constant 0 : index
    %159 = vector.load %arg9[%c2_81, %c0_82, %c0_83] : memref<25x8x1xf32, #tpu.memory_space<vmem>>, vector<1x8x1xf32>
    %160 = vector.shape_cast %159 : vector<1x8x1xf32> to vector<8x1xf32>
    %c0_84 = arith.constant 0 : index
    %c2_85 = arith.constant 2 : index
    %161 = vector.load %arg16[%c0_84, %c2_85] : memref<8x644xf32, #tpu.memory_space<vmem>>, vector<8x512xf32>
    %162 = vector.broadcast %160 : vector<8x1xf32> to vector<8x512xf32>
    %163 = arith.mulf %162, %161 : vector<8x512xf32>
    %c7 = arith.constant 7 : index
    %c0_86 = arith.constant 0 : index
    %c0_87 = arith.constant 0 : index
    %164 = vector.load %arg9[%c7, %c0_86, %c0_87] : memref<25x8x1xf32, #tpu.memory_space<vmem>>, vector<1x8x1xf32>
    %165 = vector.shape_cast %164 : vector<1x8x1xf32> to vector<8x1xf32>
    %c0_88 = arith.constant 0 : index
    %c34 = arith.constant 34 : index
    %166 = vector.load %arg16[%c0_88, %c34] : memref<8x644xf32, #tpu.memory_space<vmem>>, vector<8x512xf32>
    %167 = vector.broadcast %165 : vector<8x1xf32> to vector<8x512xf32>
    %168 = arith.mulf %167, %166 : vector<8x512xf32>
    %169 = arith.addf %163, %168 : vector<8x512xf32>
    %c12 = arith.constant 12 : index
    %c0_89 = arith.constant 0 : index
    %c0_90 = arith.constant 0 : index
    %170 = vector.load %arg9[%c12, %c0_89, %c0_90] : memref<25x8x1xf32, #tpu.memory_space<vmem>>, vector<1x8x1xf32>
    %171 = vector.shape_cast %170 : vector<1x8x1xf32> to vector<8x1xf32>
    %c0_91 = arith.constant 0 : index
    %c66_92 = arith.constant 66 : index
    %172 = vector.load %arg16[%c0_91, %c66_92] : memref<8x644xf32, #tpu.memory_space<vmem>>, vector<8x512xf32>
    %173 = vector.broadcast %171 : vector<8x1xf32> to vector<8x512xf32>
    %174 = arith.mulf %173, %172 : vector<8x512xf32>
    %175 = arith.addf %169, %174 : vector<8x512xf32>
    %c17 = arith.constant 17 : index
    %c0_93 = arith.constant 0 : index
    %c0_94 = arith.constant 0 : index
    %176 = vector.load %arg9[%c17, %c0_93, %c0_94] : memref<25x8x1xf32, #tpu.memory_space<vmem>>, vector<1x8x1xf32>
    %177 = vector.shape_cast %176 : vector<1x8x1xf32> to vector<8x1xf32>
    %c0_95 = arith.constant 0 : index
    %c98 = arith.constant 98 : index
    %178 = vector.load %arg16[%c0_95, %c98] : memref<8x644xf32, #tpu.memory_space<vmem>>, vector<8x512xf32>
    %179 = vector.broadcast %177 : vector<8x1xf32> to vector<8x512xf32>
    %180 = arith.mulf %179, %178 : vector<8x512xf32>
    %181 = arith.addf %175, %180 : vector<8x512xf32>
    %c22 = arith.constant 22 : index
    %c0_96 = arith.constant 0 : index
    %c0_97 = arith.constant 0 : index
    %182 = vector.load %arg9[%c22, %c0_96, %c0_97] : memref<25x8x1xf32, #tpu.memory_space<vmem>>, vector<1x8x1xf32>
    %183 = vector.shape_cast %182 : vector<1x8x1xf32> to vector<8x1xf32>
    %c0_98 = arith.constant 0 : index
    %c130 = arith.constant 130 : index
    %184 = vector.load %arg16[%c0_98, %c130] : memref<8x644xf32, #tpu.memory_space<vmem>>, vector<8x512xf32>
    %185 = vector.broadcast %183 : vector<8x1xf32> to vector<8x512xf32>
    %186 = arith.mulf %185, %184 : vector<8x512xf32>
    %187 = arith.addf %181, %186 : vector<8x512xf32>
    %c2_99 = arith.constant 2 : index
    %c0_100 = arith.constant 0 : index
    %c0_101 = arith.constant 0 : index
    %188 = vector.load %arg12[%c2_99, %c0_100, %c0_101] : memref<5x1x512xf32, #tpu.memory_space<vmem>>, vector<1x1x512xf32>
    %189 = vector.shape_cast %188 : vector<1x1x512xf32> to vector<1x512xf32>
    %190 = vector.broadcast %189 : vector<1x512xf32> to vector<8x512xf32>
    %191 = arith.mulf %190, %187 : vector<8x512xf32>
    %192 = arith.addf %158, %191 : vector<8x512xf32>
    %c3_102 = arith.constant 3 : index
    %c0_103 = arith.constant 0 : index
    %c0_104 = arith.constant 0 : index
    %193 = vector.load %arg9[%c3_102, %c0_103, %c0_104] : memref<25x8x1xf32, #tpu.memory_space<vmem>>, vector<1x8x1xf32>
    %194 = vector.shape_cast %193 : vector<1x8x1xf32> to vector<8x1xf32>
    %c0_105 = arith.constant 0 : index
    %c3_106 = arith.constant 3 : index
    %195 = vector.load %arg16[%c0_105, %c3_106] : memref<8x644xf32, #tpu.memory_space<vmem>>, vector<8x512xf32>
    %196 = vector.broadcast %194 : vector<8x1xf32> to vector<8x512xf32>
    %197 = arith.mulf %196, %195 : vector<8x512xf32>
    %c8 = arith.constant 8 : index
    %c0_107 = arith.constant 0 : index
    %c0_108 = arith.constant 0 : index
    %198 = vector.load %arg9[%c8, %c0_107, %c0_108] : memref<25x8x1xf32, #tpu.memory_space<vmem>>, vector<1x8x1xf32>
    %199 = vector.shape_cast %198 : vector<1x8x1xf32> to vector<8x1xf32>
    %c0_109 = arith.constant 0 : index
    %c35 = arith.constant 35 : index
    %200 = vector.load %arg16[%c0_109, %c35] : memref<8x644xf32, #tpu.memory_space<vmem>>, vector<8x512xf32>
    %201 = vector.broadcast %199 : vector<8x1xf32> to vector<8x512xf32>
    %202 = arith.mulf %201, %200 : vector<8x512xf32>
    %203 = arith.addf %197, %202 : vector<8x512xf32>
    %c13 = arith.constant 13 : index
    %c0_110 = arith.constant 0 : index
    %c0_111 = arith.constant 0 : index
    %204 = vector.load %arg9[%c13, %c0_110, %c0_111] : memref<25x8x1xf32, #tpu.memory_space<vmem>>, vector<1x8x1xf32>
    %205 = vector.shape_cast %204 : vector<1x8x1xf32> to vector<8x1xf32>
    %c0_112 = arith.constant 0 : index
    %c67 = arith.constant 67 : index
    %206 = vector.load %arg16[%c0_112, %c67] : memref<8x644xf32, #tpu.memory_space<vmem>>, vector<8x512xf32>
    %207 = vector.broadcast %205 : vector<8x1xf32> to vector<8x512xf32>
    %208 = arith.mulf %207, %206 : vector<8x512xf32>
    %209 = arith.addf %203, %208 : vector<8x512xf32>
    %c18 = arith.constant 18 : index
    %c0_113 = arith.constant 0 : index
    %c0_114 = arith.constant 0 : index
    %210 = vector.load %arg9[%c18, %c0_113, %c0_114] : memref<25x8x1xf32, #tpu.memory_space<vmem>>, vector<1x8x1xf32>
    %211 = vector.shape_cast %210 : vector<1x8x1xf32> to vector<8x1xf32>
    %c0_115 = arith.constant 0 : index
    %c99 = arith.constant 99 : index
    %212 = vector.load %arg16[%c0_115, %c99] : memref<8x644xf32, #tpu.memory_space<vmem>>, vector<8x512xf32>
    %213 = vector.broadcast %211 : vector<8x1xf32> to vector<8x512xf32>
    %214 = arith.mulf %213, %212 : vector<8x512xf32>
    %215 = arith.addf %209, %214 : vector<8x512xf32>
    %c23 = arith.constant 23 : index
    %c0_116 = arith.constant 0 : index
    %c0_117 = arith.constant 0 : index
    %216 = vector.load %arg9[%c23, %c0_116, %c0_117] : memref<25x8x1xf32, #tpu.memory_space<vmem>>, vector<1x8x1xf32>
    %217 = vector.shape_cast %216 : vector<1x8x1xf32> to vector<8x1xf32>
    %c0_118 = arith.constant 0 : index
    %c131 = arith.constant 131 : index
    %218 = vector.load %arg16[%c0_118, %c131] : memref<8x644xf32, #tpu.memory_space<vmem>>, vector<8x512xf32>
    %219 = vector.broadcast %217 : vector<8x1xf32> to vector<8x512xf32>
    %220 = arith.mulf %219, %218 : vector<8x512xf32>
    %221 = arith.addf %215, %220 : vector<8x512xf32>
    %c3_119 = arith.constant 3 : index
    %c0_120 = arith.constant 0 : index
    %c0_121 = arith.constant 0 : index
    %222 = vector.load %arg12[%c3_119, %c0_120, %c0_121] : memref<5x1x512xf32, #tpu.memory_space<vmem>>, vector<1x1x512xf32>
    %223 = vector.shape_cast %222 : vector<1x1x512xf32> to vector<1x512xf32>
    %224 = vector.broadcast %223 : vector<1x512xf32> to vector<8x512xf32>
    %225 = arith.mulf %224, %221 : vector<8x512xf32>
    %226 = arith.addf %192, %225 : vector<8x512xf32>
    %c4_122 = arith.constant 4 : index
    %c0_123 = arith.constant 0 : index
    %c0_124 = arith.constant 0 : index
    %227 = vector.load %arg9[%c4_122, %c0_123, %c0_124] : memref<25x8x1xf32, #tpu.memory_space<vmem>>, vector<1x8x1xf32>
    %228 = vector.shape_cast %227 : vector<1x8x1xf32> to vector<8x1xf32>
    %c0_125 = arith.constant 0 : index
    %c4_126 = arith.constant 4 : index
    %229 = vector.load %arg16[%c0_125, %c4_126] : memref<8x644xf32, #tpu.memory_space<vmem>>, vector<8x512xf32>
    %230 = vector.broadcast %228 : vector<8x1xf32> to vector<8x512xf32>
    %231 = arith.mulf %230, %229 : vector<8x512xf32>
    %c9 = arith.constant 9 : index
    %c0_127 = arith.constant 0 : index
    %c0_128 = arith.constant 0 : index
    %232 = vector.load %arg9[%c9, %c0_127, %c0_128] : memref<25x8x1xf32, #tpu.memory_space<vmem>>, vector<1x8x1xf32>
    %233 = vector.shape_cast %232 : vector<1x8x1xf32> to vector<8x1xf32>
    %c0_129 = arith.constant 0 : index
    %c36 = arith.constant 36 : index
    %234 = vector.load %arg16[%c0_129, %c36] : memref<8x644xf32, #tpu.memory_space<vmem>>, vector<8x512xf32>
    %235 = vector.broadcast %233 : vector<8x1xf32> to vector<8x512xf32>
    %236 = arith.mulf %235, %234 : vector<8x512xf32>
    %237 = arith.addf %231, %236 : vector<8x512xf32>
    %c14 = arith.constant 14 : index
    %c0_130 = arith.constant 0 : index
    %c0_131 = arith.constant 0 : index
    %238 = vector.load %arg9[%c14, %c0_130, %c0_131] : memref<25x8x1xf32, #tpu.memory_space<vmem>>, vector<1x8x1xf32>
    %239 = vector.shape_cast %238 : vector<1x8x1xf32> to vector<8x1xf32>
    %c0_132 = arith.constant 0 : index
    %c68 = arith.constant 68 : index
    %240 = vector.load %arg16[%c0_132, %c68] : memref<8x644xf32, #tpu.memory_space<vmem>>, vector<8x512xf32>
    %241 = vector.broadcast %239 : vector<8x1xf32> to vector<8x512xf32>
    %242 = arith.mulf %241, %240 : vector<8x512xf32>
    %243 = arith.addf %237, %242 : vector<8x512xf32>
    %c19 = arith.constant 19 : index
    %c0_133 = arith.constant 0 : index
    %c0_134 = arith.constant 0 : index
    %244 = vector.load %arg9[%c19, %c0_133, %c0_134] : memref<25x8x1xf32, #tpu.memory_space<vmem>>, vector<1x8x1xf32>
    %245 = vector.shape_cast %244 : vector<1x8x1xf32> to vector<8x1xf32>
    %c0_135 = arith.constant 0 : index
    %c100 = arith.constant 100 : index
    %246 = vector.load %arg16[%c0_135, %c100] : memref<8x644xf32, #tpu.memory_space<vmem>>, vector<8x512xf32>
    %247 = vector.broadcast %245 : vector<8x1xf32> to vector<8x512xf32>
    %248 = arith.mulf %247, %246 : vector<8x512xf32>
    %249 = arith.addf %243, %248 : vector<8x512xf32>
    %c24 = arith.constant 24 : index
    %c0_136 = arith.constant 0 : index
    %c0_137 = arith.constant 0 : index
    %250 = vector.load %arg9[%c24, %c0_136, %c0_137] : memref<25x8x1xf32, #tpu.memory_space<vmem>>, vector<1x8x1xf32>
    %251 = vector.shape_cast %250 : vector<1x8x1xf32> to vector<8x1xf32>
    %c0_138 = arith.constant 0 : index
    %c132 = arith.constant 132 : index
    %252 = vector.load %arg16[%c0_138, %c132] : memref<8x644xf32, #tpu.memory_space<vmem>>, vector<8x512xf32>
    %253 = vector.broadcast %251 : vector<8x1xf32> to vector<8x512xf32>
    %254 = arith.mulf %253, %252 : vector<8x512xf32>
    %255 = arith.addf %249, %254 : vector<8x512xf32>
    %c4_139 = arith.constant 4 : index
    %c0_140 = arith.constant 0 : index
    %c0_141 = arith.constant 0 : index
    %256 = vector.load %arg12[%c4_139, %c0_140, %c0_141] : memref<5x1x512xf32, #tpu.memory_space<vmem>>, vector<1x1x512xf32>
    %257 = vector.shape_cast %256 : vector<1x1x512xf32> to vector<1x512xf32>
    %258 = vector.broadcast %257 : vector<1x512xf32> to vector<8x512xf32>
    %259 = arith.mulf %258, %255 : vector<8x512xf32>
    %260 = arith.addf %226, %259 : vector<8x512xf32>
    %c5_142 = arith.constant 5 : index
    %c0_143 = arith.constant 0 : index
    %c0_144 = arith.constant 0 : index
    %261 = vector.load %arg2[%c5_142, %c0_143, %c0_144] : memref<16x8x1xf32, #tpu.memory_space<vmem>>, vector<1x8x1xf32>
    %262 = vector.shape_cast %261 : vector<1x8x1xf32> to vector<8x1xf32>
    %263 = vector.broadcast %262 : vector<8x1xf32> to vector<8x512xf32>
    %264 = arith.addf %260, %263 : vector<8x512xf32>
    %cst_145 = arith.constant 0.000000e+00 : f32
    %265 = vector.broadcast %cst_145 : f32 to vector<8x297xf32>
    %c0_146 = arith.constant 0 : index
    %c0_147 = arith.constant 0 : index
    %266 = vector.load %arg17[%c0_146, %c0_147] : memref<8x1106xf32, #tpu.memory_space<vmem>>, vector<8x297xf32>
    tpu.vector_store %arg17[%c0_146, %c0_147], %265 {strides = array<i32>} : memref<8x1106xf32, #tpu.memory_space<vmem>>, vector<8x297xf32>,
    %c0_148 = arith.constant 0 : index
    %c809 = arith.constant 809 : index
    %267 = vector.load %arg17[%c0_148, %c809] : memref<8x1106xf32, #tpu.memory_space<vmem>>, vector<8x297xf32>
    tpu.vector_store %arg17[%c0_148, %c809], %265 {strides = array<i32>} : memref<8x1106xf32, #tpu.memory_space<vmem>>, vector<8x297xf32>,
    %c0_149 = arith.constant 0 : index
    %c297 = arith.constant 297 : index
    %268 = vector.load %arg17[%c0_149, %c297] : memref<8x1106xf32, #tpu.memory_space<vmem>>, vector<8x512xf32>
    tpu.vector_store %arg17[%c0_149, %c297], %264 {strides = array<i32>} : memref<8x1106xf32, #tpu.memory_space<vmem>>, vector<8x512xf32>,
    %c0_150 = arith.constant 0 : index
    %c0_151 = arith.constant 0 : index
    %c0_152 = arith.constant 0 : index
    %269 = vector.load %arg10[%c0_150, %c0_151, %c0_152] : memref<49x8x1xf32, #tpu.memory_space<vmem>>, vector<1x8x1xf32>
    %270 = vector.shape_cast %269 : vector<1x8x1xf32> to vector<8x1xf32>
    %c0_153 = arith.constant 0 : index
    %c0_154 = arith.constant 0 : index
    %271 = vector.load %arg17[%c0_153, %c0_154] : memref<8x1106xf32, #tpu.memory_space<vmem>>, vector<8x512xf32>
    %272 = vector.broadcast %270 : vector<8x1xf32> to vector<8x512xf32>
    %273 = arith.mulf %272, %271 : vector<8x512xf32>
    %c7_155 = arith.constant 7 : index
    %c0_156 = arith.constant 0 : index
    %c0_157 = arith.constant 0 : index
    %274 = vector.load %arg10[%c7_155, %c0_156, %c0_157] : memref<49x8x1xf32, #tpu.memory_space<vmem>>, vector<1x8x1xf32>
    %275 = vector.shape_cast %274 : vector<1x8x1xf32> to vector<8x1xf32>
    %c0_158 = arith.constant 0 : index
    %c96_159 = arith.constant 96 : index
    %276 = vector.load %arg17[%c0_158, %c96_159] : memref<8x1106xf32, #tpu.memory_space<vmem>>, vector<8x512xf32>
    %277 = vector.broadcast %275 : vector<8x1xf32> to vector<8x512xf32>
    %278 = arith.mulf %277, %276 : vector<8x512xf32>
    %279 = arith.addf %273, %278 : vector<8x512xf32>
    %c14_160 = arith.constant 14 : index
    %c0_161 = arith.constant 0 : index
    %c0_162 = arith.constant 0 : index
    %280 = vector.load %arg10[%c14_160, %c0_161, %c0_162] : memref<49x8x1xf32, #tpu.memory_space<vmem>>, vector<1x8x1xf32>
    %281 = vector.shape_cast %280 : vector<1x8x1xf32> to vector<8x1xf32>
    %c0_163 = arith.constant 0 : index
    %c192 = arith.constant 192 : index
    %282 = vector.load %arg17[%c0_163, %c192] : memref<8x1106xf32, #tpu.memory_space<vmem>>, vector<8x512xf32>
    %283 = vector.broadcast %281 : vector<8x1xf32> to vector<8x512xf32>
    %284 = arith.mulf %283, %282 : vector<8x512xf32>
    %285 = arith.addf %279, %284 : vector<8x512xf32>
    %c21_164 = arith.constant 21 : index
    %c0_165 = arith.constant 0 : index
    %c0_166 = arith.constant 0 : index
    %286 = vector.load %arg10[%c21_164, %c0_165, %c0_166] : memref<49x8x1xf32, #tpu.memory_space<vmem>>, vector<1x8x1xf32>
    %287 = vector.shape_cast %286 : vector<1x8x1xf32> to vector<8x1xf32>
    %c0_167 = arith.constant 0 : index
    %c288 = arith.constant 288 : index
    %288 = vector.load %arg17[%c0_167, %c288] : memref<8x1106xf32, #tpu.memory_space<vmem>>, vector<8x512xf32>
    %289 = vector.broadcast %287 : vector<8x1xf32> to vector<8x512xf32>
    %290 = arith.mulf %289, %288 : vector<8x512xf32>
    %291 = arith.addf %285, %290 : vector<8x512xf32>
    %c28 = arith.constant 28 : index
    %c0_168 = arith.constant 0 : index
    %c0_169 = arith.constant 0 : index
    %292 = vector.load %arg10[%c28, %c0_168, %c0_169] : memref<49x8x1xf32, #tpu.memory_space<vmem>>, vector<1x8x1xf32>
    %293 = vector.shape_cast %292 : vector<1x8x1xf32> to vector<8x1xf32>
    %c0_170 = arith.constant 0 : index
    %c384 = arith.constant 384 : index
    %294 = vector.load %arg17[%c0_170, %c384] : memref<8x1106xf32, #tpu.memory_space<vmem>>, vector<8x512xf32>
    %295 = vector.broadcast %293 : vector<8x1xf32> to vector<8x512xf32>
    %296 = arith.mulf %295, %294 : vector<8x512xf32>
    %297 = arith.addf %291, %296 : vector<8x512xf32>
    %c35_171 = arith.constant 35 : index
    %c0_172 = arith.constant 0 : index
    %c0_173 = arith.constant 0 : index
    %298 = vector.load %arg10[%c35_171, %c0_172, %c0_173] : memref<49x8x1xf32, #tpu.memory_space<vmem>>, vector<1x8x1xf32>
    %299 = vector.shape_cast %298 : vector<1x8x1xf32> to vector<8x1xf32>
    %c0_174 = arith.constant 0 : index
    %c480 = arith.constant 480 : index
    %300 = vector.load %arg17[%c0_174, %c480] : memref<8x1106xf32, #tpu.memory_space<vmem>>, vector<8x512xf32>
    %301 = vector.broadcast %299 : vector<8x1xf32> to vector<8x512xf32>
    %302 = arith.mulf %301, %300 : vector<8x512xf32>
    %303 = arith.addf %297, %302 : vector<8x512xf32>
    %c42 = arith.constant 42 : index
    %c0_175 = arith.constant 0 : index
    %c0_176 = arith.constant 0 : index
    %304 = vector.load %arg10[%c42, %c0_175, %c0_176] : memref<49x8x1xf32, #tpu.memory_space<vmem>>, vector<1x8x1xf32>
    %305 = vector.shape_cast %304 : vector<1x8x1xf32> to vector<8x1xf32>
    %c0_177 = arith.constant 0 : index
    %c576 = arith.constant 576 : index
    %306 = vector.load %arg17[%c0_177, %c576] : memref<8x1106xf32, #tpu.memory_space<vmem>>, vector<8x512xf32>
    %307 = vector.broadcast %305 : vector<8x1xf32> to vector<8x512xf32>
    %308 = arith.mulf %307, %306 : vector<8x512xf32>
    %309 = arith.addf %303, %308 : vector<8x512xf32>
    %c0_178 = arith.constant 0 : index
    %c0_179 = arith.constant 0 : index
    %c0_180 = arith.constant 0 : index
    %310 = vector.load %arg13[%c0_178, %c0_179, %c0_180] : memref<7x1x512xf32, #tpu.memory_space<vmem>>, vector<1x1x512xf32>
    %311 = vector.shape_cast %310 : vector<1x1x512xf32> to vector<1x512xf32>
    %312 = vector.broadcast %311 : vector<1x512xf32> to vector<8x512xf32>
    %313 = arith.mulf %312, %309 : vector<8x512xf32>
    %c1_181 = arith.constant 1 : index
    %c0_182 = arith.constant 0 : index
    %c0_183 = arith.constant 0 : index
    %314 = vector.load %arg10[%c1_181, %c0_182, %c0_183] : memref<49x8x1xf32, #tpu.memory_space<vmem>>, vector<1x8x1xf32>
    %315 = vector.shape_cast %314 : vector<1x8x1xf32> to vector<8x1xf32>
    %c0_184 = arith.constant 0 : index
    %c3_185 = arith.constant 3 : index
    %316 = vector.load %arg17[%c0_184, %c3_185] : memref<8x1106xf32, #tpu.memory_space<vmem>>, vector<8x512xf32>
    %317 = vector.broadcast %315 : vector<8x1xf32> to vector<8x512xf32>
    %318 = arith.mulf %317, %316 : vector<8x512xf32>
    %c8_186 = arith.constant 8 : index
    %c0_187 = arith.constant 0 : index
    %c0_188 = arith.constant 0 : index
    %319 = vector.load %arg10[%c8_186, %c0_187, %c0_188] : memref<49x8x1xf32, #tpu.memory_space<vmem>>, vector<1x8x1xf32>
    %320 = vector.shape_cast %319 : vector<1x8x1xf32> to vector<8x1xf32>
    %c0_189 = arith.constant 0 : index
    %c99_190 = arith.constant 99 : index
    %321 = vector.load %arg17[%c0_189, %c99_190] : memref<8x1106xf32, #tpu.memory_space<vmem>>, vector<8x512xf32>
    %322 = vector.broadcast %320 : vector<8x1xf32> to vector<8x512xf32>
    %323 = arith.mulf %322, %321 : vector<8x512xf32>
    %324 = arith.addf %318, %323 : vector<8x512xf32>
    %c15_191 = arith.constant 15 : index
    %c0_192 = arith.constant 0 : index
    %c0_193 = arith.constant 0 : index
    %325 = vector.load %arg10[%c15_191, %c0_192, %c0_193] : memref<49x8x1xf32, #tpu.memory_space<vmem>>, vector<1x8x1xf32>
    %326 = vector.shape_cast %325 : vector<1x8x1xf32> to vector<8x1xf32>
    %c0_194 = arith.constant 0 : index
    %c195 = arith.constant 195 : index
    %327 = vector.load %arg17[%c0_194, %c195] : memref<8x1106xf32, #tpu.memory_space<vmem>>, vector<8x512xf32>
    %328 = vector.broadcast %326 : vector<8x1xf32> to vector<8x512xf32>
    %329 = arith.mulf %328, %327 : vector<8x512xf32>
    %330 = arith.addf %324, %329 : vector<8x512xf32>
    %c22_195 = arith.constant 22 : index
    %c0_196 = arith.constant 0 : index
    %c0_197 = arith.constant 0 : index
    %331 = vector.load %arg10[%c22_195, %c0_196, %c0_197] : memref<49x8x1xf32, #tpu.memory_space<vmem>>, vector<1x8x1xf32>
    %332 = vector.shape_cast %331 : vector<1x8x1xf32> to vector<8x1xf32>
    %c0_198 = arith.constant 0 : index
    %c291 = arith.constant 291 : index
    %333 = vector.load %arg17[%c0_198, %c291] : memref<8x1106xf32, #tpu.memory_space<vmem>>, vector<8x512xf32>
    %334 = vector.broadcast %332 : vector<8x1xf32> to vector<8x512xf32>
    %335 = arith.mulf %334, %333 : vector<8x512xf32>
    %336 = arith.addf %330, %335 : vector<8x512xf32>
    %c29 = arith.constant 29 : index
    %c0_199 = arith.constant 0 : index
    %c0_200 = arith.constant 0 : index
    %337 = vector.load %arg10[%c29, %c0_199, %c0_200] : memref<49x8x1xf32, #tpu.memory_space<vmem>>, vector<1x8x1xf32>
    %338 = vector.shape_cast %337 : vector<1x8x1xf32> to vector<8x1xf32>
    %c0_201 = arith.constant 0 : index
    %c387 = arith.constant 387 : index
    %339 = vector.load %arg17[%c0_201, %c387] : memref<8x1106xf32, #tpu.memory_space<vmem>>, vector<8x512xf32>
    %340 = vector.broadcast %338 : vector<8x1xf32> to vector<8x512xf32>
    %341 = arith.mulf %340, %339 : vector<8x512xf32>
    %342 = arith.addf %336, %341 : vector<8x512xf32>
    %c36_202 = arith.constant 36 : index
    %c0_203 = arith.constant 0 : index
    %c0_204 = arith.constant 0 : index
    %343 = vector.load %arg10[%c36_202, %c0_203, %c0_204] : memref<49x8x1xf32, #tpu.memory_space<vmem>>, vector<1x8x1xf32>
    %344 = vector.shape_cast %343 : vector<1x8x1xf32> to vector<8x1xf32>
    %c0_205 = arith.constant 0 : index
    %c483 = arith.constant 483 : index
    %345 = vector.load %arg17[%c0_205, %c483] : memref<8x1106xf32, #tpu.memory_space<vmem>>, vector<8x512xf32>
    %346 = vector.broadcast %344 : vector<8x1xf32> to vector<8x512xf32>
    %347 = arith.mulf %346, %345 : vector<8x512xf32>
    %348 = arith.addf %342, %347 : vector<8x512xf32>
    %c43 = arith.constant 43 : index
    %c0_206 = arith.constant 0 : index
    %c0_207 = arith.constant 0 : index
    %349 = vector.load %arg10[%c43, %c0_206, %c0_207] : memref<49x8x1xf32, #tpu.memory_space<vmem>>, vector<1x8x1xf32>
    %350 = vector.shape_cast %349 : vector<1x8x1xf32> to vector<8x1xf32>
    %c0_208 = arith.constant 0 : index
    %c579 = arith.constant 579 : index
    %351 = vector.load %arg17[%c0_208, %c579] : memref<8x1106xf32, #tpu.memory_space<vmem>>, vector<8x512xf32>
    %352 = vector.broadcast %350 : vector<8x1xf32> to vector<8x512xf32>
    %353 = arith.mulf %352, %351 : vector<8x512xf32>
    %354 = arith.addf %348, %353 : vector<8x512xf32>
    %c1_209 = arith.constant 1 : index
    %c0_210 = arith.constant 0 : index
    %c0_211 = arith.constant 0 : index
    %355 = vector.load %arg13[%c1_209, %c0_210, %c0_211] : memref<7x1x512xf32, #tpu.memory_space<vmem>>, vector<1x1x512xf32>
    %356 = vector.shape_cast %355 : vector<1x1x512xf32> to vector<1x512xf32>
    %357 = vector.broadcast %356 : vector<1x512xf32> to vector<8x512xf32>
    %358 = arith.mulf %357, %354 : vector<8x512xf32>
    %359 = arith.addf %313, %358 : vector<8x512xf32>
    %c2_212 = arith.constant 2 : index
    %c0_213 = arith.constant 0 : index
    %c0_214 = arith.constant 0 : index
    %360 = vector.load %arg10[%c2_212, %c0_213, %c0_214] : memref<49x8x1xf32, #tpu.memory_space<vmem>>, vector<1x8x1xf32>
    %361 = vector.shape_cast %360 : vector<1x8x1xf32> to vector<8x1xf32>
    %c0_215 = arith.constant 0 : index
    %c6_216 = arith.constant 6 : index
    %362 = vector.load %arg17[%c0_215, %c6_216] : memref<8x1106xf32, #tpu.memory_space<vmem>>, vector<8x512xf32>
    %363 = vector.broadcast %361 : vector<8x1xf32> to vector<8x512xf32>
    %364 = arith.mulf %363, %362 : vector<8x512xf32>
    %c9_217 = arith.constant 9 : index
    %c0_218 = arith.constant 0 : index
    %c0_219 = arith.constant 0 : index
    %365 = vector.load %arg10[%c9_217, %c0_218, %c0_219] : memref<49x8x1xf32, #tpu.memory_space<vmem>>, vector<1x8x1xf32>
    %366 = vector.shape_cast %365 : vector<1x8x1xf32> to vector<8x1xf32>
    %c0_220 = arith.constant 0 : index
    %c102 = arith.constant 102 : index
    %367 = vector.load %arg17[%c0_220, %c102] : memref<8x1106xf32, #tpu.memory_space<vmem>>, vector<8x512xf32>
    %368 = vector.broadcast %366 : vector<8x1xf32> to vector<8x512xf32>
    %369 = arith.mulf %368, %367 : vector<8x512xf32>
    %370 = arith.addf %364, %369 : vector<8x512xf32>
    %c16_221 = arith.constant 16 : index
    %c0_222 = arith.constant 0 : index
    %c0_223 = arith.constant 0 : index
    %371 = vector.load %arg10[%c16_221, %c0_222, %c0_223] : memref<49x8x1xf32, #tpu.memory_space<vmem>>, vector<1x8x1xf32>
    %372 = vector.shape_cast %371 : vector<1x8x1xf32> to vector<8x1xf32>
    %c0_224 = arith.constant 0 : index
    %c198 = arith.constant 198 : index
    %373 = vector.load %arg17[%c0_224, %c198] : memref<8x1106xf32, #tpu.memory_space<vmem>>, vector<8x512xf32>
    %374 = vector.broadcast %372 : vector<8x1xf32> to vector<8x512xf32>
    %375 = arith.mulf %374, %373 : vector<8x512xf32>
    %376 = arith.addf %370, %375 : vector<8x512xf32>
    %c23_225 = arith.constant 23 : index
    %c0_226 = arith.constant 0 : index
    %c0_227 = arith.constant 0 : index
    %377 = vector.load %arg10[%c23_225, %c0_226, %c0_227] : memref<49x8x1xf32, #tpu.memory_space<vmem>>, vector<1x8x1xf32>
    %378 = vector.shape_cast %377 : vector<1x8x1xf32> to vector<8x1xf32>
    %c0_228 = arith.constant 0 : index
    %c294 = arith.constant 294 : index
    %379 = vector.load %arg17[%c0_228, %c294] : memref<8x1106xf32, #tpu.memory_space<vmem>>, vector<8x512xf32>
    %380 = vector.broadcast %378 : vector<8x1xf32> to vector<8x512xf32>
    %381 = arith.mulf %380, %379 : vector<8x512xf32>
    %382 = arith.addf %376, %381 : vector<8x512xf32>
    %c30 = arith.constant 30 : index
    %c0_229 = arith.constant 0 : index
    %c0_230 = arith.constant 0 : index
    %383 = vector.load %arg10[%c30, %c0_229, %c0_230] : memref<49x8x1xf32, #tpu.memory_space<vmem>>, vector<1x8x1xf32>
    %384 = vector.shape_cast %383 : vector<1x8x1xf32> to vector<8x1xf32>
    %c0_231 = arith.constant 0 : index
    %c390 = arith.constant 390 : index
    %385 = vector.load %arg17[%c0_231, %c390] : memref<8x1106xf32, #tpu.memory_space<vmem>>, vector<8x512xf32>
    %386 = vector.broadcast %384 : vector<8x1xf32> to vector<8x512xf32>
    %387 = arith.mulf %386, %385 : vector<8x512xf32>
    %388 = arith.addf %382, %387 : vector<8x512xf32>
    %c37 = arith.constant 37 : index
    %c0_232 = arith.constant 0 : index
    %c0_233 = arith.constant 0 : index
    %389 = vector.load %arg10[%c37, %c0_232, %c0_233] : memref<49x8x1xf32, #tpu.memory_space<vmem>>, vector<1x8x1xf32>
    %390 = vector.shape_cast %389 : vector<1x8x1xf32> to vector<8x1xf32>
    %c0_234 = arith.constant 0 : index
    %c486 = arith.constant 486 : index
    %391 = vector.load %arg17[%c0_234, %c486] : memref<8x1106xf32, #tpu.memory_space<vmem>>, vector<8x512xf32>
    %392 = vector.broadcast %390 : vector<8x1xf32> to vector<8x512xf32>
    %393 = arith.mulf %392, %391 : vector<8x512xf32>
    %394 = arith.addf %388, %393 : vector<8x512xf32>
    %c44 = arith.constant 44 : index
    %c0_235 = arith.constant 0 : index
    %c0_236 = arith.constant 0 : index
    %395 = vector.load %arg10[%c44, %c0_235, %c0_236] : memref<49x8x1xf32, #tpu.memory_space<vmem>>, vector<1x8x1xf32>
    %396 = vector.shape_cast %395 : vector<1x8x1xf32> to vector<8x1xf32>
    %c0_237 = arith.constant 0 : index
    %c582 = arith.constant 582 : index
    %397 = vector.load %arg17[%c0_237, %c582] : memref<8x1106xf32, #tpu.memory_space<vmem>>, vector<8x512xf32>
    %398 = vector.broadcast %396 : vector<8x1xf32> to vector<8x512xf32>
    %399 = arith.mulf %398, %397 : vector<8x512xf32>
    %400 = arith.addf %394, %399 : vector<8x512xf32>
    %c2_238 = arith.constant 2 : index
    %c0_239 = arith.constant 0 : index
    %c0_240 = arith.constant 0 : index
    %401 = vector.load %arg13[%c2_238, %c0_239, %c0_240] : memref<7x1x512xf32, #tpu.memory_space<vmem>>, vector<1x1x512xf32>
    %402 = vector.shape_cast %401 : vector<1x1x512xf32> to vector<1x512xf32>
    %403 = vector.broadcast %402 : vector<1x512xf32> to vector<8x512xf32>
    %404 = arith.mulf %403, %400 : vector<8x512xf32>
    %405 = arith.addf %359, %404 : vector<8x512xf32>
    %c3_241 = arith.constant 3 : index
    %c0_242 = arith.constant 0 : index
    %c0_243 = arith.constant 0 : index
    %406 = vector.load %arg10[%c3_241, %c0_242, %c0_243] : memref<49x8x1xf32, #tpu.memory_space<vmem>>, vector<1x8x1xf32>
    %407 = vector.shape_cast %406 : vector<1x8x1xf32> to vector<8x1xf32>
    %c0_244 = arith.constant 0 : index
    %c9_245 = arith.constant 9 : index
    %408 = vector.load %arg17[%c0_244, %c9_245] : memref<8x1106xf32, #tpu.memory_space<vmem>>, vector<8x512xf32>
    %409 = vector.broadcast %407 : vector<8x1xf32> to vector<8x512xf32>
    %410 = arith.mulf %409, %408 : vector<8x512xf32>
    %c10_246 = arith.constant 10 : index
    %c0_247 = arith.constant 0 : index
    %c0_248 = arith.constant 0 : index
    %411 = vector.load %arg10[%c10_246, %c0_247, %c0_248] : memref<49x8x1xf32, #tpu.memory_space<vmem>>, vector<1x8x1xf32>
    %412 = vector.shape_cast %411 : vector<1x8x1xf32> to vector<8x1xf32>
    %c0_249 = arith.constant 0 : index
    %c105 = arith.constant 105 : index
    %413 = vector.load %arg17[%c0_249, %c105] : memref<8x1106xf32, #tpu.memory_space<vmem>>, vector<8x512xf32>
    %414 = vector.broadcast %412 : vector<8x1xf32> to vector<8x512xf32>
    %415 = arith.mulf %414, %413 : vector<8x512xf32>
    %416 = arith.addf %410, %415 : vector<8x512xf32>
    %c17_250 = arith.constant 17 : index
    %c0_251 = arith.constant 0 : index
    %c0_252 = arith.constant 0 : index
    %417 = vector.load %arg10[%c17_250, %c0_251, %c0_252] : memref<49x8x1xf32, #tpu.memory_space<vmem>>, vector<1x8x1xf32>
    %418 = vector.shape_cast %417 : vector<1x8x1xf32> to vector<8x1xf32>
    %c0_253 = arith.constant 0 : index
    %c201 = arith.constant 201 : index
    %419 = vector.load %arg17[%c0_253, %c201] : memref<8x1106xf32, #tpu.memory_space<vmem>>, vector<8x512xf32>
    %420 = vector.broadcast %418 : vector<8x1xf32> to vector<8x512xf32>
    %421 = arith.mulf %420, %419 : vector<8x512xf32>
    %422 = arith.addf %416, %421 : vector<8x512xf32>
    %c24_254 = arith.constant 24 : index
    %c0_255 = arith.constant 0 : index
    %c0_256 = arith.constant 0 : index
    %423 = vector.load %arg10[%c24_254, %c0_255, %c0_256] : memref<49x8x1xf32, #tpu.memory_space<vmem>>, vector<1x8x1xf32>
    %424 = vector.shape_cast %423 : vector<1x8x1xf32> to vector<8x1xf32>
    %c0_257 = arith.constant 0 : index
    %c297_258 = arith.constant 297 : index
    %425 = vector.load %arg17[%c0_257, %c297_258] : memref<8x1106xf32, #tpu.memory_space<vmem>>, vector<8x512xf32>
    %426 = vector.broadcast %424 : vector<8x1xf32> to vector<8x512xf32>
    %427 = arith.mulf %426, %425 : vector<8x512xf32>
    %428 = arith.addf %422, %427 : vector<8x512xf32>
    %c31 = arith.constant 31 : index
    %c0_259 = arith.constant 0 : index
    %c0_260 = arith.constant 0 : index
    %429 = vector.load %arg10[%c31, %c0_259, %c0_260] : memref<49x8x1xf32, #tpu.memory_space<vmem>>, vector<1x8x1xf32>
    %430 = vector.shape_cast %429 : vector<1x8x1xf32> to vector<8x1xf32>
    %c0_261 = arith.constant 0 : index
    %c393 = arith.constant 393 : index
    %431 = vector.load %arg17[%c0_261, %c393] : memref<8x1106xf32, #tpu.memory_space<vmem>>, vector<8x512xf32>
    %432 = vector.broadcast %430 : vector<8x1xf32> to vector<8x512xf32>
    %433 = arith.mulf %432, %431 : vector<8x512xf32>
    %434 = arith.addf %428, %433 : vector<8x512xf32>
    %c38 = arith.constant 38 : index
    %c0_262 = arith.constant 0 : index
    %c0_263 = arith.constant 0 : index
    %435 = vector.load %arg10[%c38, %c0_262, %c0_263] : memref<49x8x1xf32, #tpu.memory_space<vmem>>, vector<1x8x1xf32>
    %436 = vector.shape_cast %435 : vector<1x8x1xf32> to vector<8x1xf32>
    %c0_264 = arith.constant 0 : index
    %c489 = arith.constant 489 : index
    %437 = vector.load %arg17[%c0_264, %c489] : memref<8x1106xf32, #tpu.memory_space<vmem>>, vector<8x512xf32>
    %438 = vector.broadcast %436 : vector<8x1xf32> to vector<8x512xf32>
    %439 = arith.mulf %438, %437 : vector<8x512xf32>
    %440 = arith.addf %434, %439 : vector<8x512xf32>
    %c45 = arith.constant 45 : index
    %c0_265 = arith.constant 0 : index
    %c0_266 = arith.constant 0 : index
    %441 = vector.load %arg10[%c45, %c0_265, %c0_266] : memref<49x8x1xf32, #tpu.memory_space<vmem>>, vector<1x8x1xf32>
    %442 = vector.shape_cast %441 : vector<1x8x1xf32> to vector<8x1xf32>
    %c0_267 = arith.constant 0 : index
    %c585 = arith.constant 585 : index
    %443 = vector.load %arg17[%c0_267, %c585] : memref<8x1106xf32, #tpu.memory_space<vmem>>, vector<8x512xf32>
    %444 = vector.broadcast %442 : vector<8x1xf32> to vector<8x512xf32>
    %445 = arith.mulf %444, %443 : vector<8x512xf32>
    %446 = arith.addf %440, %445 : vector<8x512xf32>
    %c3_268 = arith.constant 3 : index
    %c0_269 = arith.constant 0 : index
    %c0_270 = arith.constant 0 : index
    %447 = vector.load %arg13[%c3_268, %c0_269, %c0_270] : memref<7x1x512xf32, #tpu.memory_space<vmem>>, vector<1x1x512xf32>
    %448 = vector.shape_cast %447 : vector<1x1x512xf32> to vector<1x512xf32>
    %449 = vector.broadcast %448 : vector<1x512xf32> to vector<8x512xf32>
    %450 = arith.mulf %449, %446 : vector<8x512xf32>
    %451 = arith.addf %405, %450 : vector<8x512xf32>
    %c4_271 = arith.constant 4 : index
    %c0_272 = arith.constant 0 : index
    %c0_273 = arith.constant 0 : index
    %452 = vector.load %arg10[%c4_271, %c0_272, %c0_273] : memref<49x8x1xf32, #tpu.memory_space<vmem>>, vector<1x8x1xf32>
    %453 = vector.shape_cast %452 : vector<1x8x1xf32> to vector<8x1xf32>
    %c0_274 = arith.constant 0 : index
    %c12_275 = arith.constant 12 : index
    %454 = vector.load %arg17[%c0_274, %c12_275] : memref<8x1106xf32, #tpu.memory_space<vmem>>, vector<8x512xf32>
    %455 = vector.broadcast %453 : vector<8x1xf32> to vector<8x512xf32>
    %456 = arith.mulf %455, %454 : vector<8x512xf32>
    %c11_276 = arith.constant 11 : index
    %c0_277 = arith.constant 0 : index
    %c0_278 = arith.constant 0 : index
    %457 = vector.load %arg10[%c11_276, %c0_277, %c0_278] : memref<49x8x1xf32, #tpu.memory_space<vmem>>, vector<1x8x1xf32>
    %458 = vector.shape_cast %457 : vector<1x8x1xf32> to vector<8x1xf32>
    %c0_279 = arith.constant 0 : index
    %c108 = arith.constant 108 : index
    %459 = vector.load %arg17[%c0_279, %c108] : memref<8x1106xf32, #tpu.memory_space<vmem>>, vector<8x512xf32>
    %460 = vector.broadcast %458 : vector<8x1xf32> to vector<8x512xf32>
    %461 = arith.mulf %460, %459 : vector<8x512xf32>
    %462 = arith.addf %456, %461 : vector<8x512xf32>
    %c18_280 = arith.constant 18 : index
    %c0_281 = arith.constant 0 : index
    %c0_282 = arith.constant 0 : index
    %463 = vector.load %arg10[%c18_280, %c0_281, %c0_282] : memref<49x8x1xf32, #tpu.memory_space<vmem>>, vector<1x8x1xf32>
    %464 = vector.shape_cast %463 : vector<1x8x1xf32> to vector<8x1xf32>
    %c0_283 = arith.constant 0 : index
    %c204 = arith.constant 204 : index
    %465 = vector.load %arg17[%c0_283, %c204] : memref<8x1106xf32, #tpu.memory_space<vmem>>, vector<8x512xf32>
    %466 = vector.broadcast %464 : vector<8x1xf32> to vector<8x512xf32>
    %467 = arith.mulf %466, %465 : vector<8x512xf32>
    %468 = arith.addf %462, %467 : vector<8x512xf32>
    %c25 = arith.constant 25 : index
    %c0_284 = arith.constant 0 : index
    %c0_285 = arith.constant 0 : index
    %469 = vector.load %arg10[%c25, %c0_284, %c0_285] : memref<49x8x1xf32, #tpu.memory_space<vmem>>, vector<1x8x1xf32>
    %470 = vector.shape_cast %469 : vector<1x8x1xf32> to vector<8x1xf32>
    %c0_286 = arith.constant 0 : index
    %c300 = arith.constant 300 : index
    %471 = vector.load %arg17[%c0_286, %c300] : memref<8x1106xf32, #tpu.memory_space<vmem>>, vector<8x512xf32>
    %472 = vector.broadcast %470 : vector<8x1xf32> to vector<8x512xf32>
    %473 = arith.mulf %472, %471 : vector<8x512xf32>
    %474 = arith.addf %468, %473 : vector<8x512xf32>
    %c32_287 = arith.constant 32 : index
    %c0_288 = arith.constant 0 : index
    %c0_289 = arith.constant 0 : index
    %475 = vector.load %arg10[%c32_287, %c0_288, %c0_289] : memref<49x8x1xf32, #tpu.memory_space<vmem>>, vector<1x8x1xf32>
    %476 = vector.shape_cast %475 : vector<1x8x1xf32> to vector<8x1xf32>
    %c0_290 = arith.constant 0 : index
    %c396 = arith.constant 396 : index
    %477 = vector.load %arg17[%c0_290, %c396] : memref<8x1106xf32, #tpu.memory_space<vmem>>, vector<8x512xf32>
    %478 = vector.broadcast %476 : vector<8x1xf32> to vector<8x512xf32>
    %479 = arith.mulf %478, %477 : vector<8x512xf32>
    %480 = arith.addf %474, %479 : vector<8x512xf32>
    %c39 = arith.constant 39 : index
    %c0_291 = arith.constant 0 : index
    %c0_292 = arith.constant 0 : index
    %481 = vector.load %arg10[%c39, %c0_291, %c0_292] : memref<49x8x1xf32, #tpu.memory_space<vmem>>, vector<1x8x1xf32>
    %482 = vector.shape_cast %481 : vector<1x8x1xf32> to vector<8x1xf32>
    %c0_293 = arith.constant 0 : index
    %c492 = arith.constant 492 : index
    %483 = vector.load %arg17[%c0_293, %c492] : memref<8x1106xf32, #tpu.memory_space<vmem>>, vector<8x512xf32>
    %484 = vector.broadcast %482 : vector<8x1xf32> to vector<8x512xf32>
    %485 = arith.mulf %484, %483 : vector<8x512xf32>
    %486 = arith.addf %480, %485 : vector<8x512xf32>
    %c46 = arith.constant 46 : index
    %c0_294 = arith.constant 0 : index
    %c0_295 = arith.constant 0 : index
    %487 = vector.load %arg10[%c46, %c0_294, %c0_295] : memref<49x8x1xf32, #tpu.memory_space<vmem>>, vector<1x8x1xf32>
    %488 = vector.shape_cast %487 : vector<1x8x1xf32> to vector<8x1xf32>
    %c0_296 = arith.constant 0 : index
    %c588 = arith.constant 588 : index
    %489 = vector.load %arg17[%c0_296, %c588] : memref<8x1106xf32, #tpu.memory_space<vmem>>, vector<8x512xf32>
    %490 = vector.broadcast %488 : vector<8x1xf32> to vector<8x512xf32>
    %491 = arith.mulf %490, %489 : vector<8x512xf32>
    %492 = arith.addf %486, %491 : vector<8x512xf32>
    %c4_297 = arith.constant 4 : index
    %c0_298 = arith.constant 0 : index
    %c0_299 = arith.constant 0 : index
    %493 = vector.load %arg13[%c4_297, %c0_298, %c0_299] : memref<7x1x512xf32, #tpu.memory_space<vmem>>, vector<1x1x512xf32>
    %494 = vector.shape_cast %493 : vector<1x1x512xf32> to vector<1x512xf32>
    %495 = vector.broadcast %494 : vector<1x512xf32> to vector<8x512xf32>
    %496 = arith.mulf %495, %492 : vector<8x512xf32>
    %497 = arith.addf %451, %496 : vector<8x512xf32>
    %c5_300 = arith.constant 5 : index
    %c0_301 = arith.constant 0 : index
    %c0_302 = arith.constant 0 : index
    %498 = vector.load %arg10[%c5_300, %c0_301, %c0_302] : memref<49x8x1xf32, #tpu.memory_space<vmem>>, vector<1x8x1xf32>
    %499 = vector.shape_cast %498 : vector<1x8x1xf32> to vector<8x1xf32>
    %c0_303 = arith.constant 0 : index
    %c15_304 = arith.constant 15 : index
    %500 = vector.load %arg17[%c0_303, %c15_304] : memref<8x1106xf32, #tpu.memory_space<vmem>>, vector<8x512xf32>
    %501 = vector.broadcast %499 : vector<8x1xf32> to vector<8x512xf32>
    %502 = arith.mulf %501, %500 : vector<8x512xf32>
    %c12_305 = arith.constant 12 : index
    %c0_306 = arith.constant 0 : index
    %c0_307 = arith.constant 0 : index
    %503 = vector.load %arg10[%c12_305, %c0_306, %c0_307] : memref<49x8x1xf32, #tpu.memory_space<vmem>>, vector<1x8x1xf32>
    %504 = vector.shape_cast %503 : vector<1x8x1xf32> to vector<8x1xf32>
    %c0_308 = arith.constant 0 : index
    %c111 = arith.constant 111 : index
    %505 = vector.load %arg17[%c0_308, %c111] : memref<8x1106xf32, #tpu.memory_space<vmem>>, vector<8x512xf32>
    %506 = vector.broadcast %504 : vector<8x1xf32> to vector<8x512xf32>
    %507 = arith.mulf %506, %505 : vector<8x512xf32>
    %508 = arith.addf %502, %507 : vector<8x512xf32>
    %c19_309 = arith.constant 19 : index
    %c0_310 = arith.constant 0 : index
    %c0_311 = arith.constant 0 : index
    %509 = vector.load %arg10[%c19_309, %c0_310, %c0_311] : memref<49x8x1xf32, #tpu.memory_space<vmem>>, vector<1x8x1xf32>
    %510 = vector.shape_cast %509 : vector<1x8x1xf32> to vector<8x1xf32>
    %c0_312 = arith.constant 0 : index
    %c207 = arith.constant 207 : index
    %511 = vector.load %arg17[%c0_312, %c207] : memref<8x1106xf32, #tpu.memory_space<vmem>>, vector<8x512xf32>
    %512 = vector.broadcast %510 : vector<8x1xf32> to vector<8x512xf32>
    %513 = arith.mulf %512, %511 : vector<8x512xf32>
    %514 = arith.addf %508, %513 : vector<8x512xf32>
    %c26 = arith.constant 26 : index
    %c0_313 = arith.constant 0 : index
    %c0_314 = arith.constant 0 : index
    %515 = vector.load %arg10[%c26, %c0_313, %c0_314] : memref<49x8x1xf32, #tpu.memory_space<vmem>>, vector<1x8x1xf32>
    %516 = vector.shape_cast %515 : vector<1x8x1xf32> to vector<8x1xf32>
    %c0_315 = arith.constant 0 : index
    %c303 = arith.constant 303 : index
    %517 = vector.load %arg17[%c0_315, %c303] : memref<8x1106xf32, #tpu.memory_space<vmem>>, vector<8x512xf32>
    %518 = vector.broadcast %516 : vector<8x1xf32> to vector<8x512xf32>
    %519 = arith.mulf %518, %517 : vector<8x512xf32>
    %520 = arith.addf %514, %519 : vector<8x512xf32>
    %c33_316 = arith.constant 33 : index
    %c0_317 = arith.constant 0 : index
    %c0_318 = arith.constant 0 : index
    %521 = vector.load %arg10[%c33_316, %c0_317, %c0_318] : memref<49x8x1xf32, #tpu.memory_space<vmem>>, vector<1x8x1xf32>
    %522 = vector.shape_cast %521 : vector<1x8x1xf32> to vector<8x1xf32>
    %c0_319 = arith.constant 0 : index
    %c399 = arith.constant 399 : index
    %523 = vector.load %arg17[%c0_319, %c399] : memref<8x1106xf32, #tpu.memory_space<vmem>>, vector<8x512xf32>
    %524 = vector.broadcast %522 : vector<8x1xf32> to vector<8x512xf32>
    %525 = arith.mulf %524, %523 : vector<8x512xf32>
    %526 = arith.addf %520, %525 : vector<8x512xf32>
    %c40 = arith.constant 40 : index
    %c0_320 = arith.constant 0 : index
    %c0_321 = arith.constant 0 : index
    %527 = vector.load %arg10[%c40, %c0_320, %c0_321] : memref<49x8x1xf32, #tpu.memory_space<vmem>>, vector<1x8x1xf32>
    %528 = vector.shape_cast %527 : vector<1x8x1xf32> to vector<8x1xf32>
    %c0_322 = arith.constant 0 : index
    %c495 = arith.constant 495 : index
    %529 = vector.load %arg17[%c0_322, %c495] : memref<8x1106xf32, #tpu.memory_space<vmem>>, vector<8x512xf32>
    %530 = vector.broadcast %528 : vector<8x1xf32> to vector<8x512xf32>
    %531 = arith.mulf %530, %529 : vector<8x512xf32>
    %532 = arith.addf %526, %531 : vector<8x512xf32>
    %c47 = arith.constant 47 : index
    %c0_323 = arith.constant 0 : index
    %c0_324 = arith.constant 0 : index
    %533 = vector.load %arg10[%c47, %c0_323, %c0_324] : memref<49x8x1xf32, #tpu.memory_space<vmem>>, vector<1x8x1xf32>
    %534 = vector.shape_cast %533 : vector<1x8x1xf32> to vector<8x1xf32>
    %c0_325 = arith.constant 0 : index
    %c591 = arith.constant 591 : index
    %535 = vector.load %arg17[%c0_325, %c591] : memref<8x1106xf32, #tpu.memory_space<vmem>>, vector<8x512xf32>
    %536 = vector.broadcast %534 : vector<8x1xf32> to vector<8x512xf32>
    %537 = arith.mulf %536, %535 : vector<8x512xf32>
    %538 = arith.addf %532, %537 : vector<8x512xf32>
    %c5_326 = arith.constant 5 : index
    %c0_327 = arith.constant 0 : index
    %c0_328 = arith.constant 0 : index
    %539 = vector.load %arg13[%c5_326, %c0_327, %c0_328] : memref<7x1x512xf32, #tpu.memory_space<vmem>>, vector<1x1x512xf32>
    %540 = vector.shape_cast %539 : vector<1x1x512xf32> to vector<1x512xf32>
    %541 = vector.broadcast %540 : vector<1x512xf32> to vector<8x512xf32>
    %542 = arith.mulf %541, %538 : vector<8x512xf32>
    %543 = arith.addf %497, %542 : vector<8x512xf32>
    %c6_329 = arith.constant 6 : index
    %c0_330 = arith.constant 0 : index
    %c0_331 = arith.constant 0 : index
    %544 = vector.load %arg10[%c6_329, %c0_330, %c0_331] : memref<49x8x1xf32, #tpu.memory_space<vmem>>, vector<1x8x1xf32>
    %545 = vector.shape_cast %544 : vector<1x8x1xf32> to vector<8x1xf32>
    %c0_332 = arith.constant 0 : index
    %c18_333 = arith.constant 18 : index
    %546 = vector.load %arg17[%c0_332, %c18_333] : memref<8x1106xf32, #tpu.memory_space<vmem>>, vector<8x512xf32>
    %547 = vector.broadcast %545 : vector<8x1xf32> to vector<8x512xf32>
    %548 = arith.mulf %547, %546 : vector<8x512xf32>
    %c13_334 = arith.constant 13 : index
    %c0_335 = arith.constant 0 : index
    %c0_336 = arith.constant 0 : index
    %549 = vector.load %arg10[%c13_334, %c0_335, %c0_336] : memref<49x8x1xf32, #tpu.memory_space<vmem>>, vector<1x8x1xf32>
    %550 = vector.shape_cast %549 : vector<1x8x1xf32> to vector<8x1xf32>
    %c0_337 = arith.constant 0 : index
    %c114 = arith.constant 114 : index
    %551 = vector.load %arg17[%c0_337, %c114] : memref<8x1106xf32, #tpu.memory_space<vmem>>, vector<8x512xf32>
    %552 = vector.broadcast %550 : vector<8x1xf32> to vector<8x512xf32>
    %553 = arith.mulf %552, %551 : vector<8x512xf32>
    %554 = arith.addf %548, %553 : vector<8x512xf32>
    %c20_338 = arith.constant 20 : index
    %c0_339 = arith.constant 0 : index
    %c0_340 = arith.constant 0 : index
    %555 = vector.load %arg10[%c20_338, %c0_339, %c0_340] : memref<49x8x1xf32, #tpu.memory_space<vmem>>, vector<1x8x1xf32>
    %556 = vector.shape_cast %555 : vector<1x8x1xf32> to vector<8x1xf32>
    %c0_341 = arith.constant 0 : index
    %c210 = arith.constant 210 : index
    %557 = vector.load %arg17[%c0_341, %c210] : memref<8x1106xf32, #tpu.memory_space<vmem>>, vector<8x512xf32>
    %558 = vector.broadcast %556 : vector<8x1xf32> to vector<8x512xf32>
    %559 = arith.mulf %558, %557 : vector<8x512xf32>
    %560 = arith.addf %554, %559 : vector<8x512xf32>
    %c27 = arith.constant 27 : index
    %c0_342 = arith.constant 0 : index
    %c0_343 = arith.constant 0 : index
    %561 = vector.load %arg10[%c27, %c0_342, %c0_343] : memref<49x8x1xf32, #tpu.memory_space<vmem>>, vector<1x8x1xf32>
    %562 = vector.shape_cast %561 : vector<1x8x1xf32> to vector<8x1xf32>
    %c0_344 = arith.constant 0 : index
    %c306 = arith.constant 306 : index
    %563 = vector.load %arg17[%c0_344, %c306] : memref<8x1106xf32, #tpu.memory_space<vmem>>, vector<8x512xf32>
    %564 = vector.broadcast %562 : vector<8x1xf32> to vector<8x512xf32>
    %565 = arith.mulf %564, %563 : vector<8x512xf32>
    %566 = arith.addf %560, %565 : vector<8x512xf32>
    %c34_345 = arith.constant 34 : index
    %c0_346 = arith.constant 0 : index
    %c0_347 = arith.constant 0 : index
    %567 = vector.load %arg10[%c34_345, %c0_346, %c0_347] : memref<49x8x1xf32, #tpu.memory_space<vmem>>, vector<1x8x1xf32>
    %568 = vector.shape_cast %567 : vector<1x8x1xf32> to vector<8x1xf32>
    %c0_348 = arith.constant 0 : index
    %c402 = arith.constant 402 : index
    %569 = vector.load %arg17[%c0_348, %c402] : memref<8x1106xf32, #tpu.memory_space<vmem>>, vector<8x512xf32>
    %570 = vector.broadcast %568 : vector<8x1xf32> to vector<8x512xf32>
    %571 = arith.mulf %570, %569 : vector<8x512xf32>
    %572 = arith.addf %566, %571 : vector<8x512xf32>
    %c41 = arith.constant 41 : index
    %c0_349 = arith.constant 0 : index
    %c0_350 = arith.constant 0 : index
    %573 = vector.load %arg10[%c41, %c0_349, %c0_350] : memref<49x8x1xf32, #tpu.memory_space<vmem>>, vector<1x8x1xf32>
    %574 = vector.shape_cast %573 : vector<1x8x1xf32> to vector<8x1xf32>
    %c0_351 = arith.constant 0 : index
    %c498 = arith.constant 498 : index
    %575 = vector.load %arg17[%c0_351, %c498] : memref<8x1106xf32, #tpu.memory_space<vmem>>, vector<8x512xf32>
    %576 = vector.broadcast %574 : vector<8x1xf32> to vector<8x512xf32>
    %577 = arith.mulf %576, %575 : vector<8x512xf32>
    %578 = arith.addf %572, %577 : vector<8x512xf32>
    %c48 = arith.constant 48 : index
    %c0_352 = arith.constant 0 : index
    %c0_353 = arith.constant 0 : index
    %579 = vector.load %arg10[%c48, %c0_352, %c0_353] : memref<49x8x1xf32, #tpu.memory_space<vmem>>, vector<1x8x1xf32>
    %580 = vector.shape_cast %579 : vector<1x8x1xf32> to vector<8x1xf32>
    %c0_354 = arith.constant 0 : index
    %c594 = arith.constant 594 : index
    %581 = vector.load %arg17[%c0_354, %c594] : memref<8x1106xf32, #tpu.memory_space<vmem>>, vector<8x512xf32>
    %582 = vector.broadcast %580 : vector<8x1xf32> to vector<8x512xf32>
    %583 = arith.mulf %582, %581 : vector<8x512xf32>
    %584 = arith.addf %578, %583 : vector<8x512xf32>
    %c6_355 = arith.constant 6 : index
    %c0_356 = arith.constant 0 : index
    %c0_357 = arith.constant 0 : index
    %585 = vector.load %arg13[%c6_355, %c0_356, %c0_357] : memref<7x1x512xf32, #tpu.memory_space<vmem>>, vector<1x1x512xf32>
    %586 = vector.shape_cast %585 : vector<1x1x512xf32> to vector<1x512xf32>
    %587 = vector.broadcast %586 : vector<1x512xf32> to vector<8x512xf32>
    %588 = arith.mulf %587, %584 : vector<8x512xf32>
    %589 = arith.addf %543, %588 : vector<8x512xf32>
    %c6_358 = arith.constant 6 : index
    %c0_359 = arith.constant 0 : index
    %c0_360 = arith.constant 0 : index
    %590 = vector.load %arg2[%c6_358, %c0_359, %c0_360] : memref<16x8x1xf32, #tpu.memory_space<vmem>>, vector<1x8x1xf32>
    %591 = vector.shape_cast %590 : vector<1x8x1xf32> to vector<8x1xf32>
    %592 = vector.broadcast %591 : vector<8x1xf32> to vector<8x512xf32>
    %593 = arith.addf %589, %592 : vector<8x512xf32>
    %c1_361 = arith.constant 1 : index
    %c0_362 = arith.constant 0 : index
    %c0_363 = arith.constant 0 : index
    %594 = vector.load %arg4[%c1_361, %c0_362, %c0_363] : memref<3x8x8xbf16, #tpu.memory_space<vmem>>, vector<1x8x8xbf16>
    %595 = vector.shape_cast %594 : vector<1x8x8xbf16> to vector<8x8xbf16>
    %596 = arith.truncf %593 : vector<8x512xf32> to vector<8x512xbf16>
    %cst_364 = arith.constant dense<0.000000e+00> : vector<8x512xf32>
    %597 = tpu.matmul %595, %596, %cst_364 {dimension_numbers = #tpu.dot_dimension_numbers<[1], [0], [0], [1], [0, 0, 1, 1], [], []>} : vector<8x8xbf16>, vector<8x512xbf16>, vector<8x512xf32> -> vector<8x512xf32>
    %c7_365 = arith.constant 7 : index
    %c0_366 = arith.constant 0 : index
    %c0_367 = arith.constant 0 : index
    %598 = vector.load %arg2[%c7_365, %c0_366, %c0_367] : memref<16x8x1xf32, #tpu.memory_space<vmem>>, vector<1x8x1xf32>
    %599 = vector.shape_cast %598 : vector<1x8x1xf32> to vector<8x1xf32>
    %600 = vector.broadcast %599 : vector<8x1xf32> to vector<8x512xf32>
    %601 = arith.addf %597, %600 : vector<8x512xf32>
    %cst_368 = arith.constant dense<0.000000e+00> : vector<8xf32>
    %602 = vector.multi_reduction <add>, %87, %cst_368 [1] : vector<8x512xf32> to vector<8xf32>
    %603 = vector.shape_cast %602 : vector<8xf32> to vector<8x1xf32>
    %cst_369 = arith.constant 0.001953125 : f32
    %604 = vector.broadcast %cst_369 : f32 to vector<8x1xf32>
    %605 = arith.mulf %603, %604 : vector<8x1xf32>
    %c0_370 = arith.constant 0 : index
    %c0_371 = arith.constant 0 : index
    %606 = vector.load %arg5[%c0_370, %c0_371] : memref<8x2xf32, #tpu.memory_space<vmem>>, vector<8x2xf32>
    %607 = vector.broadcast %605 : vector<8x1xf32> to vector<8x2xf32>
    %608 = arith.mulf %606, %607 : vector<8x2xf32>
    %cst_372 = arith.constant dense<0.000000e+00> : vector<2xf32>
    %609 = vector.multi_reduction <add>, %608, %cst_372 [0] : vector<8x2xf32> to vector<2xf32>
    %610 = vector.shape_cast %609 : vector<2xf32> to vector<1x2xf32>
    %cst_373 = arith.constant 0.000000e+00 : f32
    %611 = vector.broadcast %cst_373 : f32 to vector<1x2xf32>
    %612 = arith.maximumf %610, %611 : vector<1x2xf32>
    %c0_374 = arith.constant 0 : index
    %c0_375 = arith.constant 0 : index
    %613 = vector.load %arg6[%c0_374, %c0_375] : memref<8x2xf32, #tpu.memory_space<vmem>>, vector<8x2xf32>
    %614 = vector.broadcast %612 : vector<1x2xf32> to vector<8x2xf32>
    %615 = arith.mulf %613, %614 : vector<8x2xf32>
    %cst_376 = arith.constant dense<0.000000e+00> : vector<8xf32>
    %616 = vector.multi_reduction <add>, %615, %cst_376 [1] : vector<8x2xf32> to vector<8xf32>
    %617 = vector.shape_cast %616 : vector<8xf32> to vector<8x1xf32>
    %cst_377 = arith.constant 0.000000e+00 : f32
    %618 = vector.broadcast %cst_377 : f32 to vector<8x1xf32>
    %619 = arith.subf %618, %617 : vector<8x1xf32>
    %620 = math.exp %619 : vector<8x1xf32>
    %cst_378 = arith.constant 1.000000e+00 : f32
    %621 = vector.broadcast %cst_378 : f32 to vector<8x1xf32>
    %622 = arith.addf %621, %620 : vector<8x1xf32>
    %cst_379 = arith.constant 1.000000e+00 : f32
    %623 = vector.broadcast %cst_379 : f32 to vector<8x1xf32>
    %624 = arith.divf %623, %622 : vector<8x1xf32>
    %625 = vector.broadcast %624 : vector<8x1xf32> to vector<8x512xf32>
    %626 = arith.mulf %625, %601 : vector<8x512xf32>
    %627 = arith.mulf %626, %87 : vector<8x512xf32>
    %c2_380 = arith.constant 2 : index
    %c0_381 = arith.constant 0 : index
    %c0_382 = arith.constant 0 : index
    %628 = vector.load %arg4[%c2_380, %c0_381, %c0_382] : memref<3x8x8xbf16, #tpu.memory_space<vmem>>, vector<1x8x8xbf16>
    %629 = vector.shape_cast %628 : vector<1x8x8xbf16> to vector<8x8xbf16>
    %630 = arith.truncf %627 : vector<8x512xf32> to vector<8x512xbf16>
    %cst_383 = arith.constant dense<0.000000e+00> : vector<8x512xf32>
    %631 = tpu.matmul %629, %630, %cst_383 {dimension_numbers = #tpu.dot_dimension_numbers<[1], [0], [0], [1], [0, 0, 1, 1], [], []>} : vector<8x8xbf16>, vector<8x512xbf16>, vector<8x512xf32> -> vector<8x512xf32>
    %c8_384 = arith.constant 8 : index
    %c0_385 = arith.constant 0 : index
    %c0_386 = arith.constant 0 : index
    %632 = vector.load %arg2[%c8_384, %c0_385, %c0_386] : memref<16x8x1xf32, #tpu.memory_space<vmem>>, vector<1x8x1xf32>
    %633 = vector.shape_cast %632 : vector<1x8x1xf32> to vector<8x1xf32>
    %634 = vector.broadcast %633 : vector<8x1xf32> to vector<8x512xf32>
    %635 = arith.addf %631, %634 : vector<8x512xf32>
    %636 = arith.addf %635, %39 : vector<8x512xf32>
    %c9_387 = arith.constant 9 : index
    %c0_388 = arith.constant 0 : index
    %c0_389 = arith.constant 0 : index
    %637 = vector.load %arg2[%c9_387, %c0_388, %c0_389] : memref<16x8x1xf32, #tpu.memory_space<vmem>>, vector<1x8x1xf32>
    %638 = vector.shape_cast %637 : vector<1x8x1xf32> to vector<8x1xf32>
    %639 = vector.broadcast %638 : vector<8x1xf32> to vector<8x512xf32>
    %640 = arith.mulf %639, %636 : vector<8x512xf32>
    %641 = arith.addf %31, %640 : vector<8x512xf32>
    %c11_390 = arith.constant 11 : index
    %c0_391 = arith.constant 0 : index
    %c0_392 = arith.constant 0 : index
    %642 = vector.load %arg2[%c11_390, %c0_391, %c0_392] : memref<16x8x1xf32, #tpu.memory_space<vmem>>, vector<1x8x1xf32>
    %643 = vector.shape_cast %642 : vector<1x8x1xf32> to vector<8x1xf32>
    %644 = vector.broadcast %643 : vector<8x1xf32> to vector<8x512xf32>
    %645 = arith.mulf %641, %644 : vector<8x512xf32>
    %c12_393 = arith.constant 12 : index
    %c0_394 = arith.constant 0 : index
    %c0_395 = arith.constant 0 : index
    %646 = vector.load %arg2[%c12_393, %c0_394, %c0_395] : memref<16x8x1xf32, #tpu.memory_space<vmem>>, vector<1x8x1xf32>
    %647 = vector.shape_cast %646 : vector<1x8x1xf32> to vector<8x1xf32>
    %648 = vector.broadcast %647 : vector<8x1xf32> to vector<8x512xf32>
    %649 = arith.addf %645, %648 : vector<8x512xf32>
    %c0_396 = arith.constant 0 : index
    %c0_397 = arith.constant 0 : index
    %650 = vector.load %arg7[%c0_396, %c0_397] : memref<32x8xbf16, #tpu.memory_space<vmem>>, vector<32x8xbf16>
    %651 = arith.truncf %649 : vector<8x512xf32> to vector<8x512xbf16>
    %cst_398 = arith.constant dense<0.000000e+00> : vector<32x512xf32>
    %652 = tpu.matmul %650, %651, %cst_398 {dimension_numbers = #tpu.dot_dimension_numbers<[1], [0], [0], [1], [0, 0, 1, 1], [], []>} : vector<32x8xbf16>, vector<8x512xbf16>, vector<32x512xf32> -> vector<32x512xf32>
    %c0_399 = arith.constant 0 : index
    %c0_400 = arith.constant 0 : index
    %c0_401 = arith.constant 0 : index
    %653 = vector.load %arg3[%c0_399, %c0_400, %c0_401] : memref<2x32x1xf32, #tpu.memory_space<vmem>>, vector<1x32x1xf32>
    %654 = vector.shape_cast %653 : vector<1x32x1xf32> to vector<32x1xf32>
    %655 = vector.broadcast %654 : vector<32x1xf32> to vector<32x512xf32>
    %656 = arith.addf %652, %655 : vector<32x512xf32>
    %cst_402 = arith.constant 0.000000e+00 : f32
    %657 = vector.broadcast %cst_402 : f32 to vector<32x33xf32>
    %c0_403 = arith.constant 0 : index
    %c0_404 = arith.constant 0 : index
    %658 = vector.load %arg18[%c0_403, %c0_404] : memref<32x578xf32, #tpu.memory_space<vmem>>, vector<32x33xf32>
    tpu.vector_store %arg18[%c0_403, %c0_404], %657 {strides = array<i32>} : memref<32x578xf32, #tpu.memory_space<vmem>>, vector<32x33xf32>,
    %c0_405 = arith.constant 0 : index
    %c545 = arith.constant 545 : index
    %659 = vector.load %arg18[%c0_405, %c545] : memref<32x578xf32, #tpu.memory_space<vmem>>, vector<32x33xf32>
    tpu.vector_store %arg18[%c0_405, %c545], %657 {strides = array<i32>} : memref<32x578xf32, #tpu.memory_space<vmem>>, vector<32x33xf32>,
    %c0_406 = arith.constant 0 : index
    %c33_407 = arith.constant 33 : index
    %660 = vector.load %arg18[%c0_406, %c33_407] : memref<32x578xf32, #tpu.memory_space<vmem>>, vector<32x512xf32>
    tpu.vector_store %arg18[%c0_406, %c33_407], %656 {strides = array<i32>} : memref<32x578xf32, #tpu.memory_space<vmem>>, vector<32x512xf32>,
    %c0_408 = arith.constant 0 : index
    %c0_409 = arith.constant 0 : index
    %c0_410 = arith.constant 0 : index
    %661 = vector.load %arg11[%c0_408, %c0_409, %c0_410] : memref<9x32x1xf32, #tpu.memory_space<vmem>>, vector<1x32x1xf32>
    %662 = vector.shape_cast %661 : vector<1x32x1xf32> to vector<32x1xf32>
    %c0_411 = arith.constant 0 : index
    %c0_412 = arith.constant 0 : index
    %663 = vector.load %arg18[%c0_411, %c0_412] : memref<32x578xf32, #tpu.memory_space<vmem>>, vector<32x512xf32>
    %664 = vector.broadcast %662 : vector<32x1xf32> to vector<32x512xf32>
    %665 = arith.mulf %664, %663 : vector<32x512xf32>
    %c3_413 = arith.constant 3 : index
    %c0_414 = arith.constant 0 : index
    %c0_415 = arith.constant 0 : index
    %666 = vector.load %arg11[%c3_413, %c0_414, %c0_415] : memref<9x32x1xf32, #tpu.memory_space<vmem>>, vector<1x32x1xf32>
    %667 = vector.shape_cast %666 : vector<1x32x1xf32> to vector<32x1xf32>
    %c0_416 = arith.constant 0 : index
    %c32_417 = arith.constant 32 : index
    %668 = vector.load %arg18[%c0_416, %c32_417] : memref<32x578xf32, #tpu.memory_space<vmem>>, vector<32x512xf32>
    %669 = vector.broadcast %667 : vector<32x1xf32> to vector<32x512xf32>
    %670 = arith.mulf %669, %668 : vector<32x512xf32>
    %671 = arith.addf %665, %670 : vector<32x512xf32>
    %c6_418 = arith.constant 6 : index
    %c0_419 = arith.constant 0 : index
    %c0_420 = arith.constant 0 : index
    %672 = vector.load %arg11[%c6_418, %c0_419, %c0_420] : memref<9x32x1xf32, #tpu.memory_space<vmem>>, vector<1x32x1xf32>
    %673 = vector.shape_cast %672 : vector<1x32x1xf32> to vector<32x1xf32>
    %c0_421 = arith.constant 0 : index
    %c64_422 = arith.constant 64 : index
    %674 = vector.load %arg18[%c0_421, %c64_422] : memref<32x578xf32, #tpu.memory_space<vmem>>, vector<32x512xf32>
    %675 = vector.broadcast %673 : vector<32x1xf32> to vector<32x512xf32>
    %676 = arith.mulf %675, %674 : vector<32x512xf32>
    %677 = arith.addf %671, %676 : vector<32x512xf32>
    %c0_423 = arith.constant 0 : index
    %c0_424 = arith.constant 0 : index
    %c0_425 = arith.constant 0 : index
    %678 = vector.load %arg14[%c0_423, %c0_424, %c0_425] : memref<3x1x512xf32, #tpu.memory_space<vmem>>, vector<1x1x512xf32>
    %679 = vector.shape_cast %678 : vector<1x1x512xf32> to vector<1x512xf32>
    %680 = vector.broadcast %679 : vector<1x512xf32> to vector<32x512xf32>
    %681 = arith.mulf %680, %677 : vector<32x512xf32>
    %c1_426 = arith.constant 1 : index
    %c0_427 = arith.constant 0 : index
    %c0_428 = arith.constant 0 : index
    %682 = vector.load %arg11[%c1_426, %c0_427, %c0_428] : memref<9x32x1xf32, #tpu.memory_space<vmem>>, vector<1x32x1xf32>
    %683 = vector.shape_cast %682 : vector<1x32x1xf32> to vector<32x1xf32>
    %c0_429 = arith.constant 0 : index
    %c1_430 = arith.constant 1 : index
    %684 = vector.load %arg18[%c0_429, %c1_430] : memref<32x578xf32, #tpu.memory_space<vmem>>, vector<32x512xf32>
    %685 = vector.broadcast %683 : vector<32x1xf32> to vector<32x512xf32>
    %686 = arith.mulf %685, %684 : vector<32x512xf32>
    %c4_431 = arith.constant 4 : index
    %c0_432 = arith.constant 0 : index
    %c0_433 = arith.constant 0 : index
    %687 = vector.load %arg11[%c4_431, %c0_432, %c0_433] : memref<9x32x1xf32, #tpu.memory_space<vmem>>, vector<1x32x1xf32>
    %688 = vector.shape_cast %687 : vector<1x32x1xf32> to vector<32x1xf32>
    %c0_434 = arith.constant 0 : index
    %c33_435 = arith.constant 33 : index
    %689 = vector.load %arg18[%c0_434, %c33_435] : memref<32x578xf32, #tpu.memory_space<vmem>>, vector<32x512xf32>
    %690 = vector.broadcast %688 : vector<32x1xf32> to vector<32x512xf32>
    %691 = arith.mulf %690, %689 : vector<32x512xf32>
    %692 = arith.addf %686, %691 : vector<32x512xf32>
    %c7_436 = arith.constant 7 : index
    %c0_437 = arith.constant 0 : index
    %c0_438 = arith.constant 0 : index
    %693 = vector.load %arg11[%c7_436, %c0_437, %c0_438] : memref<9x32x1xf32, #tpu.memory_space<vmem>>, vector<1x32x1xf32>
    %694 = vector.shape_cast %693 : vector<1x32x1xf32> to vector<32x1xf32>
    %c0_439 = arith.constant 0 : index
    %c65_440 = arith.constant 65 : index
    %695 = vector.load %arg18[%c0_439, %c65_440] : memref<32x578xf32, #tpu.memory_space<vmem>>, vector<32x512xf32>
    %696 = vector.broadcast %694 : vector<32x1xf32> to vector<32x512xf32>
    %697 = arith.mulf %696, %695 : vector<32x512xf32>
    %698 = arith.addf %692, %697 : vector<32x512xf32>
    %c1_441 = arith.constant 1 : index
    %c0_442 = arith.constant 0 : index
    %c0_443 = arith.constant 0 : index
    %699 = vector.load %arg14[%c1_441, %c0_442, %c0_443] : memref<3x1x512xf32, #tpu.memory_space<vmem>>, vector<1x1x512xf32>
    %700 = vector.shape_cast %699 : vector<1x1x512xf32> to vector<1x512xf32>
    %701 = vector.broadcast %700 : vector<1x512xf32> to vector<32x512xf32>
    %702 = arith.mulf %701, %698 : vector<32x512xf32>
    %703 = arith.addf %681, %702 : vector<32x512xf32>
    %c2_444 = arith.constant 2 : index
    %c0_445 = arith.constant 0 : index
    %c0_446 = arith.constant 0 : index
    %704 = vector.load %arg11[%c2_444, %c0_445, %c0_446] : memref<9x32x1xf32, #tpu.memory_space<vmem>>, vector<1x32x1xf32>
    %705 = vector.shape_cast %704 : vector<1x32x1xf32> to vector<32x1xf32>
    %c0_447 = arith.constant 0 : index
    %c2_448 = arith.constant 2 : index
    %706 = vector.load %arg18[%c0_447, %c2_448] : memref<32x578xf32, #tpu.memory_space<vmem>>, vector<32x512xf32>
    %707 = vector.broadcast %705 : vector<32x1xf32> to vector<32x512xf32>
    %708 = arith.mulf %707, %706 : vector<32x512xf32>
    %c5_449 = arith.constant 5 : index
    %c0_450 = arith.constant 0 : index
    %c0_451 = arith.constant 0 : index
    %709 = vector.load %arg11[%c5_449, %c0_450, %c0_451] : memref<9x32x1xf32, #tpu.memory_space<vmem>>, vector<1x32x1xf32>
    %710 = vector.shape_cast %709 : vector<1x32x1xf32> to vector<32x1xf32>
    %c0_452 = arith.constant 0 : index
    %c34_453 = arith.constant 34 : index
    %711 = vector.load %arg18[%c0_452, %c34_453] : memref<32x578xf32, #tpu.memory_space<vmem>>, vector<32x512xf32>
    %712 = vector.broadcast %710 : vector<32x1xf32> to vector<32x512xf32>
    %713 = arith.mulf %712, %711 : vector<32x512xf32>
    %714 = arith.addf %708, %713 : vector<32x512xf32>
    %c8_454 = arith.constant 8 : index
    %c0_455 = arith.constant 0 : index
    %c0_456 = arith.constant 0 : index
    %715 = vector.load %arg11[%c8_454, %c0_455, %c0_456] : memref<9x32x1xf32, #tpu.memory_space<vmem>>, vector<1x32x1xf32>
    %716 = vector.shape_cast %715 : vector<1x32x1xf32> to vector<32x1xf32>
    %c0_457 = arith.constant 0 : index
    %c66_458 = arith.constant 66 : index
    %717 = vector.load %arg18[%c0_457, %c66_458] : memref<32x578xf32, #tpu.memory_space<vmem>>, vector<32x512xf32>
    %718 = vector.broadcast %716 : vector<32x1xf32> to vector<32x512xf32>
    %719 = arith.mulf %718, %717 : vector<32x512xf32>
    %720 = arith.addf %714, %719 : vector<32x512xf32>
    %c2_459 = arith.constant 2 : index
    %c0_460 = arith.constant 0 : index
    %c0_461 = arith.constant 0 : index
    %721 = vector.load %arg14[%c2_459, %c0_460, %c0_461] : memref<3x1x512xf32, #tpu.memory_space<vmem>>, vector<1x1x512xf32>
    %722 = vector.shape_cast %721 : vector<1x1x512xf32> to vector<1x512xf32>
    %723 = vector.broadcast %722 : vector<1x512xf32> to vector<32x512xf32>
    %724 = arith.mulf %723, %720 : vector<32x512xf32>
    %725 = arith.addf %703, %724 : vector<32x512xf32>
    %c1_462 = arith.constant 1 : index
    %c0_463 = arith.constant 0 : index
    %c0_464 = arith.constant 0 : index
    %726 = vector.load %arg3[%c1_462, %c0_463, %c0_464] : memref<2x32x1xf32, #tpu.memory_space<vmem>>, vector<1x32x1xf32>
    %727 = vector.shape_cast %726 : vector<1x32x1xf32> to vector<32x1xf32>
    %728 = vector.broadcast %727 : vector<32x1xf32> to vector<32x512xf32>
    %729 = arith.addf %725, %728 : vector<32x512xf32>
    %cst_465 = arith.constant 0.707106769 : f32
    %730 = vector.broadcast %cst_465 : f32 to vector<32x512xf32>
    %731 = arith.mulf %729, %730 : vector<32x512xf32>
    %732 = math.absf %731 : vector<32x512xf32>
    %cst_466 = arith.constant 0.327591091 : f32
    %733 = vector.broadcast %cst_466 : f32 to vector<32x512xf32>
    %734 = arith.mulf %733, %732 : vector<32x512xf32>
    %cst_467 = arith.constant 1.000000e+00 : f32
    %735 = vector.broadcast %cst_467 : f32 to vector<32x512xf32>
    %736 = arith.addf %735, %734 : vector<32x512xf32>
    %cst_468 = arith.constant 1.000000e+00 : f32
    %737 = vector.broadcast %cst_468 : f32 to vector<32x512xf32>
    %738 = arith.divf %737, %736 : vector<32x512xf32>
    %cst_469 = arith.constant 1.06140542 : f32
    %739 = vector.broadcast %cst_469 : f32 to vector<32x512xf32>
    %740 = arith.mulf %738, %739 : vector<32x512xf32>
    %cst_470 = arith.constant -1.45315206 : f32
    %741 = vector.broadcast %cst_470 : f32 to vector<32x512xf32>
    %742 = arith.addf %741, %740 : vector<32x512xf32>
    %743 = arith.mulf %738, %742 : vector<32x512xf32>
    %cst_471 = arith.constant 1.42141378 : f32
    %744 = vector.broadcast %cst_471 : f32 to vector<32x512xf32>
    %745 = arith.addf %744, %743 : vector<32x512xf32>
    %746 = arith.mulf %738, %745 : vector<32x512xf32>
    %cst_472 = arith.constant -0.284496725 : f32
    %747 = vector.broadcast %cst_472 : f32 to vector<32x512xf32>
    %748 = arith.addf %747, %746 : vector<32x512xf32>
    %749 = arith.mulf %738, %748 : vector<32x512xf32>
    %cst_473 = arith.constant 0.254829586 : f32
    %750 = vector.broadcast %cst_473 : f32 to vector<32x512xf32>
    %751 = arith.addf %750, %749 : vector<32x512xf32>
    %752 = arith.mulf %738, %751 : vector<32x512xf32>
    %cst_474 = arith.constant 0.000000e+00 : f32
    %753 = vector.broadcast %cst_474 : f32 to vector<32x512xf32>
    %754 = arith.subf %753, %732 : vector<32x512xf32>
    %755 = arith.mulf %754, %732 : vector<32x512xf32>
    %756 = math.exp %755 : vector<32x512xf32>
    %757 = arith.mulf %752, %756 : vector<32x512xf32>
    %cst_475 = arith.constant 1.000000e+00 : f32
    %758 = vector.broadcast %cst_475 : f32 to vector<32x512xf32>
    %759 = arith.subf %758, %757 : vector<32x512xf32>
    %cst_476 = arith.constant 0.000000e+00 : f32
    %760 = vector.broadcast %cst_476 : f32 to vector<32x512xf32>
    %761 = arith.cmpf oge, %731, %760 : vector<32x512xf32>
    %cst_477 = arith.constant 0.000000e+00 : f32
    %762 = vector.broadcast %cst_477 : f32 to vector<32x512xf32>
    %763 = arith.subf %762, %759 : vector<32x512xf32>
    %764 = arith.select %761, %759, %763 : vector<32x512xi1>, vector<32x512xf32>
    %cst_478 = arith.constant 5.000000e-01 : f32
    %765 = vector.broadcast %cst_478 : f32 to vector<32x512xf32>
    %766 = arith.mulf %765, %729 : vector<32x512xf32>
    %cst_479 = arith.constant 1.000000e+00 : f32
    %767 = vector.broadcast %cst_479 : f32 to vector<32x512xf32>
    %768 = arith.addf %767, %764 : vector<32x512xf32>
    %769 = arith.mulf %766, %768 : vector<32x512xf32>
    %c0_480 = arith.constant 0 : index
    %c0_481 = arith.constant 0 : index
    %770 = vector.load %arg8[%c0_480, %c0_481] : memref<8x32xbf16, #tpu.memory_space<vmem>>, vector<8x32xbf16>
    %771 = arith.truncf %769 : vector<32x512xf32> to vector<32x512xbf16>
    %cst_482 = arith.constant dense<0.000000e+00> : vector<8x512xf32>
    %772 = tpu.matmul %770, %771, %cst_482 {dimension_numbers = #tpu.dot_dimension_numbers<[1], [0], [0], [1], [0, 0, 1, 1], [], []>} : vector<8x32xbf16>, vector<32x512xbf16>, vector<8x512xf32> -> vector<8x512xf32>
    %c13_483 = arith.constant 13 : index
    %c0_484 = arith.constant 0 : index
    %c0_485 = arith.constant 0 : index
    %773 = vector.load %arg2[%c13_483, %c0_484, %c0_485] : memref<16x8x1xf32, #tpu.memory_space<vmem>>, vector<1x8x1xf32>
    %774 = vector.shape_cast %773 : vector<1x8x1xf32> to vector<8x1xf32>
    %775 = vector.broadcast %774 : vector<8x1xf32> to vector<8x512xf32>
    %776 = arith.addf %772, %775 : vector<8x512xf32>
    %c10_486 = arith.constant 10 : index
    %c0_487 = arith.constant 0 : index
    %c0_488 = arith.constant 0 : index
    %777 = vector.load %arg2[%c10_486, %c0_487, %c0_488] : memref<16x8x1xf32, #tpu.memory_space<vmem>>, vector<1x8x1xf32>
    %778 = vector.shape_cast %777 : vector<1x8x1xf32> to vector<8x1xf32>
    %779 = vector.broadcast %778 : vector<8x1xf32> to vector<8x512xf32>
    %780 = arith.mulf %779, %776 : vector<8x512xf32>
    %781 = arith.addf %641, %780 : vector<8x512xf32>
    %782 = arith.addf %31, %31 : vector<8x512xf32>
    %783 = arith.addf %782, %781 : vector<8x512xf32>
    %c14_489 = arith.constant 14 : index
    %c0_490 = arith.constant 0 : index
    %c0_491 = arith.constant 0 : index
    %784 = vector.load %arg2[%c14_489, %c0_490, %c0_491] : memref<16x8x1xf32, #tpu.memory_space<vmem>>, vector<1x8x1xf32>
    %785 = vector.shape_cast %784 : vector<1x8x1xf32> to vector<8x1xf32>
    %c15_492 = arith.constant 15 : index
    %c0_493 = arith.constant 0 : index
    %c0_494 = arith.constant 0 : index
    %786 = vector.load %arg2[%c15_492, %c0_493, %c0_494] : memref<16x8x1xf32, #tpu.memory_space<vmem>>, vector<1x8x1xf32>
    %787 = vector.shape_cast %786 : vector<1x8x1xf32> to vector<8x1xf32>
    %788 = vector.shape_cast %783 : vector<8x512xf32> to vector<1x8x512xf32>
    %cst_495 = arith.constant dense<0.000000e+00> : vector<1xf32>
    %789 = vector.multi_reduction <add>, %788, %cst_495 [1, 2] : vector<1x8x512xf32> to vector<1xf32>
    %790 = vector.shape_cast %789 : vector<1xf32> to vector<1x1x1xf32>
    %791 = vector.extract %790[0, 0, 0] : f32 from vector<1x1x1xf32>
    %792 = vector.broadcast %791 : f32 to vector<1x1xf32>
    %cst_496 = arith.constant 2.44140625E-4 : f32
    %793 = vector.broadcast %cst_496 : f32 to vector<1x1xf32>
    %794 = arith.mulf %792, %793 : vector<1x1xf32>
    %795 = vector.broadcast %794 : vector<1x1xf32> to vector<8x512xf32>
    %796 = arith.subf %783, %795 : vector<8x512xf32>
    %797 = arith.mulf %796, %796 : vector<8x512xf32>
    %798 = vector.shape_cast %797 : vector<8x512xf32> to vector<1x8x512xf32>
    %cst_497 = arith.constant dense<0.000000e+00> : vector<1xf32>
    %799 = vector.multi_reduction <add>, %798, %cst_497 [1, 2] : vector<1x8x512xf32> to vector<1xf32>
    %800 = vector.shape_cast %799 : vector<1xf32> to vector<1x1x1xf32>
    %801 = vector.extract %800[0, 0, 0] : f32 from vector<1x1x1xf32>
    %802 = vector.broadcast %801 : f32 to vector<1x1xf32>
    %cst_498 = arith.constant 2.44140625E-4 : f32
    %803 = vector.broadcast %cst_498 : f32 to vector<1x1xf32>
    %804 = arith.mulf %802, %803 : vector<1x1xf32>
    %cst_499 = arith.constant 9.99999974E-6 : f32
    %805 = vector.broadcast %cst_499 : f32 to vector<1x1xf32>
    %806 = arith.addf %804, %805 : vector<1x1xf32>
    %807 = math.rsqrt %806 : vector<1x1xf32>
    %808 = vector.broadcast %807 : vector<1x1xf32> to vector<8x512xf32>
    %809 = arith.mulf %796, %808 : vector<8x512xf32>
    %810 = vector.broadcast %785 : vector<8x1xf32> to vector<8x512xf32>
    %811 = arith.mulf %809, %810 : vector<8x512xf32>
    %812 = vector.broadcast %787 : vector<8x1xf32> to vector<8x512xf32>
    %813 = arith.addf %811, %812 : vector<8x512xf32>
    %c0_500 = arith.constant 0 : index
    %c0_501 = arith.constant 0 : index
    %c0_502 = arith.constant 0 : index
    %814 = vector.load %arg15[%c0_500, %c0_501, %c0_502] : memref<1x8x512xf32, #tpu.memory_space<vmem>>, vector<1x8x512xf32>
    %815 = vector.shape_cast %814 : vector<1x8x512xf32> to vector<8x512xf32>
    %816 = vector.shape_cast %813 : vector<8x512xf32> to vector<1x8x512xf32>
    tpu.vector_store %arg15[%c0_500, %c0_501, %c0_502], %816 {strides = array<i32>} : memref<1x8x512xf32, #tpu.memory_space<vmem>>, vector<1x8x512xf32>,
    return
  }
  func.func @transform_0(%arg0: i32) -> (i32, i32, i32) {
    %c0_i32 = arith.constant 0 : i32
    %c0_i32_0 = arith.constant 0 : i32
    %c0_i32_1 = arith.constant 0 : i32
    return %arg0, %c0_i32, %c0_i32_0 : i32, i32, i32
  }
  func.func @transform_1(%arg0: i32) -> (i32, i32, i32) {
    %c0_i32 = arith.constant 0 : i32
    %c0_i32_0 = arith.constant 0 : i32
    %c0_i32_1 = arith.constant 0 : i32
    %c0_i32_2 = arith.constant 0 : i32
    return %c0_i32, %c0_i32_0, %c0_i32_1 : i32, i32, i32
  }
  func.func @transform_2(%arg0: i32) -> (i32, i32, i32) {
    %c0_i32 = arith.constant 0 : i32
    %c0_i32_0 = arith.constant 0 : i32
    %c0_i32_1 = arith.constant 0 : i32
    %c0_i32_2 = arith.constant 0 : i32
    return %c0_i32, %c0_i32_0, %c0_i32_1 : i32, i32, i32
  }
  func.func @transform_3(%arg0: i32) -> (i32, i32, i32) {
    %c0_i32 = arith.constant 0 : i32
    %c0_i32_0 = arith.constant 0 : i32
    %c0_i32_1 = arith.constant 0 : i32
    %c0_i32_2 = arith.constant 0 : i32
    return %c0_i32, %c0_i32_0, %c0_i32_1 : i32, i32, i32
  }
  func.func @transform_4(%arg0: i32) -> (i32, i32) {
    %c0_i32 = arith.constant 0 : i32
    %c0_i32_0 = arith.constant 0 : i32
    %c0_i32_1 = arith.constant 0 : i32
    return %c0_i32, %c0_i32_0 : i32, i32
  }
  func.func @transform_5(%arg0: i32) -> (i32, i32) {
    %c0_i32 = arith.constant 0 : i32
    %c0_i32_0 = arith.constant 0 : i32
    %c0_i32_1 = arith.constant 0 : i32
    return %c0_i32, %c0_i32_0 : i32, i32
  }
  func.func @transform_6(%arg0: i32) -> (i32, i32) {
    %c0_i32 = arith.constant 0 : i32
    %c0_i32_0 = arith.constant 0 : i32
    %c0_i32_1 = arith.constant 0 : i32
    return %c0_i32, %c0_i32_0 : i32, i32
  }
  func.func @transform_7(%arg0: i32) -> (i32, i32) {
    %c0_i32 = arith.constant 0 : i32
    %c0_i32_0 = arith.constant 0 : i32
    %c0_i32_1 = arith.constant 0 : i32
    return %c0_i32, %c0_i32_0 : i32, i32
  }
  func.func @transform_8(%arg0: i32) -> (i32, i32, i32) {
    %c0_i32 = arith.constant 0 : i32
    %c0_i32_0 = arith.constant 0 : i32
    %c0_i32_1 = arith.constant 0 : i32
    %c0_i32_2 = arith.constant 0 : i32
    return %c0_i32, %c0_i32_0, %c0_i32_1 : i32, i32, i32
  }
  func.func @transform_9(%arg0: i32) -> (i32, i32, i32) {
    %c0_i32 = arith.constant 0 : i32
    %c0_i32_0 = arith.constant 0 : i32
    %c0_i32_1 = arith.constant 0 : i32
    %c0_i32_2 = arith.constant 0 : i32
    return %c0_i32, %c0_i32_0, %c0_i32_1 : i32, i32, i32
  }
  func.func @transform_10(%arg0: i32) -> (i32, i32, i32) {
    %c0_i32 = arith.constant 0 : i32
    %c0_i32_0 = arith.constant 0 : i32
    %c0_i32_1 = arith.constant 0 : i32
    %c0_i32_2 = arith.constant 0 : i32
    return %c0_i32, %c0_i32_0, %c0_i32_1 : i32, i32, i32
  }
  func.func @transform_11(%arg0: i32) -> (i32, i32, i32) {
    %c0_i32 = arith.constant 0 : i32
    %c0_i32_0 = arith.constant 0 : i32
    %c0_i32_1 = arith.constant 0 : i32
    %c0_i32_2 = arith.constant 0 : i32
    return %c0_i32, %c0_i32_0, %c0_i32_1 : i32, i32, i32
  }
  func.func @transform_12(%arg0: i32) -> (i32, i32, i32) {
    %c0_i32 = arith.constant 0 : i32
    %c0_i32_0 = arith.constant 0 : i32
    %c0_i32_1 = arith.constant 0 : i32
    %c0_i32_2 = arith.constant 0 : i32
    return %c0_i32, %c0_i32_0, %c0_i32_1 : i32, i32, i32
  }
  func.func @transform_13(%arg0: i32) -> (i32, i32, i32) {
    %c0_i32 = arith.constant 0 : i32
    %c0_i32_0 = arith.constant 0 : i32
    %c0_i32_1 = arith.constant 0 : i32
    %c0_i32_2 = arith.constant 0 : i32
    return %c0_i32, %c0_i32_0, %c0_i32_1 : i32, i32, i32
  }
  func.func @transform_14(%arg0: i32) -> (i32, i32, i32) {
    %c0_i32 = arith.constant 0 : i32
    %c0_i32_0 = arith.constant 0 : i32
    %c0_i32_1 = arith.constant 0 : i32
    return %arg0, %c0_i32, %c0_i32_0 : i32, i32, i32
  }
}

</mosaic_0001>

<llo_original>
// kernel: ciatt_patch_block_forward.2
$region0: #{ciatt_patch_block_forward.2}
  #allocation0 [shape = 'u32[]', space=smem, size = 0x4, offset = 0x4, fixed_abs, tag = 'smem constant byte address 0x4 - core index']
  #allocation1 [shape = 'u32[144,128]{1,0:T(1,128)}', space=vmem, size = 0x12000, scoped, tag = 'internal scratch']
  %s0 = inlined_call_operand.vmem [shape: f32[128,128], index: 0, kind: input, shape index: {}]
  %s1 = inlined_call_operand.vmem [shape: bf16[128,8], index: 1, kind: input, shape index: {}]
  %s2 = inlined_call_operand.vmem [shape: f32[64,8], index: 2, kind: input, shape index: {}]
  %s3 = inlined_call_operand.vmem [shape: bf16[8,24], index: 3, kind: input, shape index: {}]
  %s4 = inlined_call_operand.vmem [shape: f32[1,24], index: 4, kind: input, shape index: {}]
  %s5 = inlined_call_operand.vmem [shape: bf16[8,8], index: 5, kind: input, shape index: {}]
  %s6 = inlined_call_operand.vmem [shape: f32[1,8], index: 6, kind: input, shape index: {}]
  %s7 = inlined_call_operand.vmem [shape: bf16[8,128], index: 7, kind: input, shape index: {}]
  %s8 = inlined_call_operand.vmem [shape: f32[1,128], index: 8, kind: input, shape index: {}]
  %s9 = inlined_call_operand.vmem [shape: f32[128,128], index: 9, kind: output, shape index: {}]
  %s10 = sld [smem:[#allocation0]]
  $region69: #{ciatt_patch_block_forward.2} parent=0
    _
  %s12 = ssub.s32 1, %s10
  %s13 = scalar_select 0, %s12, %s10
  loop: start=0, step=1, limit=4
  $region2: #{ciatt_patch_block_forward.2} parent=0 // loop_pre_header
    _
  $region3: #{ciatt_patch_block_forward.2} parent=0 // loop_header
    %s15 = sphi 0, %s19
    %p16 = scmp.ge.s32.totalorder %s15, 4
    %s25 = sphi 0, %s27
    %s28 = sphi 0, %s25
    %s29 = sphi 0, %s28
    %s45 = sphi 0, %s29
    %s49 = sphi 0, %s49
    %s51 = sphi 0, %s49
    %s52 = sphi 0, %s51
    %s66 = sphi 0, %s52
    %s70 = sphi 0, %s70
    %s72 = sphi 0, %s70
    %s73 = sphi 0, %s72
    %s87 = sphi 0, %s73
    %s91 = sphi 0, %s91
    %s93 = sphi 0, %s91
    %s94 = sphi 0, %s93
    %s108 = sphi 0, %s94
    %s112 = sphi 0, %s112
    %s114 = sphi 0, %s112
    %s115 = sphi 0, %s114
    %s129 = sphi 0, %s115
    %s133 = sphi 0, %s133
    %s135 = sphi 0, %s133
    %s136 = sphi 0, %s135
    %s150 = sphi 0, %s136
    %s154 = sphi 0, %s154
    %s156 = sphi 0, %s154
    %s157 = sphi 0, %s156
    %s171 = sphi 0, %s157
    %s175 = sphi 0, %s175
    %s177 = sphi 0, %s175
    %s178 = sphi 0, %s177
    %s192 = sphi 0, %s178
    %s196 = sphi 0, %s196
    %s198 = sphi 0, %s196
    %s199 = sphi 0, %s198
    %s213 = sphi 0, %s199
    %s219 = sphi 0, %s221
    %s222 = sphi 0, %s219
    %s223 = sphi 0, %s222
    %s239 = sphi 0, %s223
  $region4: #{ciatt_patch_block_forward.2} parent=0 // loop_header_branch
    %18 = sbr.rel (%p16) target = $region8
  $region5: #{ciatt_patch_block_forward.2} parent=0 // loop_body
    %s20 = ssub.s32 %s15, 1
    %s21 = ssub.s32 %s15, 2
    %s22 = sadd.s32 %s15, 1
    %s23 = ssub.s32 %s15, %s22
    %p24 = scmp.eq.s32.totalorder %s23, 0
    %s26 = sadd.s32 %s25, 1
    %s27 = scalar_select %p24, %s25, %s26
    %p30 = pneg %p24
    %p31 = scmp.eq.s32.totalorder %s15, 1
    %p32 = por %p30, %p31
    %p33 = scmp.ne.s32.totalorder %s25, %s28
    %p34 = scmp.eq.s32.totalorder %s15, 0
    %p35 = por %p33, %p34
    %p36 = scmp.ne.s32.totalorder %s25, %s28
    %p37 = scmp.eq.s32.totalorder %s20, 1
    %p38 = por %p36, %p37
    %p39 = scmp.ne.s32.totalorder %s28, %s29
    %p40 = scmp.eq.s32.totalorder %s20, 0
    %p41 = por %p39, %p40
    %p42 = scmp.ne.s32.totalorder %s28, %s29
    %p43 = scmp.eq.s32.totalorder %s21, 1
    %p44 = por %p42, %p43
    %p46 = scmp.ne.s32.totalorder %s29, %s45
    %p47 = scmp.eq.s32.totalorder %s21, 0
    %p48 = por %p46, %p47
    %s50 = sadd.s32 %s49, 1
    %p53 = scmp.eq.s32.totalorder %s15, 1
    %p54 = scmp.ne.s32.totalorder %s49, %s51
    %p55 = scmp.eq.s32.totalorder %s15, 0
    %p56 = por %p54, %p55
    %p57 = scmp.ne.s32.totalorder %s49, %s51
    %p58 = scmp.eq.s32.totalorder %s20, 1
    %p59 = por %p57, %p58
    %p60 = scmp.ne.s32.totalorder %s51, %s52
    %p61 = scmp.eq.s32.totalorder %s20, 0
    %p62 = por %p60, %p61
    %p63 = scmp.ne.s32.totalorder %s51, %s52
    %p64 = scmp.eq.s32.totalorder %s21, 1
    %p65 = por %p63, %p64
    %p67 = scmp.ne.s32.totalorder %s52, %s66
    %p68 = scmp.eq.s32.totalorder %s21, 0
    %p69 = por %p67, %p68
    %s71 = sadd.s32 %s70, 1
    %p74 = scmp.eq.s32.totalorder %s15, 1
    %p75 = scmp.ne.s32.totalorder %s70, %s72
    %p76 = scmp.eq.s32.totalorder %s15, 0
    %p77 = por %p75, %p76
    %p78 = scmp.ne.s32.totalorder %s70, %s72
    %p79 = scmp.eq.s32.totalorder %s20, 1
    %p80 = por %p78, %p79
    %p81 = scmp.ne.s32.totalorder %s72, %s73
    %p82 = scmp.eq.s32.totalorder %s20, 0
    %p83 = por %p81, %p82
    %p84 = scmp.ne.s32.totalorder %s72, %s73
    %p85 = scmp.eq.s32.totalorder %s21, 1
    %p86 = por %p84, %p85
    %p88 = scmp.ne.s32.totalorder %s73, %s87
    %p89 = scmp.eq.s32.totalorder %s21, 0
    %p90 = por %p88, %p89
    %s92 = sadd.s32 %s91, 1
    %p95 = scmp.eq.s32.totalorder %s15, 1
    %p96 = scmp.ne.s32.totalorder %s91, %s93
    %p97 = scmp.eq.s32.totalorder %s15, 0
    %p98 = por %p96, %p97
    %p99 = scmp.ne.s32.totalorder %s91, %s93
    %p100 = scmp.eq.s32.totalorder %s20, 1
    %p101 = por %p99, %p100
    %p102 = scmp.ne.s32.totalorder %s93, %s94
    %p103 = scmp.eq.s32.totalorder %s20, 0
    %p104 = por %p102, %p103
    %p105 = scmp.ne.s32.totalorder %s93, %s94
    %p106 = scmp.eq.s32.totalorder %s21, 1
    %p107 = por %p105, %p106
    %p109 = scmp.ne.s32.totalorder %s94, %s108
    %p110 = scmp.eq.s32.totalorder %s21, 0
    %p111 = por %p109, %p110
    %s113 = sadd.s32 %s112, 1
    %p116 = scmp.eq.s32.totalorder %s15, 1
    %p117 = scmp.ne.s32.totalorder %s112, %s114
    %p118 = scmp.eq.s32.totalorder %s15, 0
    %p119 = por %p117, %p118
    %p120 = scmp.ne.s32.totalorder %s112, %s114
    %p121 = scmp.eq.s32.totalorder %s20, 1
    %p122 = por %p120, %p121
    %p123 = scmp.ne.s32.totalorder %s114, %s115
    %p124 = scmp.eq.s32.totalorder %s20, 0
    %p125 = por %p123, %p124
    %p126 = scmp.ne.s32.totalorder %s114, %s115
    %p127 = scmp.eq.s32.totalorder %s21, 1
    %p128 = por %p126, %p127
    %p130 = scmp.ne.s32.totalorder %s115, %s129
    %p131 = scmp.eq.s32.totalorder %s21, 0
    %p132 = por %p130, %p131
    %s134 = sadd.s32 %s133, 1
    %p137 = scmp.eq.s32.totalorder %s15, 1
    %p138 = scmp.ne.s32.totalorder %s133, %s135
    %p139 = scmp.eq.s32.totalorder %s15, 0
    %p140 = por %p138, %p139
    %p141 = scmp.ne.s32.totalorder %s133, %s135
    %p142 = scmp.eq.s32.totalorder %s20, 1
    %p143 = por %p141, %p142
    %p144 = scmp.ne.s32.totalorder %s135, %s136
    %p145 = scmp.eq.s32.totalorder %s20, 0
    %p146 = por %p144, %p145
    %p147 = scmp.ne.s32.totalorder %s135, %s136
    %p148 = scmp.eq.s32.totalorder %s21, 1
    %p149 = por %p147, %p148
    %p151 = scmp.ne.s32.totalorder %s136, %s150
    %p152 = scmp.eq.s32.totalorder %s21, 0
    %p153 = por %p151, %p152
    %s155 = sadd.s32 %s154, 1
    %p158 = scmp.eq.s32.totalorder %s15, 1
    %p159 = scmp.ne.s32.totalorder %s154, %s156
    %p160 = scmp.eq.s32.totalorder %s15, 0
    %p161 = por %p159, %p160
    %p162 = scmp.ne.s32.totalorder %s154, %s156
    %p163 = scmp.eq.s32.totalorder %s20, 1
    %p164 = por %p162, %p163
    %p165 = scmp.ne.s32.totalorder %s156, %s157
    %p166 = scmp.eq.s32.totalorder %s20, 0
    %p167 = por %p165, %p166
    %p168 = scmp.ne.s32.totalorder %s156, %s157
    %p169 = scmp.eq.s32.totalorder %s21, 1
    %p170 = por %p168, %p169
    %p172 = scmp.ne.s32.totalorder %s157, %s171
    %p173 = scmp.eq.s32.totalorder %s21, 0
    %p174 = por %p172, %p173
    %s176 = sadd.s32 %s175, 1
    %p179 = scmp.eq.s32.totalorder %s15, 1
    %p180 = scmp.ne.s32.totalorder %s175, %s177
    %p181 = scmp.eq.s32.totalorder %s15, 0
    %p182 = por %p180, %p181
    %p183 = scmp.ne.s32.totalorder %s175, %s177
    %p184 = scmp.eq.s32.totalorder %s20, 1
    %p185 = por %p183, %p184
    %p186 = scmp.ne.s32.totalorder %s177, %s178
    %p187 = scmp.eq.s32.totalorder %s20, 0
    %p188 = por %p186, %p187
    %p189 = scmp.ne.s32.totalorder %s177, %s178
    %p190 = scmp.eq.s32.totalorder %s21, 1
    %p191 = por %p189, %p190
    %p193 = scmp.ne.s32.totalorder %s178, %s192
    %p194 = scmp.eq.s32.totalorder %s21, 0
    %p195 = por %p193, %p194
    %s197 = sadd.s32 %s196, 1
    %p200 = scmp.eq.s32.totalorder %s15, 1
    %p201 = scmp.ne.s32.totalorder %s196, %s198
    %p202 = scmp.eq.s32.totalorder %s15, 0
    %p203 = por %p201, %p202
    %p204 = scmp.ne.s32.totalorder %s196, %s198
    %p205 = scmp.eq.s32.totalorder %s20, 1
    %p206 = por %p204, %p205
    %p207 = scmp.ne.s32.totalorder %s198, %s199
    %p208 = scmp.eq.s32.totalorder %s20, 0
    %p209 = por %p207, %p208
    %p210 = scmp.ne.s32.totalorder %s198, %s199
    %p211 = scmp.eq.s32.totalorder %s21, 1
    %p212 = por %p210, %p211
    %p214 = scmp.ne.s32.totalorder %s199, %s213
    %p215 = scmp.eq.s32.totalorder %s21, 0
    %p216 = por %p214, %p215
    %s217 = ssub.s32 %s15, %s22
    %p218 = scmp.eq.s32.totalorder %s217, 0
    %s220 = sadd.s32 %s219, 1
    %s221 = scalar_select %p218, %s219, %s220
    %p224 = pneg %p218
    %p225 = scmp.eq.s32.totalorder %s15, 1
    %p226 = por %p224, %p225
    %p227 = scmp.ne.s32.totalorder %s219, %s222
    %p228 = scmp.eq.s32.totalorder %s15, 0
    %p229 = por %p227, %p228
    %p230 = scmp.ne.s32.totalorder %s219, %s222
    %p231 = scmp.eq.s32.totalorder %s20, 1
    %p232 = por %p230, %p231
    %p233 = scmp.ne.s32.totalorder %s222, %s223
    %p234 = scmp.eq.s32.totalorder %s20, 0
    %p235 = por %p233, %p234
    %p236 = scmp.ne.s32.totalorder %s222, %s223
    %p237 = scmp.eq.s32.totalorder %s21, 1
    %p238 = por %p236, %p237
    %p240 = scmp.ne.s32.totalorder %s223, %s239
    %p241 = scmp.eq.s32.totalorder %s21, 0
    %p242 = por %p240, %p241
    %p243 = scmp.le.s32.totalorder 1, %s15
    %p244 = scmp.lt.s32.totalorder %s15, 3
    %p245 = pnand %p243, %p244
    %p246 = pneg %p245
    // Predicated region
    $region9: #{ciatt_patch_block_forward.2} parent=5 // pred_check
      _
    $region10: #{ciatt_patch_block_forward.2} parent=5 // pred_check_branch
      %248 = sbr.rel (%p245) target = $region12
    $region11: #{ciatt_patch_block_forward.2} parent=5 // pred_region
      %s249 = ssub.s32 %s15, 1
      // Predicated region
      $region13: #{ciatt_patch_block_forward.2} parent=11 // pred_check
        %p250 = pneg %p62
      $region14: #{ciatt_patch_block_forward.2} parent=11 // pred_check_branch
        %252 = sbr.rel (%p250) target = $region16
      $region15: #{ciatt_patch_block_forward.2} parent=11 // pred_region
        _
      $region16: #{ciatt_patch_block_forward.2} parent=11 // pred_fallthru
        _
      // Predicated region
      $region17: #{ciatt_patch_block_forward.2} parent=11 // pred_check
        %p253 = pneg %p83
      $region18: #{ciatt_patch_block_forward.2} parent=11 // pred_check_branch
        %255 = sbr.rel (%p253) target = $region20
      $region19: #{ciatt_patch_block_forward.2} parent=11 // pred_region
        _
      $region20: #{ciatt_patch_block_forward.2} parent=11 // pred_fallthru
        _
      // Predicated region
      $region21: #{ciatt_patch_block_forward.2} parent=11 // pred_check
        %p256 = pneg %p104
      $region22: #{ciatt_patch_block_forward.2} parent=11 // pred_check_branch
        %258 = sbr.rel (%p256) target = $region24
      $region23: #{ciatt_patch_block_forward.2} parent=11 // pred_region
        _
      $region24: #{ciatt_patch_block_forward.2} parent=11 // pred_fallthru
        _
      // Predicated region
      $region25: #{ciatt_patch_block_forward.2} parent=11 // pred_check
        %p259 = pneg %p125
      $region26: #{ciatt_patch_block_forward.2} parent=11 // pred_check_branch
        %261 = sbr.rel (%p259) target = $region28
      $region27: #{ciatt_patch_block_forward.2} parent=11 // pred_region
        _
      $region28: #{ciatt_patch_block_forward.2} parent=11 // pred_fallthru
        _
      // Predicated region
      $region29: #{ciatt_patch_block_forward.2} parent=11 // pred_check
        %p262 = pneg %p146
      $region30: #{ciatt_patch_block_forward.2} parent=11 // pred_check_branch
        %264 = sbr.rel (%p262) target = $region32
      $region31: #{ciatt_patch_block_forward.2} parent=11 // pred_region
        _
      $region32: #{ciatt_patch_block_forward.2} parent=11 // pred_fallthru
        _
      // Predicated region
      $region33: #{ciatt_patch_block_forward.2} parent=11 // pred_check
        %p265 = pneg %p167
      $region34: #{ciatt_patch_block_forward.2} parent=11 // pred_check_branch
        %267 = sbr.rel (%p265) target = $region36
      $region35: #{ciatt_patch_block_forward.2} parent=11 // pred_region
        _
      $region36: #{ciatt_patch_block_forward.2} parent=11 // pred_fallthru
        _
      // Predicated region
      $region37: #{ciatt_patch_block_forward.2} parent=11 // pred_check
        %p268 = pneg %p188
      $region38: #{ciatt_patch_block_forward.2} parent=11 // pred_check_branch
        %270 = sbr.rel (%p268) target = $region40
      $region39: #{ciatt_patch_block_forward.2} parent=11 // pred_region
        _
      $region40: #{ciatt_patch_block_forward.2} parent=11 // pred_fallthru
        _
      // Predicated region
      $region41: #{ciatt_patch_block_forward.2} parent=11 // pred_check
        %p271 = pneg %p209
      $region42: #{ciatt_patch_block_forward.2} parent=11 // pred_check_branch
        %273 = sbr.rel (%p271) target = $region44
      $region43: #{ciatt_patch_block_forward.2} parent=11 // pred_region
        _
      $region44: #{ciatt_patch_block_forward.2} parent=11 // pred_fallthru
        _
    $region12: #{ciatt_patch_block_forward.2} parent=5 // pred_fallthru
      _
    %p274 = scmp.lt.s32.totalorder %s15, 2
    // Predicated region
    $region45: #{ciatt_patch_block_forward.2} parent=5 // pred_check
      %p275 = pneg %p274
    $region46: #{ciatt_patch_block_forward.2} parent=5 // pred_check_branch
      %277 = sbr.rel (%p275) target = $region48
    $region47: #{ciatt_patch_block_forward.2} parent=5 // pred_region
      // Predicated region
      $region49: #{ciatt_patch_block_forward.2} parent=47 // pred_check
        %p278 = pneg %p35
      $region50: #{ciatt_patch_block_forward.2} parent=47 // pred_check_branch
        %280 = sbr.rel (%p278) target = $region52
      $region51: #{ciatt_patch_block_forward.2} parent=47 // pred_region
        %s281 = smul.u32 8, %s15
        %p282 = scmp.lt.s32.totalorder %s281, 15
        %s283 = scalar_select %p282, %s281, 15
        %s284 = smul.addr %s283, 8
        %s285 = scalar_lea.vmem %s0, %s284
        %s286 = smul.u32 8, %s15
      $region52: #{ciatt_patch_block_forward.2} parent=47 // pred_fallthru
        _
    $region48: #{ciatt_patch_block_forward.2} parent=5 // pred_fallthru
      _
    %p287 = scmp.le.s32.totalorder 1, %s15
    %p288 = scmp.lt.s32.totalorder %s15, 3
    %p289 = pnand %p287, %p288
    %p290 = pneg %p289
    // Predicated region
    $region53: #{ciatt_patch_block_forward.2} parent=5 // pred_check
      _
    $region54: #{ciatt_patch_block_forward.2} parent=5 // pred_check_branch
      %292 = sbr.rel (%p289) target = $region56
    $region55: #{ciatt_patch_block_forward.2} parent=5 // pred_region
      %s293 = ssub.s32 %s15, 1
      %s294 = smul.u32 8, %s20
      %p295 = scmp.lt.s32.totalorder %s294, 15
      %s296 = scalar_select %p295, %s294, 15
      %s297 = smul.addr %s296, 8
      %s298 = scalar_lea.vmem %s0, %s297
      %p299 = pneg %p41
      %p300 = pneg %p38
      %p301 = pneg %p62
      %p302 = pneg %p59
      %p303 = pneg %p83
      %p304 = pneg %p80
      %p305 = pneg %p104
      %p306 = pneg %p101
      %p307 = pneg %p125
      %p308 = pneg %p122
      %p309 = pneg %p146
      %p310 = pneg %p143
      %p311 = pneg %p167
      %p312 = pneg %p164
      %p313 = pneg %p188
      %p314 = pneg %p185
      %p315 = pneg %p209
      %p316 = pneg %p206
      %p317 = pneg %p235
      %p318 = pneg %p232
      %s319 = smul.u32 8, %s20
      %p320 = scmp.lt.s32.totalorder %s319, 15
      %s321 = scalar_select %p320, %s319, 15
      %s322 = smul.addr %s321, 8
      %s323 = scalar_lea.vmem %s9, %s322
      %s324 = smul.u32 8, %s20
      %p325 = scmp.lt.s32.totalorder %s324, 15
      %s326 = scalar_select %p325, %s324, 15
      %s327 = smul.addr %s326, 8
      %s328 = scalar_lea.vmem %s0, %s327
      %s329 = smul.u32 8, %s20
      %s330 = smul.u32 8, %s20
      %p331 = scmp.lt.s32.totalorder %s330, 15
      %s332 = scalar_select %p331, %s330, 15
      %s333 = smul.addr %s332, 8
      %s334 = scalar_lea.vmem %s9, %s333
      %s335 = smul.u32 8, %s20
      %v337 = vld [vmem:[%s328] sm:$0xff]
      %v338 = vld [vmem:[%s328 + $0x8] sm:$0xff]
      %v339 = vld [vmem:[%s328 + $0x10] sm:$0xff]
      %v340 = vld [vmem:[%s328 + $0x18] sm:$0xff]
      %v341 = vld [vmem:[%s328 + $0x20] sm:$0xff]
      %v342 = vld [vmem:[%s328 + $0x28] sm:$0xff]
      %v343 = vld [vmem:[%s328 + $0x30] sm:$0xff]
      %v344 = vld [vmem:[%s328 + $0x38] sm:$0xff]
      %v345 = vpack.c.bf16 %v338, %v337
      %v346 = vpack.c.bf16 %v340, %v339
      %v347 = vpack.c.bf16 %v342, %v341
      %v348 = vpack.c.bf16 %v344, %v343
      %v349 = vld [vmem:[%s1] sm:$0xf]
      %v350 = vld [vmem:[%s1 + $0x4] sm:$0xf]
      %v351 = vld [vmem:[%s1 + $0x8] sm:$0xf]
      %v352 = vld [vmem:[%s1 + $0xc] sm:$0xf]
      %v353 = vld [vmem:[%s1 + $0x10] sm:$0xf]
      %v354 = vld [vmem:[%s1 + $0x14] sm:$0xf]
      %v355 = vld [vmem:[%s1 + $0x18] sm:$0xf]
      %v356 = vld [vmem:[%s1 + $0x1c] sm:$0xf]
      %v357 = vld [vmem:[%s1 + $0x20] sm:$0xf]
      %v358 = vld [vmem:[%s1 + $0x24] sm:$0xf]
      %v359 = vld [vmem:[%s1 + $0x28] sm:$0xf]
      %v360 = vld [vmem:[%s1 + $0x2c] sm:$0xf]
      %v361 = vld [vmem:[%s1 + $0x30] sm:$0xf]
      %v362 = vld [vmem:[%s1 + $0x34] sm:$0xf]
      %v363 = vld [vmem:[%s1 + $0x38] sm:$0xf]
      %v364 = vld [vmem:[%s1 + $0x3c] sm:$0xf]
      %v365 = vld [vmem:[%s2] sm:$0xff]
      %v366 = vld [vmem:[%s2 + $0x8] sm:$0xff]
      %v367 = vld [vmem:[%s2 + $0x10] sm:$0xff]
      %v368 = vld [vmem:[%s2 + $0x18] sm:$0xff]
      %v369 = vld [vmem:[%s2 + $0x20] sm:$0xff]
      %v370 = vld [vmem:[%s2 + $0x28] sm:$0xff]
      %v371 = vld [vmem:[%s2 + $0x30] sm:$0xff]
      %v372 = vld [vmem:[%s2 + $0x38] sm:$0xff]
      %v389 = vunpack.c.l.b16 %v349
      %v390 = vunpack.c.l.b16 %v350
      %v391 = vunpack.c.l.b16 %v351
      %v392 = vunpack.c.l.b16 %v352
      %v393 = vunpack.c.l.b16 %v353
      %v394 = vunpack.c.l.b16 %v354
      %v395 = vunpack.c.l.b16 %v355
      %v396 = vunpack.c.l.b16 %v356
      %v397 = vunpack.c.l.b16 %v357
      %v398 = vunpack.c.l.b16 %v358
      %v399 = vunpack.c.l.b16 %v359
      %v400 = vunpack.c.l.b16 %v360
      %v401 = vunpack.c.l.b16 %v361
      %v402 = vunpack.c.l.b16 %v362
      %v403 = vunpack.c.l.b16 %v363
      %v404 = vunpack.c.l.b16 %v364
      %v405 = vpack.c.b16 %v390, %v389
      %v406 = vpack.c.b16 %v392, %v391
      %v407 = vpack.c.b16 %v394, %v393
      %v408 = vpack.c.b16 %v396, %v395
      %v409 = vpack.c.b16 %v398, %v397
      %v410 = vpack.c.b16 %v400, %v399
      %v411 = vpack.c.b16 %v402, %v401
      %v412 = vpack.c.b16 %v404, %v403
      %421 = vmatprep.subr.bf16.mxu0 0
      %422 = vmatpush1.bf16.msra.mxu0 %v405
      %423 = vmatprep.subr.bf16.mxu0 0
      %424 = vmatpush1.bf16.msra.mxu0 %v406
      %425 = vmatprep.subr.bf16.mxu0 0
      %426 = vmatpush1.bf16.msra.mxu0 %v407
      %427 = vmatprep.subr.bf16.mxu0 0
      %428 = vmatpush1.bf16.msra.mxu0 %v408
      %429 = vmatprep.subr.bf16.mxu0 0
      %430 = vmatpush1.bf16.msra.mxu0 %v409
      %431 = vmatprep.subr.bf16.mxu0 0
      %432 = vmatpush1.bf16.msra.mxu0 %v410
      %433 = vmatprep.subr.bf16.mxu0 0
      %434 = vmatpush1.bf16.msra.mxu0 %v411
      %435 = vmatprep.subr.bf16.mxu0 0
      %436 = vmatpush1.bf16.msra.mxu0 %v412
      %437 = vmatprep.subr.bf16.mxu0 0
      %438 = vmatpush1.bf16.msra.mxu0 0
      %439 = vmatprep.subr.bf16.mxu0 0
      %440 = vmatpush1.bf16.msra.mxu0 0
      %441 = vmatprep.subr.bf16.mxu0 0
      %442 = vmatpush1.bf16.msra.mxu0 0
      %443 = vmatprep.subr.bf16.mxu0 0
      %444 = vmatpush1.bf16.msra.mxu0 0
      %445 = vmatprep.subr.bf16.mxu0 0
      %446 = vmatpush1.bf16.msra.mxu0 0
      %447 = vmatprep.subr.bf16.mxu0 0
      %448 = vmatpush1.bf16.msra.mxu0 0
      %449 = vmatprep.subr.bf16.mxu0 0
      %450 = vmatpush1.bf16.msra.mxu0 0
      %451 = vmatprep.subr.bf16.mxu0 0
      %452 = vmatpush1.bf16.msra.mxu0 0
      %453 = vmatprep.mubr.bf16.mxu0 0
      %454 = vmatmul.mubr.bf16.gmra.mrb[0].mxu0 %v345
      %v455 = vpop.f32.mrb[0].mxu0
      %v456 = vadd.f32 %v365, %v455
      %v457 = vpop.f32.mrb[0].mxu0
      %v458 = vpop.f32.mrb[0].mxu0
      %v459 = vadd.f32 %v366, %v458
      %v460 = vpop.f32.mrb[0].mxu0
      %461 = vmatprep.mubr.bf16.mxu0 0
      %462 = vmatmul.mubr.bf16.gmra.mrb[0].mxu0 %v346
      %v463 = vpop.f32.mrb[0].mxu0
      %v464 = vadd.f32 %v367, %v463
      %v465 = vpop.f32.mrb[0].mxu0
      %v466 = vpop.f32.mrb[0].mxu0
      %v467 = vadd.f32 %v368, %v466
      %v468 = vpop.f32.mrb[0].mxu0
      %469 = vmatprep.mubr.bf16.mxu0 0
      %470 = vmatmul.mubr.bf16.gmra.mrb[0].mxu0 %v347
      %v471 = vpop.f32.mrb[0].mxu0
      %v472 = vadd.f32 %v369, %v471
      %v473 = vpop.f32.mrb[0].mxu0
      %v474 = vpop.f32.mrb[0].mxu0
      %v475 = vadd.f32 %v370, %v474
      %v476 = vpop.f32.mrb[0].mxu0
      %477 = vmatprep.mubr.bf16.mxu0 0
      %478 = vmatmul.mubr.bf16.gmra.mrb[0].mxu0 %v348
      %v479 = vpop.f32.mrb[0].mxu0
      %v480 = vadd.f32 %v371, %v479
      %v481 = vpop.f32.mrb[0].mxu0
      %v482 = vpop.f32.mrb[0].mxu0
      %v483 = vadd.f32 %v372, %v482
      %v484 = vpop.f32.mrb[0].mxu0
      %485 = vdwg.mxu0
      %v486 = vpack.c.bf16 %v459, %v456
      %v487 = vpack.c.bf16 %v467, %v464
      %v488 = vpack.c.bf16 %v475, %v472
      %v489 = vpack.c.bf16 %v483, %v480
      %v490 = vld [vmem:[%s3] sm:$0xf]
      %v491 = vld [vmem:[%s4] sm:$0x1]
      %v493 = vlaneseq
      %v494 = vshrl.u32 %v493, 7
      %v495 = vsub.s32 0, %v494
      %v496 = vrot.slane %v491, %v495
      %vm498 = vcmask 64512
      %v500 = vsel %vm498, %v486, 0
      %v503 = vsel %vm498, %v487, 0
      %v506 = vsel %vm498, %v488, 0
      %v509 = vsel %vm498, %v489, 0
      %vm511 = vcmask 1043456
      %v513 = vsel %vm511, %v490, 0
      %515 = vmatprep.subr.bf16.mxu0 0
      %516 = vmatpush1.bf16.msra.mxu0 %v513
      %517 = vmatprep.subr.bf16.mxu0 0
      %518 = vmatpush1.bf16.msra.mxu0 0
      %519 = vmatprep.subr.bf16.mxu0 0
      %520 = vmatpush1.bf16.msra.mxu0 0
      %521 = vmatprep.subr.bf16.mxu0 0
      %522 = vmatpush1.bf16.msra.mxu0 0
      %523 = vmatprep.subr.bf16.mxu0 0
      %524 = vmatpush1.bf16.msra.mxu0 0
      %525 = vmatprep.subr.bf16.mxu0 0
      %526 = vmatpush1.bf16.msra.mxu0 0
      %527 = vmatprep.subr.bf16.mxu0 0
      %528 = vmatpush1.bf16.msra.mxu0 0
      %529 = vmatprep.subr.bf16.mxu0 0
      %530 = vmatpush1.bf16.msra.mxu0 0
      %531 = vmatprep.subr.bf16.mxu0 0
      %532 = vmatpush1.bf16.msra.mxu0 0
      %533 = vmatprep.subr.bf16.mxu0 0
      %534 = vmatpush1.bf16.msra.mxu0 0
      %535 = vmatprep.subr.bf16.mxu0 0
      %536 = vmatpush1.bf16.msra.mxu0 0
      %537 = vmatprep.subr.bf16.mxu0 0
      %538 = vmatpush1.bf16.msra.mxu0 0
      %539 = vmatprep.subr.bf16.mxu0 0
      %540 = vmatpush1.bf16.msra.mxu0 0
      %541 = vmatprep.subr.bf16.mxu0 0
      %542 = vmatpush1.bf16.msra.mxu0 0
      %543 = vmatprep.subr.bf16.mxu0 0
      %544 = vmatpush1.bf16.msra.mxu0 0
      %545 = vmatprep.subr.bf16.mxu0 0
      %546 = vmatpush1.bf16.msra.mxu0 0
      %547 = vmatprep.mubr.bf16.mxu0 0
      %548 = vmatmul.mubr.bf16.gmra.mrb[0].mxu0 %v500
      %v549 = vpop.f32.mrb[0].mxu0
      %v550 = vadd.f32 %v496, %v549
      %v551 = vpop.f32.mrb[0].mxu0
      %v552 = vpop.f32.mrb[0].mxu0
      %v553 = vadd.f32 %v496, %v552
      %v554 = vpop.f32.mrb[0].mxu0
      %555 = vmatprep.mubr.bf16.mxu0 0
      %556 = vmatmul.mubr.bf16.gmra.mrb[0].mxu0 %v503
      %v557 = vpop.f32.mrb[0].mxu0
      %v558 = vadd.f32 %v496, %v557
      %v559 = vpop.f32.mrb[0].mxu0
      %v560 = vpop.f32.mrb[0].mxu0
      %v561 = vadd.f32 %v496, %v560
      %v562 = vpop.f32.mrb[0].mxu0
      %563 = vmatprep.mubr.bf16.mxu0 0
      %564 = vmatmul.mubr.bf16.gmra.mrb[0].mxu0 %v506
      %v565 = vpop.f32.mrb[0].mxu0
      %v566 = vadd.f32 %v496, %v565
      %v567 = vpop.f32.mrb[0].mxu0
      %v568 = vpop.f32.mrb[0].mxu0
      %v569 = vadd.f32 %v496, %v568
      %v570 = vpop.f32.mrb[0].mxu0
      %571 = vmatprep.mubr.bf16.mxu0 0
      %572 = vmatmul.mubr.bf16.gmra.mrb[0].mxu0 %v509
      %v573 = vpop.f32.mrb[0].mxu0
      %v574 = vadd.f32 %v496, %v573
      %v575 = vpop.f32.mrb[0].mxu0
      %v576 = vpop.f32.mrb[0].mxu0
      %v577 = vadd.f32 %v496, %v576
      %v578 = vpop.f32.mrb[0].mxu0
      %579 = vdwg.mxu0
      %v580 = vpack.c.bf16 %v553, %v550
      %v581 = vpack.c.bf16 %v561, %v558
      %v582 = vpack.c.bf16 %v569, %v566
      %v583 = vpack.c.bf16 %v577, %v574
      %588 = vrot.lane.b32.xlu0 %v580, 120
      %v589 = vpop.permute.xlu0 %588
      %590 = vrot.lane.b32.xlu0 %v581, 120
      %v591 = vpop.permute.xlu0 %590
      %592 = vrot.lane.b32.xlu0 %v582, 120
      %v593 = vpop.permute.xlu0 %592
      %594 = vrot.lane.b32.xlu0 %v583, 120
      %v595 = vpop.permute.xlu0 %594
      %vm596 = vcmask 31744
      %v598 = vsel %vm596, %v580, 0
      %v601 = vsel %vm596, %v581, 0
      %v604 = vsel %vm596, %v582, 0
      %v607 = vsel %vm596, %v583, 0
      %v610 = vsel %vm596, %v589, 0
      %v613 = vsel %vm596, %v591, 0
      %v616 = vsel %vm596, %v593, 0
      %v619 = vsel %vm596, %v595, 0
      %621 = vmatprep.subr.bf16.mxu0 0
      %622 = vmatpush1.bf16.xpose.msra.mxu0 %v610
      %623 = vmatprep.subr.bf16.mxu0 0
      %624 = vmatpush1.bf16.xpose.msra.mxu0 %v613
      %625 = vmatprep.subr.bf16.mxu0 0
      %626 = vmatpush1.bf16.xpose.msra.mxu0 %v616
      %627 = vmatprep.subr.bf16.mxu0 0
      %628 = vmatpush1.bf16.xpose.msra.mxu0 %v619
      %629 = vmatprep.subr.bf16.mxu0 0
      %630 = vmatpush1.bf16.xpose.msra.mxu0 0
      %631 = vmatprep.subr.bf16.mxu0 0
      %632 = vmatpush1.bf16.xpose.msra.mxu0 0
      %633 = vmatprep.subr.bf16.mxu0 0
      %634 = vmatpush1.bf16.xpose.msra.mxu0 0
      %635 = vmatprep.subr.bf16.mxu0 0
      %636 = vmatpush1.bf16.xpose.msra.mxu0 0
      %637 = vmatprep.subr.bf16.mxu0 0
      %638 = vmatpush1.bf16.xpose.msra.mxu0 0
      %639 = vmatprep.subr.bf16.mxu0 0
      %640 = vmatpush1.bf16.xpose.msra.mxu0 0
      %641 = vmatprep.subr.bf16.mxu0 0
      %642 = vmatpush1.bf16.xpose.msra.mxu0 0
      %643 = vmatprep.subr.bf16.mxu0 0
      %644 = vmatpush1.bf16.xpose.msra.mxu0 0
      %645 = vmatprep.subr.bf16.mxu0 0
      %646 = vmatpush1.bf16.xpose.msra.mxu0 0
      %647 = vmatprep.subr.bf16.mxu0 0
      %648 = vmatpush1.bf16.xpose.msra.mxu0 0
      %649 = vmatprep.subr.bf16.mxu0 0
      %650 = vmatpush1.bf16.xpose.msra.mxu0 0
      %651 = vmatprep.subr.bf16.mxu0 0
      %652 = vmatpush1.bf16.xpose.msra.mxu0 0
      %653 = vmatprep.mubr.bf16.mxu0 0
      %654 = vmatmul.mubr.bf16.gmra.mrb[0].mxu0 %v598
      %v655 = vpop.f32.mrb[0].mxu0
      %v656 = vadd.f32 0.0, %v655
      %v657 = vpop.f32.mrb[0].mxu0
      %v658 = vpop.f32.mrb[0].mxu0
      %v659 = vadd.f32 0.0, %v658
      %v660 = vpop.f32.mrb[0].mxu0
      %661 = vmatprep.mubr.bf16.mxu0 0
      %662 = vmatmul.mubr.bf16.gmra.mrb[0].mxu0 %v601
      %v663 = vpop.f32.mrb[0].mxu0
      %v664 = vadd.f32 0.0, %v663
      %v665 = vpop.f32.mrb[0].mxu0
      %v666 = vpop.f32.mrb[0].mxu0
      %v667 = vadd.f32 0.0, %v666
      %v668 = vpop.f32.mrb[0].mxu0
      %669 = vmatprep.mubr.bf16.mxu0 0
      %670 = vmatmul.mubr.bf16.gmra.mrb[0].mxu0 %v604
      %v671 = vpop.f32.mrb[0].mxu0
      %v672 = vadd.f32 0.0, %v671
      %v673 = vpop.f32.mrb[0].mxu0
      %v674 = vpop.f32.mrb[0].mxu0
      %v675 = vadd.f32 0.0, %v674
      %v676 = vpop.f32.mrb[0].mxu0
      %677 = vmatprep.mubr.bf16.mxu0 0
      %678 = vmatmul.mubr.bf16.gmra.mrb[0].mxu0 %v607
      %v679 = vpop.f32.mrb[0].mxu0
      %v680 = vadd.f32 0.0, %v679
      %v681 = vpop.f32.mrb[0].mxu0
      %v682 = vpop.f32.mrb[0].mxu0
      %v683 = vadd.f32 0.0, %v682
      %v684 = vpop.f32.mrb[0].mxu0
      %685 = vdwg.mxu0
      %vm686 = vcmask 523264
      %v687 = vsel %vm686, %v656, -inf
      %688 = vmax.xlane.f32.xlu0 %v687
      %v689 = vpop.xlane.xlu0 %688
      %v690 = vsel %vm686, %v659, -inf
      %691 = vmax.xlane.f32.xlu0 %v690
      %v692 = vpop.xlane.xlu0 %691
      %v693 = vsel %vm686, %v664, -inf
      %694 = vmax.xlane.f32.xlu0 %v693
      %v695 = vpop.xlane.xlu0 %694
      %v696 = vsel %vm686, %v667, -inf
      %697 = vmax.xlane.f32.xlu0 %v696
      %v698 = vpop.xlane.xlu0 %697
      %v699 = vsel %vm686, %v672, -inf
      %700 = vmax.xlane.f32.xlu0 %v699
      %v701 = vpop.xlane.xlu0 %700
      %v702 = vsel %vm686, %v675, -inf
      %703 = vmax.xlane.f32.xlu0 %v702
      %v704 = vpop.xlane.xlu0 %703
      %v705 = vsel %vm686, %v680, -inf
      %706 = vmax.xlane.f32.xlu0 %v705
      %v707 = vpop.xlane.xlu0 %706
      %v708 = vsel %vm686, %v683, -inf
      %709 = vmax.xlane.f32.xlu0 %v708
      %v710 = vpop.xlane.xlu0 %709
      %v711 = vsub.f32 %v656, %v689
      %v712 = vsub.f32 %v659, %v692
      %v713 = vsub.f32 %v664, %v695
      %v714 = vsub.f32 %v667, %v698
      %v715 = vsub.f32 %v672, %v701
      %v716 = vsub.f32 %v675, %v704
      %v717 = vsub.f32 %v680, %v707
      %v718 = vsub.f32 %v683, %v710
      %v719 = vmul.f32 %v711, 1.442695
      %v720 = vpow.pop %v719
      %v721 = vmul.f32 %v712, 1.442695
      %v722 = vpow.pop %v721
      %v723 = vmul.f32 %v713, 1.442695
      %v724 = vpow.pop %v723
      %v725 = vmul.f32 %v714, 1.442695
      %v726 = vpow.pop %v725
      %v727 = vmul.f32 %v715, 1.442695
      %v728 = vpow.pop %v727
      %v729 = vmul.f32 %v716, 1.442695
      %v730 = vpow.pop %v729
      %v731 = vmul.f32 %v717, 1.442695
      %v732 = vpow.pop %v731
      %v733 = vmul.f32 %v718, 1.442695
      %v734 = vpow.pop %v733
      %v735 = vsel %vm686, %v720, 0.0
      %736 = vadd.xlane.f32.xlu0 %v735
      %v737 = vpop.xlane.xlu0 %736
      %v738 = vsel %vm686, %v722, 0.0
      %739 = vadd.xlane.f32.xlu0 %v738
      %v740 = vpop.xlane.xlu0 %739
      %v741 = vsel %vm686, %v724, 0.0
      %742 = vadd.xlane.f32.xlu0 %v741
      %v743 = vpop.xlane.xlu0 %742
      %v744 = vsel %vm686, %v726, 0.0
      %745 = vadd.xlane.f32.xlu0 %v744
      %v746 = vpop.xlane.xlu0 %745
      %v747 = vsel %vm686, %v728, 0.0
      %748 = vadd.xlane.f32.xlu0 %v747
      %v749 = vpop.xlane.xlu0 %748
      %v750 = vsel %vm686, %v730, 0.0
      %751 = vadd.xlane.f32.xlu0 %v750
      %v752 = vpop.xlane.xlu0 %751
      %v753 = vsel %vm686, %v732, 0.0
      %754 = vadd.xlane.f32.xlu0 %v753
      %v755 = vpop.xlane.xlu0 %754
      %v756 = vsel %vm686, %v734, 0.0
      %757 = vadd.xlane.f32.xlu0 %v756
      %v758 = vpop.xlane.xlu0 %757
      %v759 = vrcp.pop %v737
      %v760 = vmul.f32 1.0, %v759
      %v761 = vrcp.pop %v740
      %v762 = vmul.f32 1.0, %v761
      %v763 = vrcp.pop %v743
      %v764 = vmul.f32 1.0, %v763
      %v765 = vrcp.pop %v746
      %v766 = vmul.f32 1.0, %v765
      %v767 = vrcp.pop %v749
      %v768 = vmul.f32 1.0, %v767
      %v769 = vrcp.pop %v752
      %v770 = vmul.f32 1.0, %v769
      %v771 = vrcp.pop %v755
      %v772 = vmul.f32 1.0, %v771
      %v773 = vrcp.pop %v758
      %v774 = vmul.f32 1.0, %v773
      %v775 = vmul.f32 %v760, 0.35355338
      %v776 = vmul.f32 %v762, 0.35355338
      %v777 = vmul.f32 %v764, 0.35355338
      %v778 = vmul.f32 %v766, 0.35355338
      %v779 = vmul.f32 %v768, 0.35355338
      %v780 = vmul.f32 %v770, 0.35355338
      %v781 = vmul.f32 %v772, 0.35355338
      %v782 = vmul.f32 %v774, 0.35355338
      %v783 = vmul.f32 %v720, %v775
      %v784 = vmul.f32 %v722, %v776
      %v785 = vmul.f32 %v724, %v777
      %v786 = vmul.f32 %v726, %v778
      %v787 = vmul.f32 %v728, %v779
      %v788 = vmul.f32 %v730, %v780
      %v789 = vmul.f32 %v732, %v781
      %v790 = vmul.f32 %v734, %v782
      %v791 = vpack.c.bf16 %v784, %v783
      %v792 = vpack.c.bf16 %v786, %v785
      %v793 = vpack.c.bf16 %v788, %v787
      %v794 = vpack.c.bf16 %v790, %v789
      %795 = vrot.lane.b32.xlu0 %v580, 112
      %v796 = vpop.permute.xlu0 %795
      %797 = vrot.lane.b32.xlu0 %v581, 112
      %v798 = vpop.permute.xlu0 %797
      %799 = vrot.lane.b32.xlu0 %v582, 112
      %v800 = vpop.permute.xlu0 %799
      %801 = vrot.lane.b32.xlu0 %v583, 112
      %v802 = vpop.permute.xlu0 %801
      %v808 = vsel %vm686, %v791, 0
      %v811 = vsel %vm686, %v792, 0
      %v814 = vsel %vm686, %v793, 0
      %v817 = vsel %vm686, %v794, 0
      %819 = vmatprep.subr.bf16.mxu0 0
      %820 = vmatpush1.bf16.msra.mxu0 %v796
      %821 = vmatprep.subr.bf16.mxu0 0
      %822 = vmatpush1.bf16.msra.mxu0 %v798
      %823 = vmatprep.subr.bf16.mxu0 0
      %824 = vmatpush1.bf16.msra.mxu0 %v800
      %825 = vmatprep.subr.bf16.mxu0 0
      %826 = vmatpush1.bf16.msra.mxu0 %v802
      %827 = vmatprep.subr.bf16.mxu0 0
      %828 = vmatpush1.bf16.msra.mxu0 0
      %829 = vmatprep.subr.bf16.mxu0 0
      %830 = vmatpush1.bf16.msra.mxu0 0
      %831 = vmatprep.subr.bf16.mxu0 0
      %832 = vmatpush1.bf16.msra.mxu0 0
      %833 = vmatprep.subr.bf16.mxu0 0
      %834 = vmatpush1.bf16.msra.mxu0 0
      %835 = vmatprep.subr.bf16.mxu0 0
      %836 = vmatpush1.bf16.msra.mxu0 0
      %837 = vmatprep.subr.bf16.mxu0 0
      %838 = vmatpush1.bf16.msra.mxu0 0
      %839 = vmatprep.subr.bf16.mxu0 0
      %840 = vmatpush1.bf16.msra.mxu0 0
      %841 = vmatprep.subr.bf16.mxu0 0
      %842 = vmatpush1.bf16.msra.mxu0 0
      %843 = vmatprep.subr.bf16.mxu0 0
      %844 = vmatpush1.bf16.msra.mxu0 0
      %845 = vmatprep.subr.bf16.mxu0 0
      %846 = vmatpush1.bf16.msra.mxu0 0
      %847 = vmatprep.subr.bf16.mxu0 0
      %848 = vmatpush1.bf16.msra.mxu0 0
      %849 = vmatprep.subr.bf16.mxu0 0
      %850 = vmatpush1.bf16.msra.mxu0 0
      %851 = vmatprep.mubr.bf16.mxu0 0
      %852 = vmatmul.mubr.bf16.gmra.mrb[0].mxu0 %v808
      %v853 = vpop.f32.mrb[0].mxu0
      %v854 = vadd.f32 0.0, %v853
      %v855 = vpop.f32.mrb[0].mxu0
      %v856 = vpop.f32.mrb[0].mxu0
      %v857 = vadd.f32 0.0, %v856
      %v858 = vpop.f32.mrb[0].mxu0
      %859 = vmatprep.mubr.bf16.mxu0 0
      %860 = vmatmul.mubr.bf16.gmra.mrb[0].mxu0 %v811
      %v861 = vpop.f32.mrb[0].mxu0
      %v862 = vadd.f32 0.0, %v861
      %v863 = vpop.f32.mrb[0].mxu0
      %v864 = vpop.f32.mrb[0].mxu0
      %v865 = vadd.f32 0.0, %v864
      %v866 = vpop.f32.mrb[0].mxu0
      %867 = vmatprep.mubr.bf16.mxu0 0
      %868 = vmatmul.mubr.bf16.gmra.mrb[0].mxu0 %v814
      %v869 = vpop.f32.mrb[0].mxu0
      %v870 = vadd.f32 0.0, %v869
      %v871 = vpop.f32.mrb[0].mxu0
      %v872 = vpop.f32.mrb[0].mxu0
      %v873 = vadd.f32 0.0, %v872
      %v874 = vpop.f32.mrb[0].mxu0
      %875 = vmatprep.mubr.bf16.mxu0 0
      %876 = vmatmul.mubr.bf16.gmra.mrb[0].mxu0 %v817
      %v877 = vpop.f32.mrb[0].mxu0
      %v878 = vadd.f32 0.0, %v877
      %v879 = vpop.f32.mrb[0].mxu0
      %v880 = vpop.f32.mrb[0].mxu0
      %v881 = vadd.f32 0.0, %v880
      %v882 = vpop.f32.mrb[0].mxu0
      %883 = vdwg.mxu0
      %884 = vrot.lane.b32.xlu0 %v580, 124
      %v885 = vpop.permute.xlu0 %884
      %886 = vrot.lane.b32.xlu0 %v581, 124
      %v887 = vpop.permute.xlu0 %886
      %888 = vrot.lane.b32.xlu0 %v582, 124
      %v889 = vpop.permute.xlu0 %888
      %890 = vrot.lane.b32.xlu0 %v583, 124
      %v891 = vpop.permute.xlu0 %890
      %892 = vrot.lane.b32.xlu0 %v580, 116
      %v893 = vpop.permute.xlu0 %892
      %894 = vrot.lane.b32.xlu0 %v581, 116
      %v895 = vpop.permute.xlu0 %894
      %896 = vrot.lane.b32.xlu0 %v582, 116
      %v897 = vpop.permute.xlu0 %896
      %898 = vrot.lane.b32.xlu0 %v583, 116
      %v899 = vpop.permute.xlu0 %898
      %v901 = vsel %vm596, %v885, 0
      %v904 = vsel %vm596, %v887, 0
      %v907 = vsel %vm596, %v889, 0
      %v910 = vsel %vm596, %v891, 0
      %v913 = vsel %vm596, %v893, 0
      %v916 = vsel %vm596, %v895, 0
      %v919 = vsel %vm596, %v897, 0
      %v922 = vsel %vm596, %v899, 0
      %924 = vmatprep.subr.bf16.mxu0 0
      %925 = vmatpush1.bf16.xpose.msra.mxu0 %v913
      %926 = vmatprep.subr.bf16.mxu0 0
      %927 = vmatpush1.bf16.xpose.msra.mxu0 %v916
      %928 = vmatprep.subr.bf16.mxu0 0
      %929 = vmatpush1.bf16.xpose.msra.mxu0 %v919
      %930 = vmatprep.subr.bf16.mxu0 0
      %931 = vmatpush1.bf16.xpose.msra.mxu0 %v922
      %932 = vmatprep.subr.bf16.mxu0 0
      %933 = vmatpush1.bf16.xpose.msra.mxu0 0
      %934 = vmatprep.subr.bf16.mxu0 0
      %935 = vmatpush1.bf16.xpose.msra.mxu0 0
      %936 = vmatprep.subr.bf16.mxu0 0
      %937 = vmatpush1.bf16.xpose.msra.mxu0 0
      %938 = vmatprep.subr.bf16.mxu0 0
      %939 = vmatpush1.bf16.xpose.msra.mxu0 0
      %940 = vmatprep.subr.bf16.mxu0 0
      %941 = vmatpush1.bf16.xpose.msra.mxu0 0
      %942 = vmatprep.subr.bf16.mxu0 0
      %943 = vmatpush1.bf16.xpose.msra.mxu0 0
      %944 = vmatprep.subr.bf16.mxu0 0
      %945 = vmatpush1.bf16.xpose.msra.mxu0 0
      %946 = vmatprep.subr.bf16.mxu0 0
      %947 = vmatpush1.bf16.xpose.msra.mxu0 0
      %948 = vmatprep.subr.bf16.mxu0 0
      %949 = vmatpush1.bf16.xpose.msra.mxu0 0
      %950 = vmatprep.subr.bf16.mxu0 0
      %951 = vmatpush1.bf16.xpose.msra.mxu0 0
      %952 = vmatprep.subr.bf16.mxu0 0
      %953 = vmatpush1.bf16.xpose.msra.mxu0 0
      %954 = vmatprep.subr.bf16.mxu0 0
      %955 = vmatpush1.bf16.xpose.msra.mxu0 0
      %956 = vmatprep.mubr.bf16.mxu0 0
      %957 = vmatmul.mubr.bf16.gmra.mrb[0].mxu0 %v901
      %v958 = vpop.f32.mrb[0].mxu0
      %v959 = vadd.f32 0.0, %v958
      %v960 = vpop.f32.mrb[0].mxu0
      %v961 = vpop.f32.mrb[0].mxu0
      %v962 = vadd.f32 0.0, %v961
      %v963 = vpop.f32.mrb[0].mxu0
      %964 = vmatprep.mubr.bf16.mxu0 0
      %965 = vmatmul.mubr.bf16.gmra.mrb[0].mxu0 %v904
      %v966 = vpop.f32.mrb[0].mxu0
      %v967 = vadd.f32 0.0, %v966
      %v968 = vpop.f32.mrb[0].mxu0
      %v969 = vpop.f32.mrb[0].mxu0
      %v970 = vadd.f32 0.0, %v969
      %v971 = vpop.f32.mrb[0].mxu0
      %972 = vmatprep.mubr.bf16.mxu0 0
      %973 = vmatmul.mubr.bf16.gmra.mrb[0].mxu0 %v907
      %v974 = vpop.f32.mrb[0].mxu0
      %v975 = vadd.f32 0.0, %v974
      %v976 = vpop.f32.mrb[0].mxu0
      %v977 = vpop.f32.mrb[0].mxu0
      %v978 = vadd.f32 0.0, %v977
      %v979 = vpop.f32.mrb[0].mxu0
      %980 = vmatprep.mubr.bf16.mxu0 0
      %981 = vmatmul.mubr.bf16.gmra.mrb[0].mxu0 %v910
      %v982 = vpop.f32.mrb[0].mxu0
      %v983 = vadd.f32 0.0, %v982
      %v984 = vpop.f32.mrb[0].mxu0
      %v985 = vpop.f32.mrb[0].mxu0
      %v986 = vadd.f32 0.0, %v985
      %v987 = vpop.f32.mrb[0].mxu0
      %988 = vdwg.mxu0
      %v989 = vsel %vm686, %v959, -inf
      %990 = vmax.xlane.f32.xlu0 %v989
      %v991 = vpop.xlane.xlu0 %990
      %v992 = vsel %vm686, %v962, -inf
      %993 = vmax.xlane.f32.xlu0 %v992
      %v994 = vpop.xlane.xlu0 %993
      %v995 = vsel %vm686, %v967, -inf
      %996 = vmax.xlane.f32.xlu0 %v995
      %v997 = vpop.xlane.xlu0 %996
      %v998 = vsel %vm686, %v970, -inf
      %999 = vmax.xlane.f32.xlu0 %v998
      %v1000 = vpop.xlane.xlu0 %999
      %v1001 = vsel %vm686, %v975, -inf
      %1002 = vmax.xlane.f32.xlu0 %v1001
      %v1003 = vpop.xlane.xlu0 %1002
      %v1004 = vsel %vm686, %v978, -inf
      %1005 = vmax.xlane.f32.xlu0 %v1004
      %v1006 = vpop.xlane.xlu0 %1005
      %v1007 = vsel %vm686, %v983, -inf
      %1008 = vmax.xlane.f32.xlu0 %v1007
      %v1009 = vpop.xlane.xlu0 %1008
      %v1010 = vsel %vm686, %v986, -inf
      %1011 = vmax.xlane.f32.xlu0 %v1010
      %v1012 = vpop.xlane.xlu0 %1011
      %v1013 = vsub.f32 %v959, %v991
      %v1014 = vsub.f32 %v962, %v994
      %v1015 = vsub.f32 %v967, %v997
      %v1016 = vsub.f32 %v970, %v1000
      %v1017 = vsub.f32 %v975, %v1003
      %v1018 = vsub.f32 %v978, %v1006
      %v1019 = vsub.f32 %v983, %v1009
      %v1020 = vsub.f32 %v986, %v1012
      %v1021 = vmul.f32 %v1013, 1.442695
      %v1022 = vpow.pop %v1021
      %v1023 = vmul.f32 %v1014, 1.442695
      %v1024 = vpow.pop %v1023
      %v1025 = vmul.f32 %v1015, 1.442695
      %v1026 = vpow.pop %v1025
      %v1027 = vmul.f32 %v1016, 1.442695
      %v1028 = vpow.pop %v1027
      %v1029 = vmul.f32 %v1017, 1.442695
      %v1030 = vpow.pop %v1029
      %v1031 = vmul.f32 %v1018, 1.442695
      %v1032 = vpow.pop %v1031
      %v1033 = vmul.f32 %v1019, 1.442695
      %v1034 = vpow.pop %v1033
      %v1035 = vmul.f32 %v1020, 1.442695
      %v1036 = vpow.pop %v1035
      %v1037 = vsel %vm686, %v1022, 0.0
      %1038 = vadd.xlane.f32.xlu0 %v1037
      %v1039 = vpop.xlane.xlu0 %1038
      %v1040 = vsel %vm686, %v1024, 0.0
      %1041 = vadd.xlane.f32.xlu0 %v1040
      %v1042 = vpop.xlane.xlu0 %1041
      %v1043 = vsel %vm686, %v1026, 0.0
      %1044 = vadd.xlane.f32.xlu0 %v1043
      %v1045 = vpop.xlane.xlu0 %1044
      %v1046 = vsel %vm686, %v1028, 0.0
      %1047 = vadd.xlane.f32.xlu0 %v1046
      %v1048 = vpop.xlane.xlu0 %1047
      %v1049 = vsel %vm686, %v1030, 0.0
      %1050 = vadd.xlane.f32.xlu0 %v1049
      %v1051 = vpop.xlane.xlu0 %1050
      %v1052 = vsel %vm686, %v1032, 0.0
      %1053 = vadd.xlane.f32.xlu0 %v1052
      %v1054 = vpop.xlane.xlu0 %1053
      %v1055 = vsel %vm686, %v1034, 0.0
      %1056 = vadd.xlane.f32.xlu0 %v1055
      %v1057 = vpop.xlane.xlu0 %1056
      %v1058 = vsel %vm686, %v1036, 0.0
      %1059 = vadd.xlane.f32.xlu0 %v1058
      %v1060 = vpop.xlane.xlu0 %1059
      %v1061 = vrcp.pop %v1039
      %v1062 = vmul.f32 1.0, %v1061
      %v1063 = vrcp.pop %v1042
      %v1064 = vmul.f32 1.0, %v1063
      %v1065 = vrcp.pop %v1045
      %v1066 = vmul.f32 1.0, %v1065
      %v1067 = vrcp.pop %v1048
      %v1068 = vmul.f32 1.0, %v1067
      %v1069 = vrcp.pop %v1051
      %v1070 = vmul.f32 1.0, %v1069
      %v1071 = vrcp.pop %v1054
      %v1072 = vmul.f32 1.0, %v1071
      %v1073 = vrcp.pop %v1057
      %v1074 = vmul.f32 1.0, %v1073
      %v1075 = vrcp.pop %v1060
      %v1076 = vmul.f32 1.0, %v1075
      %v1077 = vmul.f32 %v1062, 0.35355338
      %v1078 = vmul.f32 %v1064, 0.35355338
      %v1079 = vmul.f32 %v1066, 0.35355338
      %v1080 = vmul.f32 %v1068, 0.35355338
      %v1081 = vmul.f32 %v1070, 0.35355338
      %v1082 = vmul.f32 %v1072, 0.35355338
      %v1083 = vmul.f32 %v1074, 0.35355338
      %v1084 = vmul.f32 %v1076, 0.35355338
      %v1085 = vmul.f32 %v1022, %v1077
      %v1086 = vmul.f32 %v1024, %v1078
      %v1087 = vmul.f32 %v1026, %v1079
      %v1088 = vmul.f32 %v1028, %v1080
      %v1089 = vmul.f32 %v1030, %v1081
      %v1090 = vmul.f32 %v1032, %v1082
      %v1091 = vmul.f32 %v1034, %v1083
      %v1092 = vmul.f32 %v1036, %v1084
      %v1093 = vpack.c.bf16 %v1086, %v1085
      %v1094 = vpack.c.bf16 %v1088, %v1087
      %v1095 = vpack.c.bf16 %v1090, %v1089
      %v1096 = vpack.c.bf16 %v1092, %v1091
      %1097 = vrot.lane.b32.xlu0 %v580, 108
      %v1098 = vpop.permute.xlu0 %1097
      %1099 = vrot.lane.b32.xlu0 %v581, 108
      %v1100 = vpop.permute.xlu0 %1099
      %1101 = vrot.lane.b32.xlu0 %v582, 108
      %v1102 = vpop.permute.xlu0 %1101
      %1103 = vrot.lane.b32.xlu0 %v583, 108
      %v1104 = vpop.permute.xlu0 %1103
      %v1110 = vsel %vm686, %v1093, 0
      %v1113 = vsel %vm686, %v1094, 0
      %v1116 = vsel %vm686, %v1095, 0
      %v1119 = vsel %vm686, %v1096, 0
      %1121 = vmatprep.subr.bf16.mxu0 0
      %1122 = vmatpush1.bf16.msra.mxu0 %v1098
      %1123 = vmatprep.subr.bf16.mxu0 0
      %1124 = vmatpush1.bf16.msra.mxu0 %v1100
      %1125 = vmatprep.subr.bf16.mxu0 0
      %1126 = vmatpush1.bf16.msra.mxu0 %v1102
      %1127 = vmatprep.subr.bf16.mxu0 0
      %1128 = vmatpush1.bf16.msra.mxu0 %v1104
      %1129 = vmatprep.subr.bf16.mxu0 0
      %1130 = vmatpush1.bf16.msra.mxu0 0
      %1131 = vmatprep.subr.bf16.mxu0 0
      %1132 = vmatpush1.bf16.msra.mxu0 0
      %1133 = vmatprep.subr.bf16.mxu0 0
      %1134 = vmatpush1.bf16.msra.mxu0 0
      %1135 = vmatprep.subr.bf16.mxu0 0
      %1136 = vmatpush1.bf16.msra.mxu0 0
      %1137 = vmatprep.subr.bf16.mxu0 0
      %1138 = vmatpush1.bf16.msra.mxu0 0
      %1139 = vmatprep.subr.bf16.mxu0 0
      %1140 = vmatpush1.bf16.msra.mxu0 0
      %1141 = vmatprep.subr.bf16.mxu0 0
      %1142 = vmatpush1.bf16.msra.mxu0 0
      %1143 = vmatprep.subr.bf16.mxu0 0
      %1144 = vmatpush1.bf16.msra.mxu0 0
      %1145 = vmatprep.subr.bf16.mxu0 0
      %1146 = vmatpush1.bf16.msra.mxu0 0
      %1147 = vmatprep.subr.bf16.mxu0 0
      %1148 = vmatpush1.bf16.msra.mxu0 0
      %1149 = vmatprep.subr.bf16.mxu0 0
      %1150 = vmatpush1.bf16.msra.mxu0 0
      %1151 = vmatprep.subr.bf16.mxu0 0
      %1152 = vmatpush1.bf16.msra.mxu0 0
      %1153 = vmatprep.mubr.bf16.mxu0 0
      %1154 = vmatmul.mubr.bf16.gmra.mrb[0].mxu0 %v1110
      %v1155 = vpop.f32.mrb[0].mxu0
      %v1156 = vadd.f32 0.0, %v1155
      %v1157 = vpop.f32.mrb[0].mxu0
      %v1158 = vpop.f32.mrb[0].mxu0
      %v1159 = vadd.f32 0.0, %v1158
      %v1160 = vpop.f32.mrb[0].mxu0
      %1161 = vmatprep.mubr.bf16.mxu0 0
      %1162 = vmatmul.mubr.bf16.gmra.mrb[0].mxu0 %v1113
      %v1163 = vpop.f32.mrb[0].mxu0
      %v1164 = vadd.f32 0.0, %v1163
      %v1165 = vpop.f32.mrb[0].mxu0
      %v1166 = vpop.f32.mrb[0].mxu0
      %v1167 = vadd.f32 0.0, %v1166
      %v1168 = vpop.f32.mrb[0].mxu0
      %1169 = vmatprep.mubr.bf16.mxu0 0
      %1170 = vmatmul.mubr.bf16.gmra.mrb[0].mxu0 %v1116
      %v1171 = vpop.f32.mrb[0].mxu0
      %v1172 = vadd.f32 0.0, %v1171
      %v1173 = vpop.f32.mrb[0].mxu0
      %v1174 = vpop.f32.mrb[0].mxu0
      %v1175 = vadd.f32 0.0, %v1174
      %v1176 = vpop.f32.mrb[0].mxu0
      %1177 = vmatprep.mubr.bf16.mxu0 0
      %1178 = vmatmul.mubr.bf16.gmra.mrb[0].mxu0 %v1119
      %v1179 = vpop.f32.mrb[0].mxu0
      %v1180 = vadd.f32 0.0, %v1179
      %v1181 = vpop.f32.mrb[0].mxu0
      %v1182 = vpop.f32.mrb[0].mxu0
      %v1183 = vadd.f32 0.0, %v1182
      %v1184 = vpop.f32.mrb[0].mxu0
      %1185 = vdwg.mxu0
      %1194 = vrot.lane.b32.xlu0 %v1156, 4
      %v1195 = vpop.permute.xlu0 %1194
      %1196 = vrot.lane.b32.xlu0 %v1159, 4
      %v1197 = vpop.permute.xlu0 %1196
      %1198 = vrot.lane.b32.xlu0 %v1164, 4
      %v1199 = vpop.permute.xlu0 %1198
      %1200 = vrot.lane.b32.xlu0 %v1167, 4
      %v1201 = vpop.permute.xlu0 %1200
      %1202 = vrot.lane.b32.xlu0 %v1172, 4
      %v1203 = vpop.permute.xlu0 %1202
      %1204 = vrot.lane.b32.xlu0 %v1175, 4
      %v1205 = vpop.permute.xlu0 %1204
      %1206 = vrot.lane.b32.xlu0 %v1180, 4
      %v1207 = vpop.permute.xlu0 %1206
      %1208 = vrot.lane.b32.xlu0 %v1183, 4
      %v1209 = vpop.permute.xlu0 %1208
      %v1218 = vsel %vm596, %v854, %v1195
      %v1219 = vsel %vm596, %v857, %v1197
      %v1220 = vsel %vm596, %v862, %v1199
      %v1221 = vsel %vm596, %v865, %v1201
      %v1222 = vsel %vm596, %v870, %v1203
      %v1223 = vsel %vm596, %v873, %v1205
      %v1224 = vsel %vm596, %v878, %v1207
      %v1225 = vsel %vm596, %v881, %v1209
      %v1226 = vpack.c.bf16 %v1219, %v1218
      %v1227 = vpack.c.bf16 %v1221, %v1220
      %v1228 = vpack.c.bf16 %v1223, %v1222
      %v1229 = vpack.c.bf16 %v1225, %v1224
      %v1230 = vld [vmem:[%s5] sm:$0xf]
      %v1231 = vld [vmem:[%s6] sm:$0x1]
      %v1233 = vlaneseq
      %v1234 = vshrl.u32 %v1233, 7
      %v1235 = vsub.s32 0, %v1234
      %v1236 = vrot.slane %v1231, %v1235
      %v1239 = vsel %vm498, %v1226, 0
      %v1242 = vsel %vm498, %v1227, 0
      %v1245 = vsel %vm498, %v1228, 0
      %v1248 = vsel %vm498, %v1229, 0
      %v1251 = vsel %vm511, %v1230, 0
      %1253 = vmatprep.subr.bf16.mxu0 0
      %1254 = vmatpush1.bf16.msra.mxu0 %v1251
      %1255 = vmatprep.subr.bf16.mxu0 0
      %1256 = vmatpush1.bf16.msra.mxu0 0
      %1257 = vmatprep.subr.bf16.mxu0 0
      %1258 = vmatpush1.bf16.msra.mxu0 0
      %1259 = vmatprep.subr.bf16.mxu0 0
      %1260 = vmatpush1.bf16.msra.mxu0 0
      %1261 = vmatprep.subr.bf16.mxu0 0
      %1262 = vmatpush1.bf16.msra.mxu0 0
      %1263 = vmatprep.subr.bf16.mxu0 0
      %1264 = vmatpush1.bf16.msra.mxu0 0
      %1265 = vmatprep.subr.bf16.mxu0 0
      %1266 = vmatpush1.bf16.msra.mxu0 0
      %1267 = vmatprep.subr.bf16.mxu0 0
      %1268 = vmatpush1.bf16.msra.mxu0 0
      %1269 = vmatprep.subr.bf16.mxu0 0
      %1270 = vmatpush1.bf16.msra.mxu0 0
      %1271 = vmatprep.subr.bf16.mxu0 0
      %1272 = vmatpush1.bf16.msra.mxu0 0
      %1273 = vmatprep.subr.bf16.mxu0 0
      %1274 = vmatpush1.bf16.msra.mxu0 0
      %1275 = vmatprep.subr.bf16.mxu0 0
      %1276 = vmatpush1.bf16.msra.mxu0 0
      %1277 = vmatprep.subr.bf16.mxu0 0
      %1278 = vmatpush1.bf16.msra.mxu0 0
      %1279 = vmatprep.subr.bf16.mxu0 0
      %1280 = vmatpush1.bf16.msra.mxu0 0
      %1281 = vmatprep.subr.bf16.mxu0 0
      %1282 = vmatpush1.bf16.msra.mxu0 0
      %1283 = vmatprep.subr.bf16.mxu0 0
      %1284 = vmatpush1.bf16.msra.mxu0 0
      %1285 = vmatprep.mubr.bf16.mxu0 0
      %1286 = vmatmul.mubr.bf16.gmra.mrb[0].mxu0 %v1239
      %v1287 = vpop.f32.mrb[0].mxu0
      %v1288 = vadd.f32 %v1236, %v1287
      %v1289 = vpop.f32.mrb[0].mxu0
      %v1290 = vpop.f32.mrb[0].mxu0
      %v1291 = vadd.f32 %v1236, %v1290
      %v1292 = vpop.f32.mrb[0].mxu0
      %1293 = vmatprep.mubr.bf16.mxu0 0
      %1294 = vmatmul.mubr.bf16.gmra.mrb[0].mxu0 %v1242
      %v1295 = vpop.f32.mrb[0].mxu0
      %v1296 = vadd.f32 %v1236, %v1295
      %v1297 = vpop.f32.mrb[0].mxu0
      %v1298 = vpop.f32.mrb[0].mxu0
      %v1299 = vadd.f32 %v1236, %v1298
      %v1300 = vpop.f32.mrb[0].mxu0
      %1301 = vmatprep.mubr.bf16.mxu0 0
      %1302 = vmatmul.mubr.bf16.gmra.mrb[0].mxu0 %v1245
      %v1303 = vpop.f32.mrb[0].mxu0
      %v1304 = vadd.f32 %v1236, %v1303
      %v1305 = vpop.f32.mrb[0].mxu0
      %v1306 = vpop.f32.mrb[0].mxu0
      %v1307 = vadd.f32 %v1236, %v1306
      %v1308 = vpop.f32.mrb[0].mxu0
      %1309 = vmatprep.mubr.bf16.mxu0 0
      %1310 = vmatmul.mubr.bf16.gmra.mrb[0].mxu0 %v1248
      %v1311 = vpop.f32.mrb[0].mxu0
      %v1312 = vadd.f32 %v1236, %v1311
      %v1313 = vpop.f32.mrb[0].mxu0
      %v1314 = vpop.f32.mrb[0].mxu0
      %v1315 = vadd.f32 %v1236, %v1314
      %v1316 = vpop.f32.mrb[0].mxu0
      %1317 = vdwg.mxu0
      %v1318 = vadd.f32 %v456, %v1288
      %v1319 = vadd.f32 %v459, %v1291
      %v1320 = vadd.f32 %v464, %v1296
      %v1321 = vadd.f32 %v467, %v1299
      %v1322 = vadd.f32 %v472, %v1304
      %v1323 = vadd.f32 %v475, %v1307
      %v1324 = vadd.f32 %v480, %v1312
      %v1325 = vadd.f32 %v483, %v1315
      %v1326 = vpack.c.bf16 %v1319, %v1318
      %v1327 = vpack.c.bf16 %v1321, %v1320
      %v1328 = vpack.c.bf16 %v1323, %v1322
      %v1329 = vpack.c.bf16 %v1325, %v1324
      %v1330 = vld [vmem:[%s7] sm:$0xf]
      %v1331 = vld [vmem:[%s8] sm:$0x1]
      %v1333 = vlaneseq
      %v1334 = vshrl.u32 %v1333, 7
      %v1335 = vsub.s32 0, %v1334
      %v1336 = vrot.slane %v1331, %v1335
      %v1339 = vsel %vm498, %v1326, 0
      %v1342 = vsel %vm498, %v1327, 0
      %v1345 = vsel %vm498, %v1328, 0
      %v1348 = vsel %vm498, %v1329, 0
      %v1351 = vsel %vm511, %v1330, 0
      %1353 = vmatprep.subr.bf16.mxu0 0
      %1354 = vmatpush1.bf16.msra.mxu0 %v1351
      %1355 = vmatprep.subr.bf16.mxu0 0
      %1356 = vmatpush1.bf16.msra.mxu0 0
      %1357 = vmatprep.subr.bf16.mxu0 0
      %1358 = vmatpush1.bf16.msra.mxu0 0
      %1359 = vmatprep.subr.bf16.mxu0 0
      %1360 = vmatpush1.bf16.msra.mxu0 0
      %1361 = vmatprep.subr.bf16.mxu0 0
      %1362 = vmatpush1.bf16.msra.mxu0 0
      %1363 = vmatprep.subr.bf16.mxu0 0
      %1364 = vmatpush1.bf16.msra.mxu0 0
      %1365 = vmatprep.subr.bf16.mxu0 0
      %1366 = vmatpush1.bf16.msra.mxu0 0
      %1367 = vmatprep.subr.bf16.mxu0 0
      %1368 = vmatpush1.bf16.msra.mxu0 0
      %1369 = vmatprep.subr.bf16.mxu0 0
      %1370 = vmatpush1.bf16.msra.mxu0 0
      %1371 = vmatprep.subr.bf16.mxu0 0
      %1372 = vmatpush1.bf16.msra.mxu0 0
      %1373 = vmatprep.subr.bf16.mxu0 0
      %1374 = vmatpush1.bf16.msra.mxu0 0
      %1375 = vmatprep.subr.bf16.mxu0 0
      %1376 = vmatpush1.bf16.msra.mxu0 0
      %1377 = vmatprep.subr.bf16.mxu0 0
      %1378 = vmatpush1.bf16.msra.mxu0 0
      %1379 = vmatprep.subr.bf16.mxu0 0
      %1380 = vmatpush1.bf16.msra.mxu0 0
      %1381 = vmatprep.subr.bf16.mxu0 0
      %1382 = vmatpush1.bf16.msra.mxu0 0
      %1383 = vmatprep.subr.bf16.mxu0 0
      %1384 = vmatpush1.bf16.msra.mxu0 0
      %1385 = vmatprep.mubr.bf16.mxu0 0
      %1386 = vmatmul.mubr.bf16.gmra.mrb[0].mxu0 %v1339
      %v1387 = vpop.f32.mrb[0].mxu0
      %v1388 = vadd.f32 %v1336, %v1387
      %v1389 = vpop.f32.mrb[0].mxu0
      %v1390 = vpop.f32.mrb[0].mxu0
      %v1391 = vadd.f32 %v1336, %v1390
      %v1392 = vpop.f32.mrb[0].mxu0
      %1393 = vmatprep.mubr.bf16.mxu0 0
      %1394 = vmatmul.mubr.bf16.gmra.mrb[0].mxu0 %v1342
      %v1395 = vpop.f32.mrb[0].mxu0
      %v1396 = vadd.f32 %v1336, %v1395
      %v1397 = vpop.f32.mrb[0].mxu0
      %v1398 = vpop.f32.mrb[0].mxu0
      %v1399 = vadd.f32 %v1336, %v1398
      %v1400 = vpop.f32.mrb[0].mxu0
      %1401 = vmatprep.mubr.bf16.mxu0 0
      %1402 = vmatmul.mubr.bf16.gmra.mrb[0].mxu0 %v1345
      %v1403 = vpop.f32.mrb[0].mxu0
      %v1404 = vadd.f32 %v1336, %v1403
      %v1405 = vpop.f32.mrb[0].mxu0
      %v1406 = vpop.f32.mrb[0].mxu0
      %v1407 = vadd.f32 %v1336, %v1406
      %v1408 = vpop.f32.mrb[0].mxu0
      %1409 = vmatprep.mubr.bf16.mxu0 0
      %1410 = vmatmul.mubr.bf16.gmra.mrb[0].mxu0 %v1348
      %v1411 = vpop.f32.mrb[0].mxu0
      %v1412 = vadd.f32 %v1336, %v1411
      %v1413 = vpop.f32.mrb[0].mxu0
      %v1414 = vpop.f32.mrb[0].mxu0
      %v1415 = vadd.f32 %v1336, %v1414
      %v1416 = vpop.f32.mrb[0].mxu0
      %1417 = vdwg.mxu0
      %1418 = vst [vmem:[%s334] sm:$0xff] %v1388
      %1419 = vst [vmem:[%s334 + $0x8] sm:$0xff] %v1391
      %1420 = vst [vmem:[%s334 + $0x10] sm:$0xff] %v1396
      %1421 = vst [vmem:[%s334 + $0x18] sm:$0xff] %v1399
      %1422 = vst [vmem:[%s334 + $0x20] sm:$0xff] %v1404
      %1423 = vst [vmem:[%s334 + $0x28] sm:$0xff] %v1407
      %1424 = vst [vmem:[%s334 + $0x30] sm:$0xff] %v1412
      %1425 = vst [vmem:[%s334 + $0x38] sm:$0xff] %v1415
      %s1426 = smul.u32 8, %s20
      %p1427 = scmp.lt.s32.totalorder %s1426, 15
      %s1428 = scalar_select %p1427, %s1426, 15
      %s1429 = smul.addr %s1428, 8
      %s1430 = scalar_lea.vmem %s9, %s1429
      // Predicated region
      $region57: #{ciatt_patch_block_forward.2} parent=55 // pred_check
        %p1431 = pneg %p232
      $region58: #{ciatt_patch_block_forward.2} parent=55 // pred_check_branch
        %1433 = sbr.rel (%p1431) target = $region60
      $region59: #{ciatt_patch_block_forward.2} parent=55 // pred_region
        %s1434 = smul.u32 8, %s20
      $region60: #{ciatt_patch_block_forward.2} parent=55 // pred_fallthru
        _
    $region56: #{ciatt_patch_block_forward.2} parent=5 // pred_fallthru
      _
    %p1435 = scmp.le.s32.totalorder 2, %s15
    // Predicated region
    $region61: #{ciatt_patch_block_forward.2} parent=5 // pred_check
      %p1436 = pneg %p1435
    $region62: #{ciatt_patch_block_forward.2} parent=5 // pred_check_branch
      %1438 = sbr.rel (%p1436) target = $region64
    $region63: #{ciatt_patch_block_forward.2} parent=5 // pred_region
      %s1439 = ssub.s32 %s15, 2
      // Predicated region
      $region65: #{ciatt_patch_block_forward.2} parent=63 // pred_check
        %p1440 = pneg %p238
      $region66: #{ciatt_patch_block_forward.2} parent=63 // pred_check_branch
        %1442 = sbr.rel (%p1440) target = $region68
      $region67: #{ciatt_patch_block_forward.2} parent=63 // pred_region
        %s1443 = smul.u32 8, %s21
        %p1444 = scmp.lt.s32.totalorder %s1443, 15
        %s1445 = scalar_select %p1444, %s1443, 15
        %s1446 = smul.addr %s1445, 8
        %s1447 = scalar_lea.vmem %s9, %s1446
      $region68: #{ciatt_patch_block_forward.2} parent=63 // pred_fallthru
        _
    $region64: #{ciatt_patch_block_forward.2} parent=5 // pred_fallthru
      _
  $region6: #{ciatt_patch_block_forward.2} parent=0 // loop_footer
    %s19 = sadd.s32 1, %s15
  $region7: #{ciatt_patch_block_forward.2} parent=0 // loop_footer_branch
    %14 = sbr.rel target = $region3
  $region8: #{ciatt_patch_block_forward.2} parent=0 // loop_exit
    _

// kernel: ciatt_patch_block_forward.3
$region0: #{ciatt_patch_block_forward.3}
  #allocation0 [shape = 'u32[]', space=smem, size = 0x4, offset = 0x4, fixed_abs, tag = 'smem constant byte address 0x4 - core index']
  #allocation1 [shape = 'u32[144,128]{1,0:T(1,128)}', space=vmem, size = 0x12000, scoped, tag = 'internal scratch']
  #allocation2 [shape = 'f32[8,644]{1,0:T(8,128)}', space=vmem, size = 0x6000, scoped, tag = 'scratch operand']
  #allocation3 [shape = 'f32[8,1106]{1,0:T(8,128)}', space=vmem, size = 0x9000, scoped, tag = 'scratch operand']
  #allocation4 [shape = 'f32[32,578]{1,0:T(8,128)}', space=vmem, size = 0x14000, scoped, tag = 'scratch operand']
  %s0 = inlined_call_operand.vmem [shape: f32[4,8,512], index: 0, kind: input, shape index: {}]
  %s1 = inlined_call_operand.vmem [shape: f32[16,8,1], index: 1, kind: input, shape index: {}]
  %s2 = inlined_call_operand.vmem [shape: f32[2,32,1], index: 2, kind: input, shape index: {}]
  %s3 = inlined_call_operand.vmem [shape: bf16[3,8,8], index: 3, kind: input, shape index: {}]
  %s4 = inlined_call_operand.vmem [shape: f32[8,2], index: 4, kind: input, shape index: {}]
  %s5 = inlined_call_operand.vmem [shape: f32[8,2], index: 5, kind: input, shape index: {}]
  %s6 = inlined_call_operand.vmem [shape: bf16[32,8], index: 6, kind: input, shape index: {}]
  %s7 = inlined_call_operand.vmem [shape: bf16[8,32], index: 7, kind: input, shape index: {}]
  %s8 = inlined_call_operand.vmem [shape: f32[25,8,1], index: 8, kind: input, shape index: {}]
  %s9 = inlined_call_operand.vmem [shape: f32[49,8,1], index: 9, kind: input, shape index: {}]
  %s10 = inlined_call_operand.vmem [shape: f32[9,32,1], index: 10, kind: input, shape index: {}]
  %s11 = inlined_call_operand.vmem [shape: f32[5,1,512], index: 11, kind: input, shape index: {}]
  %s12 = inlined_call_operand.vmem [shape: f32[7,1,512], index: 12, kind: input, shape index: {}]
  %s13 = inlined_call_operand.vmem [shape: f32[3,1,512], index: 13, kind: input, shape index: {}]
  %s14 = inlined_call_operand.vmem [shape: f32[4,8,512], index: 14, kind: output, shape index: {}]
  %s15 = sld [smem:[#allocation0]]
  $region89: #{ciatt_patch_block_forward.3} parent=0
    _
  %s17 = ssub.s32 1, %s15
  %s18 = scalar_select 0, %s17, %s15
  loop: start=0, step=1, limit=6
  $region2: #{ciatt_patch_block_forward.3} parent=0 // loop_pre_header
    _
  $region3: #{ciatt_patch_block_forward.3} parent=0 // loop_header
    %s20 = sphi 0, %s24
    %p21 = scmp.ge.s32.totalorder %s20, 6
    %s30 = sphi 0, %s32
    %s33 = sphi 0, %s30
    %s34 = sphi 0, %s33
    %s50 = sphi 0, %s34
    %s54 = sphi 0, %s54
    %s56 = sphi 0, %s54
    %s57 = sphi 0, %s56
    %s71 = sphi 0, %s57
    %s75 = sphi 0, %s75
    %s77 = sphi 0, %s75
    %s78 = sphi 0, %s77
    %s92 = sphi 0, %s78
    %s96 = sphi 0, %s96
    %s98 = sphi 0, %s96
    %s99 = sphi 0, %s98
    %s113 = sphi 0, %s99
    %s117 = sphi 0, %s117
    %s119 = sphi 0, %s117
    %s120 = sphi 0, %s119
    %s134 = sphi 0, %s120
    %s138 = sphi 0, %s138
    %s140 = sphi 0, %s138
    %s141 = sphi 0, %s140
    %s155 = sphi 0, %s141
    %s159 = sphi 0, %s159
    %s161 = sphi 0, %s159
    %s162 = sphi 0, %s161
    %s176 = sphi 0, %s162
    %s180 = sphi 0, %s180
    %s182 = sphi 0, %s180
    %s183 = sphi 0, %s182
    %s197 = sphi 0, %s183
    %s201 = sphi 0, %s201
    %s203 = sphi 0, %s201
    %s204 = sphi 0, %s203
    %s218 = sphi 0, %s204
    %s222 = sphi 0, %s222
    %s224 = sphi 0, %s222
    %s225 = sphi 0, %s224
    %s239 = sphi 0, %s225
    %s243 = sphi 0, %s243
    %s245 = sphi 0, %s243
    %s246 = sphi 0, %s245
    %s260 = sphi 0, %s246
    %s264 = sphi 0, %s264
    %s266 = sphi 0, %s264
    %s267 = sphi 0, %s266
    %s281 = sphi 0, %s267
    %s285 = sphi 0, %s285
    %s287 = sphi 0, %s285
    %s288 = sphi 0, %s287
    %s302 = sphi 0, %s288
    %s306 = sphi 0, %s306
    %s308 = sphi 0, %s306
    %s309 = sphi 0, %s308
    %s323 = sphi 0, %s309
    %s329 = sphi 0, %s331
    %s332 = sphi 0, %s329
    %s333 = sphi 0, %s332
    %s349 = sphi 0, %s333
  $region4: #{ciatt_patch_block_forward.3} parent=0 // loop_header_branch
    %23 = sbr.rel (%p21) target = $region8
  $region5: #{ciatt_patch_block_forward.3} parent=0 // loop_body
    %s25 = ssub.s32 %s20, 1
    %s26 = ssub.s32 %s20, 2
    %s27 = sadd.s32 %s20, 1
    %s28 = ssub.s32 %s20, %s27
    %p29 = scmp.eq.s32.totalorder %s28, 0
    %s31 = sadd.s32 %s30, 1
    %s32 = scalar_select %p29, %s30, %s31
    %p35 = pneg %p29
    %p36 = scmp.eq.s32.totalorder %s20, 3
    %p37 = por %p35, %p36
    %p38 = scmp.ne.s32.totalorder %s30, %s33
    %p39 = scmp.eq.s32.totalorder %s20, 0
    %p40 = por %p38, %p39
    %p41 = scmp.ne.s32.totalorder %s30, %s33
    %p42 = scmp.eq.s32.totalorder %s25, 3
    %p43 = por %p41, %p42
    %p44 = scmp.ne.s32.totalorder %s33, %s34
    %p45 = scmp.eq.s32.totalorder %s25, 0
    %p46 = por %p44, %p45
    %p47 = scmp.ne.s32.totalorder %s33, %s34
    %p48 = scmp.eq.s32.totalorder %s26, 3
    %p49 = por %p47, %p48
    %p51 = scmp.ne.s32.totalorder %s34, %s50
    %p52 = scmp.eq.s32.totalorder %s26, 0
    %p53 = por %p51, %p52
    %s55 = sadd.s32 %s54, 1
    %p58 = scmp.eq.s32.totalorder %s20, 3
    %p59 = scmp.ne.s32.totalorder %s54, %s56
    %p60 = scmp.eq.s32.totalorder %s20, 0
    %p61 = por %p59, %p60
    %p62 = scmp.ne.s32.totalorder %s54, %s56
    %p63 = scmp.eq.s32.totalorder %s25, 3
    %p64 = por %p62, %p63
    %p65 = scmp.ne.s32.totalorder %s56, %s57
    %p66 = scmp.eq.s32.totalorder %s25, 0
    %p67 = por %p65, %p66
    %p68 = scmp.ne.s32.totalorder %s56, %s57
    %p69 = scmp.eq.s32.totalorder %s26, 3
    %p70 = por %p68, %p69
    %p72 = scmp.ne.s32.totalorder %s57, %s71
    %p73 = scmp.eq.s32.totalorder %s26, 0
    %p74 = por %p72, %p73
    %s76 = sadd.s32 %s75, 1
    %p79 = scmp.eq.s32.totalorder %s20, 3
    %p80 = scmp.ne.s32.totalorder %s75, %s77
    %p81 = scmp.eq.s32.totalorder %s20, 0
    %p82 = por %p80, %p81
    %p83 = scmp.ne.s32.totalorder %s75, %s77
    %p84 = scmp.eq.s32.totalorder %s25, 3
    %p85 = por %p83, %p84
    %p86 = scmp.ne.s32.totalorder %s77, %s78
    %p87 = scmp.eq.s32.totalorder %s25, 0
    %p88 = por %p86, %p87
    %p89 = scmp.ne.s32.totalorder %s77, %s78
    %p90 = scmp.eq.s32.totalorder %s26, 3
    %p91 = por %p89, %p90
    %p93 = scmp.ne.s32.totalorder %s78, %s92
    %p94 = scmp.eq.s32.totalorder %s26, 0
    %p95 = por %p93, %p94
    %s97 = sadd.s32 %s96, 1
    %p100 = scmp.eq.s32.totalorder %s20, 3
    %p101 = scmp.ne.s32.totalorder %s96, %s98
    %p102 = scmp.eq.s32.totalorder %s20, 0
    %p103 = por %p101, %p102
    %p104 = scmp.ne.s32.totalorder %s96, %s98
    %p105 = scmp.eq.s32.totalorder %s25, 3
    %p106 = por %p104, %p105
    %p107 = scmp.ne.s32.totalorder %s98, %s99
    %p108 = scmp.eq.s32.totalorder %s25, 0
    %p109 = por %p107, %p108
    %p110 = scmp.ne.s32.totalorder %s98, %s99
    %p111 = scmp.eq.s32.totalorder %s26, 3
    %p112 = por %p110, %p111
    %p114 = scmp.ne.s32.totalorder %s99, %s113
    %p115 = scmp.eq.s32.totalorder %s26, 0
    %p116 = por %p114, %p115
    %s118 = sadd.s32 %s117, 1
    %p121 = scmp.eq.s32.totalorder %s20, 3
    %p122 = scmp.ne.s32.totalorder %s117, %s119
    %p123 = scmp.eq.s32.totalorder %s20, 0
    %p124 = por %p122, %p123
    %p125 = scmp.ne.s32.totalorder %s117, %s119
    %p126 = scmp.eq.s32.totalorder %s25, 3
    %p127 = por %p125, %p126
    %p128 = scmp.ne.s32.totalorder %s119, %s120
    %p129 = scmp.eq.s32.totalorder %s25, 0
    %p130 = por %p128, %p129
    %p131 = scmp.ne.s32.totalorder %s119, %s120
    %p132 = scmp.eq.s32.totalorder %s26, 3
    %p133 = por %p131, %p132
    %p135 = scmp.ne.s32.totalorder %s120, %s134
    %p136 = scmp.eq.s32.totalorder %s26, 0
    %p137 = por %p135, %p136
    %s139 = sadd.s32 %s138, 1
    %p142 = scmp.eq.s32.totalorder %s20, 3
    %p143 = scmp.ne.s32.totalorder %s138, %s140
    %p144 = scmp.eq.s32.totalorder %s20, 0
    %p145 = por %p143, %p144
    %p146 = scmp.ne.s32.totalorder %s138, %s140
    %p147 = scmp.eq.s32.totalorder %s25, 3
    %p148 = por %p146, %p147
    %p149 = scmp.ne.s32.totalorder %s140, %s141
    %p150 = scmp.eq.s32.totalorder %s25, 0
    %p151 = por %p149, %p150
    %p152 = scmp.ne.s32.totalorder %s140, %s141
    %p153 = scmp.eq.s32.totalorder %s26, 3
    %p154 = por %p152, %p153
    %p156 = scmp.ne.s32.totalorder %s141, %s155
    %p157 = scmp.eq.s32.totalorder %s26, 0
    %p158 = por %p156, %p157
    %s160 = sadd.s32 %s159, 1
    %p163 = scmp.eq.s32.totalorder %s20, 3
    %p164 = scmp.ne.s32.totalorder %s159, %s161
    %p165 = scmp.eq.s32.totalorder %s20, 0
    %p166 = por %p164, %p165
    %p167 = scmp.ne.s32.totalorder %s159, %s161
    %p168 = scmp.eq.s32.totalorder %s25, 3
    %p169 = por %p167, %p168
    %p170 = scmp.ne.s32.totalorder %s161, %s162
    %p171 = scmp.eq.s32.totalorder %s25, 0
    %p172 = por %p170, %p171
    %p173 = scmp.ne.s32.totalorder %s161, %s162
    %p174 = scmp.eq.s32.totalorder %s26, 3
    %p175 = por %p173, %p174
    %p177 = scmp.ne.s32.totalorder %s162, %s176
    %p178 = scmp.eq.s32.totalorder %s26, 0
    %p179 = por %p177, %p178
    %s181 = sadd.s32 %s180, 1
    %p184 = scmp.eq.s32.totalorder %s20, 3
    %p185 = scmp.ne.s32.totalorder %s180, %s182
    %p186 = scmp.eq.s32.totalorder %s20, 0
    %p187 = por %p185, %p186
    %p188 = scmp.ne.s32.totalorder %s180, %s182
    %p189 = scmp.eq.s32.totalorder %s25, 3
    %p190 = por %p188, %p189
    %p191 = scmp.ne.s32.totalorder %s182, %s183
    %p192 = scmp.eq.s32.totalorder %s25, 0
    %p193 = por %p191, %p192
    %p194 = scmp.ne.s32.totalorder %s182, %s183
    %p195 = scmp.eq.s32.totalorder %s26, 3
    %p196 = por %p194, %p195
    %p198 = scmp.ne.s32.totalorder %s183, %s197
    %p199 = scmp.eq.s32.totalorder %s26, 0
    %p200 = por %p198, %p199
    %s202 = sadd.s32 %s201, 1
    %p205 = scmp.eq.s32.totalorder %s20, 3
    %p206 = scmp.ne.s32.totalorder %s201, %s203
    %p207 = scmp.eq.s32.totalorder %s20, 0
    %p208 = por %p206, %p207
    %p209 = scmp.ne.s32.totalorder %s201, %s203
    %p210 = scmp.eq.s32.totalorder %s25, 3
    %p211 = por %p209, %p210
    %p212 = scmp.ne.s32.totalorder %s203, %s204
    %p213 = scmp.eq.s32.totalorder %s25, 0
    %p214 = por %p212, %p213
    %p215 = scmp.ne.s32.totalorder %s203, %s204
    %p216 = scmp.eq.s32.totalorder %s26, 3
    %p217 = por %p215, %p216
    %p219 = scmp.ne.s32.totalorder %s204, %s218
    %p220 = scmp.eq.s32.totalorder %s26, 0
    %p221 = por %p219, %p220
    %s223 = sadd.s32 %s222, 1
    %p226 = scmp.eq.s32.totalorder %s20, 3
    %p227 = scmp.ne.s32.totalorder %s222, %s224
    %p228 = scmp.eq.s32.totalorder %s20, 0
    %p229 = por %p227, %p228
    %p230 = scmp.ne.s32.totalorder %s222, %s224
    %p231 = scmp.eq.s32.totalorder %s25, 3
    %p232 = por %p230, %p231
    %p233 = scmp.ne.s32.totalorder %s224, %s225
    %p234 = scmp.eq.s32.totalorder %s25, 0
    %p235 = por %p233, %p234
    %p236 = scmp.ne.s32.totalorder %s224, %s225
    %p237 = scmp.eq.s32.totalorder %s26, 3
    %p238 = por %p236, %p237
    %p240 = scmp.ne.s32.totalorder %s225, %s239
    %p241 = scmp.eq.s32.totalorder %s26, 0
    %p242 = por %p240, %p241
    %s244 = sadd.s32 %s243, 1
    %p247 = scmp.eq.s32.totalorder %s20, 3
    %p248 = scmp.ne.s32.totalorder %s243, %s245
    %p249 = scmp.eq.s32.totalorder %s20, 0
    %p250 = por %p248, %p249
    %p251 = scmp.ne.s32.totalorder %s243, %s245
    %p252 = scmp.eq.s32.totalorder %s25, 3
    %p253 = por %p251, %p252
    %p254 = scmp.ne.s32.totalorder %s245, %s246
    %p255 = scmp.eq.s32.totalorder %s25, 0
    %p256 = por %p254, %p255
    %p257 = scmp.ne.s32.totalorder %s245, %s246
    %p258 = scmp.eq.s32.totalorder %s26, 3
    %p259 = por %p257, %p258
    %p261 = scmp.ne.s32.totalorder %s246, %s260
    %p262 = scmp.eq.s32.totalorder %s26, 0
    %p263 = por %p261, %p262
    %s265 = sadd.s32 %s264, 1
    %p268 = scmp.eq.s32.totalorder %s20, 3
    %p269 = scmp.ne.s32.totalorder %s264, %s266
    %p270 = scmp.eq.s32.totalorder %s20, 0
    %p271 = por %p269, %p270
    %p272 = scmp.ne.s32.totalorder %s264, %s266
    %p273 = scmp.eq.s32.totalorder %s25, 3
    %p274 = por %p272, %p273
    %p275 = scmp.ne.s32.totalorder %s266, %s267
    %p276 = scmp.eq.s32.totalorder %s25, 0
    %p277 = por %p275, %p276
    %p278 = scmp.ne.s32.totalorder %s266, %s267
    %p279 = scmp.eq.s32.totalorder %s26, 3
    %p280 = por %p278, %p279
    %p282 = scmp.ne.s32.totalorder %s267, %s281
    %p283 = scmp.eq.s32.totalorder %s26, 0
    %p284 = por %p282, %p283
    %s286 = sadd.s32 %s285, 1
    %p289 = scmp.eq.s32.totalorder %s20, 3
    %p290 = scmp.ne.s32.totalorder %s285, %s287
    %p291 = scmp.eq.s32.totalorder %s20, 0
    %p292 = por %p290, %p291
    %p293 = scmp.ne.s32.totalorder %s285, %s287
    %p294 = scmp.eq.s32.totalorder %s25, 3
    %p295 = por %p293, %p294
    %p296 = scmp.ne.s32.totalorder %s287, %s288
    %p297 = scmp.eq.s32.totalorder %s25, 0
    %p298 = por %p296, %p297
    %p299 = scmp.ne.s32.totalorder %s287, %s288
    %p300 = scmp.eq.s32.totalorder %s26, 3
    %p301 = por %p299, %p300
    %p303 = scmp.ne.s32.totalorder %s288, %s302
    %p304 = scmp.eq.s32.totalorder %s26, 0
    %p305 = por %p303, %p304
    %s307 = sadd.s32 %s306, 1
    %p310 = scmp.eq.s32.totalorder %s20, 3
    %p311 = scmp.ne.s32.totalorder %s306, %s308
    %p312 = scmp.eq.s32.totalorder %s20, 0
    %p313 = por %p311, %p312
    %p314 = scmp.ne.s32.totalorder %s306, %s308
    %p315 = scmp.eq.s32.totalorder %s25, 3
    %p316 = por %p314, %p315
    %p317 = scmp.ne.s32.totalorder %s308, %s309
    %p318 = scmp.eq.s32.totalorder %s25, 0
    %p319 = por %p317, %p318
    %p320 = scmp.ne.s32.totalorder %s308, %s309
    %p321 = scmp.eq.s32.totalorder %s26, 3
    %p322 = por %p320, %p321
    %p324 = scmp.ne.s32.totalorder %s309, %s323
    %p325 = scmp.eq.s32.totalorder %s26, 0
    %p326 = por %p324, %p325
    %s327 = ssub.s32 %s20, %s27
    %p328 = scmp.eq.s32.totalorder %s327, 0
    %s330 = sadd.s32 %s329, 1
    %s331 = scalar_select %p328, %s329, %s330
    %p334 = pneg %p328
    %p335 = scmp.eq.s32.totalorder %s20, 3
    %p336 = por %p334, %p335
    %p337 = scmp.ne.s32.totalorder %s329, %s332
    %p338 = scmp.eq.s32.totalorder %s20, 0
    %p339 = por %p337, %p338
    %p340 = scmp.ne.s32.totalorder %s329, %s332
    %p341 = scmp.eq.s32.totalorder %s25, 3
    %p342 = por %p340, %p341
    %p343 = scmp.ne.s32.totalorder %s332, %s333
    %p344 = scmp.eq.s32.totalorder %s25, 0
    %p345 = por %p343, %p344
    %p346 = scmp.ne.s32.totalorder %s332, %s333
    %p347 = scmp.eq.s32.totalorder %s26, 3
    %p348 = por %p346, %p347
    %p350 = scmp.ne.s32.totalorder %s333, %s349
    %p351 = scmp.eq.s32.totalorder %s26, 0
    %p352 = por %p350, %p351
    %p353 = scmp.le.s32.totalorder 1, %s20
    %p354 = scmp.lt.s32.totalorder %s20, 5
    %p355 = pnand %p353, %p354
    %p356 = pneg %p355
    // Predicated region
    $region9: #{ciatt_patch_block_forward.3} parent=5 // pred_check
      _
    $region10: #{ciatt_patch_block_forward.3} parent=5 // pred_check_branch
      %358 = sbr.rel (%p355) target = $region12
    $region11: #{ciatt_patch_block_forward.3} parent=5 // pred_region
      %s359 = ssub.s32 %s20, 1
      // Predicated region
      $region13: #{ciatt_patch_block_forward.3} parent=11 // pred_check
        %p360 = pneg %p67
      $region14: #{ciatt_patch_block_forward.3} parent=11 // pred_check_branch
        %362 = sbr.rel (%p360) target = $region16
      $region15: #{ciatt_patch_block_forward.3} parent=11 // pred_region
        _
      $region16: #{ciatt_patch_block_forward.3} parent=11 // pred_fallthru
        _
      // Predicated region
      $region17: #{ciatt_patch_block_forward.3} parent=11 // pred_check
        %p363 = pneg %p88
      $region18: #{ciatt_patch_block_forward.3} parent=11 // pred_check_branch
        %365 = sbr.rel (%p363) target = $region20
      $region19: #{ciatt_patch_block_forward.3} parent=11 // pred_region
        _
      $region20: #{ciatt_patch_block_forward.3} parent=11 // pred_fallthru
        _
      // Predicated region
      $region21: #{ciatt_patch_block_forward.3} parent=11 // pred_check
        %p366 = pneg %p109
      $region22: #{ciatt_patch_block_forward.3} parent=11 // pred_check_branch
        %368 = sbr.rel (%p366) target = $region24
      $region23: #{ciatt_patch_block_forward.3} parent=11 // pred_region
        _
      $region24: #{ciatt_patch_block_forward.3} parent=11 // pred_fallthru
        _
      // Predicated region
      $region25: #{ciatt_patch_block_forward.3} parent=11 // pred_check
        %p369 = pneg %p130
      $region26: #{ciatt_patch_block_forward.3} parent=11 // pred_check_branch
        %371 = sbr.rel (%p369) target = $region28
      $region27: #{ciatt_patch_block_forward.3} parent=11 // pred_region
        _
      $region28: #{ciatt_patch_block_forward.3} parent=11 // pred_fallthru
        _
      // Predicated region
      $region29: #{ciatt_patch_block_forward.3} parent=11 // pred_check
        %p372 = pneg %p151
      $region30: #{ciatt_patch_block_forward.3} parent=11 // pred_check_branch
        %374 = sbr.rel (%p372) target = $region32
      $region31: #{ciatt_patch_block_forward.3} parent=11 // pred_region
        _
      $region32: #{ciatt_patch_block_forward.3} parent=11 // pred_fallthru
        _
      // Predicated region
      $region33: #{ciatt_patch_block_forward.3} parent=11 // pred_check
        %p375 = pneg %p172
      $region34: #{ciatt_patch_block_forward.3} parent=11 // pred_check_branch
        %377 = sbr.rel (%p375) target = $region36
      $region35: #{ciatt_patch_block_forward.3} parent=11 // pred_region
        _
      $region36: #{ciatt_patch_block_forward.3} parent=11 // pred_fallthru
        _
      // Predicated region
      $region37: #{ciatt_patch_block_forward.3} parent=11 // pred_check
        %p378 = pneg %p193
      $region38: #{ciatt_patch_block_forward.3} parent=11 // pred_check_branch
        %380 = sbr.rel (%p378) target = $region40
      $region39: #{ciatt_patch_block_forward.3} parent=11 // pred_region
        _
      $region40: #{ciatt_patch_block_forward.3} parent=11 // pred_fallthru
        _
      // Predicated region
      $region41: #{ciatt_patch_block_forward.3} parent=11 // pred_check
        %p381 = pneg %p214
      $region42: #{ciatt_patch_block_forward.3} parent=11 // pred_check_branch
        %383 = sbr.rel (%p381) target = $region44
      $region43: #{ciatt_patch_block_forward.3} parent=11 // pred_region
        _
      $region44: #{ciatt_patch_block_forward.3} parent=11 // pred_fallthru
        _
      // Predicated region
      $region45: #{ciatt_patch_block_forward.3} parent=11 // pred_check
        %p384 = pneg %p235
      $region46: #{ciatt_patch_block_forward.3} parent=11 // pred_check_branch
        %386 = sbr.rel (%p384) target = $region48
      $region47: #{ciatt_patch_block_forward.3} parent=11 // pred_region
        _
      $region48: #{ciatt_patch_block_forward.3} parent=11 // pred_fallthru
        _
      // Predicated region
      $region49: #{ciatt_patch_block_forward.3} parent=11 // pred_check
        %p387 = pneg %p256
      $region50: #{ciatt_patch_block_forward.3} parent=11 // pred_check_branch
        %389 = sbr.rel (%p387) target = $region52
      $region51: #{ciatt_patch_block_forward.3} parent=11 // pred_region
        _
      $region52: #{ciatt_patch_block_forward.3} parent=11 // pred_fallthru
        _
      // Predicated region
      $region53: #{ciatt_patch_block_forward.3} parent=11 // pred_check
        %p390 = pneg %p277
      $region54: #{ciatt_patch_block_forward.3} parent=11 // pred_check_branch
        %392 = sbr.rel (%p390) target = $region56
      $region55: #{ciatt_patch_block_forward.3} parent=11 // pred_region
        _
      $region56: #{ciatt_patch_block_forward.3} parent=11 // pred_fallthru
        _
      // Predicated region
      $region57: #{ciatt_patch_block_forward.3} parent=11 // pred_check
        %p393 = pneg %p298
      $region58: #{ciatt_patch_block_forward.3} parent=11 // pred_check_branch
        %395 = sbr.rel (%p393) target = $region60
      $region59: #{ciatt_patch_block_forward.3} parent=11 // pred_region
        _
      $region60: #{ciatt_patch_block_forward.3} parent=11 // pred_fallthru
        _
      // Predicated region
      $region61: #{ciatt_patch_block_forward.3} parent=11 // pred_check
        %p396 = pneg %p319
      $region62: #{ciatt_patch_block_forward.3} parent=11 // pred_check_branch
        %398 = sbr.rel (%p396) target = $region64
      $region63: #{ciatt_patch_block_forward.3} parent=11 // pred_region
        _
      $region64: #{ciatt_patch_block_forward.3} parent=11 // pred_fallthru
        _
    $region12: #{ciatt_patch_block_forward.3} parent=5 // pred_fallthru
      _
    %p399 = scmp.lt.s32.totalorder %s20, 4
    // Predicated region
    $region65: #{ciatt_patch_block_forward.3} parent=5 // pred_check
      %p400 = pneg %p399
    $region66: #{ciatt_patch_block_forward.3} parent=5 // pred_check_branch
      %402 = sbr.rel (%p400) target = $region68
    $region67: #{ciatt_patch_block_forward.3} parent=5 // pred_region
      // Predicated region
      $region69: #{ciatt_patch_block_forward.3} parent=67 // pred_check
        %p403 = pneg %p40
      $region70: #{ciatt_patch_block_forward.3} parent=67 // pred_check_branch
        %405 = sbr.rel (%p403) target = $region72
      $region71: #{ciatt_patch_block_forward.3} parent=67 // pred_region
        %p406 = scmp.lt.s32.totalorder %s20, 3
        %s407 = scalar_select %p406, %s20, 3
        %s408 = smul.addr %s407, 4
        %s409 = smul.addr %s408, 8
        %s410 = scalar_lea.vmem %s0, %s409
      $region72: #{ciatt_patch_block_forward.3} parent=67 // pred_fallthru
        _
    $region68: #{ciatt_patch_block_forward.3} parent=5 // pred_fallthru
      _
    %p411 = scmp.le.s32.totalorder 1, %s20
    %p412 = scmp.lt.s32.totalorder %s20, 5
    %p413 = pnand %p411, %p412
    %p414 = pneg %p413
    // Predicated region
    $region73: #{ciatt_patch_block_forward.3} parent=5 // pred_check
      _
    $region74: #{ciatt_patch_block_forward.3} parent=5 // pred_check_branch
      %416 = sbr.rel (%p413) target = $region76
    $region75: #{ciatt_patch_block_forward.3} parent=5 // pred_region
      %s417 = ssub.s32 %s20, 1
      %p418 = scmp.lt.s32.totalorder %s25, 3
      %s419 = scalar_select %p418, %s25, 3
      %s420 = smul.addr %s419, 4
      %s421 = smul.addr %s420, 8
      %s422 = scalar_lea.vmem %s0, %s421
      %p423 = pneg %p46
      %p424 = pneg %p43
      %p425 = pneg %p67
      %p426 = pneg %p64
      %p427 = pneg %p88
      %p428 = pneg %p85
      %p429 = pneg %p109
      %p430 = pneg %p106
      %p431 = pneg %p130
      %p432 = pneg %p127
      %p433 = pneg %p151
      %p434 = pneg %p148
      %p435 = pneg %p172
      %p436 = pneg %p169
      %p437 = pneg %p193
      %p438 = pneg %p190
      %p439 = pneg %p214
      %p440 = pneg %p211
      %p441 = pneg %p235
      %p442 = pneg %p232
      %p443 = pneg %p256
      %p444 = pneg %p253
      %p445 = pneg %p277
      %p446 = pneg %p274
      %p447 = pneg %p298
      %p448 = pneg %p295
      %p449 = pneg %p319
      %p450 = pneg %p316
      %p451 = pneg %p345
      %p452 = pneg %p342
      %p453 = scmp.lt.s32.totalorder %s25, 3
      %s454 = scalar_select %p453, %s25, 3
      %s455 = smul.addr %s454, 4
      %s456 = smul.addr %s455, 8
      %s457 = scalar_lea.vmem %s14, %s456
      %p458 = scmp.lt.s32.totalorder %s25, 3
      %s459 = scalar_select %p458, %s25, 3
      %s460 = smul.addr %s459, 4
      %s461 = smul.addr %s460, 8
      %s462 = scalar_lea.vmem %s0, %s461
      %p463 = scmp.lt.s32.totalorder %s25, 3
      %s464 = scalar_select %p463, %s25, 3
      %s465 = smul.addr %s464, 4
      %s466 = smul.addr %s465, 8
      %s467 = scalar_lea.vmem %s14, %s466
      %v469 = vld [vmem:[%s462] sm:$0xff]
      %v470 = vld [vmem:[%s462 + $0x8] sm:$0xff]
      %v471 = vld [vmem:[%s462 + $0x10] sm:$0xff]
      %v472 = vld [vmem:[%s462 + $0x18] sm:$0xff]
      %v473 = vld [vmem:[%s1] sm:$0xff]
      %s474 = scalar_lea.vmem %s1, 8
      %v475 = vld [vmem:[%s474] sm:$0xff]
      %v476 = vadd.f32 %v469, %v470
      %v477 = vadd.f32 %v476, %v471
      %v478 = vadd.f32 %v477, %v472
      %479 = vadd.xlane.f32.xlu0 %v478
      %v480 = vpop.xlane.xlu0 %479
      %v481 = vrot.slane %v480, 4
      %v482 = vadd.f32 %v480, %v481
      %v483 = vrot.slane %v482, 2
      %v484 = vadd.f32 %v482, %v483
      %v485 = vrot.slane %v484, 1
      %v486 = vadd.f32 %v484, %v485
      %s487 = vtos %v486
      %v488 = vstv %s487
      %v489 = vmul.f32 %v488, 0.00024414063
      %v490 = vsub.f32 %v469, %v489
      %v491 = vsub.f32 %v470, %v489
      %v492 = vsub.f32 %v471, %v489
      %v493 = vsub.f32 %v472, %v489
      %v494 = vmul.f32 %v490, %v490
      %v495 = vmul.f32 %v491, %v491
      %v496 = vmul.f32 %v492, %v492
      %v497 = vmul.f32 %v493, %v493
      %v498 = vadd.f32 %v494, %v495
      %v499 = vadd.f32 %v498, %v496
      %v500 = vadd.f32 %v499, %v497
      %501 = vadd.xlane.f32.xlu0 %v500
      %v502 = vpop.xlane.xlu0 %501
      %v503 = vrot.slane %v502, 4
      %v504 = vadd.f32 %v502, %v503
      %v505 = vrot.slane %v504, 2
      %v506 = vadd.f32 %v504, %v505
      %v507 = vrot.slane %v506, 1
      %v508 = vadd.f32 %v506, %v507
      %s509 = vtos %v508
      %v510 = vstv %s509
      %v511 = vmul.f32 %v510, 0.00024414063
      %v512 = vadd.f32 %v511, 1e-05
      %v513 = vrsqrt.pop %v512
      %v514 = vmul.f32 %v490, %v513
      %v515 = vmul.f32 %v491, %v513
      %v516 = vmul.f32 %v492, %v513
      %v517 = vmul.f32 %v493, %v513
      %519 = vset.pattern.permute.xlu0 0
      %520 = vperm.xlu0 %519, %v473
      %v521 = vpop.permute.xlu0 %520
      %v523 = vmul.f32 %v514, %v521
      %v524 = vmul.f32 %v515, %v521
      %v525 = vmul.f32 %v516, %v521
      %v526 = vmul.f32 %v517, %v521
      %528 = vset.pattern.permute.xlu0 0
      %529 = vperm.xlu0 %528, %v475
      %v530 = vpop.permute.xlu0 %529
      %v532 = vadd.f32 %v523, %v530
      %v533 = vadd.f32 %v524, %v530
      %v534 = vadd.f32 %v525, %v530
      %v535 = vadd.f32 %v526, %v530
      %s536 = scalar_lea.vmem %s1, 16
      %v537 = vld [vmem:[%s536] sm:$0xff]
      %539 = vset.pattern.permute.xlu0 0
      %540 = vperm.xlu0 %539, %v537
      %v541 = vpop.permute.xlu0 %540
      %v543 = vmul.f32 %v532, %v541
      %v544 = vmul.f32 %v533, %v541
      %v545 = vmul.f32 %v534, %v541
      %v546 = vmul.f32 %v535, %v541
      %s547 = scalar_lea.vmem %s1, 24
      %v548 = vld [vmem:[%s547] sm:$0xff]
      %550 = vset.pattern.permute.xlu0 0
      %551 = vperm.xlu0 %550, %v548
      %v552 = vpop.permute.xlu0 %551
      %v554 = vadd.f32 %v543, %v552
      %v555 = vadd.f32 %v544, %v552
      %v556 = vadd.f32 %v545, %v552
      %v557 = vadd.f32 %v546, %v552
      %v558 = vld [vmem:[%s3] sm:$0xf]
      %v559 = vpack.c.bf16 %v554, %v554
      %v560 = vpack.c.bf16 %v555, %v555
      %v561 = vpack.c.bf16 %v556, %v556
      %v562 = vpack.c.bf16 %v557, %v557
      %s563 = scalar_lea.vmem %s1, 32
      %v564 = vld [vmem:[%s563] sm:$0xff]
      %566 = vset.pattern.permute.xlu0 0
      %567 = vperm.xlu0 %566, %v564
      %v568 = vpop.permute.xlu0 %567
      %vm570 = vcmask 64512
      %v572 = vsel %vm570, %v558, 0
      %vm574 = vcmask 1043456
      %v576 = vsel %vm574, %v559, 0
      %v579 = vsel %vm574, %v560, 0
      %v582 = vsel %vm574, %v561, 0
      %v585 = vsel %vm574, %v562, 0
      %587 = vmatprep.subr.bf16.mxu0 %v579
      %588 = vmatpush1.bf16.msra.mxu0 %v576
      %589 = vmatprep.subr.bf16.mxu0 0
      %590 = vmatpush1.bf16.msra.mxu0 0
      %591 = vmatprep.subr.bf16.mxu0 0
      %592 = vmatpush1.bf16.msra.mxu0 0
      %593 = vmatprep.subr.bf16.mxu0 0
      %594 = vmatpush1.bf16.msra.mxu0 0
      %595 = vmatprep.subr.bf16.mxu0 0
      %596 = vmatpush1.bf16.msra.mxu0 0
      %597 = vmatprep.subr.bf16.mxu0 0
      %598 = vmatpush1.bf16.msra.mxu0 0
      %599 = vmatprep.subr.bf16.mxu0 0
      %600 = vmatpush1.bf16.msra.mxu0 0
      %601 = vmatprep.subr.bf16.mxu0 0
      %602 = vmatpush1.bf16.msra.mxu0 0
      %603 = vmatprep.subr.bf16.mxu0 0
      %604 = vmatpush1.bf16.msra.mxu0 0
      %605 = vmatprep.subr.bf16.mxu0 0
      %606 = vmatpush1.bf16.msra.mxu0 0
      %607 = vmatprep.subr.bf16.mxu0 0
      %608 = vmatpush1.bf16.msra.mxu0 0
      %609 = vmatprep.subr.bf16.mxu0 0
      %610 = vmatpush1.bf16.msra.mxu0 0
      %611 = vmatprep.subr.bf16.mxu0 0
      %612 = vmatpush1.bf16.msra.mxu0 0
      %613 = vmatprep.subr.bf16.mxu0 0
      %614 = vmatpush1.bf16.msra.mxu0 0
      %615 = vmatprep.subr.bf16.mxu0 0
      %616 = vmatpush1.bf16.msra.mxu0 0
      %617 = vmatprep.subr.bf16.mxu0 0
      %618 = vmatpush1.bf16.msra.mxu0 0
      %619 = vmatprep.mubr.bf16.mxu0 0
      %620 = vmatmul.mubr.bf16.gmra.mrb[0].mxu0 %v572
      %v621 = vpop.f32.mrb[0].mxu0
      %v622 = vadd.f32 %v568, %v621
      %v623 = vpop.f32.mrb[0].mxu0
      %v624 = vadd.f32 %v568, %v623
      %v625 = vpop.f32.mrb[0].mxu0
      %v626 = vpop.f32.mrb[0].mxu0
      %627 = vdwg.mxu0
      %628 = vmatprep.subr.bf16.mxu0 %v585
      %629 = vmatpush1.bf16.msra.mxu0 %v582
      %630 = vmatprep.subr.bf16.mxu0 0
      %631 = vmatpush1.bf16.msra.mxu0 0
      %632 = vmatprep.subr.bf16.mxu0 0
      %633 = vmatpush1.bf16.msra.mxu0 0
      %634 = vmatprep.subr.bf16.mxu0 0
      %635 = vmatpush1.bf16.msra.mxu0 0
      %636 = vmatprep.subr.bf16.mxu0 0
      %637 = vmatpush1.bf16.msra.mxu0 0
      %638 = vmatprep.subr.bf16.mxu0 0
      %639 = vmatpush1.bf16.msra.mxu0 0
      %640 = vmatprep.subr.bf16.mxu0 0
      %641 = vmatpush1.bf16.msra.mxu0 0
      %642 = vmatprep.subr.bf16.mxu0 0
      %643 = vmatpush1.bf16.msra.mxu0 0
      %644 = vmatprep.subr.bf16.mxu0 0
      %645 = vmatpush1.bf16.msra.mxu0 0
      %646 = vmatprep.subr.bf16.mxu0 0
      %647 = vmatpush1.bf16.msra.mxu0 0
      %648 = vmatprep.subr.bf16.mxu0 0
      %649 = vmatpush1.bf16.msra.mxu0 0
      %650 = vmatprep.subr.bf16.mxu0 0
      %651 = vmatpush1.bf16.msra.mxu0 0
      %652 = vmatprep.subr.bf16.mxu0 0
      %653 = vmatpush1.bf16.msra.mxu0 0
      %654 = vmatprep.subr.bf16.mxu0 0
      %655 = vmatpush1.bf16.msra.mxu0 0
      %656 = vmatprep.subr.bf16.mxu0 0
      %657 = vmatpush1.bf16.msra.mxu0 0
      %658 = vmatprep.subr.bf16.mxu0 0
      %659 = vmatpush1.bf16.msra.mxu0 0
      %660 = vmatprep.mubr.bf16.mxu0 0
      %661 = vmatmul.mubr.bf16.gmra.mrb[0].mxu0 %v572
      %v662 = vpop.f32.mrb[0].mxu0
      %v663 = vadd.f32 %v568, %v662
      %v664 = vpop.f32.mrb[0].mxu0
      %v665 = vadd.f32 %v568, %v664
      %v666 = vpop.f32.mrb[0].mxu0
      %v667 = vpop.f32.mrb[0].mxu0
      %668 = vdwg.mxu0
      %v669 = vmul.f32 %v622, 0.70710677
      %v670 = vmul.f32 %v624, 0.70710677
      %v671 = vmul.f32 %v663, 0.70710677
      %v672 = vmul.f32 %v665, 0.70710677
      %v673 = vand.u32 2147483647, %v669
      %v674 = vand.u32 2147483647, %v670
      %v675 = vand.u32 2147483647, %v671
      %v676 = vand.u32 2147483647, %v672
      %v677 = vmul.f32 %v673, 0.3275911
      %v678 = vmul.f32 %v674, 0.3275911
      %v679 = vmul.f32 %v675, 0.3275911
      %v680 = vmul.f32 %v676, 0.3275911
      %v681 = vadd.f32 %v677, 1.0
      %v682 = vadd.f32 %v678, 1.0
      %v683 = vadd.f32 %v679, 1.0
      %v684 = vadd.f32 %v680, 1.0
      %v685 = vrcp.pop %v681
      %v686 = vmul.f32 1.0, %v685
      %v687 = vrcp.pop %v682
      %v688 = vmul.f32 1.0, %v687
      %v689 = vrcp.pop %v683
      %v690 = vmul.f32 1.0, %v689
      %v691 = vrcp.pop %v684
      %v692 = vmul.f32 1.0, %v691
      %v693 = vmul.f32 %v686, 1.0614054
      %v694 = vmul.f32 %v688, 1.0614054
      %v695 = vmul.f32 %v690, 1.0614054
      %v696 = vmul.f32 %v692, 1.0614054
      %v697 = vadd.f32 %v693, -1.4531521
      %v698 = vadd.f32 %v694, -1.4531521
      %v699 = vadd.f32 %v695, -1.4531521
      %v700 = vadd.f32 %v696, -1.4531521
      %v701 = vmul.f32 %v686, %v697
      %v702 = vmul.f32 %v688, %v698
      %v703 = vmul.f32 %v690, %v699
      %v704 = vmul.f32 %v692, %v700
      %v705 = vadd.f32 %v701, 1.4214138
      %v706 = vadd.f32 %v702, 1.4214138
      %v707 = vadd.f32 %v703, 1.4214138
      %v708 = vadd.f32 %v704, 1.4214138
      %v709 = vmul.f32 %v686, %v705
      %v710 = vmul.f32 %v688, %v706
      %v711 = vmul.f32 %v690, %v707
      %v712 = vmul.f32 %v692, %v708
      %v713 = vadd.f32 %v709, -0.28449672
      %v714 = vadd.f32 %v710, -0.28449672
      %v715 = vadd.f32 %v711, -0.28449672
      %v716 = vadd.f32 %v712, -0.28449672
      %v717 = vmul.f32 %v686, %v713
      %v718 = vmul.f32 %v688, %v714
      %v719 = vmul.f32 %v690, %v715
      %v720 = vmul.f32 %v692, %v716
      %v721 = vadd.f32 %v717, 0.2548296
      %v722 = vadd.f32 %v718, 0.2548296
      %v723 = vadd.f32 %v719, 0.2548296
      %v724 = vadd.f32 %v720, 0.2548296
      %v725 = vmul.f32 %v686, %v721
      %v726 = vmul.f32 %v688, %v722
      %v727 = vmul.f32 %v690, %v723
      %v728 = vmul.f32 %v692, %v724
      %v729 = vsub.f32 0.0, %v673
      %v730 = vsub.f32 0.0, %v674
      %v731 = vsub.f32 0.0, %v675
      %v732 = vsub.f32 0.0, %v676
      %v733 = vmul.f32 %v729, %v673
      %v734 = vmul.f32 %v730, %v674
      %v735 = vmul.f32 %v731, %v675
      %v736 = vmul.f32 %v732, %v676
      %v737 = vmul.f32 %v733, 1.442695
      %v738 = vpow.pop %v737
      %v739 = vmul.f32 %v734, 1.442695
      %v740 = vpow.pop %v739
      %v741 = vmul.f32 %v735, 1.442695
      %v742 = vpow.pop %v741
      %v743 = vmul.f32 %v736, 1.442695
      %v744 = vpow.pop %v743
      %v745 = vmul.f32 %v725, %v738
      %v746 = vmul.f32 %v726, %v740
      %v747 = vmul.f32 %v727, %v742
      %v748 = vmul.f32 %v728, %v744
      %v749 = vsub.f32 1.0, %v745
      %v750 = vsub.f32 1.0, %v746
      %v751 = vsub.f32 1.0, %v747
      %v752 = vsub.f32 1.0, %v748
      %vm753 = vcmp.ge.f32.partialorder %v669, 0.0
      %vm754 = vcmp.ge.f32.partialorder %v670, 0.0
      %vm755 = vcmp.ge.f32.partialorder %v671, 0.0
      %vm756 = vcmp.ge.f32.partialorder %v672, 0.0
      %v757 = vsub.f32 0.0, %v749
      %v758 = vsub.f32 0.0, %v750
      %v759 = vsub.f32 0.0, %v751
      %v760 = vsub.f32 0.0, %v752
      %v761 = vsel %vm753, %v749, %v757
      %v762 = vsel %vm754, %v750, %v758
      %v763 = vsel %vm755, %v751, %v759
      %v764 = vsel %vm756, %v752, %v760
      %v765 = vmul.f32 %v622, 0.5
      %v766 = vmul.f32 %v624, 0.5
      %v767 = vmul.f32 %v663, 0.5
      %v768 = vmul.f32 %v665, 0.5
      %v769 = vadd.f32 %v761, 1.0
      %v770 = vadd.f32 %v762, 1.0
      %v771 = vadd.f32 %v763, 1.0
      %v772 = vadd.f32 %v764, 1.0
      %v773 = vmul.f32 %v765, %v769
      %v774 = vmul.f32 %v766, %v770
      %v775 = vmul.f32 %v767, %v771
      %v776 = vmul.f32 %v768, %v772
      %vm777 = vcmask 539648
      %778 = vst.msk [vmem:[#allocation2] sm:$0xff] %vm777, 0.0
      %vm779 = vcmask 1048080
      %780 = vst.msk [vmem:[#allocation2 + $0x20] sm:$0xff] %vm779, 0.0
      %vm781 = vcmask 31744
      %782 = vst.msk [vmem:[#allocation2 + $0x28] sm:$0xff] %vm781, 0.0
      %787 = vrot.lane.b32.xlu0 %v773, 66
      %v788 = vpop.permute.xlu0 %787
      %789 = vrot.lane.b32.xlu0 %v774, 66
      %v790 = vpop.permute.xlu0 %789
      %791 = vrot.lane.b32.xlu0 %v775, 66
      %v792 = vpop.permute.xlu0 %791
      %793 = vrot.lane.b32.xlu0 %v776, 66
      %v794 = vpop.permute.xlu0 %793
      %v795 = vsel %vm777, %v788, %v790
      %v796 = vsel %vm777, %v790, %v792
      %v797 = vsel %vm777, %v792, %v794
      %803 = vst.msk [vmem:[#allocation2] sm:$0xff] %vm779, %v788
      %804 = vst [vmem:[#allocation2 + $0x8] sm:$0xff] %v795
      %805 = vst [vmem:[#allocation2 + $0x10] sm:$0xff] %v796
      %806 = vst [vmem:[#allocation2 + $0x18] sm:$0xff] %v797
      %807 = vst.msk [vmem:[#allocation2 + $0x20] sm:$0xff] %vm777, %v794
      %v808 = vld [vmem:[%s8] sm:$0xff]
      %v809 = vld [vmem:[#allocation2] sm:$0xff]
      %v810 = vld [vmem:[#allocation2 + $0x8] sm:$0xff]
      %v811 = vld [vmem:[#allocation2 + $0x10] sm:$0xff]
      %v812 = vld [vmem:[#allocation2 + $0x18] sm:$0xff]
      %814 = vset.pattern.permute.xlu0 0
      %815 = vperm.xlu0 %814, %v808
      %v816 = vpop.permute.xlu0 %815
      %v818 = vmul.f32 %v816, %v809
      %v819 = vmul.f32 %v816, %v810
      %v820 = vmul.f32 %v816, %v811
      %v821 = vmul.f32 %v816, %v812
      %s822 = scalar_lea.vmem %s8, 40
      %v823 = vld [vmem:[%s822] sm:$0xff]
      %v824 = vld [vmem:[#allocation2] sm:$0xff]
      %v825 = vld [vmem:[#allocation2 + $0x8] sm:$0xff]
      %v826 = vld [vmem:[#allocation2 + $0x10] sm:$0xff]
      %v827 = vld [vmem:[#allocation2 + $0x18] sm:$0xff]
      %v828 = vld [vmem:[#allocation2 + $0x20] sm:$0xff]
      %830 = vset.pattern.permute.xlu0 0
      %831 = vperm.xlu0 %830, %v823
      %v832 = vpop.permute.xlu0 %831
      %v834 = vmul.f32 %v832, %v824
      %v835 = vmul.f32 %v832, %v825
      %v836 = vmul.f32 %v832, %v826
      %v837 = vmul.f32 %v832, %v827
      %v838 = vmul.f32 %v832, %v828
      %844 = vrot.lane.b32.xlu0 %v834, 96
      %v845 = vpop.permute.xlu0 %844
      %846 = vrot.lane.b32.xlu0 %v835, 96
      %v847 = vpop.permute.xlu0 %846
      %848 = vrot.lane.b32.xlu0 %v836, 96
      %v849 = vpop.permute.xlu0 %848
      %850 = vrot.lane.b32.xlu0 %v837, 96
      %v851 = vpop.permute.xlu0 %850
      %852 = vrot.lane.b32.xlu0 %v838, 96
      %v853 = vpop.permute.xlu0 %852
      %vm854 = vcmask 785408
      %v855 = vsel %vm854, %v845, %v847
      %v856 = vsel %vm854, %v847, %v849
      %v857 = vsel %vm854, %v849, %v851
      %v858 = vsel %vm854, %v851, %v853
      %v863 = vadd.f32 %v818, %v855
      %v864 = vadd.f32 %v819, %v856
      %v865 = vadd.f32 %v820, %v857
      %v866 = vadd.f32 %v821, %v858
      %s867 = scalar_lea.vmem %s8, 80
      %v868 = vld [vmem:[%s867] sm:$0xff]
      %870 = vset.pattern.permute.xlu0 0
      %871 = vperm.xlu0 %870, %v868
      %v872 = vpop.permute.xlu0 %871
      %v874 = vmul.f32 %v872, %v824
      %v875 = vmul.f32 %v872, %v825
      %v876 = vmul.f32 %v872, %v826
      %v877 = vmul.f32 %v872, %v827
      %v878 = vmul.f32 %v872, %v828
      %884 = vrot.lane.b32.xlu0 %v874, 64
      %v885 = vpop.permute.xlu0 %884
      %886 = vrot.lane.b32.xlu0 %v875, 64
      %v887 = vpop.permute.xlu0 %886
      %888 = vrot.lane.b32.xlu0 %v876, 64
      %v889 = vpop.permute.xlu0 %888
      %890 = vrot.lane.b32.xlu0 %v877, 64
      %v891 = vpop.permute.xlu0 %890
      %892 = vrot.lane.b32.xlu0 %v878, 64
      %v893 = vpop.permute.xlu0 %892
      %vm894 = vcmask 523264
      %v895 = vsel %vm894, %v885, %v887
      %v896 = vsel %vm894, %v887, %v889
      %v897 = vsel %vm894, %v889, %v891
      %v898 = vsel %vm894, %v891, %v893
      %v903 = vadd.f32 %v863, %v895
      %v904 = vadd.f32 %v864, %v896
      %v905 = vadd.f32 %v865, %v897
      %v906 = vadd.f32 %v866, %v898
      %s907 = scalar_lea.vmem %s8, 120
      %v908 = vld [vmem:[%s907] sm:$0xff]
      %910 = vset.pattern.permute.xlu0 0
      %911 = vperm.xlu0 %910, %v908
      %v912 = vpop.permute.xlu0 %911
      %v914 = vmul.f32 %v912, %v824
      %v915 = vmul.f32 %v912, %v825
      %v916 = vmul.f32 %v912, %v826
      %v917 = vmul.f32 %v912, %v827
      %v918 = vmul.f32 %v912, %v828
      %924 = vrot.lane.b32.xlu0 %v914, 32
      %v925 = vpop.permute.xlu0 %924
      %926 = vrot.lane.b32.xlu0 %v915, 32
      %v927 = vpop.permute.xlu0 %926
      %928 = vrot.lane.b32.xlu0 %v916, 32
      %v929 = vpop.permute.xlu0 %928
      %930 = vrot.lane.b32.xlu0 %v917, 32
      %v931 = vpop.permute.xlu0 %930
      %932 = vrot.lane.b32.xlu0 %v918, 32
      %v933 = vpop.permute.xlu0 %932
      %vm934 = vcmask 261120
      %v935 = vsel %vm934, %v925, %v927
      %v936 = vsel %vm934, %v927, %v929
      %v937 = vsel %vm934, %v929, %v931
      %v938 = vsel %vm934, %v931, %v933
      %v943 = vadd.f32 %v903, %v935
      %v944 = vadd.f32 %v904, %v936
      %v945 = vadd.f32 %v905, %v937
      %v946 = vadd.f32 %v906, %v938
      %s947 = scalar_lea.vmem %s8, 160
      %v948 = vld [vmem:[%s947] sm:$0xff]
      %950 = vset.pattern.permute.xlu0 0
      %951 = vperm.xlu0 %950, %v948
      %v952 = vpop.permute.xlu0 %951
      %v954 = vmul.f32 %v952, %v825
      %v955 = vmul.f32 %v952, %v826
      %v956 = vmul.f32 %v952, %v827
      %v957 = vmul.f32 %v952, %v828
      %v958 = vadd.f32 %v943, %v954
      %v959 = vadd.f32 %v944, %v955
      %v960 = vadd.f32 %v945, %v956
      %v961 = vadd.f32 %v946, %v957
      %v962 = vld [vmem:[%s11] sm:$0xf]
      %v964 = vlaneseq
      %v965 = vshrl.u32 %v964, 7
      %v966 = vsub.s32 0, %v965
      %v967 = vrot.slane %v962, %v966
      %v968 = vlaneseq
      %v969 = vshrl.u32 %v968, 7
      %v970 = vsub.s32 1, %v969
      %v971 = vrot.slane %v962, %v970
      %v972 = vlaneseq
      %v973 = vshrl.u32 %v972, 7
      %v974 = vsub.s32 2, %v973
      %v975 = vrot.slane %v962, %v974
      %v976 = vlaneseq
      %v977 = vshrl.u32 %v976, 7
      %v978 = vsub.s32 3, %v977
      %v979 = vrot.slane %v962, %v978
      %v984 = vmul.f32 %v967, %v958
      %v985 = vmul.f32 %v971, %v959
      %v986 = vmul.f32 %v975, %v960
      %v987 = vmul.f32 %v979, %v961
      %s988 = scalar_lea.vmem %s8, 8
      %v989 = vld [vmem:[%s988] sm:$0xff]
      %991 = vset.pattern.permute.xlu0 0
      %992 = vperm.xlu0 %991, %v989
      %v993 = vpop.permute.xlu0 %992
      %v995 = vmul.f32 %v993, %v824
      %v996 = vmul.f32 %v993, %v825
      %v997 = vmul.f32 %v993, %v826
      %v998 = vmul.f32 %v993, %v827
      %v999 = vmul.f32 %v993, %v828
      %s1000 = scalar_lea.vmem %s8, 48
      %v1001 = vld [vmem:[%s1000] sm:$0xff]
      %1003 = vset.pattern.permute.xlu0 0
      %1004 = vperm.xlu0 %1003, %v1001
      %v1005 = vpop.permute.xlu0 %1004
      %v1007 = vmul.f32 %v1005, %v824
      %v1008 = vmul.f32 %v1005, %v825
      %v1009 = vmul.f32 %v1005, %v826
      %v1010 = vmul.f32 %v1005, %v827
      %v1011 = vmul.f32 %v1005, %v828
      %1017 = vrot.lane.b32.xlu0 %v1007, 96
      %v1018 = vpop.permute.xlu0 %1017
      %1019 = vrot.lane.b32.xlu0 %v1008, 96
      %v1020 = vpop.permute.xlu0 %1019
      %1021 = vrot.lane.b32.xlu0 %v1009, 96
      %v1022 = vpop.permute.xlu0 %1021
      %1023 = vrot.lane.b32.xlu0 %v1010, 96
      %v1024 = vpop.permute.xlu0 %1023
      %1025 = vrot.lane.b32.xlu0 %v1011, 96
      %v1026 = vpop.permute.xlu0 %1025
      %v1027 = vsel %vm854, %v1018, %v1020
      %v1028 = vsel %vm854, %v1020, %v1022
      %v1029 = vsel %vm854, %v1022, %v1024
      %v1030 = vsel %vm854, %v1024, %v1026
      %v1036 = vadd.f32 %v995, %v1027
      %v1037 = vadd.f32 %v996, %v1028
      %v1038 = vadd.f32 %v997, %v1029
      %v1039 = vadd.f32 %v998, %v1030
      %v1040 = vadd.f32 %v999, %v1026
      %s1041 = scalar_lea.vmem %s8, 88
      %v1042 = vld [vmem:[%s1041] sm:$0xff]
      %1044 = vset.pattern.permute.xlu0 0
      %1045 = vperm.xlu0 %1044, %v1042
      %v1046 = vpop.permute.xlu0 %1045
      %v1048 = vmul.f32 %v1046, %v824
      %v1049 = vmul.f32 %v1046, %v825
      %v1050 = vmul.f32 %v1046, %v826
      %v1051 = vmul.f32 %v1046, %v827
      %v1052 = vmul.f32 %v1046, %v828
      %1058 = vrot.lane.b32.xlu0 %v1048, 64
      %v1059 = vpop.permute.xlu0 %1058
      %1060 = vrot.lane.b32.xlu0 %v1049, 64
      %v1061 = vpop.permute.xlu0 %1060
      %1062 = vrot.lane.b32.xlu0 %v1050, 64
      %v1063 = vpop.permute.xlu0 %1062
      %1064 = vrot.lane.b32.xlu0 %v1051, 64
      %v1065 = vpop.permute.xlu0 %1064
      %1066 = vrot.lane.b32.xlu0 %v1052, 64
      %v1067 = vpop.permute.xlu0 %1066
      %v1068 = vsel %vm894, %v1059, %v1061
      %v1069 = vsel %vm894, %v1061, %v1063
      %v1070 = vsel %vm894, %v1063, %v1065
      %v1071 = vsel %vm894, %v1065, %v1067
      %v1077 = vadd.f32 %v1036, %v1068
      %v1078 = vadd.f32 %v1037, %v1069
      %v1079 = vadd.f32 %v1038, %v1070
      %v1080 = vadd.f32 %v1039, %v1071
      %v1081 = vadd.f32 %v1040, %v1067
      %s1082 = scalar_lea.vmem %s8, 128
      %v1083 = vld [vmem:[%s1082] sm:$0xff]
      %1085 = vset.pattern.permute.xlu0 0
      %1086 = vperm.xlu0 %1085, %v1083
      %v1087 = vpop.permute.xlu0 %1086
      %v1089 = vmul.f32 %v1087, %v824
      %v1090 = vmul.f32 %v1087, %v825
      %v1091 = vmul.f32 %v1087, %v826
      %v1092 = vmul.f32 %v1087, %v827
      %v1093 = vmul.f32 %v1087, %v828
      %1099 = vrot.lane.b32.xlu0 %v1089, 32
      %v1100 = vpop.permute.xlu0 %1099
      %1101 = vrot.lane.b32.xlu0 %v1090, 32
      %v1102 = vpop.permute.xlu0 %1101
      %1103 = vrot.lane.b32.xlu0 %v1091, 32
      %v1104 = vpop.permute.xlu0 %1103
      %1105 = vrot.lane.b32.xlu0 %v1092, 32
      %v1106 = vpop.permute.xlu0 %1105
      %1107 = vrot.lane.b32.xlu0 %v1093, 32
      %v1108 = vpop.permute.xlu0 %1107
      %v1109 = vsel %vm934, %v1100, %v1102
      %v1110 = vsel %vm934, %v1102, %v1104
      %v1111 = vsel %vm934, %v1104, %v1106
      %v1112 = vsel %vm934, %v1106, %v1108
      %v1118 = vadd.f32 %v1077, %v1109
      %v1119 = vadd.f32 %v1078, %v1110
      %v1120 = vadd.f32 %v1079, %v1111
      %v1121 = vadd.f32 %v1080, %v1112
      %v1122 = vadd.f32 %v1081, %v1108
      %s1123 = scalar_lea.vmem %s8, 168
      %v1124 = vld [vmem:[%s1123] sm:$0xff]
      %v1125 = vld [vmem:[#allocation2 + $0x8] sm:$0xff]
      %v1126 = vld [vmem:[#allocation2 + $0x10] sm:$0xff]
      %v1127 = vld [vmem:[#allocation2 + $0x18] sm:$0xff]
      %v1128 = vld [vmem:[#allocation2 + $0x20] sm:$0xff]
      %v1129 = vld [vmem:[#allocation2 + $0x28] sm:$0xff]
      %1131 = vset.pattern.permute.xlu0 0
      %1132 = vperm.xlu0 %1131, %v1124
      %v1133 = vpop.permute.xlu0 %1132
      %v1135 = vmul.f32 %v1133, %v1125
      %v1136 = vmul.f32 %v1133, %v1126
      %v1137 = vmul.f32 %v1133, %v1127
      %v1138 = vmul.f32 %v1133, %v1128
      %v1139 = vmul.f32 %v1133, %v1129
      %v1140 = vadd.f32 %v1118, %v1135
      %v1141 = vadd.f32 %v1119, %v1136
      %v1142 = vadd.f32 %v1120, %v1137
      %v1143 = vadd.f32 %v1121, %v1138
      %v1144 = vadd.f32 %v1122, %v1139
      %s1145 = scalar_lea.vmem %s11, 4
      %v1146 = vld [vmem:[%s1145] sm:$0xf]
      %v1148 = vlaneseq
      %v1149 = vshrl.u32 %v1148, 7
      %v1150 = vsub.s32 0, %v1149
      %v1151 = vrot.slane %v1146, %v1150
      %v1152 = vlaneseq
      %v1153 = vshrl.u32 %v1152, 7
      %v1154 = vsub.s32 1, %v1153
      %v1155 = vrot.slane %v1146, %v1154
      %v1156 = vlaneseq
      %v1157 = vshrl.u32 %v1156, 7
      %v1158 = vsub.s32 2, %v1157
      %v1159 = vrot.slane %v1146, %v1158
      %v1160 = vlaneseq
      %v1161 = vshrl.u32 %v1160, 7
      %v1162 = vsub.s32 3, %v1161
      %v1163 = vrot.slane %v1146, %v1162
      %1173 = vrot.lane.b32.xlu0 %v1140, 127
      %v1174 = vpop.permute.xlu0 %1173
      %1175 = vrot.lane.b32.xlu0 %v1141, 127
      %v1176 = vpop.permute.xlu0 %1175
      %1177 = vrot.lane.b32.xlu0 %v1142, 127
      %v1178 = vpop.permute.xlu0 %1177
      %1179 = vrot.lane.b32.xlu0 %v1143, 127
      %v1180 = vpop.permute.xlu0 %1179
      %1181 = vrot.lane.b32.xlu0 %v1144, 127
      %v1182 = vpop.permute.xlu0 %1181
      %vm1183 = vcmask 1039360
      %v1184 = vsel %vm1183, %v1174, %v1176
      %v1185 = vsel %vm1183, %v1176, %v1178
      %v1186 = vsel %vm1183, %v1178, %v1180
      %v1187 = vsel %vm1183, %v1180, %v1182
      %v1192 = vmul.f32 %v1151, %v1184
      %v1193 = vmul.f32 %v1155, %v1185
      %v1194 = vmul.f32 %v1159, %v1186
      %v1195 = vmul.f32 %v1163, %v1187
      %v1196 = vadd.f32 %v984, %v1192
      %v1197 = vadd.f32 %v985, %v1193
      %v1198 = vadd.f32 %v986, %v1194
      %v1199 = vadd.f32 %v987, %v1195
      %s1200 = scalar_lea.vmem %s8, 16
      %v1201 = vld [vmem:[%s1200] sm:$0xff]
      %1203 = vset.pattern.permute.xlu0 0
      %1204 = vperm.xlu0 %1203, %v1201
      %v1205 = vpop.permute.xlu0 %1204
      %v1207 = vmul.f32 %v1205, %v824
      %v1208 = vmul.f32 %v1205, %v825
      %v1209 = vmul.f32 %v1205, %v826
      %v1210 = vmul.f32 %v1205, %v827
      %v1211 = vmul.f32 %v1205, %v828
      %s1212 = scalar_lea.vmem %s8, 56
      %v1213 = vld [vmem:[%s1212] sm:$0xff]
      %1215 = vset.pattern.permute.xlu0 0
      %1216 = vperm.xlu0 %1215, %v1213
      %v1217 = vpop.permute.xlu0 %1216
      %v1219 = vmul.f32 %v1217, %v824
      %v1220 = vmul.f32 %v1217, %v825
      %v1221 = vmul.f32 %v1217, %v826
      %v1222 = vmul.f32 %v1217, %v827
      %v1223 = vmul.f32 %v1217, %v828
      %1229 = vrot.lane.b32.xlu0 %v1219, 96
      %v1230 = vpop.permute.xlu0 %1229
      %1231 = vrot.lane.b32.xlu0 %v1220, 96
      %v1232 = vpop.permute.xlu0 %1231
      %1233 = vrot.lane.b32.xlu0 %v1221, 96
      %v1234 = vpop.permute.xlu0 %1233
      %1235 = vrot.lane.b32.xlu0 %v1222, 96
      %v1236 = vpop.permute.xlu0 %1235
      %1237 = vrot.lane.b32.xlu0 %v1223, 96
      %v1238 = vpop.permute.xlu0 %1237
      %v1239 = vsel %vm854, %v1230, %v1232
      %v1240 = vsel %vm854, %v1232, %v1234
      %v1241 = vsel %vm854, %v1234, %v1236
      %v1242 = vsel %vm854, %v1236, %v1238
      %v1248 = vadd.f32 %v1207, %v1239
      %v1249 = vadd.f32 %v1208, %v1240
      %v1250 = vadd.f32 %v1209, %v1241
      %v1251 = vadd.f32 %v1210, %v1242
      %v1252 = vadd.f32 %v1211, %v1238
      %s1253 = scalar_lea.vmem %s8, 96
      %v1254 = vld [vmem:[%s1253] sm:$0xff]
      %1256 = vset.pattern.permute.xlu0 0
      %1257 = vperm.xlu0 %1256, %v1254
      %v1258 = vpop.permute.xlu0 %1257
      %v1260 = vmul.f32 %v1258, %v824
      %v1261 = vmul.f32 %v1258, %v825
      %v1262 = vmul.f32 %v1258, %v826
      %v1263 = vmul.f32 %v1258, %v827
      %v1264 = vmul.f32 %v1258, %v828
      %1270 = vrot.lane.b32.xlu0 %v1260, 64
      %v1271 = vpop.permute.xlu0 %1270
      %1272 = vrot.lane.b32.xlu0 %v1261, 64
      %v1273 = vpop.permute.xlu0 %1272
      %1274 = vrot.lane.b32.xlu0 %v1262, 64
      %v1275 = vpop.permute.xlu0 %1274
      %1276 = vrot.lane.b32.xlu0 %v1263, 64
      %v1277 = vpop.permute.xlu0 %1276
      %1278 = vrot.lane.b32.xlu0 %v1264, 64
      %v1279 = vpop.permute.xlu0 %1278
      %v1280 = vsel %vm894, %v1271, %v1273
      %v1281 = vsel %vm894, %v1273, %v1275
      %v1282 = vsel %vm894, %v1275, %v1277
      %v1283 = vsel %vm894, %v1277, %v1279
      %v1289 = vadd.f32 %v1248, %v1280
      %v1290 = vadd.f32 %v1249, %v1281
      %v1291 = vadd.f32 %v1250, %v1282
      %v1292 = vadd.f32 %v1251, %v1283
      %v1293 = vadd.f32 %v1252, %v1279
      %s1294 = scalar_lea.vmem %s8, 136
      %v1295 = vld [vmem:[%s1294] sm:$0xff]
      %1297 = vset.pattern.permute.xlu0 0
      %1298 = vperm.xlu0 %1297, %v1295
      %v1299 = vpop.permute.xlu0 %1298
      %v1301 = vmul.f32 %v1299, %v824
      %v1302 = vmul.f32 %v1299, %v825
      %v1303 = vmul.f32 %v1299, %v826
      %v1304 = vmul.f32 %v1299, %v827
      %v1305 = vmul.f32 %v1299, %v828
      %1311 = vrot.lane.b32.xlu0 %v1301, 32
      %v1312 = vpop.permute.xlu0 %1311
      %1313 = vrot.lane.b32.xlu0 %v1302, 32
      %v1314 = vpop.permute.xlu0 %1313
      %1315 = vrot.lane.b32.xlu0 %v1303, 32
      %v1316 = vpop.permute.xlu0 %1315
      %1317 = vrot.lane.b32.xlu0 %v1304, 32
      %v1318 = vpop.permute.xlu0 %1317
      %1319 = vrot.lane.b32.xlu0 %v1305, 32
      %v1320 = vpop.permute.xlu0 %1319
      %v1321 = vsel %vm934, %v1312, %v1314
      %v1322 = vsel %vm934, %v1314, %v1316
      %v1323 = vsel %vm934, %v1316, %v1318
      %v1324 = vsel %vm934, %v1318, %v1320
      %v1330 = vadd.f32 %v1289, %v1321
      %v1331 = vadd.f32 %v1290, %v1322
      %v1332 = vadd.f32 %v1291, %v1323
      %v1333 = vadd.f32 %v1292, %v1324
      %v1334 = vadd.f32 %v1293, %v1320
      %s1335 = scalar_lea.vmem %s8, 176
      %v1336 = vld [vmem:[%s1335] sm:$0xff]
      %1338 = vset.pattern.permute.xlu0 0
      %1339 = vperm.xlu0 %1338, %v1336
      %v1340 = vpop.permute.xlu0 %1339
      %v1342 = vmul.f32 %v1340, %v1125
      %v1343 = vmul.f32 %v1340, %v1126
      %v1344 = vmul.f32 %v1340, %v1127
      %v1345 = vmul.f32 %v1340, %v1128
      %v1346 = vmul.f32 %v1340, %v1129
      %v1347 = vadd.f32 %v1330, %v1342
      %v1348 = vadd.f32 %v1331, %v1343
      %v1349 = vadd.f32 %v1332, %v1344
      %v1350 = vadd.f32 %v1333, %v1345
      %v1351 = vadd.f32 %v1334, %v1346
      %s1352 = scalar_lea.vmem %s11, 8
      %v1353 = vld [vmem:[%s1352] sm:$0xf]
      %v1355 = vlaneseq
      %v1356 = vshrl.u32 %v1355, 7
      %v1357 = vsub.s32 0, %v1356
      %v1358 = vrot.slane %v1353, %v1357
      %v1359 = vlaneseq
      %v1360 = vshrl.u32 %v1359, 7
      %v1361 = vsub.s32 1, %v1360
      %v1362 = vrot.slane %v1353, %v1361
      %v1363 = vlaneseq
      %v1364 = vshrl.u32 %v1363, 7
      %v1365 = vsub.s32 2, %v1364
      %v1366 = vrot.slane %v1353, %v1365
      %v1367 = vlaneseq
      %v1368 = vshrl.u32 %v1367, 7
      %v1369 = vsub.s32 3, %v1368
      %v1370 = vrot.slane %v1353, %v1369
      %1380 = vrot.lane.b32.xlu0 %v1347, 126
      %v1381 = vpop.permute.xlu0 %1380
      %1382 = vrot.lane.b32.xlu0 %v1348, 126
      %v1383 = vpop.permute.xlu0 %1382
      %1384 = vrot.lane.b32.xlu0 %v1349, 126
      %v1385 = vpop.permute.xlu0 %1384
      %1386 = vrot.lane.b32.xlu0 %v1350, 126
      %v1387 = vpop.permute.xlu0 %1386
      %1388 = vrot.lane.b32.xlu0 %v1351, 126
      %v1389 = vpop.permute.xlu0 %1388
      %vm1390 = vcmask 1031168
      %v1391 = vsel %vm1390, %v1381, %v1383
      %v1392 = vsel %vm1390, %v1383, %v1385
      %v1393 = vsel %vm1390, %v1385, %v1387
      %v1394 = vsel %vm1390, %v1387, %v1389
      %v1399 = vmul.f32 %v1358, %v1391
      %v1400 = vmul.f32 %v1362, %v1392
      %v1401 = vmul.f32 %v1366, %v1393
      %v1402 = vmul.f32 %v1370, %v1394
      %v1403 = vadd.f32 %v1196, %v1399
      %v1404 = vadd.f32 %v1197, %v1400
      %v1405 = vadd.f32 %v1198, %v1401
      %v1406 = vadd.f32 %v1199, %v1402
      %s1407 = scalar_lea.vmem %s8, 24
      %v1408 = vld [vmem:[%s1407] sm:$0xff]
      %1410 = vset.pattern.permute.xlu0 0
      %1411 = vperm.xlu0 %1410, %v1408
      %v1412 = vpop.permute.xlu0 %1411
      %v1414 = vmul.f32 %v1412, %v824
      %v1415 = vmul.f32 %v1412, %v825
      %v1416 = vmul.f32 %v1412, %v826
      %v1417 = vmul.f32 %v1412, %v827
      %v1418 = vmul.f32 %v1412, %v828
      %s1419 = scalar_lea.vmem %s8, 64
      %v1420 = vld [vmem:[%s1419] sm:$0xff]
      %1422 = vset.pattern.permute.xlu0 0
      %1423 = vperm.xlu0 %1422, %v1420
      %v1424 = vpop.permute.xlu0 %1423
      %v1426 = vmul.f32 %v1424, %v824
      %v1427 = vmul.f32 %v1424, %v825
      %v1428 = vmul.f32 %v1424, %v826
      %v1429 = vmul.f32 %v1424, %v827
      %v1430 = vmul.f32 %v1424, %v828
      %1436 = vrot.lane.b32.xlu0 %v1426, 96
      %v1437 = vpop.permute.xlu0 %1436
      %1438 = vrot.lane.b32.xlu0 %v1427, 96
      %v1439 = vpop.permute.xlu0 %1438
      %1440 = vrot.lane.b32.xlu0 %v1428, 96
      %v1441 = vpop.permute.xlu0 %1440
      %1442 = vrot.lane.b32.xlu0 %v1429, 96
      %v1443 = vpop.permute.xlu0 %1442
      %1444 = vrot.lane.b32.xlu0 %v1430, 96
      %v1445 = vpop.permute.xlu0 %1444
      %v1446 = vsel %vm854, %v1437, %v1439
      %v1447 = vsel %vm854, %v1439, %v1441
      %v1448 = vsel %vm854, %v1441, %v1443
      %v1449 = vsel %vm854, %v1443, %v1445
      %v1455 = vadd.f32 %v1414, %v1446
      %v1456 = vadd.f32 %v1415, %v1447
      %v1457 = vadd.f32 %v1416, %v1448
      %v1458 = vadd.f32 %v1417, %v1449
      %v1459 = vadd.f32 %v1418, %v1445
      %s1460 = scalar_lea.vmem %s8, 104
      %v1461 = vld [vmem:[%s1460] sm:$0xff]
      %1463 = vset.pattern.permute.xlu0 0
      %1464 = vperm.xlu0 %1463, %v1461
      %v1465 = vpop.permute.xlu0 %1464
      %v1467 = vmul.f32 %v1465, %v824
      %v1468 = vmul.f32 %v1465, %v825
      %v1469 = vmul.f32 %v1465, %v826
      %v1470 = vmul.f32 %v1465, %v827
      %v1471 = vmul.f32 %v1465, %v828
      %1477 = vrot.lane.b32.xlu0 %v1467, 64
      %v1478 = vpop.permute.xlu0 %1477
      %1479 = vrot.lane.b32.xlu0 %v1468, 64
      %v1480 = vpop.permute.xlu0 %1479
      %1481 = vrot.lane.b32.xlu0 %v1469, 64
      %v1482 = vpop.permute.xlu0 %1481
      %1483 = vrot.lane.b32.xlu0 %v1470, 64
      %v1484 = vpop.permute.xlu0 %1483
      %1485 = vrot.lane.b32.xlu0 %v1471, 64
      %v1486 = vpop.permute.xlu0 %1485
      %v1487 = vsel %vm894, %v1478, %v1480
      %v1488 = vsel %vm894, %v1480, %v1482
      %v1489 = vsel %vm894, %v1482, %v1484
      %v1490 = vsel %vm894, %v1484, %v1486
      %v1496 = vadd.f32 %v1455, %v1487
      %v1497 = vadd.f32 %v1456, %v1488
      %v1498 = vadd.f32 %v1457, %v1489
      %v1499 = vadd.f32 %v1458, %v1490
      %v1500 = vadd.f32 %v1459, %v1486
      %s1501 = scalar_lea.vmem %s8, 144
      %v1502 = vld [vmem:[%s1501] sm:$0xff]
      %1504 = vset.pattern.permute.xlu0 0
      %1505 = vperm.xlu0 %1504, %v1502
      %v1506 = vpop.permute.xlu0 %1505
      %v1508 = vmul.f32 %v1506, %v824
      %v1509 = vmul.f32 %v1506, %v825
      %v1510 = vmul.f32 %v1506, %v826
      %v1511 = vmul.f32 %v1506, %v827
      %v1512 = vmul.f32 %v1506, %v828
      %1518 = vrot.lane.b32.xlu0 %v1508, 32
      %v1519 = vpop.permute.xlu0 %1518
      %1520 = vrot.lane.b32.xlu0 %v1509, 32
      %v1521 = vpop.permute.xlu0 %1520
      %1522 = vrot.lane.b32.xlu0 %v1510, 32
      %v1523 = vpop.permute.xlu0 %1522
      %1524 = vrot.lane.b32.xlu0 %v1511, 32
      %v1525 = vpop.permute.xlu0 %1524
      %1526 = vrot.lane.b32.xlu0 %v1512, 32
      %v1527 = vpop.permute.xlu0 %1526
      %v1528 = vsel %vm934, %v1519, %v1521
      %v1529 = vsel %vm934, %v1521, %v1523
      %v1530 = vsel %vm934, %v1523, %v1525
      %v1531 = vsel %vm934, %v1525, %v1527
      %v1537 = vadd.f32 %v1496, %v1528
      %v1538 = vadd.f32 %v1497, %v1529
      %v1539 = vadd.f32 %v1498, %v1530
      %v1540 = vadd.f32 %v1499, %v1531
      %v1541 = vadd.f32 %v1500, %v1527
      %s1542 = scalar_lea.vmem %s8, 184
      %v1543 = vld [vmem:[%s1542] sm:$0xff]
      %1545 = vset.pattern.permute.xlu0 0
      %1546 = vperm.xlu0 %1545, %v1543
      %v1547 = vpop.permute.xlu0 %1546
      %v1549 = vmul.f32 %v1547, %v1125
      %v1550 = vmul.f32 %v1547, %v1126
      %v1551 = vmul.f32 %v1547, %v1127
      %v1552 = vmul.f32 %v1547, %v1128
      %v1553 = vmul.f32 %v1547, %v1129
      %v1554 = vadd.f32 %v1537, %v1549
      %v1555 = vadd.f32 %v1538, %v1550
      %v1556 = vadd.f32 %v1539, %v1551
      %v1557 = vadd.f32 %v1540, %v1552
      %v1558 = vadd.f32 %v1541, %v1553
      %s1559 = scalar_lea.vmem %s11, 12
      %v1560 = vld [vmem:[%s1559] sm:$0xf]
      %v1562 = vlaneseq
      %v1563 = vshrl.u32 %v1562, 7
      %v1564 = vsub.s32 0, %v1563
      %v1565 = vrot.slane %v1560, %v1564
      %v1566 = vlaneseq
      %v1567 = vshrl.u32 %v1566, 7
      %v1568 = vsub.s32 1, %v1567
      %v1569 = vrot.slane %v1560, %v1568
      %v1570 = vlaneseq
      %v1571 = vshrl.u32 %v1570, 7
      %v1572 = vsub.s32 2, %v1571
      %v1573 = vrot.slane %v1560, %v1572
      %v1574 = vlaneseq
      %v1575 = vshrl.u32 %v1574, 7
      %v1576 = vsub.s32 3, %v1575
      %v1577 = vrot.slane %v1560, %v1576
      %1587 = vrot.lane.b32.xlu0 %v1554, 125
      %v1588 = vpop.permute.xlu0 %1587
      %1589 = vrot.lane.b32.xlu0 %v1555, 125
      %v1590 = vpop.permute.xlu0 %1589
      %1591 = vrot.lane.b32.xlu0 %v1556, 125
      %v1592 = vpop.permute.xlu0 %1591
      %1593 = vrot.lane.b32.xlu0 %v1557, 125
      %v1594 = vpop.permute.xlu0 %1593
      %1595 = vrot.lane.b32.xlu0 %v1558, 125
      %v1596 = vpop.permute.xlu0 %1595
      %vm1597 = vcmask 1022976
      %v1598 = vsel %vm1597, %v1588, %v1590
      %v1599 = vsel %vm1597, %v1590, %v1592
      %v1600 = vsel %vm1597, %v1592, %v1594
      %v1601 = vsel %vm1597, %v1594, %v1596
      %v1606 = vmul.f32 %v1565, %v1598
      %v1607 = vmul.f32 %v1569, %v1599
      %v1608 = vmul.f32 %v1573, %v1600
      %v1609 = vmul.f32 %v1577, %v1601
      %v1610 = vadd.f32 %v1403, %v1606
      %v1611 = vadd.f32 %v1404, %v1607
      %v1612 = vadd.f32 %v1405, %v1608
      %v1613 = vadd.f32 %v1406, %v1609
      %s1614 = scalar_lea.vmem %s8, 32
      %v1615 = vld [vmem:[%s1614] sm:$0xff]
      %1617 = vset.pattern.permute.xlu0 0
      %1618 = vperm.xlu0 %1617, %v1615
      %v1619 = vpop.permute.xlu0 %1618
      %v1621 = vmul.f32 %v1619, %v824
      %v1622 = vmul.f32 %v1619, %v825
      %v1623 = vmul.f32 %v1619, %v826
      %v1624 = vmul.f32 %v1619, %v827
      %v1625 = vmul.f32 %v1619, %v828
      %s1626 = scalar_lea.vmem %s8, 72
      %v1627 = vld [vmem:[%s1626] sm:$0xff]
      %1629 = vset.pattern.permute.xlu0 0
      %1630 = vperm.xlu0 %1629, %v1627
      %v1631 = vpop.permute.xlu0 %1630
      %v1633 = vmul.f32 %v1631, %v824
      %v1634 = vmul.f32 %v1631, %v825
      %v1635 = vmul.f32 %v1631, %v826
      %v1636 = vmul.f32 %v1631, %v827
      %v1637 = vmul.f32 %v1631, %v828
      %1643 = vrot.lane.b32.xlu0 %v1633, 96
      %v1644 = vpop.permute.xlu0 %1643
      %1645 = vrot.lane.b32.xlu0 %v1634, 96
      %v1646 = vpop.permute.xlu0 %1645
      %1647 = vrot.lane.b32.xlu0 %v1635, 96
      %v1648 = vpop.permute.xlu0 %1647
      %1649 = vrot.lane.b32.xlu0 %v1636, 96
      %v1650 = vpop.permute.xlu0 %1649
      %1651 = vrot.lane.b32.xlu0 %v1637, 96
      %v1652 = vpop.permute.xlu0 %1651
      %v1653 = vsel %vm854, %v1644, %v1646
      %v1654 = vsel %vm854, %v1646, %v1648
      %v1655 = vsel %vm854, %v1648, %v1650
      %v1656 = vsel %vm854, %v1650, %v1652
      %v1662 = vadd.f32 %v1621, %v1653
      %v1663 = vadd.f32 %v1622, %v1654
      %v1664 = vadd.f32 %v1623, %v1655
      %v1665 = vadd.f32 %v1624, %v1656
      %v1666 = vadd.f32 %v1625, %v1652
      %s1667 = scalar_lea.vmem %s8, 112
      %v1668 = vld [vmem:[%s1667] sm:$0xff]
      %1670 = vset.pattern.permute.xlu0 0
      %1671 = vperm.xlu0 %1670, %v1668
      %v1672 = vpop.permute.xlu0 %1671
      %v1674 = vmul.f32 %v1672, %v824
      %v1675 = vmul.f32 %v1672, %v825
      %v1676 = vmul.f32 %v1672, %v826
      %v1677 = vmul.f32 %v1672, %v827
      %v1678 = vmul.f32 %v1672, %v828
      %1684 = vrot.lane.b32.xlu0 %v1674, 64
      %v1685 = vpop.permute.xlu0 %1684
      %1686 = vrot.lane.b32.xlu0 %v1675, 64
      %v1687 = vpop.permute.xlu0 %1686
      %1688 = vrot.lane.b32.xlu0 %v1676, 64
      %v1689 = vpop.permute.xlu0 %1688
      %1690 = vrot.lane.b32.xlu0 %v1677, 64
      %v1691 = vpop.permute.xlu0 %1690
      %1692 = vrot.lane.b32.xlu0 %v1678, 64
      %v1693 = vpop.permute.xlu0 %1692
      %v1694 = vsel %vm894, %v1685, %v1687
      %v1695 = vsel %vm894, %v1687, %v1689
      %v1696 = vsel %vm894, %v1689, %v1691
      %v1697 = vsel %vm894, %v1691, %v1693
      %v1703 = vadd.f32 %v1662, %v1694
      %v1704 = vadd.f32 %v1663, %v1695
      %v1705 = vadd.f32 %v1664, %v1696
      %v1706 = vadd.f32 %v1665, %v1697
      %v1707 = vadd.f32 %v1666, %v1693
      %s1708 = scalar_lea.vmem %s8, 152
      %v1709 = vld [vmem:[%s1708] sm:$0xff]
      %1711 = vset.pattern.permute.xlu0 0
      %1712 = vperm.xlu0 %1711, %v1709
      %v1713 = vpop.permute.xlu0 %1712
      %v1715 = vmul.f32 %v1713, %v824
      %v1716 = vmul.f32 %v1713, %v825
      %v1717 = vmul.f32 %v1713, %v826
      %v1718 = vmul.f32 %v1713, %v827
      %v1719 = vmul.f32 %v1713, %v828
      %1725 = vrot.lane.b32.xlu0 %v1715, 32
      %v1726 = vpop.permute.xlu0 %1725
      %1727 = vrot.lane.b32.xlu0 %v1716, 32
      %v1728 = vpop.permute.xlu0 %1727
      %1729 = vrot.lane.b32.xlu0 %v1717, 32
      %v1730 = vpop.permute.xlu0 %1729
      %1731 = vrot.lane.b32.xlu0 %v1718, 32
      %v1732 = vpop.permute.xlu0 %1731
      %1733 = vrot.lane.b32.xlu0 %v1719, 32
      %v1734 = vpop.permute.xlu0 %1733
      %v1735 = vsel %vm934, %v1726, %v1728
      %v1736 = vsel %vm934, %v1728, %v1730
      %v1737 = vsel %vm934, %v1730, %v1732
      %v1738 = vsel %vm934, %v1732, %v1734
      %v1744 = vadd.f32 %v1703, %v1735
      %v1745 = vadd.f32 %v1704, %v1736
      %v1746 = vadd.f32 %v1705, %v1737
      %v1747 = vadd.f32 %v1706, %v1738
      %v1748 = vadd.f32 %v1707, %v1734
      %s1749 = scalar_lea.vmem %s8, 192
      %v1750 = vld [vmem:[%s1749] sm:$0xff]
      %1752 = vset.pattern.permute.xlu0 0
      %1753 = vperm.xlu0 %1752, %v1750
      %v1754 = vpop.permute.xlu0 %1753
      %v1756 = vmul.f32 %v1754, %v1125
      %v1757 = vmul.f32 %v1754, %v1126
      %v1758 = vmul.f32 %v1754, %v1127
      %v1759 = vmul.f32 %v1754, %v1128
      %v1760 = vmul.f32 %v1754, %v1129
      %v1761 = vadd.f32 %v1744, %v1756
      %v1762 = vadd.f32 %v1745, %v1757
      %v1763 = vadd.f32 %v1746, %v1758
      %v1764 = vadd.f32 %v1747, %v1759
      %v1765 = vadd.f32 %v1748, %v1760
      %s1766 = scalar_lea.vmem %s11, 16
      %v1767 = vld [vmem:[%s1766] sm:$0xf]
      %v1769 = vlaneseq
      %v1770 = vshrl.u32 %v1769, 7
      %v1771 = vsub.s32 0, %v1770
      %v1772 = vrot.slane %v1767, %v1771
      %v1773 = vlaneseq
      %v1774 = vshrl.u32 %v1773, 7
      %v1775 = vsub.s32 1, %v1774
      %v1776 = vrot.slane %v1767, %v1775
      %v1777 = vlaneseq
      %v1778 = vshrl.u32 %v1777, 7
      %v1779 = vsub.s32 2, %v1778
      %v1780 = vrot.slane %v1767, %v1779
      %v1781 = vlaneseq
      %v1782 = vshrl.u32 %v1781, 7
      %v1783 = vsub.s32 3, %v1782
      %v1784 = vrot.slane %v1767, %v1783
      %1794 = vrot.lane.b32.xlu0 %v1761, 124
      %v1795 = vpop.permute.xlu0 %1794
      %1796 = vrot.lane.b32.xlu0 %v1762, 124
      %v1797 = vpop.permute.xlu0 %1796
      %1798 = vrot.lane.b32.xlu0 %v1763, 124
      %v1799 = vpop.permute.xlu0 %1798
      %1800 = vrot.lane.b32.xlu0 %v1764, 124
      %v1801 = vpop.permute.xlu0 %1800
      %1802 = vrot.lane.b32.xlu0 %v1765, 124
      %v1803 = vpop.permute.xlu0 %1802
      %vm1804 = vcmask 1014784
      %v1805 = vsel %vm1804, %v1795, %v1797
      %v1806 = vsel %vm1804, %v1797, %v1799
      %v1807 = vsel %vm1804, %v1799, %v1801
      %v1808 = vsel %vm1804, %v1801, %v1803
      %v1813 = vmul.f32 %v1772, %v1805
      %v1814 = vmul.f32 %v1776, %v1806
      %v1815 = vmul.f32 %v1780, %v1807
      %v1816 = vmul.f32 %v1784, %v1808
      %v1817 = vadd.f32 %v1610, %v1813
      %v1818 = vadd.f32 %v1611, %v1814
      %v1819 = vadd.f32 %v1612, %v1815
      %v1820 = vadd.f32 %v1613, %v1816
      %s1821 = scalar_lea.vmem %s1, 40
      %v1822 = vld [vmem:[%s1821] sm:$0xff]
      %1824 = vset.pattern.permute.xlu0 0
      %1825 = vperm.xlu0 %1824, %v1822
      %v1826 = vpop.permute.xlu0 %1825
      %v1828 = vadd.f32 %v1817, %v1826
      %v1829 = vadd.f32 %v1818, %v1826
      %v1830 = vadd.f32 %v1819, %v1826
      %v1831 = vadd.f32 %v1820, %v1826
      %1832 = vst [vmem:[#allocation3] sm:$0xff] 0.0
      %1833 = vst [vmem:[#allocation3 + $0x8] sm:$0xff] 0.0
      %vm1834 = vcmask 334848
      %1835 = vst.msk [vmem:[#allocation3 + $0x10] sm:$0xff] %vm1834, 0.0
      %vm1836 = vcmask 1047880
      %1837 = vst.msk [vmem:[#allocation3 + $0x30] sm:$0xff] %vm1836, 0.0
      %1838 = vst [vmem:[#allocation3 + $0x38] sm:$0xff] 0.0
      %vm1839 = vcmask 670720
      %1840 = vst.msk [vmem:[#allocation3 + $0x40] sm:$0xff] %vm1839, 0.0
      %1845 = vrot.lane.b32.xlu0 %v1828, 41
      %v1846 = vpop.permute.xlu0 %1845
      %1847 = vrot.lane.b32.xlu0 %v1829, 41
      %v1848 = vpop.permute.xlu0 %1847
      %1849 = vrot.lane.b32.xlu0 %v1830, 41
      %v1850 = vpop.permute.xlu0 %1849
      %1851 = vrot.lane.b32.xlu0 %v1831, 41
      %v1852 = vpop.permute.xlu0 %1851
      %v1853 = vsel %vm1834, %v1846, %v1848
      %v1854 = vsel %vm1834, %v1848, %v1850
      %v1855 = vsel %vm1834, %v1850, %v1852
      %1861 = vst.msk [vmem:[#allocation3 + $0x10] sm:$0xff] %vm1836, %v1846
      %1862 = vst [vmem:[#allocation3 + $0x18] sm:$0xff] %v1853
      %1863 = vst [vmem:[#allocation3 + $0x20] sm:$0xff] %v1854
      %1864 = vst [vmem:[#allocation3 + $0x28] sm:$0xff] %v1855
      %1865 = vst.msk [vmem:[#allocation3 + $0x30] sm:$0xff] %vm1834, %v1852
      %v1866 = vld [vmem:[%s9] sm:$0xff]
      %v1867 = vld [vmem:[#allocation3] sm:$0xff]
      %v1868 = vld [vmem:[#allocation3 + $0x8] sm:$0xff]
      %v1869 = vld [vmem:[#allocation3 + $0x10] sm:$0xff]
      %v1870 = vld [vmem:[#allocation3 + $0x18] sm:$0xff]
      %1872 = vset.pattern.permute.xlu0 0
      %1873 = vperm.xlu0 %1872, %v1866
      %v1874 = vpop.permute.xlu0 %1873
      %v1876 = vmul.f32 %v1874, %v1867
      %v1877 = vmul.f32 %v1874, %v1868
      %v1878 = vmul.f32 %v1874, %v1869
      %v1879 = vmul.f32 %v1874, %v1870
      %s1880 = scalar_lea.vmem %s9, 56
      %v1881 = vld [vmem:[%s1880] sm:$0xff]
      %v1882 = vld [vmem:[#allocation3] sm:$0xff]
      %v1883 = vld [vmem:[#allocation3 + $0x8] sm:$0xff]
      %v1884 = vld [vmem:[#allocation3 + $0x10] sm:$0xff]
      %v1885 = vld [vmem:[#allocation3 + $0x18] sm:$0xff]
      %v1886 = vld [vmem:[#allocation3 + $0x20] sm:$0xff]
      %1888 = vset.pattern.permute.xlu0 0
      %1889 = vperm.xlu0 %1888, %v1881
      %v1890 = vpop.permute.xlu0 %1889
      %v1892 = vmul.f32 %v1890, %v1882
      %v1893 = vmul.f32 %v1890, %v1883
      %v1894 = vmul.f32 %v1890, %v1884
      %v1895 = vmul.f32 %v1890, %v1885
      %v1896 = vmul.f32 %v1890, %v1886
      %1902 = vrot.lane.b32.xlu0 %v1892, 32
      %v1903 = vpop.permute.xlu0 %1902
      %1904 = vrot.lane.b32.xlu0 %v1893, 32
      %v1905 = vpop.permute.xlu0 %1904
      %1906 = vrot.lane.b32.xlu0 %v1894, 32
      %v1907 = vpop.permute.xlu0 %1906
      %1908 = vrot.lane.b32.xlu0 %v1895, 32
      %v1909 = vpop.permute.xlu0 %1908
      %1910 = vrot.lane.b32.xlu0 %v1896, 32
      %v1911 = vpop.permute.xlu0 %1910
      %v1912 = vsel %vm934, %v1903, %v1905
      %v1913 = vsel %vm934, %v1905, %v1907
      %v1914 = vsel %vm934, %v1907, %v1909
      %v1915 = vsel %vm934, %v1909, %v1911
      %v1920 = vadd.f32 %v1876, %v1912
      %v1921 = vadd.f32 %v1877, %v1913
      %v1922 = vadd.f32 %v1878, %v1914
      %v1923 = vadd.f32 %v1879, %v1915
      %s1924 = scalar_lea.vmem %s9, 112
      %v1925 = vld [vmem:[%s1924] sm:$0xff]
      %v1926 = vld [vmem:[#allocation3 + $0x8] sm:$0xff]
      %v1927 = vld [vmem:[#allocation3 + $0x10] sm:$0xff]
      %v1928 = vld [vmem:[#allocation3 + $0x18] sm:$0xff]
      %v1929 = vld [vmem:[#allocation3 + $0x20] sm:$0xff]
      %v1930 = vld [vmem:[#allocation3 + $0x28] sm:$0xff]
      %1932 = vset.pattern.permute.xlu0 0
      %1933 = vperm.xlu0 %1932, %v1925
      %v1934 = vpop.permute.xlu0 %1933
      %v1936 = vmul.f32 %v1934, %v1926
      %v1937 = vmul.f32 %v1934, %v1927
      %v1938 = vmul.f32 %v1934, %v1928
      %v1939 = vmul.f32 %v1934, %v1929
      %v1940 = vmul.f32 %v1934, %v1930
      %1946 = vrot.lane.b32.xlu0 %v1936, 64
      %v1947 = vpop.permute.xlu0 %1946
      %1948 = vrot.lane.b32.xlu0 %v1937, 64
      %v1949 = vpop.permute.xlu0 %1948
      %1950 = vrot.lane.b32.xlu0 %v1938, 64
      %v1951 = vpop.permute.xlu0 %1950
      %1952 = vrot.lane.b32.xlu0 %v1939, 64
      %v1953 = vpop.permute.xlu0 %1952
      %1954 = vrot.lane.b32.xlu0 %v1940, 64
      %v1955 = vpop.permute.xlu0 %1954
      %v1956 = vsel %vm894, %v1947, %v1949
      %v1957 = vsel %vm894, %v1949, %v1951
      %v1958 = vsel %vm894, %v1951, %v1953
      %v1959 = vsel %vm894, %v1953, %v1955
      %v1964 = vadd.f32 %v1920, %v1956
      %v1965 = vadd.f32 %v1921, %v1957
      %v1966 = vadd.f32 %v1922, %v1958
      %v1967 = vadd.f32 %v1923, %v1959
      %s1968 = scalar_lea.vmem %s9, 168
      %v1969 = vld [vmem:[%s1968] sm:$0xff]
      %v1970 = vld [vmem:[#allocation3 + $0x10] sm:$0xff]
      %v1971 = vld [vmem:[#allocation3 + $0x18] sm:$0xff]
      %v1972 = vld [vmem:[#allocation3 + $0x20] sm:$0xff]
      %v1973 = vld [vmem:[#allocation3 + $0x28] sm:$0xff]
      %v1974 = vld [vmem:[#allocation3 + $0x30] sm:$0xff]
      %1976 = vset.pattern.permute.xlu0 0
      %1977 = vperm.xlu0 %1976, %v1969
      %v1978 = vpop.permute.xlu0 %1977
      %v1980 = vmul.f32 %v1978, %v1970
      %v1981 = vmul.f32 %v1978, %v1971
      %v1982 = vmul.f32 %v1978, %v1972
      %v1983 = vmul.f32 %v1978, %v1973
      %v1984 = vmul.f32 %v1978, %v1974
      %1990 = vrot.lane.b32.xlu0 %v1980, 96
      %v1991 = vpop.permute.xlu0 %1990
      %1992 = vrot.lane.b32.xlu0 %v1981, 96
      %v1993 = vpop.permute.xlu0 %1992
      %1994 = vrot.lane.b32.xlu0 %v1982, 96
      %v1995 = vpop.permute.xlu0 %1994
      %1996 = vrot.lane.b32.xlu0 %v1983, 96
      %v1997 = vpop.permute.xlu0 %1996
      %1998 = vrot.lane.b32.xlu0 %v1984, 96
      %v1999 = vpop.permute.xlu0 %1998
      %v2000 = vsel %vm854, %v1991, %v1993
      %v2001 = vsel %vm854, %v1993, %v1995
      %v2002 = vsel %vm854, %v1995, %v1997
      %v2003 = vsel %vm854, %v1997, %v1999
      %v2008 = vadd.f32 %v1964, %v2000
      %v2009 = vadd.f32 %v1965, %v2001
      %v2010 = vadd.f32 %v1966, %v2002
      %v2011 = vadd.f32 %v1967, %v2003
      %s2012 = scalar_lea.vmem %s9, 224
      %v2013 = vld [vmem:[%s2012] sm:$0xff]
      %2015 = vset.pattern.permute.xlu0 0
      %2016 = vperm.xlu0 %2015, %v2013
      %v2017 = vpop.permute.xlu0 %2016
      %v2019 = vmul.f32 %v2017, %v1971
      %v2020 = vmul.f32 %v2017, %v1972
      %v2021 = vmul.f32 %v2017, %v1973
      %v2022 = vmul.f32 %v2017, %v1974
      %v2023 = vadd.f32 %v2008, %v2019
      %v2024 = vadd.f32 %v2009, %v2020
      %v2025 = vadd.f32 %v2010, %v2021
      %v2026 = vadd.f32 %v2011, %v2022
      %s2027 = scalar_lea.vmem %s9, 280
      %v2028 = vld [vmem:[%s2027] sm:$0xff]
      %v2029 = vld [vmem:[#allocation3 + $0x18] sm:$0xff]
      %v2030 = vld [vmem:[#allocation3 + $0x20] sm:$0xff]
      %v2031 = vld [vmem:[#allocation3 + $0x28] sm:$0xff]
      %v2032 = vld [vmem:[#allocation3 + $0x30] sm:$0xff]
      %v2033 = vld [vmem:[#allocation3 + $0x38] sm:$0xff]
      %2035 = vset.pattern.permute.xlu0 0
      %2036 = vperm.xlu0 %2035, %v2028
      %v2037 = vpop.permute.xlu0 %2036
      %v2039 = vmul.f32 %v2037, %v2029
      %v2040 = vmul.f32 %v2037, %v2030
      %v2041 = vmul.f32 %v2037, %v2031
      %v2042 = vmul.f32 %v2037, %v2032
      %v2043 = vmul.f32 %v2037, %v2033
      %2049 = vrot.lane.b32.xlu0 %v2039, 32
      %v2050 = vpop.permute.xlu0 %2049
      %2051 = vrot.lane.b32.xlu0 %v2040, 32
      %v2052 = vpop.permute.xlu0 %2051
      %2053 = vrot.lane.b32.xlu0 %v2041, 32
      %v2054 = vpop.permute.xlu0 %2053
      %2055 = vrot.lane.b32.xlu0 %v2042, 32
      %v2056 = vpop.permute.xlu0 %2055
      %2057 = vrot.lane.b32.xlu0 %v2043, 32
      %v2058 = vpop.permute.xlu0 %2057
      %v2059 = vsel %vm934, %v2050, %v2052
      %v2060 = vsel %vm934, %v2052, %v2054
      %v2061 = vsel %vm934, %v2054, %v2056
      %v2062 = vsel %vm934, %v2056, %v2058
      %v2067 = vadd.f32 %v2023, %v2059
      %v2068 = vadd.f32 %v2024, %v2060
      %v2069 = vadd.f32 %v2025, %v2061
      %v2070 = vadd.f32 %v2026, %v2062
      %s2071 = scalar_lea.vmem %s9, 336
      %v2072 = vld [vmem:[%s2071] sm:$0xff]
      %v2073 = vld [vmem:[#allocation3 + $0x20] sm:$0xff]
      %v2074 = vld [vmem:[#allocation3 + $0x28] sm:$0xff]
      %v2075 = vld [vmem:[#allocation3 + $0x30] sm:$0xff]
      %v2076 = vld [vmem:[#allocation3 + $0x38] sm:$0xff]
      %v2077 = vld [vmem:[#allocation3 + $0x40] sm:$0xff]
      %2079 = vset.pattern.permute.xlu0 0
      %2080 = vperm.xlu0 %2079, %v2072
      %v2081 = vpop.permute.xlu0 %2080
      %v2083 = vmul.f32 %v2081, %v2073
      %v2084 = vmul.f32 %v2081, %v2074
      %v2085 = vmul.f32 %v2081, %v2075
      %v2086 = vmul.f32 %v2081, %v2076
      %v2087 = vmul.f32 %v2081, %v2077
      %2093 = vrot.lane.b32.xlu0 %v2083, 64
      %v2094 = vpop.permute.xlu0 %2093
      %2095 = vrot.lane.b32.xlu0 %v2084, 64
      %v2096 = vpop.permute.xlu0 %2095
      %2097 = vrot.lane.b32.xlu0 %v2085, 64
      %v2098 = vpop.permute.xlu0 %2097
      %2099 = vrot.lane.b32.xlu0 %v2086, 64
      %v2100 = vpop.permute.xlu0 %2099
      %2101 = vrot.lane.b32.xlu0 %v2087, 64
      %v2102 = vpop.permute.xlu0 %2101
      %v2103 = vsel %vm894, %v2094, %v2096
      %v2104 = vsel %vm894, %v2096, %v2098
      %v2105 = vsel %vm894, %v2098, %v2100
      %v2106 = vsel %vm894, %v2100, %v2102
      %v2111 = vadd.f32 %v2067, %v2103
      %v2112 = vadd.f32 %v2068, %v2104
      %v2113 = vadd.f32 %v2069, %v2105
      %v2114 = vadd.f32 %v2070, %v2106
      %v2115 = vld [vmem:[%s12] sm:$0xf]
      %v2117 = vlaneseq
      %v2118 = vshrl.u32 %v2117, 7
      %v2119 = vsub.s32 0, %v2118
      %v2120 = vrot.slane %v2115, %v2119
      %v2121 = vlaneseq
      %v2122 = vshrl.u32 %v2121, 7
      %v2123 = vsub.s32 1, %v2122
      %v2124 = vrot.slane %v2115, %v2123
      %v2125 = vlaneseq
      %v2126 = vshrl.u32 %v2125, 7
      %v2127 = vsub.s32 2, %v2126
      %v2128 = vrot.slane %v2115, %v2127
      %v2129 = vlaneseq
      %v2130 = vshrl.u32 %v2129, 7
      %v2131 = vsub.s32 3, %v2130
      %v2132 = vrot.slane %v2115, %v2131
      %v2137 = vmul.f32 %v2120, %v2111
      %v2138 = vmul.f32 %v2124, %v2112
      %v2139 = vmul.f32 %v2128, %v2113
      %v2140 = vmul.f32 %v2132, %v2114
      %s2141 = scalar_lea.vmem %s9, 8
      %v2142 = vld [vmem:[%s2141] sm:$0xff]
      %2144 = vset.pattern.permute.xlu0 0
      %2145 = vperm.xlu0 %2144, %v2142
      %v2146 = vpop.permute.xlu0 %2145
      %v2148 = vmul.f32 %v2146, %v1882
      %v2149 = vmul.f32 %v2146, %v1883
      %v2150 = vmul.f32 %v2146, %v1884
      %v2151 = vmul.f32 %v2146, %v1885
      %v2152 = vmul.f32 %v2146, %v1886
      %s2153 = scalar_lea.vmem %s9, 64
      %v2154 = vld [vmem:[%s2153] sm:$0xff]
      %2156 = vset.pattern.permute.xlu0 0
      %2157 = vperm.xlu0 %2156, %v2154
      %v2158 = vpop.permute.xlu0 %2157
      %v2160 = vmul.f32 %v2158, %v1882
      %v2161 = vmul.f32 %v2158, %v1883
      %v2162 = vmul.f32 %v2158, %v1884
      %v2163 = vmul.f32 %v2158, %v1885
      %v2164 = vmul.f32 %v2158, %v1886
      %2170 = vrot.lane.b32.xlu0 %v2160, 32
      %v2171 = vpop.permute.xlu0 %2170
      %2172 = vrot.lane.b32.xlu0 %v2161, 32
      %v2173 = vpop.permute.xlu0 %2172
      %2174 = vrot.lane.b32.xlu0 %v2162, 32
      %v2175 = vpop.permute.xlu0 %2174
      %2176 = vrot.lane.b32.xlu0 %v2163, 32
      %v2177 = vpop.permute.xlu0 %2176
      %2178 = vrot.lane.b32.xlu0 %v2164, 32
      %v2179 = vpop.permute.xlu0 %2178
      %v2180 = vsel %vm934, %v2171, %v2173
      %v2181 = vsel %vm934, %v2173, %v2175
      %v2182 = vsel %vm934, %v2175, %v2177
      %v2183 = vsel %vm934, %v2177, %v2179
      %v2189 = vadd.f32 %v2148, %v2180
      %v2190 = vadd.f32 %v2149, %v2181
      %v2191 = vadd.f32 %v2150, %v2182
      %v2192 = vadd.f32 %v2151, %v2183
      %v2193 = vadd.f32 %v2152, %v2179
      %s2194 = scalar_lea.vmem %s9, 120
      %v2195 = vld [vmem:[%s2194] sm:$0xff]
      %2197 = vset.pattern.permute.xlu0 0
      %2198 = vperm.xlu0 %2197, %v2195
      %v2199 = vpop.permute.xlu0 %2198
      %v2201 = vmul.f32 %v2199, %v1926
      %v2202 = vmul.f32 %v2199, %v1927
      %v2203 = vmul.f32 %v2199, %v1928
      %v2204 = vmul.f32 %v2199, %v1929
      %v2205 = vmul.f32 %v2199, %v1930
      %2211 = vrot.lane.b32.xlu0 %v2201, 64
      %v2212 = vpop.permute.xlu0 %2211
      %2213 = vrot.lane.b32.xlu0 %v2202, 64
      %v2214 = vpop.permute.xlu0 %2213
      %2215 = vrot.lane.b32.xlu0 %v2203, 64
      %v2216 = vpop.permute.xlu0 %2215
      %2217 = vrot.lane.b32.xlu0 %v2204, 64
      %v2218 = vpop.permute.xlu0 %2217
      %2219 = vrot.lane.b32.xlu0 %v2205, 64
      %v2220 = vpop.permute.xlu0 %2219
      %v2221 = vsel %vm894, %v2212, %v2214
      %v2222 = vsel %vm894, %v2214, %v2216
      %v2223 = vsel %vm894, %v2216, %v2218
      %v2224 = vsel %vm894, %v2218, %v2220
      %v2230 = vadd.f32 %v2189, %v2221
      %v2231 = vadd.f32 %v2190, %v2222
      %v2232 = vadd.f32 %v2191, %v2223
      %v2233 = vadd.f32 %v2192, %v2224
      %v2234 = vadd.f32 %v2193, %v2220
      %s2235 = scalar_lea.vmem %s9, 176
      %v2236 = vld [vmem:[%s2235] sm:$0xff]
      %2238 = vset.pattern.permute.xlu0 0
      %2239 = vperm.xlu0 %2238, %v2236
      %v2240 = vpop.permute.xlu0 %2239
      %v2242 = vmul.f32 %v2240, %v1970
      %v2243 = vmul.f32 %v2240, %v1971
      %v2244 = vmul.f32 %v2240, %v1972
      %v2245 = vmul.f32 %v2240, %v1973
      %v2246 = vmul.f32 %v2240, %v1974
      %2252 = vrot.lane.b32.xlu0 %v2242, 96
      %v2253 = vpop.permute.xlu0 %2252
      %2254 = vrot.lane.b32.xlu0 %v2243, 96
      %v2255 = vpop.permute.xlu0 %2254
      %2256 = vrot.lane.b32.xlu0 %v2244, 96
      %v2257 = vpop.permute.xlu0 %2256
      %2258 = vrot.lane.b32.xlu0 %v2245, 96
      %v2259 = vpop.permute.xlu0 %2258
      %2260 = vrot.lane.b32.xlu0 %v2246, 96
      %v2261 = vpop.permute.xlu0 %2260
      %v2262 = vsel %vm854, %v2253, %v2255
      %v2263 = vsel %vm854, %v2255, %v2257
      %v2264 = vsel %vm854, %v2257, %v2259
      %v2265 = vsel %vm854, %v2259, %v2261
      %v2271 = vadd.f32 %v2230, %v2262
      %v2272 = vadd.f32 %v2231, %v2263
      %v2273 = vadd.f32 %v2232, %v2264
      %v2274 = vadd.f32 %v2233, %v2265
      %v2275 = vadd.f32 %v2234, %v2261
      %s2276 = scalar_lea.vmem %s9, 232
      %v2277 = vld [vmem:[%s2276] sm:$0xff]
      %2279 = vset.pattern.permute.xlu0 0
      %2280 = vperm.xlu0 %2279, %v2277
      %v2281 = vpop.permute.xlu0 %2280
      %v2283 = vmul.f32 %v2281, %v2029
      %v2284 = vmul.f32 %v2281, %v2030
      %v2285 = vmul.f32 %v2281, %v2031
      %v2286 = vmul.f32 %v2281, %v2032
      %v2287 = vmul.f32 %v2281, %v2033
      %v2288 = vadd.f32 %v2271, %v2283
      %v2289 = vadd.f32 %v2272, %v2284
      %v2290 = vadd.f32 %v2273, %v2285
      %v2291 = vadd.f32 %v2274, %v2286
      %v2292 = vadd.f32 %v2275, %v2287
      %s2293 = scalar_lea.vmem %s9, 288
      %v2294 = vld [vmem:[%s2293] sm:$0xff]
      %2296 = vset.pattern.permute.xlu0 0
      %2297 = vperm.xlu0 %2296, %v2294
      %v2298 = vpop.permute.xlu0 %2297
      %v2300 = vmul.f32 %v2298, %v2029
      %v2301 = vmul.f32 %v2298, %v2030
      %v2302 = vmul.f32 %v2298, %v2031
      %v2303 = vmul.f32 %v2298, %v2032
      %v2304 = vmul.f32 %v2298, %v2033
      %2310 = vrot.lane.b32.xlu0 %v2300, 32
      %v2311 = vpop.permute.xlu0 %2310
      %2312 = vrot.lane.b32.xlu0 %v2301, 32
      %v2313 = vpop.permute.xlu0 %2312
      %2314 = vrot.lane.b32.xlu0 %v2302, 32
      %v2315 = vpop.permute.xlu0 %2314
      %2316 = vrot.lane.b32.xlu0 %v2303, 32
      %v2317 = vpop.permute.xlu0 %2316
      %2318 = vrot.lane.b32.xlu0 %v2304, 32
      %v2319 = vpop.permute.xlu0 %2318
      %v2320 = vsel %vm934, %v2311, %v2313
      %v2321 = vsel %vm934, %v2313, %v2315
      %v2322 = vsel %vm934, %v2315, %v2317
      %v2323 = vsel %vm934, %v2317, %v2319
      %v2329 = vadd.f32 %v2288, %v2320
      %v2330 = vadd.f32 %v2289, %v2321
      %v2331 = vadd.f32 %v2290, %v2322
      %v2332 = vadd.f32 %v2291, %v2323
      %v2333 = vadd.f32 %v2292, %v2319
      %s2334 = scalar_lea.vmem %s9, 344
      %v2335 = vld [vmem:[%s2334] sm:$0xff]
      %2337 = vset.pattern.permute.xlu0 0
      %2338 = vperm.xlu0 %2337, %v2335
      %v2339 = vpop.permute.xlu0 %2338
      %v2341 = vmul.f32 %v2339, %v2073
      %v2342 = vmul.f32 %v2339, %v2074
      %v2343 = vmul.f32 %v2339, %v2075
      %v2344 = vmul.f32 %v2339, %v2076
      %v2345 = vmul.f32 %v2339, %v2077
      %2351 = vrot.lane.b32.xlu0 %v2341, 64
      %v2352 = vpop.permute.xlu0 %2351
      %2353 = vrot.lane.b32.xlu0 %v2342, 64
      %v2354 = vpop.permute.xlu0 %2353
      %2355 = vrot.lane.b32.xlu0 %v2343, 64
      %v2356 = vpop.permute.xlu0 %2355
      %2357 = vrot.lane.b32.xlu0 %v2344, 64
      %v2358 = vpop.permute.xlu0 %2357
      %2359 = vrot.lane.b32.xlu0 %v2345, 64
      %v2360 = vpop.permute.xlu0 %2359
      %v2361 = vsel %vm894, %v2352, %v2354
      %v2362 = vsel %vm894, %v2354, %v2356
      %v2363 = vsel %vm894, %v2356, %v2358
      %v2364 = vsel %vm894, %v2358, %v2360
      %v2370 = vadd.f32 %v2329, %v2361
      %v2371 = vadd.f32 %v2330, %v2362
      %v2372 = vadd.f32 %v2331, %v2363
      %v2373 = vadd.f32 %v2332, %v2364
      %v2374 = vadd.f32 %v2333, %v2360
      %s2375 = scalar_lea.vmem %s12, 4
      %v2376 = vld [vmem:[%s2375] sm:$0xf]
      %v2378 = vlaneseq
      %v2379 = vshrl.u32 %v2378, 7
      %v2380 = vsub.s32 0, %v2379
      %v2381 = vrot.slane %v2376, %v2380
      %v2382 = vlaneseq
      %v2383 = vshrl.u32 %v2382, 7
      %v2384 = vsub.s32 1, %v2383
      %v2385 = vrot.slane %v2376, %v2384
      %v2386 = vlaneseq
      %v2387 = vshrl.u32 %v2386, 7
      %v2388 = vsub.s32 2, %v2387
      %v2389 = vrot.slane %v2376, %v2388
      %v2390 = vlaneseq
      %v2391 = vshrl.u32 %v2390, 7
      %v2392 = vsub.s32 3, %v2391
      %v2393 = vrot.slane %v2376, %v2392
      %2403 = vrot.lane.b32.xlu0 %v2370, 125
      %v2404 = vpop.permute.xlu0 %2403
      %2405 = vrot.lane.b32.xlu0 %v2371, 125
      %v2406 = vpop.permute.xlu0 %2405
      %2407 = vrot.lane.b32.xlu0 %v2372, 125
      %v2408 = vpop.permute.xlu0 %2407
      %2409 = vrot.lane.b32.xlu0 %v2373, 125
      %v2410 = vpop.permute.xlu0 %2409
      %2411 = vrot.lane.b32.xlu0 %v2374, 125
      %v2412 = vpop.permute.xlu0 %2411
      %v2413 = vsel %vm1597, %v2404, %v2406
      %v2414 = vsel %vm1597, %v2406, %v2408
      %v2415 = vsel %vm1597, %v2408, %v2410
      %v2416 = vsel %vm1597, %v2410, %v2412
      %v2421 = vmul.f32 %v2381, %v2413
      %v2422 = vmul.f32 %v2385, %v2414
      %v2423 = vmul.f32 %v2389, %v2415
      %v2424 = vmul.f32 %v2393, %v2416
      %v2425 = vadd.f32 %v2137, %v2421
      %v2426 = vadd.f32 %v2138, %v2422
      %v2427 = vadd.f32 %v2139, %v2423
      %v2428 = vadd.f32 %v2140, %v2424
      %s2429 = scalar_lea.vmem %s9, 16
      %v2430 = vld [vmem:[%s2429] sm:$0xff]
      %2432 = vset.pattern.permute.xlu0 0
      %2433 = vperm.xlu0 %2432, %v2430
      %v2434 = vpop.permute.xlu0 %2433
      %v2436 = vmul.f32 %v2434, %v1882
      %v2437 = vmul.f32 %v2434, %v1883
      %v2438 = vmul.f32 %v2434, %v1884
      %v2439 = vmul.f32 %v2434, %v1885
      %v2440 = vmul.f32 %v2434, %v1886
      %s2441 = scalar_lea.vmem %s9, 72
      %v2442 = vld [vmem:[%s2441] sm:$0xff]
      %2444 = vset.pattern.permute.xlu0 0
      %2445 = vperm.xlu0 %2444, %v2442
      %v2446 = vpop.permute.xlu0 %2445
      %v2448 = vmul.f32 %v2446, %v1882
      %v2449 = vmul.f32 %v2446, %v1883
      %v2450 = vmul.f32 %v2446, %v1884
      %v2451 = vmul.f32 %v2446, %v1885
      %v2452 = vmul.f32 %v2446, %v1886
      %2458 = vrot.lane.b32.xlu0 %v2448, 32
      %v2459 = vpop.permute.xlu0 %2458
      %2460 = vrot.lane.b32.xlu0 %v2449, 32
      %v2461 = vpop.permute.xlu0 %2460
      %2462 = vrot.lane.b32.xlu0 %v2450, 32
      %v2463 = vpop.permute.xlu0 %2462
      %2464 = vrot.lane.b32.xlu0 %v2451, 32
      %v2465 = vpop.permute.xlu0 %2464
      %2466 = vrot.lane.b32.xlu0 %v2452, 32
      %v2467 = vpop.permute.xlu0 %2466
      %v2468 = vsel %vm934, %v2459, %v2461
      %v2469 = vsel %vm934, %v2461, %v2463
      %v2470 = vsel %vm934, %v2463, %v2465
      %v2471 = vsel %vm934, %v2465, %v2467
      %v2477 = vadd.f32 %v2436, %v2468
      %v2478 = vadd.f32 %v2437, %v2469
      %v2479 = vadd.f32 %v2438, %v2470
      %v2480 = vadd.f32 %v2439, %v2471
      %v2481 = vadd.f32 %v2440, %v2467
      %s2482 = scalar_lea.vmem %s9, 128
      %v2483 = vld [vmem:[%s2482] sm:$0xff]
      %2485 = vset.pattern.permute.xlu0 0
      %2486 = vperm.xlu0 %2485, %v2483
      %v2487 = vpop.permute.xlu0 %2486
      %v2489 = vmul.f32 %v2487, %v1926
      %v2490 = vmul.f32 %v2487, %v1927
      %v2491 = vmul.f32 %v2487, %v1928
      %v2492 = vmul.f32 %v2487, %v1929
      %v2493 = vmul.f32 %v2487, %v1930
      %2499 = vrot.lane.b32.xlu0 %v2489, 64
      %v2500 = vpop.permute.xlu0 %2499
      %2501 = vrot.lane.b32.xlu0 %v2490, 64
      %v2502 = vpop.permute.xlu0 %2501
      %2503 = vrot.lane.b32.xlu0 %v2491, 64
      %v2504 = vpop.permute.xlu0 %2503
      %2505 = vrot.lane.b32.xlu0 %v2492, 64
      %v2506 = vpop.permute.xlu0 %2505
      %2507 = vrot.lane.b32.xlu0 %v2493, 64
      %v2508 = vpop.permute.xlu0 %2507
      %v2509 = vsel %vm894, %v2500, %v2502
      %v2510 = vsel %vm894, %v2502, %v2504
      %v2511 = vsel %vm894, %v2504, %v2506
      %v2512 = vsel %vm894, %v2506, %v2508
      %v2518 = vadd.f32 %v2477, %v2509
      %v2519 = vadd.f32 %v2478, %v2510
      %v2520 = vadd.f32 %v2479, %v2511
      %v2521 = vadd.f32 %v2480, %v2512
      %v2522 = vadd.f32 %v2481, %v2508
      %s2523 = scalar_lea.vmem %s9, 184
      %v2524 = vld [vmem:[%s2523] sm:$0xff]
      %2526 = vset.pattern.permute.xlu0 0
      %2527 = vperm.xlu0 %2526, %v2524
      %v2528 = vpop.permute.xlu0 %2527
      %v2530 = vmul.f32 %v2528, %v1970
      %v2531 = vmul.f32 %v2528, %v1971
      %v2532 = vmul.f32 %v2528, %v1972
      %v2533 = vmul.f32 %v2528, %v1973
      %v2534 = vmul.f32 %v2528, %v1974
      %2540 = vrot.lane.b32.xlu0 %v2530, 96
      %v2541 = vpop.permute.xlu0 %2540
      %2542 = vrot.lane.b32.xlu0 %v2531, 96
      %v2543 = vpop.permute.xlu0 %2542
      %2544 = vrot.lane.b32.xlu0 %v2532, 96
      %v2545 = vpop.permute.xlu0 %2544
      %2546 = vrot.lane.b32.xlu0 %v2533, 96
      %v2547 = vpop.permute.xlu0 %2546
      %2548 = vrot.lane.b32.xlu0 %v2534, 96
      %v2549 = vpop.permute.xlu0 %2548
      %v2550 = vsel %vm854, %v2541, %v2543
      %v2551 = vsel %vm854, %v2543, %v2545
      %v2552 = vsel %vm854, %v2545, %v2547
      %v2553 = vsel %vm854, %v2547, %v2549
      %v2559 = vadd.f32 %v2518, %v2550
      %v2560 = vadd.f32 %v2519, %v2551
      %v2561 = vadd.f32 %v2520, %v2552
      %v2562 = vadd.f32 %v2521, %v2553
      %v2563 = vadd.f32 %v2522, %v2549
      %s2564 = scalar_lea.vmem %s9, 240
      %v2565 = vld [vmem:[%s2564] sm:$0xff]
      %2567 = vset.pattern.permute.xlu0 0
      %2568 = vperm.xlu0 %2567, %v2565
      %v2569 = vpop.permute.xlu0 %2568
      %v2571 = vmul.f32 %v2569, %v2029
      %v2572 = vmul.f32 %v2569, %v2030
      %v2573 = vmul.f32 %v2569, %v2031
      %v2574 = vmul.f32 %v2569, %v2032
      %v2575 = vmul.f32 %v2569, %v2033
      %v2576 = vadd.f32 %v2559, %v2571
      %v2577 = vadd.f32 %v2560, %v2572
      %v2578 = vadd.f32 %v2561, %v2573
      %v2579 = vadd.f32 %v2562, %v2574
      %v2580 = vadd.f32 %v2563, %v2575
      %s2581 = scalar_lea.vmem %s9, 296
      %v2582 = vld [vmem:[%s2581] sm:$0xff]
      %2584 = vset.pattern.permute.xlu0 0
      %2585 = vperm.xlu0 %2584, %v2582
      %v2586 = vpop.permute.xlu0 %2585
      %v2588 = vmul.f32 %v2586, %v2029
      %v2589 = vmul.f32 %v2586, %v2030
      %v2590 = vmul.f32 %v2586, %v2031
      %v2591 = vmul.f32 %v2586, %v2032
      %v2592 = vmul.f32 %v2586, %v2033
      %2598 = vrot.lane.b32.xlu0 %v2588, 32
      %v2599 = vpop.permute.xlu0 %2598
      %2600 = vrot.lane.b32.xlu0 %v2589, 32
      %v2601 = vpop.permute.xlu0 %2600
      %2602 = vrot.lane.b32.xlu0 %v2590, 32
      %v2603 = vpop.permute.xlu0 %2602
      %2604 = vrot.lane.b32.xlu0 %v2591, 32
      %v2605 = vpop.permute.xlu0 %2604
      %2606 = vrot.lane.b32.xlu0 %v2592, 32
      %v2607 = vpop.permute.xlu0 %2606
      %v2608 = vsel %vm934, %v2599, %v2601
      %v2609 = vsel %vm934, %v2601, %v2603
      %v2610 = vsel %vm934, %v2603, %v2605
      %v2611 = vsel %vm934, %v2605, %v2607
      %v2617 = vadd.f32 %v2576, %v2608
      %v2618 = vadd.f32 %v2577, %v2609
      %v2619 = vadd.f32 %v2578, %v2610
      %v2620 = vadd.f32 %v2579, %v2611
      %v2621 = vadd.f32 %v2580, %v2607
      %s2622 = scalar_lea.vmem %s9, 352
      %v2623 = vld [vmem:[%s2622] sm:$0xff]
      %2625 = vset.pattern.permute.xlu0 0
      %2626 = vperm.xlu0 %2625, %v2623
      %v2627 = vpop.permute.xlu0 %2626
      %v2629 = vmul.f32 %v2627, %v2073
      %v2630 = vmul.f32 %v2627, %v2074
      %v2631 = vmul.f32 %v2627, %v2075
      %v2632 = vmul.f32 %v2627, %v2076
      %v2633 = vmul.f32 %v2627, %v2077
      %2639 = vrot.lane.b32.xlu0 %v2629, 64
      %v2640 = vpop.permute.xlu0 %2639
      %2641 = vrot.lane.b32.xlu0 %v2630, 64
      %v2642 = vpop.permute.xlu0 %2641
      %2643 = vrot.lane.b32.xlu0 %v2631, 64
      %v2644 = vpop.permute.xlu0 %2643
      %2645 = vrot.lane.b32.xlu0 %v2632, 64
      %v2646 = vpop.permute.xlu0 %2645
      %2647 = vrot.lane.b32.xlu0 %v2633, 64
      %v2648 = vpop.permute.xlu0 %2647
      %v2649 = vsel %vm894, %v2640, %v2642
      %v2650 = vsel %vm894, %v2642, %v2644
      %v2651 = vsel %vm894, %v2644, %v2646
      %v2652 = vsel %vm894, %v2646, %v2648
      %v2658 = vadd.f32 %v2617, %v2649
      %v2659 = vadd.f32 %v2618, %v2650
      %v2660 = vadd.f32 %v2619, %v2651
      %v2661 = vadd.f32 %v2620, %v2652
      %v2662 = vadd.f32 %v2621, %v2648
      %s2663 = scalar_lea.vmem %s12, 8
      %v2664 = vld [vmem:[%s2663] sm:$0xf]
      %v2666 = vlaneseq
      %v2667 = vshrl.u32 %v2666, 7
      %v2668 = vsub.s32 0, %v2667
      %v2669 = vrot.slane %v2664, %v2668
      %v2670 = vlaneseq
      %v2671 = vshrl.u32 %v2670, 7
      %v2672 = vsub.s32 1, %v2671
      %v2673 = vrot.slane %v2664, %v2672
      %v2674 = vlaneseq
      %v2675 = vshrl.u32 %v2674, 7
      %v2676 = vsub.s32 2, %v2675
      %v2677 = vrot.slane %v2664, %v2676
      %v2678 = vlaneseq
      %v2679 = vshrl.u32 %v2678, 7
      %v2680 = vsub.s32 3, %v2679
      %v2681 = vrot.slane %v2664, %v2680
      %2691 = vrot.lane.b32.xlu0 %v2658, 122
      %v2692 = vpop.permute.xlu0 %2691
      %2693 = vrot.lane.b32.xlu0 %v2659, 122
      %v2694 = vpop.permute.xlu0 %2693
      %2695 = vrot.lane.b32.xlu0 %v2660, 122
      %v2696 = vpop.permute.xlu0 %2695
      %2697 = vrot.lane.b32.xlu0 %v2661, 122
      %v2698 = vpop.permute.xlu0 %2697
      %2699 = vrot.lane.b32.xlu0 %v2662, 122
      %v2700 = vpop.permute.xlu0 %2699
      %vm2701 = vcmask 998400
      %v2702 = vsel %vm2701, %v2692, %v2694
      %v2703 = vsel %vm2701, %v2694, %v2696
      %v2704 = vsel %vm2701, %v2696, %v2698
      %v2705 = vsel %vm2701, %v2698, %v2700
      %v2710 = vmul.f32 %v2669, %v2702
      %v2711 = vmul.f32 %v2673, %v2703
      %v2712 = vmul.f32 %v2677, %v2704
      %v2713 = vmul.f32 %v2681, %v2705
      %v2714 = vadd.f32 %v2425, %v2710
      %v2715 = vadd.f32 %v2426, %v2711
      %v2716 = vadd.f32 %v2427, %v2712
      %v2717 = vadd.f32 %v2428, %v2713
      %s2718 = scalar_lea.vmem %s9, 24
      %v2719 = vld [vmem:[%s2718] sm:$0xff]
      %2721 = vset.pattern.permute.xlu0 0
      %2722 = vperm.xlu0 %2721, %v2719
      %v2723 = vpop.permute.xlu0 %2722
      %v2725 = vmul.f32 %v2723, %v1882
      %v2726 = vmul.f32 %v2723, %v1883
      %v2727 = vmul.f32 %v2723, %v1884
      %v2728 = vmul.f32 %v2723, %v1885
      %v2729 = vmul.f32 %v2723, %v1886
      %s2730 = scalar_lea.vmem %s9, 80
      %v2731 = vld [vmem:[%s2730] sm:$0xff]
      %2733 = vset.pattern.permute.xlu0 0
      %2734 = vperm.xlu0 %2733, %v2731
      %v2735 = vpop.permute.xlu0 %2734
      %v2737 = vmul.f32 %v2735, %v1882
      %v2738 = vmul.f32 %v2735, %v1883
      %v2739 = vmul.f32 %v2735, %v1884
      %v2740 = vmul.f32 %v2735, %v1885
      %v2741 = vmul.f32 %v2735, %v1886
      %2747 = vrot.lane.b32.xlu0 %v2737, 32
      %v2748 = vpop.permute.xlu0 %2747
      %2749 = vrot.lane.b32.xlu0 %v2738, 32
      %v2750 = vpop.permute.xlu0 %2749
      %2751 = vrot.lane.b32.xlu0 %v2739, 32
      %v2752 = vpop.permute.xlu0 %2751
      %2753 = vrot.lane.b32.xlu0 %v2740, 32
      %v2754 = vpop.permute.xlu0 %2753
      %2755 = vrot.lane.b32.xlu0 %v2741, 32
      %v2756 = vpop.permute.xlu0 %2755
      %v2757 = vsel %vm934, %v2748, %v2750
      %v2758 = vsel %vm934, %v2750, %v2752
      %v2759 = vsel %vm934, %v2752, %v2754
      %v2760 = vsel %vm934, %v2754, %v2756
      %v2766 = vadd.f32 %v2725, %v2757
      %v2767 = vadd.f32 %v2726, %v2758
      %v2768 = vadd.f32 %v2727, %v2759
      %v2769 = vadd.f32 %v2728, %v2760
      %v2770 = vadd.f32 %v2729, %v2756
      %s2771 = scalar_lea.vmem %s9, 136
      %v2772 = vld [vmem:[%s2771] sm:$0xff]
      %2774 = vset.pattern.permute.xlu0 0
      %2775 = vperm.xlu0 %2774, %v2772
      %v2776 = vpop.permute.xlu0 %2775
      %v2778 = vmul.f32 %v2776, %v1926
      %v2779 = vmul.f32 %v2776, %v1927
      %v2780 = vmul.f32 %v2776, %v1928
      %v2781 = vmul.f32 %v2776, %v1929
      %v2782 = vmul.f32 %v2776, %v1930
      %2788 = vrot.lane.b32.xlu0 %v2778, 64
      %v2789 = vpop.permute.xlu0 %2788
      %2790 = vrot.lane.b32.xlu0 %v2779, 64
      %v2791 = vpop.permute.xlu0 %2790
      %2792 = vrot.lane.b32.xlu0 %v2780, 64
      %v2793 = vpop.permute.xlu0 %2792
      %2794 = vrot.lane.b32.xlu0 %v2781, 64
      %v2795 = vpop.permute.xlu0 %2794
      %2796 = vrot.lane.b32.xlu0 %v2782, 64
      %v2797 = vpop.permute.xlu0 %2796
      %v2798 = vsel %vm894, %v2789, %v2791
      %v2799 = vsel %vm894, %v2791, %v2793
      %v2800 = vsel %vm894, %v2793, %v2795
      %v2801 = vsel %vm894, %v2795, %v2797
      %v2807 = vadd.f32 %v2766, %v2798
      %v2808 = vadd.f32 %v2767, %v2799
      %v2809 = vadd.f32 %v2768, %v2800
      %v2810 = vadd.f32 %v2769, %v2801
      %v2811 = vadd.f32 %v2770, %v2797
      %s2812 = scalar_lea.vmem %s9, 192
      %v2813 = vld [vmem:[%s2812] sm:$0xff]
      %2815 = vset.pattern.permute.xlu0 0
      %2816 = vperm.xlu0 %2815, %v2813
      %v2817 = vpop.permute.xlu0 %2816
      %v2819 = vmul.f32 %v2817, %v1970
      %v2820 = vmul.f32 %v2817, %v1971
      %v2821 = vmul.f32 %v2817, %v1972
      %v2822 = vmul.f32 %v2817, %v1973
      %v2823 = vmul.f32 %v2817, %v1974
      %2829 = vrot.lane.b32.xlu0 %v2819, 96
      %v2830 = vpop.permute.xlu0 %2829
      %2831 = vrot.lane.b32.xlu0 %v2820, 96
      %v2832 = vpop.permute.xlu0 %2831
      %2833 = vrot.lane.b32.xlu0 %v2821, 96
      %v2834 = vpop.permute.xlu0 %2833
      %2835 = vrot.lane.b32.xlu0 %v2822, 96
      %v2836 = vpop.permute.xlu0 %2835
      %2837 = vrot.lane.b32.xlu0 %v2823, 96
      %v2838 = vpop.permute.xlu0 %2837
      %v2839 = vsel %vm854, %v2830, %v2832
      %v2840 = vsel %vm854, %v2832, %v2834
      %v2841 = vsel %vm854, %v2834, %v2836
      %v2842 = vsel %vm854, %v2836, %v2838
      %v2848 = vadd.f32 %v2807, %v2839
      %v2849 = vadd.f32 %v2808, %v2840
      %v2850 = vadd.f32 %v2809, %v2841
      %v2851 = vadd.f32 %v2810, %v2842
      %v2852 = vadd.f32 %v2811, %v2838
      %s2853 = scalar_lea.vmem %s9, 248
      %v2854 = vld [vmem:[%s2853] sm:$0xff]
      %2856 = vset.pattern.permute.xlu0 0
      %2857 = vperm.xlu0 %2856, %v2854
      %v2858 = vpop.permute.xlu0 %2857
      %v2860 = vmul.f32 %v2858, %v2029
      %v2861 = vmul.f32 %v2858, %v2030
      %v2862 = vmul.f32 %v2858, %v2031
      %v2863 = vmul.f32 %v2858, %v2032
      %v2864 = vmul.f32 %v2858, %v2033
      %v2865 = vadd.f32 %v2848, %v2860
      %v2866 = vadd.f32 %v2849, %v2861
      %v2867 = vadd.f32 %v2850, %v2862
      %v2868 = vadd.f32 %v2851, %v2863
      %v2869 = vadd.f32 %v2852, %v2864
      %s2870 = scalar_lea.vmem %s9, 304
      %v2871 = vld [vmem:[%s2870] sm:$0xff]
      %2873 = vset.pattern.permute.xlu0 0
      %2874 = vperm.xlu0 %2873, %v2871
      %v2875 = vpop.permute.xlu0 %2874
      %v2877 = vmul.f32 %v2875, %v2029
      %v2878 = vmul.f32 %v2875, %v2030
      %v2879 = vmul.f32 %v2875, %v2031
      %v2880 = vmul.f32 %v2875, %v2032
      %v2881 = vmul.f32 %v2875, %v2033
      %2887 = vrot.lane.b32.xlu0 %v2877, 32
      %v2888 = vpop.permute.xlu0 %2887
      %2889 = vrot.lane.b32.xlu0 %v2878, 32
      %v2890 = vpop.permute.xlu0 %2889
      %2891 = vrot.lane.b32.xlu0 %v2879, 32
      %v2892 = vpop.permute.xlu0 %2891
      %2893 = vrot.lane.b32.xlu0 %v2880, 32
      %v2894 = vpop.permute.xlu0 %2893
      %2895 = vrot.lane.b32.xlu0 %v2881, 32
      %v2896 = vpop.permute.xlu0 %2895
      %v2897 = vsel %vm934, %v2888, %v2890
      %v2898 = vsel %vm934, %v2890, %v2892
      %v2899 = vsel %vm934, %v2892, %v2894
      %v2900 = vsel %vm934, %v2894, %v2896
      %v2906 = vadd.f32 %v2865, %v2897
      %v2907 = vadd.f32 %v2866, %v2898
      %v2908 = vadd.f32 %v2867, %v2899
      %v2909 = vadd.f32 %v2868, %v2900
      %v2910 = vadd.f32 %v2869, %v2896
      %s2911 = scalar_lea.vmem %s9, 360
      %v2912 = vld [vmem:[%s2911] sm:$0xff]
      %2914 = vset.pattern.permute.xlu0 0
      %2915 = vperm.xlu0 %2914, %v2912
      %v2916 = vpop.permute.xlu0 %2915
      %v2918 = vmul.f32 %v2916, %v2073
      %v2919 = vmul.f32 %v2916, %v2074
      %v2920 = vmul.f32 %v2916, %v2075
      %v2921 = vmul.f32 %v2916, %v2076
      %v2922 = vmul.f32 %v2916, %v2077
      %2928 = vrot.lane.b32.xlu0 %v2918, 64
      %v2929 = vpop.permute.xlu0 %2928
      %2930 = vrot.lane.b32.xlu0 %v2919, 64
      %v2931 = vpop.permute.xlu0 %2930
      %2932 = vrot.lane.b32.xlu0 %v2920, 64
      %v2933 = vpop.permute.xlu0 %2932
      %2934 = vrot.lane.b32.xlu0 %v2921, 64
      %v2935 = vpop.permute.xlu0 %2934
      %2936 = vrot.lane.b32.xlu0 %v2922, 64
      %v2937 = vpop.permute.xlu0 %2936
      %v2938 = vsel %vm894, %v2929, %v2931
      %v2939 = vsel %vm894, %v2931, %v2933
      %v2940 = vsel %vm894, %v2933, %v2935
      %v2941 = vsel %vm894, %v2935, %v2937
      %v2947 = vadd.f32 %v2906, %v2938
      %v2948 = vadd.f32 %v2907, %v2939
      %v2949 = vadd.f32 %v2908, %v2940
      %v2950 = vadd.f32 %v2909, %v2941
      %v2951 = vadd.f32 %v2910, %v2937
      %s2952 = scalar_lea.vmem %s12, 12
      %v2953 = vld [vmem:[%s2952] sm:$0xf]
      %v2955 = vlaneseq
      %v2956 = vshrl.u32 %v2955, 7
      %v2957 = vsub.s32 0, %v2956
      %v2958 = vrot.slane %v2953, %v2957
      %v2959 = vlaneseq
      %v2960 = vshrl.u32 %v2959, 7
      %v2961 = vsub.s32 1, %v2960
      %v2962 = vrot.slane %v2953, %v2961
      %v2963 = vlaneseq
      %v2964 = vshrl.u32 %v2963, 7
      %v2965 = vsub.s32 2, %v2964
      %v2966 = vrot.slane %v2953, %v2965
      %v2967 = vlaneseq
      %v2968 = vshrl.u32 %v2967, 7
      %v2969 = vsub.s32 3, %v2968
      %v2970 = vrot.slane %v2953, %v2969
      %2980 = vrot.lane.b32.xlu0 %v2947, 119
      %v2981 = vpop.permute.xlu0 %2980
      %2982 = vrot.lane.b32.xlu0 %v2948, 119
      %v2983 = vpop.permute.xlu0 %2982
      %2984 = vrot.lane.b32.xlu0 %v2949, 119
      %v2985 = vpop.permute.xlu0 %2984
      %2986 = vrot.lane.b32.xlu0 %v2950, 119
      %v2987 = vpop.permute.xlu0 %2986
      %2988 = vrot.lane.b32.xlu0 %v2951, 119
      %v2989 = vpop.permute.xlu0 %2988
      %vm2990 = vcmask 973824
      %v2991 = vsel %vm2990, %v2981, %v2983
      %v2992 = vsel %vm2990, %v2983, %v2985
      %v2993 = vsel %vm2990, %v2985, %v2987
      %v2994 = vsel %vm2990, %v2987, %v2989
      %v2999 = vmul.f32 %v2958, %v2991
      %v3000 = vmul.f32 %v2962, %v2992
      %v3001 = vmul.f32 %v2966, %v2993
      %v3002 = vmul.f32 %v2970, %v2994
      %v3003 = vadd.f32 %v2714, %v2999
      %v3004 = vadd.f32 %v2715, %v3000
      %v3005 = vadd.f32 %v2716, %v3001
      %v3006 = vadd.f32 %v2717, %v3002
      %s3007 = scalar_lea.vmem %s9, 32
      %v3008 = vld [vmem:[%s3007] sm:$0xff]
      %3010 = vset.pattern.permute.xlu0 0
      %3011 = vperm.xlu0 %3010, %v3008
      %v3012 = vpop.permute.xlu0 %3011
      %v3014 = vmul.f32 %v3012, %v1882
      %v3015 = vmul.f32 %v3012, %v1883
      %v3016 = vmul.f32 %v3012, %v1884
      %v3017 = vmul.f32 %v3012, %v1885
      %v3018 = vmul.f32 %v3012, %v1886
      %s3019 = scalar_lea.vmem %s9, 88
      %v3020 = vld [vmem:[%s3019] sm:$0xff]
      %3022 = vset.pattern.permute.xlu0 0
      %3023 = vperm.xlu0 %3022, %v3020
      %v3024 = vpop.permute.xlu0 %3023
      %v3026 = vmul.f32 %v3024, %v1882
      %v3027 = vmul.f32 %v3024, %v1883
      %v3028 = vmul.f32 %v3024, %v1884
      %v3029 = vmul.f32 %v3024, %v1885
      %v3030 = vmul.f32 %v3024, %v1886
      %3036 = vrot.lane.b32.xlu0 %v3026, 32
      %v3037 = vpop.permute.xlu0 %3036
      %3038 = vrot.lane.b32.xlu0 %v3027, 32
      %v3039 = vpop.permute.xlu0 %3038
      %3040 = vrot.lane.b32.xlu0 %v3028, 32
      %v3041 = vpop.permute.xlu0 %3040
      %3042 = vrot.lane.b32.xlu0 %v3029, 32
      %v3043 = vpop.permute.xlu0 %3042
      %3044 = vrot.lane.b32.xlu0 %v3030, 32
      %v3045 = vpop.permute.xlu0 %3044
      %v3046 = vsel %vm934, %v3037, %v3039
      %v3047 = vsel %vm934, %v3039, %v3041
      %v3048 = vsel %vm934, %v3041, %v3043
      %v3049 = vsel %vm934, %v3043, %v3045
      %v3055 = vadd.f32 %v3014, %v3046
      %v3056 = vadd.f32 %v3015, %v3047
      %v3057 = vadd.f32 %v3016, %v3048
      %v3058 = vadd.f32 %v3017, %v3049
      %v3059 = vadd.f32 %v3018, %v3045
      %s3060 = scalar_lea.vmem %s9, 144
      %v3061 = vld [vmem:[%s3060] sm:$0xff]
      %3063 = vset.pattern.permute.xlu0 0
      %3064 = vperm.xlu0 %3063, %v3061
      %v3065 = vpop.permute.xlu0 %3064
      %v3067 = vmul.f32 %v3065, %v1926
      %v3068 = vmul.f32 %v3065, %v1927
      %v3069 = vmul.f32 %v3065, %v1928
      %v3070 = vmul.f32 %v3065, %v1929
      %v3071 = vmul.f32 %v3065, %v1930
      %3077 = vrot.lane.b32.xlu0 %v3067, 64
      %v3078 = vpop.permute.xlu0 %3077
      %3079 = vrot.lane.b32.xlu0 %v3068, 64
      %v3080 = vpop.permute.xlu0 %3079
      %3081 = vrot.lane.b32.xlu0 %v3069, 64
      %v3082 = vpop.permute.xlu0 %3081
      %3083 = vrot.lane.b32.xlu0 %v3070, 64
      %v3084 = vpop.permute.xlu0 %3083
      %3085 = vrot.lane.b32.xlu0 %v3071, 64
      %v3086 = vpop.permute.xlu0 %3085
      %v3087 = vsel %vm894, %v3078, %v3080
      %v3088 = vsel %vm894, %v3080, %v3082
      %v3089 = vsel %vm894, %v3082, %v3084
      %v3090 = vsel %vm894, %v3084, %v3086
      %v3096 = vadd.f32 %v3055, %v3087
      %v3097 = vadd.f32 %v3056, %v3088
      %v3098 = vadd.f32 %v3057, %v3089
      %v3099 = vadd.f32 %v3058, %v3090
      %v3100 = vadd.f32 %v3059, %v3086
      %s3101 = scalar_lea.vmem %s9, 200
      %v3102 = vld [vmem:[%s3101] sm:$0xff]
      %3104 = vset.pattern.permute.xlu0 0
      %3105 = vperm.xlu0 %3104, %v3102
      %v3106 = vpop.permute.xlu0 %3105
      %v3108 = vmul.f32 %v3106, %v1970
      %v3109 = vmul.f32 %v3106, %v1971
      %v3110 = vmul.f32 %v3106, %v1972
      %v3111 = vmul.f32 %v3106, %v1973
      %v3112 = vmul.f32 %v3106, %v1974
      %3118 = vrot.lane.b32.xlu0 %v3108, 96
      %v3119 = vpop.permute.xlu0 %3118
      %3120 = vrot.lane.b32.xlu0 %v3109, 96
      %v3121 = vpop.permute.xlu0 %3120
      %3122 = vrot.lane.b32.xlu0 %v3110, 96
      %v3123 = vpop.permute.xlu0 %3122
      %3124 = vrot.lane.b32.xlu0 %v3111, 96
      %v3125 = vpop.permute.xlu0 %3124
      %3126 = vrot.lane.b32.xlu0 %v3112, 96
      %v3127 = vpop.permute.xlu0 %3126
      %v3128 = vsel %vm854, %v3119, %v3121
      %v3129 = vsel %vm854, %v3121, %v3123
      %v3130 = vsel %vm854, %v3123, %v3125
      %v3131 = vsel %vm854, %v3125, %v3127
      %v3137 = vadd.f32 %v3096, %v3128
      %v3138 = vadd.f32 %v3097, %v3129
      %v3139 = vadd.f32 %v3098, %v3130
      %v3140 = vadd.f32 %v3099, %v3131
      %v3141 = vadd.f32 %v3100, %v3127
      %s3142 = scalar_lea.vmem %s9, 256
      %v3143 = vld [vmem:[%s3142] sm:$0xff]
      %3145 = vset.pattern.permute.xlu0 0
      %3146 = vperm.xlu0 %3145, %v3143
      %v3147 = vpop.permute.xlu0 %3146
      %v3149 = vmul.f32 %v3147, %v2029
      %v3150 = vmul.f32 %v3147, %v2030
      %v3151 = vmul.f32 %v3147, %v2031
      %v3152 = vmul.f32 %v3147, %v2032
      %v3153 = vmul.f32 %v3147, %v2033
      %v3154 = vadd.f32 %v3137, %v3149
      %v3155 = vadd.f32 %v3138, %v3150
      %v3156 = vadd.f32 %v3139, %v3151
      %v3157 = vadd.f32 %v3140, %v3152
      %v3158 = vadd.f32 %v3141, %v3153
      %s3159 = scalar_lea.vmem %s9, 312
      %v3160 = vld [vmem:[%s3159] sm:$0xff]
      %3162 = vset.pattern.permute.xlu0 0
      %3163 = vperm.xlu0 %3162, %v3160
      %v3164 = vpop.permute.xlu0 %3163
      %v3166 = vmul.f32 %v3164, %v2029
      %v3167 = vmul.f32 %v3164, %v2030
      %v3168 = vmul.f32 %v3164, %v2031
      %v3169 = vmul.f32 %v3164, %v2032
      %v3170 = vmul.f32 %v3164, %v2033
      %3176 = vrot.lane.b32.xlu0 %v3166, 32
      %v3177 = vpop.permute.xlu0 %3176
      %3178 = vrot.lane.b32.xlu0 %v3167, 32
      %v3179 = vpop.permute.xlu0 %3178
      %3180 = vrot.lane.b32.xlu0 %v3168, 32
      %v3181 = vpop.permute.xlu0 %3180
      %3182 = vrot.lane.b32.xlu0 %v3169, 32
      %v3183 = vpop.permute.xlu0 %3182
      %3184 = vrot.lane.b32.xlu0 %v3170, 32
      %v3185 = vpop.permute.xlu0 %3184
      %v3186 = vsel %vm934, %v3177, %v3179
      %v3187 = vsel %vm934, %v3179, %v3181
      %v3188 = vsel %vm934, %v3181, %v3183
      %v3189 = vsel %vm934, %v3183, %v3185
      %v3195 = vadd.f32 %v3154, %v3186
      %v3196 = vadd.f32 %v3155, %v3187
      %v3197 = vadd.f32 %v3156, %v3188
      %v3198 = vadd.f32 %v3157, %v3189
      %v3199 = vadd.f32 %v3158, %v3185
      %s3200 = scalar_lea.vmem %s9, 368
      %v3201 = vld [vmem:[%s3200] sm:$0xff]
      %3203 = vset.pattern.permute.xlu0 0
      %3204 = vperm.xlu0 %3203, %v3201
      %v3205 = vpop.permute.xlu0 %3204
      %v3207 = vmul.f32 %v3205, %v2073
      %v3208 = vmul.f32 %v3205, %v2074
      %v3209 = vmul.f32 %v3205, %v2075
      %v3210 = vmul.f32 %v3205, %v2076
      %v3211 = vmul.f32 %v3205, %v2077
      %3217 = vrot.lane.b32.xlu0 %v3207, 64
      %v3218 = vpop.permute.xlu0 %3217
      %3219 = vrot.lane.b32.xlu0 %v3208, 64
      %v3220 = vpop.permute.xlu0 %3219
      %3221 = vrot.lane.b32.xlu0 %v3209, 64
      %v3222 = vpop.permute.xlu0 %3221
      %3223 = vrot.lane.b32.xlu0 %v3210, 64
      %v3224 = vpop.permute.xlu0 %3223
      %3225 = vrot.lane.b32.xlu0 %v3211, 64
      %v3226 = vpop.permute.xlu0 %3225
      %v3227 = vsel %vm894, %v3218, %v3220
      %v3228 = vsel %vm894, %v3220, %v3222
      %v3229 = vsel %vm894, %v3222, %v3224
      %v3230 = vsel %vm894, %v3224, %v3226
      %v3236 = vadd.f32 %v3195, %v3227
      %v3237 = vadd.f32 %v3196, %v3228
      %v3238 = vadd.f32 %v3197, %v3229
      %v3239 = vadd.f32 %v3198, %v3230
      %v3240 = vadd.f32 %v3199, %v3226
      %s3241 = scalar_lea.vmem %s12, 16
      %v3242 = vld [vmem:[%s3241] sm:$0xf]
      %v3244 = vlaneseq
      %v3245 = vshrl.u32 %v3244, 7
      %v3246 = vsub.s32 0, %v3245
      %v3247 = vrot.slane %v3242, %v3246
      %v3248 = vlaneseq
      %v3249 = vshrl.u32 %v3248, 7
      %v3250 = vsub.s32 1, %v3249
      %v3251 = vrot.slane %v3242, %v3250
      %v3252 = vlaneseq
      %v3253 = vshrl.u32 %v3252, 7
      %v3254 = vsub.s32 2, %v3253
      %v3255 = vrot.slane %v3242, %v3254
      %v3256 = vlaneseq
      %v3257 = vshrl.u32 %v3256, 7
      %v3258 = vsub.s32 3, %v3257
      %v3259 = vrot.slane %v3242, %v3258
      %3269 = vrot.lane.b32.xlu0 %v3236, 116
      %v3270 = vpop.permute.xlu0 %3269
      %3271 = vrot.lane.b32.xlu0 %v3237, 116
      %v3272 = vpop.permute.xlu0 %3271
      %3273 = vrot.lane.b32.xlu0 %v3238, 116
      %v3274 = vpop.permute.xlu0 %3273
      %3275 = vrot.lane.b32.xlu0 %v3239, 116
      %v3276 = vpop.permute.xlu0 %3275
      %3277 = vrot.lane.b32.xlu0 %v3240, 116
      %v3278 = vpop.permute.xlu0 %3277
      %vm3279 = vcmask 949248
      %v3280 = vsel %vm3279, %v3270, %v3272
      %v3281 = vsel %vm3279, %v3272, %v3274
      %v3282 = vsel %vm3279, %v3274, %v3276
      %v3283 = vsel %vm3279, %v3276, %v3278
      %v3288 = vmul.f32 %v3247, %v3280
      %v3289 = vmul.f32 %v3251, %v3281
      %v3290 = vmul.f32 %v3255, %v3282
      %v3291 = vmul.f32 %v3259, %v3283
      %v3292 = vadd.f32 %v3003, %v3288
      %v3293 = vadd.f32 %v3004, %v3289
      %v3294 = vadd.f32 %v3005, %v3290
      %v3295 = vadd.f32 %v3006, %v3291
      %s3296 = scalar_lea.vmem %s9, 40
      %v3297 = vld [vmem:[%s3296] sm:$0xff]
      %3299 = vset.pattern.permute.xlu0 0
      %3300 = vperm.xlu0 %3299, %v3297
      %v3301 = vpop.permute.xlu0 %3300
      %v3303 = vmul.f32 %v3301, %v1882
      %v3304 = vmul.f32 %v3301, %v1883
      %v3305 = vmul.f32 %v3301, %v1884
      %v3306 = vmul.f32 %v3301, %v1885
      %v3307 = vmul.f32 %v3301, %v1886
      %s3308 = scalar_lea.vmem %s9, 96
      %v3309 = vld [vmem:[%s3308] sm:$0xff]
      %3311 = vset.pattern.permute.xlu0 0
      %3312 = vperm.xlu0 %3311, %v3309
      %v3313 = vpop.permute.xlu0 %3312
      %v3315 = vmul.f32 %v3313, %v1882
      %v3316 = vmul.f32 %v3313, %v1883
      %v3317 = vmul.f32 %v3313, %v1884
      %v3318 = vmul.f32 %v3313, %v1885
      %v3319 = vmul.f32 %v3313, %v1886
      %3325 = vrot.lane.b32.xlu0 %v3315, 32
      %v3326 = vpop.permute.xlu0 %3325
      %3327 = vrot.lane.b32.xlu0 %v3316, 32
      %v3328 = vpop.permute.xlu0 %3327
      %3329 = vrot.lane.b32.xlu0 %v3317, 32
      %v3330 = vpop.permute.xlu0 %3329
      %3331 = vrot.lane.b32.xlu0 %v3318, 32
      %v3332 = vpop.permute.xlu0 %3331
      %3333 = vrot.lane.b32.xlu0 %v3319, 32
      %v3334 = vpop.permute.xlu0 %3333
      %v3335 = vsel %vm934, %v3326, %v3328
      %v3336 = vsel %vm934, %v3328, %v3330
      %v3337 = vsel %vm934, %v3330, %v3332
      %v3338 = vsel %vm934, %v3332, %v3334
      %v3344 = vadd.f32 %v3303, %v3335
      %v3345 = vadd.f32 %v3304, %v3336
      %v3346 = vadd.f32 %v3305, %v3337
      %v3347 = vadd.f32 %v3306, %v3338
      %v3348 = vadd.f32 %v3307, %v3334
      %s3349 = scalar_lea.vmem %s9, 152
      %v3350 = vld [vmem:[%s3349] sm:$0xff]
      %3352 = vset.pattern.permute.xlu0 0
      %3353 = vperm.xlu0 %3352, %v3350
      %v3354 = vpop.permute.xlu0 %3353
      %v3356 = vmul.f32 %v3354, %v1926
      %v3357 = vmul.f32 %v3354, %v1927
      %v3358 = vmul.f32 %v3354, %v1928
      %v3359 = vmul.f32 %v3354, %v1929
      %v3360 = vmul.f32 %v3354, %v1930
      %3366 = vrot.lane.b32.xlu0 %v3356, 64
      %v3367 = vpop.permute.xlu0 %3366
      %3368 = vrot.lane.b32.xlu0 %v3357, 64
      %v3369 = vpop.permute.xlu0 %3368
      %3370 = vrot.lane.b32.xlu0 %v3358, 64
      %v3371 = vpop.permute.xlu0 %3370
      %3372 = vrot.lane.b32.xlu0 %v3359, 64
      %v3373 = vpop.permute.xlu0 %3372
      %3374 = vrot.lane.b32.xlu0 %v3360, 64
      %v3375 = vpop.permute.xlu0 %3374
      %v3376 = vsel %vm894, %v3367, %v3369
      %v3377 = vsel %vm894, %v3369, %v3371
      %v3378 = vsel %vm894, %v3371, %v3373
      %v3379 = vsel %vm894, %v3373, %v3375
      %v3385 = vadd.f32 %v3344, %v3376
      %v3386 = vadd.f32 %v3345, %v3377
      %v3387 = vadd.f32 %v3346, %v3378
      %v3388 = vadd.f32 %v3347, %v3379
      %v3389 = vadd.f32 %v3348, %v3375
      %s3390 = scalar_lea.vmem %s9, 208
      %v3391 = vld [vmem:[%s3390] sm:$0xff]
      %3393 = vset.pattern.permute.xlu0 0
      %3394 = vperm.xlu0 %3393, %v3391
      %v3395 = vpop.permute.xlu0 %3394
      %v3397 = vmul.f32 %v3395, %v1970
      %v3398 = vmul.f32 %v3395, %v1971
      %v3399 = vmul.f32 %v3395, %v1972
      %v3400 = vmul.f32 %v3395, %v1973
      %v3401 = vmul.f32 %v3395, %v1974
      %3407 = vrot.lane.b32.xlu0 %v3397, 96
      %v3408 = vpop.permute.xlu0 %3407
      %3409 = vrot.lane.b32.xlu0 %v3398, 96
      %v3410 = vpop.permute.xlu0 %3409
      %3411 = vrot.lane.b32.xlu0 %v3399, 96
      %v3412 = vpop.permute.xlu0 %3411
      %3413 = vrot.lane.b32.xlu0 %v3400, 96
      %v3414 = vpop.permute.xlu0 %3413
      %3415 = vrot.lane.b32.xlu0 %v3401, 96
      %v3416 = vpop.permute.xlu0 %3415
      %v3417 = vsel %vm854, %v3408, %v3410
      %v3418 = vsel %vm854, %v3410, %v3412
      %v3419 = vsel %vm854, %v3412, %v3414
      %v3420 = vsel %vm854, %v3414, %v3416
      %v3426 = vadd.f32 %v3385, %v3417
      %v3427 = vadd.f32 %v3386, %v3418
      %v3428 = vadd.f32 %v3387, %v3419
      %v3429 = vadd.f32 %v3388, %v3420
      %v3430 = vadd.f32 %v3389, %v3416
      %s3431 = scalar_lea.vmem %s9, 264
      %v3432 = vld [vmem:[%s3431] sm:$0xff]
      %3434 = vset.pattern.permute.xlu0 0
      %3435 = vperm.xlu0 %3434, %v3432
      %v3436 = vpop.permute.xlu0 %3435
      %v3438 = vmul.f32 %v3436, %v2029
      %v3439 = vmul.f32 %v3436, %v2030
      %v3440 = vmul.f32 %v3436, %v2031
      %v3441 = vmul.f32 %v3436, %v2032
      %v3442 = vmul.f32 %v3436, %v2033
      %v3443 = vadd.f32 %v3426, %v3438
      %v3444 = vadd.f32 %v3427, %v3439
      %v3445 = vadd.f32 %v3428, %v3440
      %v3446 = vadd.f32 %v3429, %v3441
      %v3447 = vadd.f32 %v3430, %v3442
      %s3448 = scalar_lea.vmem %s9, 320
      %v3449 = vld [vmem:[%s3448] sm:$0xff]
      %3451 = vset.pattern.permute.xlu0 0
      %3452 = vperm.xlu0 %3451, %v3449
      %v3453 = vpop.permute.xlu0 %3452
      %v3455 = vmul.f32 %v3453, %v2029
      %v3456 = vmul.f32 %v3453, %v2030
      %v3457 = vmul.f32 %v3453, %v2031
      %v3458 = vmul.f32 %v3453, %v2032
      %v3459 = vmul.f32 %v3453, %v2033
      %3465 = vrot.lane.b32.xlu0 %v3455, 32
      %v3466 = vpop.permute.xlu0 %3465
      %3467 = vrot.lane.b32.xlu0 %v3456, 32
      %v3468 = vpop.permute.xlu0 %3467
      %3469 = vrot.lane.b32.xlu0 %v3457, 32
      %v3470 = vpop.permute.xlu0 %3469
      %3471 = vrot.lane.b32.xlu0 %v3458, 32
      %v3472 = vpop.permute.xlu0 %3471
      %3473 = vrot.lane.b32.xlu0 %v3459, 32
      %v3474 = vpop.permute.xlu0 %3473
      %v3475 = vsel %vm934, %v3466, %v3468
      %v3476 = vsel %vm934, %v3468, %v3470
      %v3477 = vsel %vm934, %v3470, %v3472
      %v3478 = vsel %vm934, %v3472, %v3474
      %v3484 = vadd.f32 %v3443, %v3475
      %v3485 = vadd.f32 %v3444, %v3476
      %v3486 = vadd.f32 %v3445, %v3477
      %v3487 = vadd.f32 %v3446, %v3478
      %v3488 = vadd.f32 %v3447, %v3474
      %s3489 = scalar_lea.vmem %s9, 376
      %v3490 = vld [vmem:[%s3489] sm:$0xff]
      %3492 = vset.pattern.permute.xlu0 0
      %3493 = vperm.xlu0 %3492, %v3490
      %v3494 = vpop.permute.xlu0 %3493
      %v3496 = vmul.f32 %v3494, %v2073
      %v3497 = vmul.f32 %v3494, %v2074
      %v3498 = vmul.f32 %v3494, %v2075
      %v3499 = vmul.f32 %v3494, %v2076
      %v3500 = vmul.f32 %v3494, %v2077
      %3506 = vrot.lane.b32.xlu0 %v3496, 64
      %v3507 = vpop.permute.xlu0 %3506
      %3508 = vrot.lane.b32.xlu0 %v3497, 64
      %v3509 = vpop.permute.xlu0 %3508
      %3510 = vrot.lane.b32.xlu0 %v3498, 64
      %v3511 = vpop.permute.xlu0 %3510
      %3512 = vrot.lane.b32.xlu0 %v3499, 64
      %v3513 = vpop.permute.xlu0 %3512
      %3514 = vrot.lane.b32.xlu0 %v3500, 64
      %v3515 = vpop.permute.xlu0 %3514
      %v3516 = vsel %vm894, %v3507, %v3509
      %v3517 = vsel %vm894, %v3509, %v3511
      %v3518 = vsel %vm894, %v3511, %v3513
      %v3519 = vsel %vm894, %v3513, %v3515
      %v3525 = vadd.f32 %v3484, %v3516
      %v3526 = vadd.f32 %v3485, %v3517
      %v3527 = vadd.f32 %v3486, %v3518
      %v3528 = vadd.f32 %v3487, %v3519
      %v3529 = vadd.f32 %v3488, %v3515
      %s3530 = scalar_lea.vmem %s12, 20
      %v3531 = vld [vmem:[%s3530] sm:$0xf]
      %v3533 = vlaneseq
      %v3534 = vshrl.u32 %v3533, 7
      %v3535 = vsub.s32 0, %v3534
      %v3536 = vrot.slane %v3531, %v3535
      %v3537 = vlaneseq
      %v3538 = vshrl.u32 %v3537, 7
      %v3539 = vsub.s32 1, %v3538
      %v3540 = vrot.slane %v3531, %v3539
      %v3541 = vlaneseq
      %v3542 = vshrl.u32 %v3541, 7
      %v3543 = vsub.s32 2, %v3542
      %v3544 = vrot.slane %v3531, %v3543
      %v3545 = vlaneseq
      %v3546 = vshrl.u32 %v3545, 7
      %v3547 = vsub.s32 3, %v3546
      %v3548 = vrot.slane %v3531, %v3547
      %3558 = vrot.lane.b32.xlu0 %v3525, 113
      %v3559 = vpop.permute.xlu0 %3558
      %3560 = vrot.lane.b32.xlu0 %v3526, 113
      %v3561 = vpop.permute.xlu0 %3560
      %3562 = vrot.lane.b32.xlu0 %v3527, 113
      %v3563 = vpop.permute.xlu0 %3562
      %3564 = vrot.lane.b32.xlu0 %v3528, 113
      %v3565 = vpop.permute.xlu0 %3564
      %3566 = vrot.lane.b32.xlu0 %v3529, 113
      %v3567 = vpop.permute.xlu0 %3566
      %vm3568 = vcmask 924672
      %v3569 = vsel %vm3568, %v3559, %v3561
      %v3570 = vsel %vm3568, %v3561, %v3563
      %v3571 = vsel %vm3568, %v3563, %v3565
      %v3572 = vsel %vm3568, %v3565, %v3567
      %v3577 = vmul.f32 %v3536, %v3569
      %v3578 = vmul.f32 %v3540, %v3570
      %v3579 = vmul.f32 %v3544, %v3571
      %v3580 = vmul.f32 %v3548, %v3572
      %v3581 = vadd.f32 %v3292, %v3577
      %v3582 = vadd.f32 %v3293, %v3578
      %v3583 = vadd.f32 %v3294, %v3579
      %v3584 = vadd.f32 %v3295, %v3580
      %s3585 = scalar_lea.vmem %s9, 48
      %v3586 = vld [vmem:[%s3585] sm:$0xff]
      %3588 = vset.pattern.permute.xlu0 0
      %3589 = vperm.xlu0 %3588, %v3586
      %v3590 = vpop.permute.xlu0 %3589
      %v3592 = vmul.f32 %v3590, %v1882
      %v3593 = vmul.f32 %v3590, %v1883
      %v3594 = vmul.f32 %v3590, %v1884
      %v3595 = vmul.f32 %v3590, %v1885
      %v3596 = vmul.f32 %v3590, %v1886
      %s3597 = scalar_lea.vmem %s9, 104
      %v3598 = vld [vmem:[%s3597] sm:$0xff]
      %3600 = vset.pattern.permute.xlu0 0
      %3601 = vperm.xlu0 %3600, %v3598
      %v3602 = vpop.permute.xlu0 %3601
      %v3604 = vmul.f32 %v3602, %v1882
      %v3605 = vmul.f32 %v3602, %v1883
      %v3606 = vmul.f32 %v3602, %v1884
      %v3607 = vmul.f32 %v3602, %v1885
      %v3608 = vmul.f32 %v3602, %v1886
      %3614 = vrot.lane.b32.xlu0 %v3604, 32
      %v3615 = vpop.permute.xlu0 %3614
      %3616 = vrot.lane.b32.xlu0 %v3605, 32
      %v3617 = vpop.permute.xlu0 %3616
      %3618 = vrot.lane.b32.xlu0 %v3606, 32
      %v3619 = vpop.permute.xlu0 %3618
      %3620 = vrot.lane.b32.xlu0 %v3607, 32
      %v3621 = vpop.permute.xlu0 %3620
      %3622 = vrot.lane.b32.xlu0 %v3608, 32
      %v3623 = vpop.permute.xlu0 %3622
      %v3624 = vsel %vm934, %v3615, %v3617
      %v3625 = vsel %vm934, %v3617, %v3619
      %v3626 = vsel %vm934, %v3619, %v3621
      %v3627 = vsel %vm934, %v3621, %v3623
      %v3633 = vadd.f32 %v3592, %v3624
      %v3634 = vadd.f32 %v3593, %v3625
      %v3635 = vadd.f32 %v3594, %v3626
      %v3636 = vadd.f32 %v3595, %v3627
      %v3637 = vadd.f32 %v3596, %v3623
      %s3638 = scalar_lea.vmem %s9, 160
      %v3639 = vld [vmem:[%s3638] sm:$0xff]
      %3641 = vset.pattern.permute.xlu0 0
      %3642 = vperm.xlu0 %3641, %v3639
      %v3643 = vpop.permute.xlu0 %3642
      %v3645 = vmul.f32 %v3643, %v1926
      %v3646 = vmul.f32 %v3643, %v1927
      %v3647 = vmul.f32 %v3643, %v1928
      %v3648 = vmul.f32 %v3643, %v1929
      %v3649 = vmul.f32 %v3643, %v1930
      %3655 = vrot.lane.b32.xlu0 %v3645, 64
      %v3656 = vpop.permute.xlu0 %3655
      %3657 = vrot.lane.b32.xlu0 %v3646, 64
      %v3658 = vpop.permute.xlu0 %3657
      %3659 = vrot.lane.b32.xlu0 %v3647, 64
      %v3660 = vpop.permute.xlu0 %3659
      %3661 = vrot.lane.b32.xlu0 %v3648, 64
      %v3662 = vpop.permute.xlu0 %3661
      %3663 = vrot.lane.b32.xlu0 %v3649, 64
      %v3664 = vpop.permute.xlu0 %3663
      %v3665 = vsel %vm894, %v3656, %v3658
      %v3666 = vsel %vm894, %v3658, %v3660
      %v3667 = vsel %vm894, %v3660, %v3662
      %v3668 = vsel %vm894, %v3662, %v3664
      %v3674 = vadd.f32 %v3633, %v3665
      %v3675 = vadd.f32 %v3634, %v3666
      %v3676 = vadd.f32 %v3635, %v3667
      %v3677 = vadd.f32 %v3636, %v3668
      %v3678 = vadd.f32 %v3637, %v3664
      %s3679 = scalar_lea.vmem %s9, 216
      %v3680 = vld [vmem:[%s3679] sm:$0xff]
      %3682 = vset.pattern.permute.xlu0 0
      %3683 = vperm.xlu0 %3682, %v3680
      %v3684 = vpop.permute.xlu0 %3683
      %v3686 = vmul.f32 %v3684, %v1970
      %v3687 = vmul.f32 %v3684, %v1971
      %v3688 = vmul.f32 %v3684, %v1972
      %v3689 = vmul.f32 %v3684, %v1973
      %v3690 = vmul.f32 %v3684, %v1974
      %3696 = vrot.lane.b32.xlu0 %v3686, 96
      %v3697 = vpop.permute.xlu0 %3696
      %3698 = vrot.lane.b32.xlu0 %v3687, 96
      %v3699 = vpop.permute.xlu0 %3698
      %3700 = vrot.lane.b32.xlu0 %v3688, 96
      %v3701 = vpop.permute.xlu0 %3700
      %3702 = vrot.lane.b32.xlu0 %v3689, 96
      %v3703 = vpop.permute.xlu0 %3702
      %3704 = vrot.lane.b32.xlu0 %v3690, 96
      %v3705 = vpop.permute.xlu0 %3704
      %v3706 = vsel %vm854, %v3697, %v3699
      %v3707 = vsel %vm854, %v3699, %v3701
      %v3708 = vsel %vm854, %v3701, %v3703
      %v3709 = vsel %vm854, %v3703, %v3705
      %v3715 = vadd.f32 %v3674, %v3706
      %v3716 = vadd.f32 %v3675, %v3707
      %v3717 = vadd.f32 %v3676, %v3708
      %v3718 = vadd.f32 %v3677, %v3709
      %v3719 = vadd.f32 %v3678, %v3705
      %s3720 = scalar_lea.vmem %s9, 272
      %v3721 = vld [vmem:[%s3720] sm:$0xff]
      %3723 = vset.pattern.permute.xlu0 0
      %3724 = vperm.xlu0 %3723, %v3721
      %v3725 = vpop.permute.xlu0 %3724
      %v3727 = vmul.f32 %v3725, %v2029
      %v3728 = vmul.f32 %v3725, %v2030
      %v3729 = vmul.f32 %v3725, %v2031
      %v3730 = vmul.f32 %v3725, %v2032
      %v3731 = vmul.f32 %v3725, %v2033
      %v3732 = vadd.f32 %v3715, %v3727
      %v3733 = vadd.f32 %v3716, %v3728
      %v3734 = vadd.f32 %v3717, %v3729
      %v3735 = vadd.f32 %v3718, %v3730
      %v3736 = vadd.f32 %v3719, %v3731
      %s3737 = scalar_lea.vmem %s9, 328
      %v3738 = vld [vmem:[%s3737] sm:$0xff]
      %3740 = vset.pattern.permute.xlu0 0
      %3741 = vperm.xlu0 %3740, %v3738
      %v3742 = vpop.permute.xlu0 %3741
      %v3744 = vmul.f32 %v3742, %v2029
      %v3745 = vmul.f32 %v3742, %v2030
      %v3746 = vmul.f32 %v3742, %v2031
      %v3747 = vmul.f32 %v3742, %v2032
      %v3748 = vmul.f32 %v3742, %v2033
      %3754 = vrot.lane.b32.xlu0 %v3744, 32
      %v3755 = vpop.permute.xlu0 %3754
      %3756 = vrot.lane.b32.xlu0 %v3745, 32
      %v3757 = vpop.permute.xlu0 %3756
      %3758 = vrot.lane.b32.xlu0 %v3746, 32
      %v3759 = vpop.permute.xlu0 %3758
      %3760 = vrot.lane.b32.xlu0 %v3747, 32
      %v3761 = vpop.permute.xlu0 %3760
      %3762 = vrot.lane.b32.xlu0 %v3748, 32
      %v3763 = vpop.permute.xlu0 %3762
      %v3764 = vsel %vm934, %v3755, %v3757
      %v3765 = vsel %vm934, %v3757, %v3759
      %v3766 = vsel %vm934, %v3759, %v3761
      %v3767 = vsel %vm934, %v3761, %v3763
      %v3773 = vadd.f32 %v3732, %v3764
      %v3774 = vadd.f32 %v3733, %v3765
      %v3775 = vadd.f32 %v3734, %v3766
      %v3776 = vadd.f32 %v3735, %v3767
      %v3777 = vadd.f32 %v3736, %v3763
      %s3778 = scalar_lea.vmem %s9, 384
      %v3779 = vld [vmem:[%s3778] sm:$0xff]
      %3781 = vset.pattern.permute.xlu0 0
      %3782 = vperm.xlu0 %3781, %v3779
      %v3783 = vpop.permute.xlu0 %3782
      %v3785 = vmul.f32 %v3783, %v2073
      %v3786 = vmul.f32 %v3783, %v2074
      %v3787 = vmul.f32 %v3783, %v2075
      %v3788 = vmul.f32 %v3783, %v2076
      %v3789 = vmul.f32 %v3783, %v2077
      %3795 = vrot.lane.b32.xlu0 %v3785, 64
      %v3796 = vpop.permute.xlu0 %3795
      %3797 = vrot.lane.b32.xlu0 %v3786, 64
      %v3798 = vpop.permute.xlu0 %3797
      %3799 = vrot.lane.b32.xlu0 %v3787, 64
      %v3800 = vpop.permute.xlu0 %3799
      %3801 = vrot.lane.b32.xlu0 %v3788, 64
      %v3802 = vpop.permute.xlu0 %3801
      %3803 = vrot.lane.b32.xlu0 %v3789, 64
      %v3804 = vpop.permute.xlu0 %3803
      %v3805 = vsel %vm894, %v3796, %v3798
      %v3806 = vsel %vm894, %v3798, %v3800
      %v3807 = vsel %vm894, %v3800, %v3802
      %v3808 = vsel %vm894, %v3802, %v3804
      %v3814 = vadd.f32 %v3773, %v3805
      %v3815 = vadd.f32 %v3774, %v3806
      %v3816 = vadd.f32 %v3775, %v3807
      %v3817 = vadd.f32 %v3776, %v3808
      %v3818 = vadd.f32 %v3777, %v3804
      %s3819 = scalar_lea.vmem %s12, 24
      %v3820 = vld [vmem:[%s3819] sm:$0xf]
      %v3822 = vlaneseq
      %v3823 = vshrl.u32 %v3822, 7
      %v3824 = vsub.s32 0, %v3823
      %v3825 = vrot.slane %v3820, %v3824
      %v3826 = vlaneseq
      %v3827 = vshrl.u32 %v3826, 7
      %v3828 = vsub.s32 1, %v3827
      %v3829 = vrot.slane %v3820, %v3828
      %v3830 = vlaneseq
      %v3831 = vshrl.u32 %v3830, 7
      %v3832 = vsub.s32 2, %v3831
      %v3833 = vrot.slane %v3820, %v3832
      %v3834 = vlaneseq
      %v3835 = vshrl.u32 %v3834, 7
      %v3836 = vsub.s32 3, %v3835
      %v3837 = vrot.slane %v3820, %v3836
      %3847 = vrot.lane.b32.xlu0 %v3814, 110
      %v3848 = vpop.permute.xlu0 %3847
      %3849 = vrot.lane.b32.xlu0 %v3815, 110
      %v3850 = vpop.permute.xlu0 %3849
      %3851 = vrot.lane.b32.xlu0 %v3816, 110
      %v3852 = vpop.permute.xlu0 %3851
      %3853 = vrot.lane.b32.xlu0 %v3817, 110
      %v3854 = vpop.permute.xlu0 %3853
      %3855 = vrot.lane.b32.xlu0 %v3818, 110
      %v3856 = vpop.permute.xlu0 %3855
      %vm3857 = vcmask 900096
      %v3858 = vsel %vm3857, %v3848, %v3850
      %v3859 = vsel %vm3857, %v3850, %v3852
      %v3860 = vsel %vm3857, %v3852, %v3854
      %v3861 = vsel %vm3857, %v3854, %v3856
      %v3866 = vmul.f32 %v3825, %v3858
      %v3867 = vmul.f32 %v3829, %v3859
      %v3868 = vmul.f32 %v3833, %v3860
      %v3869 = vmul.f32 %v3837, %v3861
      %v3870 = vadd.f32 %v3581, %v3866
      %v3871 = vadd.f32 %v3582, %v3867
      %v3872 = vadd.f32 %v3583, %v3868
      %v3873 = vadd.f32 %v3584, %v3869
      %s3874 = scalar_lea.vmem %s1, 48
      %v3875 = vld [vmem:[%s3874] sm:$0xff]
      %3877 = vset.pattern.permute.xlu0 0
      %3878 = vperm.xlu0 %3877, %v3875
      %v3879 = vpop.permute.xlu0 %3878
      %v3881 = vadd.f32 %v3870, %v3879
      %v3882 = vadd.f32 %v3871, %v3879
      %v3883 = vadd.f32 %v3872, %v3879
      %v3884 = vadd.f32 %v3873, %v3879
      %s3885 = scalar_lea.vmem %s3, 4
      %v3886 = vld [vmem:[%s3885] sm:$0xf]
      %v3887 = vpack.c.bf16 %v3881, %v3881
      %v3888 = vpack.c.bf16 %v3882, %v3882
      %v3889 = vpack.c.bf16 %v3883, %v3883
      %v3890 = vpack.c.bf16 %v3884, %v3884
      %s3891 = scalar_lea.vmem %s1, 56
      %v3892 = vld [vmem:[%s3891] sm:$0xff]
      %3894 = vset.pattern.permute.xlu0 0
      %3895 = vperm.xlu0 %3894, %v3892
      %v3896 = vpop.permute.xlu0 %3895
      %v3899 = vsel %vm570, %v3886, 0
      %v3902 = vsel %vm574, %v3887, 0
      %v3905 = vsel %vm574, %v3888, 0
      %v3908 = vsel %vm574, %v3889, 0
      %v3911 = vsel %vm574, %v3890, 0
      %3913 = vmatprep.subr.bf16.mxu0 %v3905
      %3914 = vmatpush1.bf16.msra.mxu0 %v3902
      %3915 = vmatprep.subr.bf16.mxu0 0
      %3916 = vmatpush1.bf16.msra.mxu0 0
      %3917 = vmatprep.subr.bf16.mxu0 0
      %3918 = vmatpush1.bf16.msra.mxu0 0
      %3919 = vmatprep.subr.bf16.mxu0 0
      %3920 = vmatpush1.bf16.msra.mxu0 0
      %3921 = vmatprep.subr.bf16.mxu0 0
      %3922 = vmatpush1.bf16.msra.mxu0 0
      %3923 = vmatprep.subr.bf16.mxu0 0
      %3924 = vmatpush1.bf16.msra.mxu0 0
      %3925 = vmatprep.subr.bf16.mxu0 0
      %3926 = vmatpush1.bf16.msra.mxu0 0
      %3927 = vmatprep.subr.bf16.mxu0 0
      %3928 = vmatpush1.bf16.msra.mxu0 0
      %3929 = vmatprep.subr.bf16.mxu0 0
      %3930 = vmatpush1.bf16.msra.mxu0 0
      %3931 = vmatprep.subr.bf16.mxu0 0
      %3932 = vmatpush1.bf16.msra.mxu0 0
      %3933 = vmatprep.subr.bf16.mxu0 0
      %3934 = vmatpush1.bf16.msra.mxu0 0
      %3935 = vmatprep.subr.bf16.mxu0 0
      %3936 = vmatpush1.bf16.msra.mxu0 0
      %3937 = vmatprep.subr.bf16.mxu0 0
      %3938 = vmatpush1.bf16.msra.mxu0 0
      %3939 = vmatprep.subr.bf16.mxu0 0
      %3940 = vmatpush1.bf16.msra.mxu0 0
      %3941 = vmatprep.subr.bf16.mxu0 0
      %3942 = vmatpush1.bf16.msra.mxu0 0
      %3943 = vmatprep.subr.bf16.mxu0 0
      %3944 = vmatpush1.bf16.msra.mxu0 0
      %3945 = vmatprep.mubr.bf16.mxu0 0
      %3946 = vmatmul.mubr.bf16.gmra.mrb[0].mxu0 %v3899
      %v3947 = vpop.f32.mrb[0].mxu0
      %v3948 = vadd.f32 %v3896, %v3947
      %v3949 = vpop.f32.mrb[0].mxu0
      %v3950 = vadd.f32 %v3896, %v3949
      %v3951 = vpop.f32.mrb[0].mxu0
      %v3952 = vpop.f32.mrb[0].mxu0
      %3953 = vdwg.mxu0
      %3954 = vmatprep.subr.bf16.mxu0 %v3911
      %3955 = vmatpush1.bf16.msra.mxu0 %v3908
      %3956 = vmatprep.subr.bf16.mxu0 0
      %3957 = vmatpush1.bf16.msra.mxu0 0
      %3958 = vmatprep.subr.bf16.mxu0 0
      %3959 = vmatpush1.bf16.msra.mxu0 0
      %3960 = vmatprep.subr.bf16.mxu0 0
      %3961 = vmatpush1.bf16.msra.mxu0 0
      %3962 = vmatprep.subr.bf16.mxu0 0
      %3963 = vmatpush1.bf16.msra.mxu0 0
      %3964 = vmatprep.subr.bf16.mxu0 0
      %3965 = vmatpush1.bf16.msra.mxu0 0
      %3966 = vmatprep.subr.bf16.mxu0 0
      %3967 = vmatpush1.bf16.msra.mxu0 0
      %3968 = vmatprep.subr.bf16.mxu0 0
      %3969 = vmatpush1.bf16.msra.mxu0 0
      %3970 = vmatprep.subr.bf16.mxu0 0
      %3971 = vmatpush1.bf16.msra.mxu0 0
      %3972 = vmatprep.subr.bf16.mxu0 0
      %3973 = vmatpush1.bf16.msra.mxu0 0
      %3974 = vmatprep.subr.bf16.mxu0 0
      %3975 = vmatpush1.bf16.msra.mxu0 0
      %3976 = vmatprep.subr.bf16.mxu0 0
      %3977 = vmatpush1.bf16.msra.mxu0 0
      %3978 = vmatprep.subr.bf16.mxu0 0
      %3979 = vmatpush1.bf16.msra.mxu0 0
      %3980 = vmatprep.subr.bf16.mxu0 0
      %3981 = vmatpush1.bf16.msra.mxu0 0
      %3982 = vmatprep.subr.bf16.mxu0 0
      %3983 = vmatpush1.bf16.msra.mxu0 0
      %3984 = vmatprep.subr.bf16.mxu0 0
      %3985 = vmatpush1.bf16.msra.mxu0 0
      %3986 = vmatprep.mubr.bf16.mxu0 0
      %3987 = vmatmul.mubr.bf16.gmra.mrb[0].mxu0 %v3899
      %v3988 = vpop.f32.mrb[0].mxu0
      %v3989 = vadd.f32 %v3896, %v3988
      %v3990 = vpop.f32.mrb[0].mxu0
      %v3991 = vadd.f32 %v3896, %v3990
      %v3992 = vpop.f32.mrb[0].mxu0
      %v3993 = vpop.f32.mrb[0].mxu0
      %3994 = vdwg.mxu0
      %v3995 = vadd.f32 %v773, %v774
      %v3996 = vadd.f32 %v3995, %v775
      %v3997 = vadd.f32 %v3996, %v776
      %3998 = vadd.xlane.f32.xlu0 %v3997
      %v3999 = vpop.xlane.xlu0 %3998
      %v4000 = vmul.f32 %v3999, 0.001953125
      %v4001 = vld [vmem:[%s4] sm:$0xff]
      %v4002 = vmul.f32 %v4001, %v4000
      %vm4003 = vcmask 15360
      %v4004 = vsel %vm4003, %v4002, 0.0
      %v4005 = vrot.slane %v4004, 4
      %v4006 = vadd.f32 %v4004, %v4005
      %v4007 = vrot.slane %v4006, 2
      %v4008 = vadd.f32 %v4006, %v4007
      %v4009 = vrot.slane %v4008, 1
      %v4010 = vadd.f32 %v4008, %v4009
      %v4011 = vmax.f32 %v4010, 0.0
      %v4012 = vld [vmem:[%s5] sm:$0xff]
      %v4013 = vmul.f32 %v4012, %v4011
      %v4014 = vsel %vm4003, %v4013, 0.0
      %4015 = vadd.xlane.f32.xlu0 %v4014
      %v4016 = vpop.xlane.xlu0 %4015
      %v4017 = vsub.f32 0.0, %v4016
      %v4018 = vmul.f32 %v4017, 1.442695
      %v4019 = vpow.pop %v4018
      %v4020 = vadd.f32 %v4019, 1.0
      %v4021 = vrcp.pop %v4020
      %v4022 = vmul.f32 1.0, %v4021
      %v4023 = vmul.f32 %v4022, %v3948
      %v4024 = vmul.f32 %v4022, %v3950
      %v4025 = vmul.f32 %v4022, %v3989
      %v4026 = vmul.f32 %v4022, %v3991
      %v4027 = vmul.f32 %v4023, %v773
      %v4028 = vmul.f32 %v4024, %v774
      %v4029 = vmul.f32 %v4025, %v775
      %v4030 = vmul.f32 %v4026, %v776
      %s4031 = scalar_lea.vmem %s3, 8
      %v4032 = vld [vmem:[%s4031] sm:$0xf]
      %v4033 = vpack.c.bf16 %v4027, %v4027
      %v4034 = vpack.c.bf16 %v4028, %v4028
      %v4035 = vpack.c.bf16 %v4029, %v4029
      %v4036 = vpack.c.bf16 %v4030, %v4030
      %s4037 = scalar_lea.vmem %s1, 64
      %v4038 = vld [vmem:[%s4037] sm:$0xff]
      %4040 = vset.pattern.permute.xlu0 0
      %4041 = vperm.xlu0 %4040, %v4038
      %v4042 = vpop.permute.xlu0 %4041
      %v4045 = vsel %vm570, %v4032, 0
      %v4048 = vsel %vm574, %v4033, 0
      %v4051 = vsel %vm574, %v4034, 0
      %v4054 = vsel %vm574, %v4035, 0
      %v4057 = vsel %vm574, %v4036, 0
      %4059 = vmatprep.subr.bf16.mxu0 %v4051
      %4060 = vmatpush1.bf16.msra.mxu0 %v4048
      %4061 = vmatprep.subr.bf16.mxu0 0
      %4062 = vmatpush1.bf16.msra.mxu0 0
      %4063 = vmatprep.subr.bf16.mxu0 0
      %4064 = vmatpush1.bf16.msra.mxu0 0
      %4065 = vmatprep.subr.bf16.mxu0 0
      %4066 = vmatpush1.bf16.msra.mxu0 0
      %4067 = vmatprep.subr.bf16.mxu0 0
      %4068 = vmatpush1.bf16.msra.mxu0 0
      %4069 = vmatprep.subr.bf16.mxu0 0
      %4070 = vmatpush1.bf16.msra.mxu0 0
      %4071 = vmatprep.subr.bf16.mxu0 0
      %4072 = vmatpush1.bf16.msra.mxu0 0
      %4073 = vmatprep.subr.bf16.mxu0 0
      %4074 = vmatpush1.bf16.msra.mxu0 0
      %4075 = vmatprep.subr.bf16.mxu0 0
      %4076 = vmatpush1.bf16.msra.mxu0 0
      %4077 = vmatprep.subr.bf16.mxu0 0
      %4078 = vmatpush1.bf16.msra.mxu0 0
      %4079 = vmatprep.subr.bf16.mxu0 0
      %4080 = vmatpush1.bf16.msra.mxu0 0
      %4081 = vmatprep.subr.bf16.mxu0 0
      %4082 = vmatpush1.bf16.msra.mxu0 0
      %4083 = vmatprep.subr.bf16.mxu0 0
      %4084 = vmatpush1.bf16.msra.mxu0 0
      %4085 = vmatprep.subr.bf16.mxu0 0
      %4086 = vmatpush1.bf16.msra.mxu0 0
      %4087 = vmatprep.subr.bf16.mxu0 0
      %4088 = vmatpush1.bf16.msra.mxu0 0
      %4089 = vmatprep.subr.bf16.mxu0 0
      %4090 = vmatpush1.bf16.msra.mxu0 0
      %4091 = vmatprep.mubr.bf16.mxu0 0
      %4092 = vmatmul.mubr.bf16.gmra.mrb[0].mxu0 %v4045
      %v4093 = vpop.f32.mrb[0].mxu0
      %v4094 = vadd.f32 %v4042, %v4093
      %v4095 = vpop.f32.mrb[0].mxu0
      %v4096 = vadd.f32 %v4042, %v4095
      %v4097 = vpop.f32.mrb[0].mxu0
      %v4098 = vpop.f32.mrb[0].mxu0
      %4099 = vdwg.mxu0
      %4100 = vmatprep.subr.bf16.mxu0 %v4057
      %4101 = vmatpush1.bf16.msra.mxu0 %v4054
      %4102 = vmatprep.subr.bf16.mxu0 0
      %4103 = vmatpush1.bf16.msra.mxu0 0
      %4104 = vmatprep.subr.bf16.mxu0 0
      %4105 = vmatpush1.bf16.msra.mxu0 0
      %4106 = vmatprep.subr.bf16.mxu0 0
      %4107 = vmatpush1.bf16.msra.mxu0 0
      %4108 = vmatprep.subr.bf16.mxu0 0
      %4109 = vmatpush1.bf16.msra.mxu0 0
      %4110 = vmatprep.subr.bf16.mxu0 0
      %4111 = vmatpush1.bf16.msra.mxu0 0
      %4112 = vmatprep.subr.bf16.mxu0 0
      %4113 = vmatpush1.bf16.msra.mxu0 0
      %4114 = vmatprep.subr.bf16.mxu0 0
      %4115 = vmatpush1.bf16.msra.mxu0 0
      %4116 = vmatprep.subr.bf16.mxu0 0
      %4117 = vmatpush1.bf16.msra.mxu0 0
      %4118 = vmatprep.subr.bf16.mxu0 0
      %4119 = vmatpush1.bf16.msra.mxu0 0
      %4120 = vmatprep.subr.bf16.mxu0 0
      %4121 = vmatpush1.bf16.msra.mxu0 0
      %4122 = vmatprep.subr.bf16.mxu0 0
      %4123 = vmatpush1.bf16.msra.mxu0 0
      %4124 = vmatprep.subr.bf16.mxu0 0
      %4125 = vmatpush1.bf16.msra.mxu0 0
      %4126 = vmatprep.subr.bf16.mxu0 0
      %4127 = vmatpush1.bf16.msra.mxu0 0
      %4128 = vmatprep.subr.bf16.mxu0 0
      %4129 = vmatpush1.bf16.msra.mxu0 0
      %4130 = vmatprep.subr.bf16.mxu0 0
      %4131 = vmatpush1.bf16.msra.mxu0 0
      %4132 = vmatprep.mubr.bf16.mxu0 0
      %4133 = vmatmul.mubr.bf16.gmra.mrb[0].mxu0 %v4045
      %v4134 = vpop.f32.mrb[0].mxu0
      %v4135 = vadd.f32 %v4042, %v4134
      %v4136 = vpop.f32.mrb[0].mxu0
      %v4137 = vadd.f32 %v4042, %v4136
      %v4138 = vpop.f32.mrb[0].mxu0
      %v4139 = vpop.f32.mrb[0].mxu0
      %4140 = vdwg.mxu0
      %v4141 = vadd.f32 %v4094, %v554
      %v4142 = vadd.f32 %v4096, %v555
      %v4143 = vadd.f32 %v4135, %v556
      %v4144 = vadd.f32 %v4137, %v557
      %s4145 = scalar_lea.vmem %s1, 72
      %v4146 = vld [vmem:[%s4145] sm:$0xff]
      %4148 = vset.pattern.permute.xlu0 0
      %4149 = vperm.xlu0 %4148, %v4146
      %v4150 = vpop.permute.xlu0 %4149
      %v4152 = vmul.f32 %v4150, %v4141
      %v4153 = vmul.f32 %v4150, %v4142
      %v4154 = vmul.f32 %v4150, %v4143
      %v4155 = vmul.f32 %v4150, %v4144
      %v4156 = vadd.f32 %v532, %v4152
      %v4157 = vadd.f32 %v533, %v4153
      %v4158 = vadd.f32 %v534, %v4154
      %v4159 = vadd.f32 %v535, %v4155
      %s4160 = scalar_lea.vmem %s1, 88
      %v4161 = vld [vmem:[%s4160] sm:$0xff]
      %4163 = vset.pattern.permute.xlu0 0
      %4164 = vperm.xlu0 %4163, %v4161
      %v4165 = vpop.permute.xlu0 %4164
      %v4167 = vmul.f32 %v4156, %v4165
      %v4168 = vmul.f32 %v4157, %v4165
      %v4169 = vmul.f32 %v4158, %v4165
      %v4170 = vmul.f32 %v4159, %v4165
      %s4171 = scalar_lea.vmem %s1, 96
      %v4172 = vld [vmem:[%s4171] sm:$0xff]
      %4174 = vset.pattern.permute.xlu0 0
      %4175 = vperm.xlu0 %4174, %v4172
      %v4176 = vpop.permute.xlu0 %4175
      %v4178 = vadd.f32 %v4167, %v4176
      %v4179 = vadd.f32 %v4168, %v4176
      %v4180 = vadd.f32 %v4169, %v4176
      %v4181 = vadd.f32 %v4170, %v4176
      %v4182 = vld [vmem:[%s6] sm:$0xf]
      %v4183 = vld [vmem:[%s6 + $0x4] sm:$0xf]
      %v4184 = vld [vmem:[%s6 + $0x8] sm:$0xf]
      %v4185 = vld [vmem:[%s6 + $0xc] sm:$0xf]
      %v4186 = vpack.c.bf16 %v4178, %v4178
      %v4187 = vpack.c.bf16 %v4179, %v4179
      %v4188 = vpack.c.bf16 %v4180, %v4180
      %v4189 = vpack.c.bf16 %v4181, %v4181
      %v4190 = vld [vmem:[%s2] sm:$0xff]
      %v4191 = vld [vmem:[%s2 + $0x8] sm:$0xff]
      %v4192 = vld [vmem:[%s2 + $0x10] sm:$0xff]
      %v4193 = vld [vmem:[%s2 + $0x18] sm:$0xff]
      %4195 = vset.pattern.permute.xlu0 0
      %4196 = vperm.xlu0 %4195, %v4190
      %v4197 = vpop.permute.xlu0 %4196
      %4200 = vset.pattern.permute.xlu0 0
      %4201 = vperm.xlu0 %4200, %v4191
      %v4202 = vpop.permute.xlu0 %4201
      %4205 = vset.pattern.permute.xlu0 0
      %4206 = vperm.xlu0 %4205, %v4192
      %v4207 = vpop.permute.xlu0 %4206
      %4210 = vset.pattern.permute.xlu0 0
      %4211 = vperm.xlu0 %4210, %v4193
      %v4212 = vpop.permute.xlu0 %4211
      %v4218 = vunpack.c.l.b16 %v4182
      %v4219 = vunpack.c.l.b16 %v4183
      %v4220 = vunpack.c.l.b16 %v4184
      %v4221 = vunpack.c.l.b16 %v4185
      %v4222 = vpack.c.b16 %v4219, %v4218
      %v4223 = vpack.c.b16 %v4221, %v4220
      %v4225 = vsel %vm570, %v4222, 0
      %v4228 = vsel %vm570, %v4223, 0
      %v4231 = vsel %vm574, %v4186, 0
      %v4234 = vsel %vm574, %v4187, 0
      %v4237 = vsel %vm574, %v4188, 0
      %v4240 = vsel %vm574, %v4189, 0
      %4242 = vmatprep.subr.bf16.mxu0 %v4234
      %4243 = vmatpush1.bf16.msra.mxu0 %v4231
      %4244 = vmatprep.subr.bf16.mxu0 0
      %4245 = vmatpush1.bf16.msra.mxu0 0
      %4246 = vmatprep.subr.bf16.mxu0 0
      %4247 = vmatpush1.bf16.msra.mxu0 0
      %4248 = vmatprep.subr.bf16.mxu0 0
      %4249 = vmatpush1.bf16.msra.mxu0 0
      %4250 = vmatprep.subr.bf16.mxu0 0
      %4251 = vmatpush1.bf16.msra.mxu0 0
      %4252 = vmatprep.subr.bf16.mxu0 0
      %4253 = vmatpush1.bf16.msra.mxu0 0
      %4254 = vmatprep.subr.bf16.mxu0 0
      %4255 = vmatpush1.bf16.msra.mxu0 0
      %4256 = vmatprep.subr.bf16.mxu0 0
      %4257 = vmatpush1.bf16.msra.mxu0 0
      %4258 = vmatprep.subr.bf16.mxu0 0
      %4259 = vmatpush1.bf16.msra.mxu0 0
      %4260 = vmatprep.subr.bf16.mxu0 0
      %4261 = vmatpush1.bf16.msra.mxu0 0
      %4262 = vmatprep.subr.bf16.mxu0 0
      %4263 = vmatpush1.bf16.msra.mxu0 0
      %4264 = vmatprep.subr.bf16.mxu0 0
      %4265 = vmatpush1.bf16.msra.mxu0 0
      %4266 = vmatprep.subr.bf16.mxu0 0
      %4267 = vmatpush1.bf16.msra.mxu0 0
      %4268 = vmatprep.subr.bf16.mxu0 0
      %4269 = vmatpush1.bf16.msra.mxu0 0
      %4270 = vmatprep.subr.bf16.mxu0 0
      %4271 = vmatpush1.bf16.msra.mxu0 0
      %4272 = vmatprep.subr.bf16.mxu0 0
      %4273 = vmatpush1.bf16.msra.mxu0 0
      %4274 = vmatprep.mubr.bf16.mxu0 0
      %4275 = vmatmul.mubr.bf16.gmra.mrb[0].mxu0 %v4225
      %v4276 = vpop.f32.mrb[0].mxu0
      %v4277 = vadd.f32 %v4197, %v4276
      %v4278 = vpop.f32.mrb[0].mxu0
      %v4279 = vadd.f32 %v4197, %v4278
      %v4280 = vpop.f32.mrb[0].mxu0
      %v4281 = vadd.f32 %v4202, %v4280
      %v4282 = vpop.f32.mrb[0].mxu0
      %v4283 = vadd.f32 %v4202, %v4282
      %4284 = vmatprep.mubr.bf16.mxu0 0
      %4285 = vmatmul.mubr.bf16.gmra.mrb[0].mxu0 %v4228
      %v4286 = vpop.f32.mrb[0].mxu0
      %v4287 = vadd.f32 %v4207, %v4286
      %v4288 = vpop.f32.mrb[0].mxu0
      %v4289 = vadd.f32 %v4207, %v4288
      %v4290 = vpop.f32.mrb[0].mxu0
      %v4291 = vadd.f32 %v4212, %v4290
      %v4292 = vpop.f32.mrb[0].mxu0
      %v4293 = vadd.f32 %v4212, %v4292
      %4294 = vdwg.mxu0
      %4295 = vmatprep.subr.bf16.mxu0 %v4240
      %4296 = vmatpush1.bf16.msra.mxu0 %v4237
      %4297 = vmatprep.subr.bf16.mxu0 0
      %4298 = vmatpush1.bf16.msra.mxu0 0
      %4299 = vmatprep.subr.bf16.mxu0 0
      %4300 = vmatpush1.bf16.msra.mxu0 0
      %4301 = vmatprep.subr.bf16.mxu0 0
      %4302 = vmatpush1.bf16.msra.mxu0 0
      %4303 = vmatprep.subr.bf16.mxu0 0
      %4304 = vmatpush1.bf16.msra.mxu0 0
      %4305 = vmatprep.subr.bf16.mxu0 0
      %4306 = vmatpush1.bf16.msra.mxu0 0
      %4307 = vmatprep.subr.bf16.mxu0 0
      %4308 = vmatpush1.bf16.msra.mxu0 0
      %4309 = vmatprep.subr.bf16.mxu0 0
      %4310 = vmatpush1.bf16.msra.mxu0 0
      %4311 = vmatprep.subr.bf16.mxu0 0
      %4312 = vmatpush1.bf16.msra.mxu0 0
      %4313 = vmatprep.subr.bf16.mxu0 0
      %4314 = vmatpush1.bf16.msra.mxu0 0
      %4315 = vmatprep.subr.bf16.mxu0 0
      %4316 = vmatpush1.bf16.msra.mxu0 0
      %4317 = vmatprep.subr.bf16.mxu0 0
      %4318 = vmatpush1.bf16.msra.mxu0 0
      %4319 = vmatprep.subr.bf16.mxu0 0
      %4320 = vmatpush1.bf16.msra.mxu0 0
      %4321 = vmatprep.subr.bf16.mxu0 0
      %4322 = vmatpush1.bf16.msra.mxu0 0
      %4323 = vmatprep.subr.bf16.mxu0 0
      %4324 = vmatpush1.bf16.msra.mxu0 0
      %4325 = vmatprep.subr.bf16.mxu0 0
      %4326 = vmatpush1.bf16.msra.mxu0 0
      %4327 = vmatprep.mubr.bf16.mxu0 0
      %4328 = vmatmul.mubr.bf16.gmra.mrb[0].mxu0 %v4225
      %v4329 = vpop.f32.mrb[0].mxu0
      %v4330 = vadd.f32 %v4197, %v4329
      %v4331 = vpop.f32.mrb[0].mxu0
      %v4332 = vadd.f32 %v4197, %v4331
      %v4333 = vpop.f32.mrb[0].mxu0
      %v4334 = vadd.f32 %v4202, %v4333
      %v4335 = vpop.f32.mrb[0].mxu0
      %v4336 = vadd.f32 %v4202, %v4335
      %4337 = vmatprep.mubr.bf16.mxu0 0
      %4338 = vmatmul.mubr.bf16.gmra.mrb[0].mxu0 %v4228
      %v4339 = vpop.f32.mrb[0].mxu0
      %v4340 = vadd.f32 %v4207, %v4339
      %v4341 = vpop.f32.mrb[0].mxu0
      %v4342 = vadd.f32 %v4207, %v4341
      %v4343 = vpop.f32.mrb[0].mxu0
      %v4344 = vadd.f32 %v4212, %v4343
      %v4345 = vpop.f32.mrb[0].mxu0
      %v4346 = vadd.f32 %v4212, %v4345
      %4347 = vdwg.mxu0
      %vm4348 = vcmask 269312
      %4349 = vst.msk [vmem:[#allocation4] sm:$0xff] %vm4348, 0.0
      %4350 = vst.msk [vmem:[#allocation4 + $0x28] sm:$0xff] %vm4348, 0.0
      %4351 = vst.msk [vmem:[#allocation4 + $0x50] sm:$0xff] %vm4348, 0.0
      %4352 = vst.msk [vmem:[#allocation4 + $0x78] sm:$0xff] %vm4348, 0.0
      %vm4353 = vcmask 539912
      %4354 = vst.msk [vmem:[#allocation4 + $0x20] sm:$0xff] %vm4353, 0.0
      %4355 = vst.msk [vmem:[#allocation4 + $0x48] sm:$0xff] %vm4353, 0.0
      %4356 = vst.msk [vmem:[#allocation4 + $0x70] sm:$0xff] %vm4353, 0.0
      %4357 = vst.msk [vmem:[#allocation4 + $0x98] sm:$0xff] %vm4353, 0.0
      %4374 = vrot.lane.b32.xlu0 %v4277, 33
      %v4375 = vpop.permute.xlu0 %4374
      %4376 = vrot.lane.b32.xlu0 %v4279, 33
      %v4377 = vpop.permute.xlu0 %4376
      %4378 = vrot.lane.b32.xlu0 %v4330, 33
      %v4379 = vpop.permute.xlu0 %4378
      %4380 = vrot.lane.b32.xlu0 %v4332, 33
      %v4381 = vpop.permute.xlu0 %4380
      %4382 = vrot.lane.b32.xlu0 %v4281, 33
      %v4383 = vpop.permute.xlu0 %4382
      %4384 = vrot.lane.b32.xlu0 %v4283, 33
      %v4385 = vpop.permute.xlu0 %4384
      %4386 = vrot.lane.b32.xlu0 %v4334, 33
      %v4387 = vpop.permute.xlu0 %4386
      %4388 = vrot.lane.b32.xlu0 %v4336, 33
      %v4389 = vpop.permute.xlu0 %4388
      %4390 = vrot.lane.b32.xlu0 %v4287, 33
      %v4391 = vpop.permute.xlu0 %4390
      %4392 = vrot.lane.b32.xlu0 %v4289, 33
      %v4393 = vpop.permute.xlu0 %4392
      %4394 = vrot.lane.b32.xlu0 %v4340, 33
      %v4395 = vpop.permute.xlu0 %4394
      %4396 = vrot.lane.b32.xlu0 %v4342, 33
      %v4397 = vpop.permute.xlu0 %4396
      %4398 = vrot.lane.b32.xlu0 %v4291, 33
      %v4399 = vpop.permute.xlu0 %4398
      %4400 = vrot.lane.b32.xlu0 %v4293, 33
      %v4401 = vpop.permute.xlu0 %4400
      %4402 = vrot.lane.b32.xlu0 %v4344, 33
      %v4403 = vpop.permute.xlu0 %4402
      %4404 = vrot.lane.b32.xlu0 %v4346, 33
      %v4405 = vpop.permute.xlu0 %4404
      %v4406 = vsel %vm4348, %v4375, %v4377
      %v4407 = vsel %vm4348, %v4377, %v4379
      %v4408 = vsel %vm4348, %v4379, %v4381
      %v4409 = vsel %vm4348, %v4383, %v4385
      %v4410 = vsel %vm4348, %v4385, %v4387
      %v4411 = vsel %vm4348, %v4387, %v4389
      %v4412 = vsel %vm4348, %v4391, %v4393
      %v4413 = vsel %vm4348, %v4393, %v4395
      %v4414 = vsel %vm4348, %v4395, %v4397
      %v4415 = vsel %vm4348, %v4399, %v4401
      %v4416 = vsel %vm4348, %v4401, %v4403
      %v4417 = vsel %vm4348, %v4403, %v4405
      %vm4438 = vcmask 1047816
      %4439 = vst.msk [vmem:[#allocation4] sm:$0xff] %vm4438, %v4375
      %4440 = vst [vmem:[#allocation4 + $0x8] sm:$0xff] %v4406
      %4441 = vst [vmem:[#allocation4 + $0x10] sm:$0xff] %v4407
      %4442 = vst [vmem:[#allocation4 + $0x18] sm:$0xff] %v4408
      %4443 = vst.msk [vmem:[#allocation4 + $0x20] sm:$0xff] %vm4348, %v4381
      %4444 = vst.msk [vmem:[#allocation4 + $0x28] sm:$0xff] %vm4438, %v4383
      %4445 = vst [vmem:[#allocation4 + $0x30] sm:$0xff] %v4409
      %4446 = vst [vmem:[#allocation4 + $0x38] sm:$0xff] %v4410
      %4447 = vst [vmem:[#allocation4 + $0x40] sm:$0xff] %v4411
      %4448 = vst.msk [vmem:[#allocation4 + $0x48] sm:$0xff] %vm4348, %v4389
      %4449 = vst.msk [vmem:[#allocation4 + $0x50] sm:$0xff] %vm4438, %v4391
      %4450 = vst [vmem:[#allocation4 + $0x58] sm:$0xff] %v4412
      %4451 = vst [vmem:[#allocation4 + $0x60] sm:$0xff] %v4413
      %4452 = vst [vmem:[#allocation4 + $0x68] sm:$0xff] %v4414
      %4453 = vst.msk [vmem:[#allocation4 + $0x70] sm:$0xff] %vm4348, %v4397
      %4454 = vst.msk [vmem:[#allocation4 + $0x78] sm:$0xff] %vm4438, %v4399
      %4455 = vst [vmem:[#allocation4 + $0x80] sm:$0xff] %v4415
      %4456 = vst [vmem:[#allocation4 + $0x88] sm:$0xff] %v4416
      %4457 = vst [vmem:[#allocation4 + $0x90] sm:$0xff] %v4417
      %4458 = vst.msk [vmem:[#allocation4 + $0x98] sm:$0xff] %vm4348, %v4405
      %v4459 = vld [vmem:[%s10] sm:$0xff]
      %v4460 = vld [vmem:[%s10 + $0x8] sm:$0xff]
      %v4461 = vld [vmem:[%s10 + $0x10] sm:$0xff]
      %v4462 = vld [vmem:[%s10 + $0x18] sm:$0xff]
      %v4463 = vld [vmem:[#allocation4] sm:$0xff]
      %v4464 = vld [vmem:[#allocation4 + $0x8] sm:$0xff]
      %v4465 = vld [vmem:[#allocation4 + $0x10] sm:$0xff]
      %v4466 = vld [vmem:[#allocation4 + $0x18] sm:$0xff]
      %v4467 = vld [vmem:[#allocation4 + $0x28] sm:$0xff]
      %v4468 = vld [vmem:[#allocation4 + $0x30] sm:$0xff]
      %v4469 = vld [vmem:[#allocation4 + $0x38] sm:$0xff]
      %v4470 = vld [vmem:[#allocation4 + $0x40] sm:$0xff]
      %v4471 = vld [vmem:[#allocation4 + $0x50] sm:$0xff]
      %v4472 = vld [vmem:[#allocation4 + $0x58] sm:$0xff]
      %v4473 = vld [vmem:[#allocation4 + $0x60] sm:$0xff]
      %v4474 = vld [vmem:[#allocation4 + $0x68] sm:$0xff]
      %v4475 = vld [vmem:[#allocation4 + $0x78] sm:$0xff]
      %v4476 = vld [vmem:[#allocation4 + $0x80] sm:$0xff]
      %v4477 = vld [vmem:[#allocation4 + $0x88] sm:$0xff]
      %v4478 = vld [vmem:[#allocation4 + $0x90] sm:$0xff]
      %4480 = vset.pattern.permute.xlu0 0
      %4481 = vperm.xlu0 %4480, %v4459
      %v4482 = vpop.permute.xlu0 %4481
      %4485 = vset.pattern.permute.xlu0 0
      %4486 = vperm.xlu0 %4485, %v4460
      %v4487 = vpop.permute.xlu0 %4486
      %4490 = vset.pattern.permute.xlu0 0
      %4491 = vperm.xlu0 %4490, %v4461
      %v4492 = vpop.permute.xlu0 %4491
      %4495 = vset.pattern.permute.xlu0 0
      %4496 = vperm.xlu0 %4495, %v4462
      %v4497 = vpop.permute.xlu0 %4496
      %v4499 = vmul.f32 %v4482, %v4463
      %v4500 = vmul.f32 %v4482, %v4464
      %v4501 = vmul.f32 %v4482, %v4465
      %v4502 = vmul.f32 %v4482, %v4466
      %v4503 = vmul.f32 %v4487, %v4467
      %v4504 = vmul.f32 %v4487, %v4468
      %v4505 = vmul.f32 %v4487, %v4469
      %v4506 = vmul.f32 %v4487, %v4470
      %v4507 = vmul.f32 %v4492, %v4471
      %v4508 = vmul.f32 %v4492, %v4472
      %v4509 = vmul.f32 %v4492, %v4473
      %v4510 = vmul.f32 %v4492, %v4474
      %v4511 = vmul.f32 %v4497, %v4475
      %v4512 = vmul.f32 %v4497, %v4476
      %v4513 = vmul.f32 %v4497, %v4477
      %v4514 = vmul.f32 %v4497, %v4478
      %s4515 = scalar_lea.vmem %s10, 96
      %v4516 = vld [vmem:[%s4515] sm:$0xff]
      %v4517 = vld [vmem:[%s4515 + $0x8] sm:$0xff]
      %v4518 = vld [vmem:[%s4515 + $0x10] sm:$0xff]
      %v4519 = vld [vmem:[%s4515 + $0x18] sm:$0xff]
      %v4520 = vld [vmem:[#allocation4] sm:$0xff]
      %v4521 = vld [vmem:[#allocation4 + $0x8] sm:$0xff]
      %v4522 = vld [vmem:[#allocation4 + $0x10] sm:$0xff]
      %v4523 = vld [vmem:[#allocation4 + $0x18] sm:$0xff]
      %v4524 = vld [vmem:[#allocation4 + $0x20] sm:$0xff]
      %v4525 = vld [vmem:[#allocation4 + $0x28] sm:$0xff]
      %v4526 = vld [vmem:[#allocation4 + $0x30] sm:$0xff]
      %v4527 = vld [vmem:[#allocation4 + $0x38] sm:$0xff]
      %v4528 = vld [vmem:[#allocation4 + $0x40] sm:$0xff]
      %v4529 = vld [vmem:[#allocation4 + $0x48] sm:$0xff]
      %v4530 = vld [vmem:[#allocation4 + $0x50] sm:$0xff]
      %v4531 = vld [vmem:[#allocation4 + $0x58] sm:$0xff]
      %v4532 = vld [vmem:[#allocation4 + $0x60] sm:$0xff]
      %v4533 = vld [vmem:[#allocation4 + $0x68] sm:$0xff]
      %v4534 = vld [vmem:[#allocation4 + $0x70] sm:$0xff]
      %v4535 = vld [vmem:[#allocation4 + $0x78] sm:$0xff]
      %v4536 = vld [vmem:[#allocation4 + $0x80] sm:$0xff]
      %v4537 = vld [vmem:[#allocation4 + $0x88] sm:$0xff]
      %v4538 = vld [vmem:[#allocation4 + $0x90] sm:$0xff]
      %v4539 = vld [vmem:[#allocation4 + $0x98] sm:$0xff]
      %4541 = vset.pattern.permute.xlu0 0
      %4542 = vperm.xlu0 %4541, %v4516
      %v4543 = vpop.permute.xlu0 %4542
      %4546 = vset.pattern.permute.xlu0 0
      %4547 = vperm.xlu0 %4546, %v4517
      %v4548 = vpop.permute.xlu0 %4547
      %4551 = vset.pattern.permute.xlu0 0
      %4552 = vperm.xlu0 %4551, %v4518
      %v4553 = vpop.permute.xlu0 %4552
      %4556 = vset.pattern.permute.xlu0 0
      %4557 = vperm.xlu0 %4556, %v4519
      %v4558 = vpop.permute.xlu0 %4557
      %v4560 = vmul.f32 %v4543, %v4520
      %v4561 = vmul.f32 %v4543, %v4521
      %v4562 = vmul.f32 %v4543, %v4522
      %v4563 = vmul.f32 %v4543, %v4523
      %v4564 = vmul.f32 %v4543, %v4524
      %v4565 = vmul.f32 %v4548, %v4525
      %v4566 = vmul.f32 %v4548, %v4526
      %v4567 = vmul.f32 %v4548, %v4527
      %v4568 = vmul.f32 %v4548, %v4528
      %v4569 = vmul.f32 %v4548, %v4529
      %v4570 = vmul.f32 %v4553, %v4530
      %v4571 = vmul.f32 %v4553, %v4531
      %v4572 = vmul.f32 %v4553, %v4532
      %v4573 = vmul.f32 %v4553, %v4533
      %v4574 = vmul.f32 %v4553, %v4534
      %v4575 = vmul.f32 %v4558, %v4535
      %v4576 = vmul.f32 %v4558, %v4536
      %v4577 = vmul.f32 %v4558, %v4537
      %v4578 = vmul.f32 %v4558, %v4538
      %v4579 = vmul.f32 %v4558, %v4539
      %4600 = vrot.lane.b32.xlu0 %v4560, 96
      %v4601 = vpop.permute.xlu0 %4600
      %4602 = vrot.lane.b32.xlu0 %v4561, 96
      %v4603 = vpop.permute.xlu0 %4602
      %4604 = vrot.lane.b32.xlu0 %v4562, 96
      %v4605 = vpop.permute.xlu0 %4604
      %4606 = vrot.lane.b32.xlu0 %v4563, 96
      %v4607 = vpop.permute.xlu0 %4606
      %4608 = vrot.lane.b32.xlu0 %v4564, 96
      %v4609 = vpop.permute.xlu0 %4608
      %4610 = vrot.lane.b32.xlu0 %v4565, 96
      %v4611 = vpop.permute.xlu0 %4610
      %4612 = vrot.lane.b32.xlu0 %v4566, 96
      %v4613 = vpop.permute.xlu0 %4612
      %4614 = vrot.lane.b32.xlu0 %v4567, 96
      %v4615 = vpop.permute.xlu0 %4614
      %4616 = vrot.lane.b32.xlu0 %v4568, 96
      %v4617 = vpop.permute.xlu0 %4616
      %4618 = vrot.lane.b32.xlu0 %v4569, 96
      %v4619 = vpop.permute.xlu0 %4618
      %4620 = vrot.lane.b32.xlu0 %v4570, 96
      %v4621 = vpop.permute.xlu0 %4620
      %4622 = vrot.lane.b32.xlu0 %v4571, 96
      %v4623 = vpop.permute.xlu0 %4622
      %4624 = vrot.lane.b32.xlu0 %v4572, 96
      %v4625 = vpop.permute.xlu0 %4624
      %4626 = vrot.lane.b32.xlu0 %v4573, 96
      %v4627 = vpop.permute.xlu0 %4626
      %4628 = vrot.lane.b32.xlu0 %v4574, 96
      %v4629 = vpop.permute.xlu0 %4628
      %4630 = vrot.lane.b32.xlu0 %v4575, 96
      %v4631 = vpop.permute.xlu0 %4630
      %4632 = vrot.lane.b32.xlu0 %v4576, 96
      %v4633 = vpop.permute.xlu0 %4632
      %4634 = vrot.lane.b32.xlu0 %v4577, 96
      %v4635 = vpop.permute.xlu0 %4634
      %4636 = vrot.lane.b32.xlu0 %v4578, 96
      %v4637 = vpop.permute.xlu0 %4636
      %4638 = vrot.lane.b32.xlu0 %v4579, 96
      %v4639 = vpop.permute.xlu0 %4638
      %v4640 = vsel %vm854, %v4601, %v4603
      %v4641 = vsel %vm854, %v4603, %v4605
      %v4642 = vsel %vm854, %v4605, %v4607
      %v4643 = vsel %vm854, %v4607, %v4609
      %v4644 = vsel %vm854, %v4611, %v4613
      %v4645 = vsel %vm854, %v4613, %v4615
      %v4646 = vsel %vm854, %v4615, %v4617
      %v4647 = vsel %vm854, %v4617, %v4619
      %v4648 = vsel %vm854, %v4621, %v4623
      %v4649 = vsel %vm854, %v4623, %v4625
      %v4650 = vsel %vm854, %v4625, %v4627
      %v4651 = vsel %vm854, %v4627, %v4629
      %v4652 = vsel %vm854, %v4631, %v4633
      %v4653 = vsel %vm854, %v4633, %v4635
      %v4654 = vsel %vm854, %v4635, %v4637
      %v4655 = vsel %vm854, %v4637, %v4639
      %v4672 = vadd.f32 %v4499, %v4640
      %v4673 = vadd.f32 %v4500, %v4641
      %v4674 = vadd.f32 %v4501, %v4642
      %v4675 = vadd.f32 %v4502, %v4643
      %v4676 = vadd.f32 %v4503, %v4644
      %v4677 = vadd.f32 %v4504, %v4645
      %v4678 = vadd.f32 %v4505, %v4646
      %v4679 = vadd.f32 %v4506, %v4647
      %v4680 = vadd.f32 %v4507, %v4648
      %v4681 = vadd.f32 %v4508, %v4649
      %v4682 = vadd.f32 %v4509, %v4650
      %v4683 = vadd.f32 %v4510, %v4651
      %v4684 = vadd.f32 %v4511, %v4652
      %v4685 = vadd.f32 %v4512, %v4653
      %v4686 = vadd.f32 %v4513, %v4654
      %v4687 = vadd.f32 %v4514, %v4655
      %s4688 = scalar_lea.vmem %s10, 192
      %v4689 = vld [vmem:[%s4688] sm:$0xff]
      %v4690 = vld [vmem:[%s4688 + $0x8] sm:$0xff]
      %v4691 = vld [vmem:[%s4688 + $0x10] sm:$0xff]
      %v4692 = vld [vmem:[%s4688 + $0x18] sm:$0xff]
      %4694 = vset.pattern.permute.xlu0 0
      %4695 = vperm.xlu0 %4694, %v4689
      %v4696 = vpop.permute.xlu0 %4695
      %4699 = vset.pattern.permute.xlu0 0
      %4700 = vperm.xlu0 %4699, %v4690
      %v4701 = vpop.permute.xlu0 %4700
      %4704 = vset.pattern.permute.xlu0 0
      %4705 = vperm.xlu0 %4704, %v4691
      %v4706 = vpop.permute.xlu0 %4705
      %4709 = vset.pattern.permute.xlu0 0
      %4710 = vperm.xlu0 %4709, %v4692
      %v4711 = vpop.permute.xlu0 %4710
      %v4713 = vmul.f32 %v4696, %v4520
      %v4714 = vmul.f32 %v4696, %v4521
      %v4715 = vmul.f32 %v4696, %v4522
      %v4716 = vmul.f32 %v4696, %v4523
      %v4717 = vmul.f32 %v4696, %v4524
      %v4718 = vmul.f32 %v4701, %v4525
      %v4719 = vmul.f32 %v4701, %v4526
      %v4720 = vmul.f32 %v4701, %v4527
      %v4721 = vmul.f32 %v4701, %v4528
      %v4722 = vmul.f32 %v4701, %v4529
      %v4723 = vmul.f32 %v4706, %v4530
      %v4724 = vmul.f32 %v4706, %v4531
      %v4725 = vmul.f32 %v4706, %v4532
      %v4726 = vmul.f32 %v4706, %v4533
      %v4727 = vmul.f32 %v4706, %v4534
      %v4728 = vmul.f32 %v4711, %v4535
      %v4729 = vmul.f32 %v4711, %v4536
      %v4730 = vmul.f32 %v4711, %v4537
      %v4731 = vmul.f32 %v4711, %v4538
      %v4732 = vmul.f32 %v4711, %v4539
      %4753 = vrot.lane.b32.xlu0 %v4713, 64
      %v4754 = vpop.permute.xlu0 %4753
      %4755 = vrot.lane.b32.xlu0 %v4714, 64
      %v4756 = vpop.permute.xlu0 %4755
      %4757 = vrot.lane.b32.xlu0 %v4715, 64
      %v4758 = vpop.permute.xlu0 %4757
      %4759 = vrot.lane.b32.xlu0 %v4716, 64
      %v4760 = vpop.permute.xlu0 %4759
      %4761 = vrot.lane.b32.xlu0 %v4717, 64
      %v4762 = vpop.permute.xlu0 %4761
      %4763 = vrot.lane.b32.xlu0 %v4718, 64
      %v4764 = vpop.permute.xlu0 %4763
      %4765 = vrot.lane.b32.xlu0 %v4719, 64
      %v4766 = vpop.permute.xlu0 %4765
      %4767 = vrot.lane.b32.xlu0 %v4720, 64
      %v4768 = vpop.permute.xlu0 %4767
      %4769 = vrot.lane.b32.xlu0 %v4721, 64
      %v4770 = vpop.permute.xlu0 %4769
      %4771 = vrot.lane.b32.xlu0 %v4722, 64
      %v4772 = vpop.permute.xlu0 %4771
      %4773 = vrot.lane.b32.xlu0 %v4723, 64
      %v4774 = vpop.permute.xlu0 %4773
      %4775 = vrot.lane.b32.xlu0 %v4724, 64
      %v4776 = vpop.permute.xlu0 %4775
      %4777 = vrot.lane.b32.xlu0 %v4725, 64
      %v4778 = vpop.permute.xlu0 %4777
      %4779 = vrot.lane.b32.xlu0 %v4726, 64
      %v4780 = vpop.permute.xlu0 %4779
      %4781 = vrot.lane.b32.xlu0 %v4727, 64
      %v4782 = vpop.permute.xlu0 %4781
      %4783 = vrot.lane.b32.xlu0 %v4728, 64
      %v4784 = vpop.permute.xlu0 %4783
      %4785 = vrot.lane.b32.xlu0 %v4729, 64
      %v4786 = vpop.permute.xlu0 %4785
      %4787 = vrot.lane.b32.xlu0 %v4730, 64
      %v4788 = vpop.permute.xlu0 %4787
      %4789 = vrot.lane.b32.xlu0 %v4731, 64
      %v4790 = vpop.permute.xlu0 %4789
      %4791 = vrot.lane.b32.xlu0 %v4732, 64
      %v4792 = vpop.permute.xlu0 %4791
      %v4793 = vsel %vm894, %v4754, %v4756
      %v4794 = vsel %vm894, %v4756, %v4758
      %v4795 = vsel %vm894, %v4758, %v4760
      %v4796 = vsel %vm894, %v4760, %v4762
      %v4797 = vsel %vm894, %v4764, %v4766
      %v4798 = vsel %vm894, %v4766, %v4768
      %v4799 = vsel %vm894, %v4768, %v4770
      %v4800 = vsel %vm894, %v4770, %v4772
      %v4801 = vsel %vm894, %v4774, %v4776
      %v4802 = vsel %vm894, %v4776, %v4778
      %v4803 = vsel %vm894, %v4778, %v4780
      %v4804 = vsel %vm894, %v4780, %v4782
      %v4805 = vsel %vm894, %v4784, %v4786
      %v4806 = vsel %vm894, %v4786, %v4788
      %v4807 = vsel %vm894, %v4788, %v4790
      %v4808 = vsel %vm894, %v4790, %v4792
      %v4825 = vadd.f32 %v4672, %v4793
      %v4826 = vadd.f32 %v4673, %v4794
      %v4827 = vadd.f32 %v4674, %v4795
      %v4828 = vadd.f32 %v4675, %v4796
      %v4829 = vadd.f32 %v4676, %v4797
      %v4830 = vadd.f32 %v4677, %v4798
      %v4831 = vadd.f32 %v4678, %v4799
      %v4832 = vadd.f32 %v4679, %v4800
      %v4833 = vadd.f32 %v4680, %v4801
      %v4834 = vadd.f32 %v4681, %v4802
      %v4835 = vadd.f32 %v4682, %v4803
      %v4836 = vadd.f32 %v4683, %v4804
      %v4837 = vadd.f32 %v4684, %v4805
      %v4838 = vadd.f32 %v4685, %v4806
      %v4839 = vadd.f32 %v4686, %v4807
      %v4840 = vadd.f32 %v4687, %v4808
      %v4841 = vld [vmem:[%s13] sm:$0xf]
      %v4843 = vlaneseq
      %v4844 = vshrl.u32 %v4843, 7
      %v4845 = vsub.s32 0, %v4844
      %v4846 = vrot.slane %v4841, %v4845
      %v4847 = vlaneseq
      %v4848 = vshrl.u32 %v4847, 7
      %v4849 = vsub.s32 1, %v4848
      %v4850 = vrot.slane %v4841, %v4849
      %v4851 = vlaneseq
      %v4852 = vshrl.u32 %v4851, 7
      %v4853 = vsub.s32 2, %v4852
      %v4854 = vrot.slane %v4841, %v4853
      %v4855 = vlaneseq
      %v4856 = vshrl.u32 %v4855, 7
      %v4857 = vsub.s32 3, %v4856
      %v4858 = vrot.slane %v4841, %v4857
      %v4863 = vmul.f32 %v4846, %v4825
      %v4864 = vmul.f32 %v4850, %v4826
      %v4865 = vmul.f32 %v4854, %v4827
      %v4866 = vmul.f32 %v4858, %v4828
      %v4867 = vmul.f32 %v4846, %v4829
      %v4868 = vmul.f32 %v4850, %v4830
      %v4869 = vmul.f32 %v4854, %v4831
      %v4870 = vmul.f32 %v4858, %v4832
      %v4871 = vmul.f32 %v4846, %v4833
      %v4872 = vmul.f32 %v4850, %v4834
      %v4873 = vmul.f32 %v4854, %v4835
      %v4874 = vmul.f32 %v4858, %v4836
      %v4875 = vmul.f32 %v4846, %v4837
      %v4876 = vmul.f32 %v4850, %v4838
      %v4877 = vmul.f32 %v4854, %v4839
      %v4878 = vmul.f32 %v4858, %v4840
      %s4879 = scalar_lea.vmem %s10, 32
      %v4880 = vld [vmem:[%s4879] sm:$0xff]
      %v4881 = vld [vmem:[%s4879 + $0x8] sm:$0xff]
      %v4882 = vld [vmem:[%s4879 + $0x10] sm:$0xff]
      %v4883 = vld [vmem:[%s4879 + $0x18] sm:$0xff]
      %4885 = vset.pattern.permute.xlu0 0
      %4886 = vperm.xlu0 %4885, %v4880
      %v4887 = vpop.permute.xlu0 %4886
      %4890 = vset.pattern.permute.xlu0 0
      %4891 = vperm.xlu0 %4890, %v4881
      %v4892 = vpop.permute.xlu0 %4891
      %4895 = vset.pattern.permute.xlu0 0
      %4896 = vperm.xlu0 %4895, %v4882
      %v4897 = vpop.permute.xlu0 %4896
      %4900 = vset.pattern.permute.xlu0 0
      %4901 = vperm.xlu0 %4900, %v4883
      %v4902 = vpop.permute.xlu0 %4901
      %v4904 = vmul.f32 %v4887, %v4520
      %v4905 = vmul.f32 %v4887, %v4521
      %v4906 = vmul.f32 %v4887, %v4522
      %v4907 = vmul.f32 %v4887, %v4523
      %v4908 = vmul.f32 %v4887, %v4524
      %v4909 = vmul.f32 %v4892, %v4525
      %v4910 = vmul.f32 %v4892, %v4526
      %v4911 = vmul.f32 %v4892, %v4527
      %v4912 = vmul.f32 %v4892, %v4528
      %v4913 = vmul.f32 %v4892, %v4529
      %v4914 = vmul.f32 %v4897, %v4530
      %v4915 = vmul.f32 %v4897, %v4531
      %v4916 = vmul.f32 %v4897, %v4532
      %v4917 = vmul.f32 %v4897, %v4533
      %v4918 = vmul.f32 %v4897, %v4534
      %v4919 = vmul.f32 %v4902, %v4535
      %v4920 = vmul.f32 %v4902, %v4536
      %v4921 = vmul.f32 %v4902, %v4537
      %v4922 = vmul.f32 %v4902, %v4538
      %v4923 = vmul.f32 %v4902, %v4539
      %s4924 = scalar_lea.vmem %s10, 128
      %v4925 = vld [vmem:[%s4924] sm:$0xff]
      %v4926 = vld [vmem:[%s4924 + $0x8] sm:$0xff]
      %v4927 = vld [vmem:[%s4924 + $0x10] sm:$0xff]
      %v4928 = vld [vmem:[%s4924 + $0x18] sm:$0xff]
      %4930 = vset.pattern.permute.xlu0 0
      %4931 = vperm.xlu0 %4930, %v4925
      %v4932 = vpop.permute.xlu0 %4931
      %4935 = vset.pattern.permute.xlu0 0
      %4936 = vperm.xlu0 %4935, %v4926
      %v4937 = vpop.permute.xlu0 %4936
      %4940 = vset.pattern.permute.xlu0 0
      %4941 = vperm.xlu0 %4940, %v4927
      %v4942 = vpop.permute.xlu0 %4941
      %4945 = vset.pattern.permute.xlu0 0
      %4946 = vperm.xlu0 %4945, %v4928
      %v4947 = vpop.permute.xlu0 %4946
      %v4949 = vmul.f32 %v4932, %v4520
      %v4950 = vmul.f32 %v4932, %v4521
      %v4951 = vmul.f32 %v4932, %v4522
      %v4952 = vmul.f32 %v4932, %v4523
      %v4953 = vmul.f32 %v4932, %v4524
      %v4954 = vmul.f32 %v4937, %v4525
      %v4955 = vmul.f32 %v4937, %v4526
      %v4956 = vmul.f32 %v4937, %v4527
      %v4957 = vmul.f32 %v4937, %v4528
      %v4958 = vmul.f32 %v4937, %v4529
      %v4959 = vmul.f32 %v4942, %v4530
      %v4960 = vmul.f32 %v4942, %v4531
      %v4961 = vmul.f32 %v4942, %v4532
      %v4962 = vmul.f32 %v4942, %v4533
      %v4963 = vmul.f32 %v4942, %v4534
      %v4964 = vmul.f32 %v4947, %v4535
      %v4965 = vmul.f32 %v4947, %v4536
      %v4966 = vmul.f32 %v4947, %v4537
      %v4967 = vmul.f32 %v4947, %v4538
      %v4968 = vmul.f32 %v4947, %v4539
      %4989 = vrot.lane.b32.xlu0 %v4949, 96
      %v4990 = vpop.permute.xlu0 %4989
      %4991 = vrot.lane.b32.xlu0 %v4950, 96
      %v4992 = vpop.permute.xlu0 %4991
      %4993 = vrot.lane.b32.xlu0 %v4951, 96
      %v4994 = vpop.permute.xlu0 %4993
      %4995 = vrot.lane.b32.xlu0 %v4952, 96
      %v4996 = vpop.permute.xlu0 %4995
      %4997 = vrot.lane.b32.xlu0 %v4953, 96
      %v4998 = vpop.permute.xlu0 %4997
      %4999 = vrot.lane.b32.xlu0 %v4954, 96
      %v5000 = vpop.permute.xlu0 %4999
      %5001 = vrot.lane.b32.xlu0 %v4955, 96
      %v5002 = vpop.permute.xlu0 %5001
      %5003 = vrot.lane.b32.xlu0 %v4956, 96
      %v5004 = vpop.permute.xlu0 %5003
      %5005 = vrot.lane.b32.xlu0 %v4957, 96
      %v5006 = vpop.permute.xlu0 %5005
      %5007 = vrot.lane.b32.xlu0 %v4958, 96
      %v5008 = vpop.permute.xlu0 %5007
      %5009 = vrot.lane.b32.xlu0 %v4959, 96
      %v5010 = vpop.permute.xlu0 %5009
      %5011 = vrot.lane.b32.xlu0 %v4960, 96
      %v5012 = vpop.permute.xlu0 %5011
      %5013 = vrot.lane.b32.xlu0 %v4961, 96
      %v5014 = vpop.permute.xlu0 %5013
      %5015 = vrot.lane.b32.xlu0 %v4962, 96
      %v5016 = vpop.permute.xlu0 %5015
      %5017 = vrot.lane.b32.xlu0 %v4963, 96
      %v5018 = vpop.permute.xlu0 %5017
      %5019 = vrot.lane.b32.xlu0 %v4964, 96
      %v5020 = vpop.permute.xlu0 %5019
      %5021 = vrot.lane.b32.xlu0 %v4965, 96
      %v5022 = vpop.permute.xlu0 %5021
      %5023 = vrot.lane.b32.xlu0 %v4966, 96
      %v5024 = vpop.permute.xlu0 %5023
      %5025 = vrot.lane.b32.xlu0 %v4967, 96
      %v5026 = vpop.permute.xlu0 %5025
      %5027 = vrot.lane.b32.xlu0 %v4968, 96
      %v5028 = vpop.permute.xlu0 %5027
      %v5029 = vsel %vm854, %v4990, %v4992
      %v5030 = vsel %vm854, %v4992, %v4994
      %v5031 = vsel %vm854, %v4994, %v4996
      %v5032 = vsel %vm854, %v4996, %v4998
      %v5033 = vsel %vm854, %v5000, %v5002
      %v5034 = vsel %vm854, %v5002, %v5004
      %v5035 = vsel %vm854, %v5004, %v5006
      %v5036 = vsel %vm854, %v5006, %v5008
      %v5037 = vsel %vm854, %v5010, %v5012
      %v5038 = vsel %vm854, %v5012, %v5014
      %v5039 = vsel %vm854, %v5014, %v5016
      %v5040 = vsel %vm854, %v5016, %v5018
      %v5041 = vsel %vm854, %v5020, %v5022
      %v5042 = vsel %vm854, %v5022, %v5024
      %v5043 = vsel %vm854, %v5024, %v5026
      %v5044 = vsel %vm854, %v5026, %v5028
      %v5065 = vadd.f32 %v4904, %v5029
      %v5066 = vadd.f32 %v4905, %v5030
      %v5067 = vadd.f32 %v4906, %v5031
      %v5068 = vadd.f32 %v4907, %v5032
      %v5069 = vadd.f32 %v4908, %v4998
      %v5070 = vadd.f32 %v4909, %v5033
      %v5071 = vadd.f32 %v4910, %v5034
      %v5072 = vadd.f32 %v4911, %v5035
      %v5073 = vadd.f32 %v4912, %v5036
      %v5074 = vadd.f32 %v4913, %v5008
      %v5075 = vadd.f32 %v4914, %v5037
      %v5076 = vadd.f32 %v4915, %v5038
      %v5077 = vadd.f32 %v4916, %v5039
      %v5078 = vadd.f32 %v4917, %v5040
      %v5079 = vadd.f32 %v4918, %v5018
      %v5080 = vadd.f32 %v4919, %v5041
      %v5081 = vadd.f32 %v4920, %v5042
      %v5082 = vadd.f32 %v4921, %v5043
      %v5083 = vadd.f32 %v4922, %v5044
      %v5084 = vadd.f32 %v4923, %v5028
      %s5085 = scalar_lea.vmem %s10, 224
      %v5086 = vld [vmem:[%s5085] sm:$0xff]
      %v5087 = vld [vmem:[%s5085 + $0x8] sm:$0xff]
      %v5088 = vld [vmem:[%s5085 + $0x10] sm:$0xff]
      %v5089 = vld [vmem:[%s5085 + $0x18] sm:$0xff]
      %5091 = vset.pattern.permute.xlu0 0
      %5092 = vperm.xlu0 %5091, %v5086
      %v5093 = vpop.permute.xlu0 %5092
      %5096 = vset.pattern.permute.xlu0 0
      %5097 = vperm.xlu0 %5096, %v5087
      %v5098 = vpop.permute.xlu0 %5097
      %5101 = vset.pattern.permute.xlu0 0
      %5102 = vperm.xlu0 %5101, %v5088
      %v5103 = vpop.permute.xlu0 %5102
      %5106 = vset.pattern.permute.xlu0 0
      %5107 = vperm.xlu0 %5106, %v5089
      %v5108 = vpop.permute.xlu0 %5107
      %v5110 = vmul.f32 %v5093, %v4520
      %v5111 = vmul.f32 %v5093, %v4521
      %v5112 = vmul.f32 %v5093, %v4522
      %v5113 = vmul.f32 %v5093, %v4523
      %v5114 = vmul.f32 %v5093, %v4524
      %v5115 = vmul.f32 %v5098, %v4525
      %v5116 = vmul.f32 %v5098, %v4526
      %v5117 = vmul.f32 %v5098, %v4527
      %v5118 = vmul.f32 %v5098, %v4528
      %v5119 = vmul.f32 %v5098, %v4529
      %v5120 = vmul.f32 %v5103, %v4530
      %v5121 = vmul.f32 %v5103, %v4531
      %v5122 = vmul.f32 %v5103, %v4532
      %v5123 = vmul.f32 %v5103, %v4533
      %v5124 = vmul.f32 %v5103, %v4534
      %v5125 = vmul.f32 %v5108, %v4535
      %v5126 = vmul.f32 %v5108, %v4536
      %v5127 = vmul.f32 %v5108, %v4537
      %v5128 = vmul.f32 %v5108, %v4538
      %v5129 = vmul.f32 %v5108, %v4539
      %5150 = vrot.lane.b32.xlu0 %v5110, 64
      %v5151 = vpop.permute.xlu0 %5150
      %5152 = vrot.lane.b32.xlu0 %v5111, 64
      %v5153 = vpop.permute.xlu0 %5152
      %5154 = vrot.lane.b32.xlu0 %v5112, 64
      %v5155 = vpop.permute.xlu0 %5154
      %5156 = vrot.lane.b32.xlu0 %v5113, 64
      %v5157 = vpop.permute.xlu0 %5156
      %5158 = vrot.lane.b32.xlu0 %v5114, 64
      %v5159 = vpop.permute.xlu0 %5158
      %5160 = vrot.lane.b32.xlu0 %v5115, 64
      %v5161 = vpop.permute.xlu0 %5160
      %5162 = vrot.lane.b32.xlu0 %v5116, 64
      %v5163 = vpop.permute.xlu0 %5162
      %5164 = vrot.lane.b32.xlu0 %v5117, 64
      %v5165 = vpop.permute.xlu0 %5164
      %5166 = vrot.lane.b32.xlu0 %v5118, 64
      %v5167 = vpop.permute.xlu0 %5166
      %5168 = vrot.lane.b32.xlu0 %v5119, 64
      %v5169 = vpop.permute.xlu0 %5168
      %5170 = vrot.lane.b32.xlu0 %v5120, 64
      %v5171 = vpop.permute.xlu0 %5170
      %5172 = vrot.lane.b32.xlu0 %v5121, 64
      %v5173 = vpop.permute.xlu0 %5172
      %5174 = vrot.lane.b32.xlu0 %v5122, 64
      %v5175 = vpop.permute.xlu0 %5174
      %5176 = vrot.lane.b32.xlu0 %v5123, 64
      %v5177 = vpop.permute.xlu0 %5176
      %5178 = vrot.lane.b32.xlu0 %v5124, 64
      %v5179 = vpop.permute.xlu0 %5178
      %5180 = vrot.lane.b32.xlu0 %v5125, 64
      %v5181 = vpop.permute.xlu0 %5180
      %5182 = vrot.lane.b32.xlu0 %v5126, 64
      %v5183 = vpop.permute.xlu0 %5182
      %5184 = vrot.lane.b32.xlu0 %v5127, 64
      %v5185 = vpop.permute.xlu0 %5184
      %5186 = vrot.lane.b32.xlu0 %v5128, 64
      %v5187 = vpop.permute.xlu0 %5186
      %5188 = vrot.lane.b32.xlu0 %v5129, 64
      %v5189 = vpop.permute.xlu0 %5188
      %v5190 = vsel %vm894, %v5151, %v5153
      %v5191 = vsel %vm894, %v5153, %v5155
      %v5192 = vsel %vm894, %v5155, %v5157
      %v5193 = vsel %vm894, %v5157, %v5159
      %v5194 = vsel %vm894, %v5161, %v5163
      %v5195 = vsel %vm894, %v5163, %v5165
      %v5196 = vsel %vm894, %v5165, %v5167
      %v5197 = vsel %vm894, %v5167, %v5169
      %v5198 = vsel %vm894, %v5171, %v5173
      %v5199 = vsel %vm894, %v5173, %v5175
      %v5200 = vsel %vm894, %v5175, %v5177
      %v5201 = vsel %vm894, %v5177, %v5179
      %v5202 = vsel %vm894, %v5181, %v5183
      %v5203 = vsel %vm894, %v5183, %v5185
      %v5204 = vsel %vm894, %v5185, %v5187
      %v5205 = vsel %vm894, %v5187, %v5189
      %v5226 = vadd.f32 %v5065, %v5190
      %v5227 = vadd.f32 %v5066, %v5191
      %v5228 = vadd.f32 %v5067, %v5192
      %v5229 = vadd.f32 %v5068, %v5193
      %v5230 = vadd.f32 %v5069, %v5159
      %v5231 = vadd.f32 %v5070, %v5194
      %v5232 = vadd.f32 %v5071, %v5195
      %v5233 = vadd.f32 %v5072, %v5196
      %v5234 = vadd.f32 %v5073, %v5197
      %v5235 = vadd.f32 %v5074, %v5169
      %v5236 = vadd.f32 %v5075, %v5198
      %v5237 = vadd.f32 %v5076, %v5199
      %v5238 = vadd.f32 %v5077, %v5200
      %v5239 = vadd.f32 %v5078, %v5201
      %v5240 = vadd.f32 %v5079, %v5179
      %v5241 = vadd.f32 %v5080, %v5202
      %v5242 = vadd.f32 %v5081, %v5203
      %v5243 = vadd.f32 %v5082, %v5204
      %v5244 = vadd.f32 %v5083, %v5205
      %v5245 = vadd.f32 %v5084, %v5189
      %s5246 = scalar_lea.vmem %s13, 4
      %v5247 = vld [vmem:[%s5246] sm:$0xf]
      %v5249 = vlaneseq
      %v5250 = vshrl.u32 %v5249, 7
      %v5251 = vsub.s32 0, %v5250
      %v5252 = vrot.slane %v5247, %v5251
      %v5253 = vlaneseq
      %v5254 = vshrl.u32 %v5253, 7
      %v5255 = vsub.s32 1, %v5254
      %v5256 = vrot.slane %v5247, %v5255
      %v5257 = vlaneseq
      %v5258 = vshrl.u32 %v5257, 7
      %v5259 = vsub.s32 2, %v5258
      %v5260 = vrot.slane %v5247, %v5259
      %v5261 = vlaneseq
      %v5262 = vshrl.u32 %v5261, 7
      %v5263 = vsub.s32 3, %v5262
      %v5264 = vrot.slane %v5247, %v5263
      %5289 = vrot.lane.b32.xlu0 %v5226, 127
      %v5290 = vpop.permute.xlu0 %5289
      %5291 = vrot.lane.b32.xlu0 %v5227, 127
      %v5292 = vpop.permute.xlu0 %5291
      %5293 = vrot.lane.b32.xlu0 %v5228, 127
      %v5294 = vpop.permute.xlu0 %5293
      %5295 = vrot.lane.b32.xlu0 %v5229, 127
      %v5296 = vpop.permute.xlu0 %5295
      %5297 = vrot.lane.b32.xlu0 %v5230, 127
      %v5298 = vpop.permute.xlu0 %5297
      %5299 = vrot.lane.b32.xlu0 %v5231, 127
      %v5300 = vpop.permute.xlu0 %5299
      %5301 = vrot.lane.b32.xlu0 %v5232, 127
      %v5302 = vpop.permute.xlu0 %5301
      %5303 = vrot.lane.b32.xlu0 %v5233, 127
      %v5304 = vpop.permute.xlu0 %5303
      %5305 = vrot.lane.b32.xlu0 %v5234, 127
      %v5306 = vpop.permute.xlu0 %5305
      %5307 = vrot.lane.b32.xlu0 %v5235, 127
      %v5308 = vpop.permute.xlu0 %5307
      %5309 = vrot.lane.b32.xlu0 %v5236, 127
      %v5310 = vpop.permute.xlu0 %5309
      %5311 = vrot.lane.b32.xlu0 %v5237, 127
      %v5312 = vpop.permute.xlu0 %5311
      %5313 = vrot.lane.b32.xlu0 %v5238, 127
      %v5314 = vpop.permute.xlu0 %5313
      %5315 = vrot.lane.b32.xlu0 %v5239, 127
      %v5316 = vpop.permute.xlu0 %5315
      %5317 = vrot.lane.b32.xlu0 %v5240, 127
      %v5318 = vpop.permute.xlu0 %5317
      %5319 = vrot.lane.b32.xlu0 %v5241, 127
      %v5320 = vpop.permute.xlu0 %5319
      %5321 = vrot.lane.b32.xlu0 %v5242, 127
      %v5322 = vpop.permute.xlu0 %5321
      %5323 = vrot.lane.b32.xlu0 %v5243, 127
      %v5324 = vpop.permute.xlu0 %5323
      %5325 = vrot.lane.b32.xlu0 %v5244, 127
      %v5326 = vpop.permute.xlu0 %5325
      %5327 = vrot.lane.b32.xlu0 %v5245, 127
      %v5328 = vpop.permute.xlu0 %5327
      %v5329 = vsel %vm1183, %v5290, %v5292
      %v5330 = vsel %vm1183, %v5292, %v5294
      %v5331 = vsel %vm1183, %v5294, %v5296
      %v5332 = vsel %vm1183, %v5296, %v5298
      %v5333 = vsel %vm1183, %v5300, %v5302
      %v5334 = vsel %vm1183, %v5302, %v5304
      %v5335 = vsel %vm1183, %v5304, %v5306
      %v5336 = vsel %vm1183, %v5306, %v5308
      %v5337 = vsel %vm1183, %v5310, %v5312
      %v5338 = vsel %vm1183, %v5312, %v5314
      %v5339 = vsel %vm1183, %v5314, %v5316
      %v5340 = vsel %vm1183, %v5316, %v5318
      %v5341 = vsel %vm1183, %v5320, %v5322
      %v5342 = vsel %vm1183, %v5322, %v5324
      %v5343 = vsel %vm1183, %v5324, %v5326
      %v5344 = vsel %vm1183, %v5326, %v5328
      %v5361 = vmul.f32 %v5252, %v5329
      %v5362 = vmul.f32 %v5256, %v5330
      %v5363 = vmul.f32 %v5260, %v5331
      %v5364 = vmul.f32 %v5264, %v5332
      %v5365 = vmul.f32 %v5252, %v5333
      %v5366 = vmul.f32 %v5256, %v5334
      %v5367 = vmul.f32 %v5260, %v5335
      %v5368 = vmul.f32 %v5264, %v5336
      %v5369 = vmul.f32 %v5252, %v5337
      %v5370 = vmul.f32 %v5256, %v5338
      %v5371 = vmul.f32 %v5260, %v5339
      %v5372 = vmul.f32 %v5264, %v5340
      %v5373 = vmul.f32 %v5252, %v5341
      %v5374 = vmul.f32 %v5256, %v5342
      %v5375 = vmul.f32 %v5260, %v5343
      %v5376 = vmul.f32 %v5264, %v5344
      %v5377 = vadd.f32 %v4863, %v5361
      %v5378 = vadd.f32 %v4864, %v5362
      %v5379 = vadd.f32 %v4865, %v5363
      %v5380 = vadd.f32 %v4866, %v5364
      %v5381 = vadd.f32 %v4867, %v5365
      %v5382 = vadd.f32 %v4868, %v5366
      %v5383 = vadd.f32 %v4869, %v5367
      %v5384 = vadd.f32 %v4870, %v5368
      %v5385 = vadd.f32 %v4871, %v5369
      %v5386 = vadd.f32 %v4872, %v5370
      %v5387 = vadd.f32 %v4873, %v5371
      %v5388 = vadd.f32 %v4874, %v5372
      %v5389 = vadd.f32 %v4875, %v5373
      %v5390 = vadd.f32 %v4876, %v5374
      %v5391 = vadd.f32 %v4877, %v5375
      %v5392 = vadd.f32 %v4878, %v5376
      %s5393 = scalar_lea.vmem %s10, 64
      %v5394 = vld [vmem:[%s5393] sm:$0xff]
      %v5395 = vld [vmem:[%s5393 + $0x8] sm:$0xff]
      %v5396 = vld [vmem:[%s5393 + $0x10] sm:$0xff]
      %v5397 = vld [vmem:[%s5393 + $0x18] sm:$0xff]
      %5399 = vset.pattern.permute.xlu0 0
      %5400 = vperm.xlu0 %5399, %v5394
      %v5401 = vpop.permute.xlu0 %5400
      %5404 = vset.pattern.permute.xlu0 0
      %5405 = vperm.xlu0 %5404, %v5395
      %v5406 = vpop.permute.xlu0 %5405
      %5409 = vset.pattern.permute.xlu0 0
      %5410 = vperm.xlu0 %5409, %v5396
      %v5411 = vpop.permute.xlu0 %5410
      %5414 = vset.pattern.permute.xlu0 0
      %5415 = vperm.xlu0 %5414, %v5397
      %v5416 = vpop.permute.xlu0 %5415
      %v5418 = vmul.f32 %v5401, %v4520
      %v5419 = vmul.f32 %v5401, %v4521
      %v5420 = vmul.f32 %v5401, %v4522
      %v5421 = vmul.f32 %v5401, %v4523
      %v5422 = vmul.f32 %v5401, %v4524
      %v5423 = vmul.f32 %v5406, %v4525
      %v5424 = vmul.f32 %v5406, %v4526
      %v5425 = vmul.f32 %v5406, %v4527
      %v5426 = vmul.f32 %v5406, %v4528
      %v5427 = vmul.f32 %v5406, %v4529
      %v5428 = vmul.f32 %v5411, %v4530
      %v5429 = vmul.f32 %v5411, %v4531
      %v5430 = vmul.f32 %v5411, %v4532
      %v5431 = vmul.f32 %v5411, %v4533
      %v5432 = vmul.f32 %v5411, %v4534
      %v5433 = vmul.f32 %v5416, %v4535
      %v5434 = vmul.f32 %v5416, %v4536
      %v5435 = vmul.f32 %v5416, %v4537
      %v5436 = vmul.f32 %v5416, %v4538
      %v5437 = vmul.f32 %v5416, %v4539
      %s5438 = scalar_lea.vmem %s10, 160
      %v5439 = vld [vmem:[%s5438] sm:$0xff]
      %v5440 = vld [vmem:[%s5438 + $0x8] sm:$0xff]
      %v5441 = vld [vmem:[%s5438 + $0x10] sm:$0xff]
      %v5442 = vld [vmem:[%s5438 + $0x18] sm:$0xff]
      %5444 = vset.pattern.permute.xlu0 0
      %5445 = vperm.xlu0 %5444, %v5439
      %v5446 = vpop.permute.xlu0 %5445
      %5449 = vset.pattern.permute.xlu0 0
      %5450 = vperm.xlu0 %5449, %v5440
      %v5451 = vpop.permute.xlu0 %5450
      %5454 = vset.pattern.permute.xlu0 0
      %5455 = vperm.xlu0 %5454, %v5441
      %v5456 = vpop.permute.xlu0 %5455
      %5459 = vset.pattern.permute.xlu0 0
      %5460 = vperm.xlu0 %5459, %v5442
      %v5461 = vpop.permute.xlu0 %5460
      %v5463 = vmul.f32 %v5446, %v4520
      %v5464 = vmul.f32 %v5446, %v4521
      %v5465 = vmul.f32 %v5446, %v4522
      %v5466 = vmul.f32 %v5446, %v4523
      %v5467 = vmul.f32 %v5446, %v4524
      %v5468 = vmul.f32 %v5451, %v4525
      %v5469 = vmul.f32 %v5451, %v4526
      %v5470 = vmul.f32 %v5451, %v4527
      %v5471 = vmul.f32 %v5451, %v4528
      %v5472 = vmul.f32 %v5451, %v4529
      %v5473 = vmul.f32 %v5456, %v4530
      %v5474 = vmul.f32 %v5456, %v4531
      %v5475 = vmul.f32 %v5456, %v4532
      %v5476 = vmul.f32 %v5456, %v4533
      %v5477 = vmul.f32 %v5456, %v4534
      %v5478 = vmul.f32 %v5461, %v4535
      %v5479 = vmul.f32 %v5461, %v4536
      %v5480 = vmul.f32 %v5461, %v4537
      %v5481 = vmul.f32 %v5461, %v4538
      %v5482 = vmul.f32 %v5461, %v4539
      %5503 = vrot.lane.b32.xlu0 %v5463, 96
      %v5504 = vpop.permute.xlu0 %5503
      %5505 = vrot.lane.b32.xlu0 %v5464, 96
      %v5506 = vpop.permute.xlu0 %5505
      %5507 = vrot.lane.b32.xlu0 %v5465, 96
      %v5508 = vpop.permute.xlu0 %5507
      %5509 = vrot.lane.b32.xlu0 %v5466, 96
      %v5510 = vpop.permute.xlu0 %5509
      %5511 = vrot.lane.b32.xlu0 %v5467, 96
      %v5512 = vpop.permute.xlu0 %5511
      %5513 = vrot.lane.b32.xlu0 %v5468, 96
      %v5514 = vpop.permute.xlu0 %5513
      %5515 = vrot.lane.b32.xlu0 %v5469, 96
      %v5516 = vpop.permute.xlu0 %5515
      %5517 = vrot.lane.b32.xlu0 %v5470, 96
      %v5518 = vpop.permute.xlu0 %5517
      %5519 = vrot.lane.b32.xlu0 %v5471, 96
      %v5520 = vpop.permute.xlu0 %5519
      %5521 = vrot.lane.b32.xlu0 %v5472, 96
      %v5522 = vpop.permute.xlu0 %5521
      %5523 = vrot.lane.b32.xlu0 %v5473, 96
      %v5524 = vpop.permute.xlu0 %5523
      %5525 = vrot.lane.b32.xlu0 %v5474, 96
      %v5526 = vpop.permute.xlu0 %5525
      %5527 = vrot.lane.b32.xlu0 %v5475, 96
      %v5528 = vpop.permute.xlu0 %5527
      %5529 = vrot.lane.b32.xlu0 %v5476, 96
      %v5530 = vpop.permute.xlu0 %5529
      %5531 = vrot.lane.b32.xlu0 %v5477, 96
      %v5532 = vpop.permute.xlu0 %5531
      %5533 = vrot.lane.b32.xlu0 %v5478, 96
      %v5534 = vpop.permute.xlu0 %5533
      %5535 = vrot.lane.b32.xlu0 %v5479, 96
      %v5536 = vpop.permute.xlu0 %5535
      %5537 = vrot.lane.b32.xlu0 %v5480, 96
      %v5538 = vpop.permute.xlu0 %5537
      %5539 = vrot.lane.b32.xlu0 %v5481, 96
      %v5540 = vpop.permute.xlu0 %5539
      %5541 = vrot.lane.b32.xlu0 %v5482, 96
      %v5542 = vpop.permute.xlu0 %5541
      %v5543 = vsel %vm854, %v5504, %v5506
      %v5544 = vsel %vm854, %v5506, %v5508
      %v5545 = vsel %vm854, %v5508, %v5510
      %v5546 = vsel %vm854, %v5510, %v5512
      %v5547 = vsel %vm854, %v5514, %v5516
      %v5548 = vsel %vm854, %v5516, %v5518
      %v5549 = vsel %vm854, %v5518, %v5520
      %v5550 = vsel %vm854, %v5520, %v5522
      %v5551 = vsel %vm854, %v5524, %v5526
      %v5552 = vsel %vm854, %v5526, %v5528
      %v5553 = vsel %vm854, %v5528, %v5530
      %v5554 = vsel %vm854, %v5530, %v5532
      %v5555 = vsel %vm854, %v5534, %v5536
      %v5556 = vsel %vm854, %v5536, %v5538
      %v5557 = vsel %vm854, %v5538, %v5540
      %v5558 = vsel %vm854, %v5540, %v5542
      %v5579 = vadd.f32 %v5418, %v5543
      %v5580 = vadd.f32 %v5419, %v5544
      %v5581 = vadd.f32 %v5420, %v5545
      %v5582 = vadd.f32 %v5421, %v5546
      %v5583 = vadd.f32 %v5422, %v5512
      %v5584 = vadd.f32 %v5423, %v5547
      %v5585 = vadd.f32 %v5424, %v5548
      %v5586 = vadd.f32 %v5425, %v5549
      %v5587 = vadd.f32 %v5426, %v5550
      %v5588 = vadd.f32 %v5427, %v5522
      %v5589 = vadd.f32 %v5428, %v5551
      %v5590 = vadd.f32 %v5429, %v5552
      %v5591 = vadd.f32 %v5430, %v5553
      %v5592 = vadd.f32 %v5431, %v5554
      %v5593 = vadd.f32 %v5432, %v5532
      %v5594 = vadd.f32 %v5433, %v5555
      %v5595 = vadd.f32 %v5434, %v5556
      %v5596 = vadd.f32 %v5435, %v5557
      %v5597 = vadd.f32 %v5436, %v5558
      %v5598 = vadd.f32 %v5437, %v5542
      %s5599 = scalar_lea.vmem %s10, 256
      %v5600 = vld [vmem:[%s5599] sm:$0xff]
      %v5601 = vld [vmem:[%s5599 + $0x8] sm:$0xff]
      %v5602 = vld [vmem:[%s5599 + $0x10] sm:$0xff]
      %v5603 = vld [vmem:[%s5599 + $0x18] sm:$0xff]
      %5605 = vset.pattern.permute.xlu0 0
      %5606 = vperm.xlu0 %5605, %v5600
      %v5607 = vpop.permute.xlu0 %5606
      %5610 = vset.pattern.permute.xlu0 0
      %5611 = vperm.xlu0 %5610, %v5601
      %v5612 = vpop.permute.xlu0 %5611
      %5615 = vset.pattern.permute.xlu0 0
      %5616 = vperm.xlu0 %5615, %v5602
      %v5617 = vpop.permute.xlu0 %5616
      %5620 = vset.pattern.permute.xlu0 0
      %5621 = vperm.xlu0 %5620, %v5603
      %v5622 = vpop.permute.xlu0 %5621
      %v5624 = vmul.f32 %v5607, %v4520
      %v5625 = vmul.f32 %v5607, %v4521
      %v5626 = vmul.f32 %v5607, %v4522
      %v5627 = vmul.f32 %v5607, %v4523
      %v5628 = vmul.f32 %v5607, %v4524
      %v5629 = vmul.f32 %v5612, %v4525
      %v5630 = vmul.f32 %v5612, %v4526
      %v5631 = vmul.f32 %v5612, %v4527
      %v5632 = vmul.f32 %v5612, %v4528
      %v5633 = vmul.f32 %v5612, %v4529
      %v5634 = vmul.f32 %v5617, %v4530
      %v5635 = vmul.f32 %v5617, %v4531
      %v5636 = vmul.f32 %v5617, %v4532
      %v5637 = vmul.f32 %v5617, %v4533
      %v5638 = vmul.f32 %v5617, %v4534
      %v5639 = vmul.f32 %v5622, %v4535
      %v5640 = vmul.f32 %v5622, %v4536
      %v5641 = vmul.f32 %v5622, %v4537
      %v5642 = vmul.f32 %v5622, %v4538
      %v5643 = vmul.f32 %v5622, %v4539
      %5664 = vrot.lane.b32.xlu0 %v5624, 64
      %v5665 = vpop.permute.xlu0 %5664
      %5666 = vrot.lane.b32.xlu0 %v5625, 64
      %v5667 = vpop.permute.xlu0 %5666
      %5668 = vrot.lane.b32.xlu0 %v5626, 64
      %v5669 = vpop.permute.xlu0 %5668
      %5670 = vrot.lane.b32.xlu0 %v5627, 64
      %v5671 = vpop.permute.xlu0 %5670
      %5672 = vrot.lane.b32.xlu0 %v5628, 64
      %v5673 = vpop.permute.xlu0 %5672
      %5674 = vrot.lane.b32.xlu0 %v5629, 64
      %v5675 = vpop.permute.xlu0 %5674
      %5676 = vrot.lane.b32.xlu0 %v5630, 64
      %v5677 = vpop.permute.xlu0 %5676
      %5678 = vrot.lane.b32.xlu0 %v5631, 64
      %v5679 = vpop.permute.xlu0 %5678
      %5680 = vrot.lane.b32.xlu0 %v5632, 64
      %v5681 = vpop.permute.xlu0 %5680
      %5682 = vrot.lane.b32.xlu0 %v5633, 64
      %v5683 = vpop.permute.xlu0 %5682
      %5684 = vrot.lane.b32.xlu0 %v5634, 64
      %v5685 = vpop.permute.xlu0 %5684
      %5686 = vrot.lane.b32.xlu0 %v5635, 64
      %v5687 = vpop.permute.xlu0 %5686
      %5688 = vrot.lane.b32.xlu0 %v5636, 64
      %v5689 = vpop.permute.xlu0 %5688
      %5690 = vrot.lane.b32.xlu0 %v5637, 64
      %v5691 = vpop.permute.xlu0 %5690
      %5692 = vrot.lane.b32.xlu0 %v5638, 64
      %v5693 = vpop.permute.xlu0 %5692
      %5694 = vrot.lane.b32.xlu0 %v5639, 64
      %v5695 = vpop.permute.xlu0 %5694
      %5696 = vrot.lane.b32.xlu0 %v5640, 64
      %v5697 = vpop.permute.xlu0 %5696
      %5698 = vrot.lane.b32.xlu0 %v5641, 64
      %v5699 = vpop.permute.xlu0 %5698
      %5700 = vrot.lane.b32.xlu0 %v5642, 64
      %v5701 = vpop.permute.xlu0 %5700
      %5702 = vrot.lane.b32.xlu0 %v5643, 64
      %v5703 = vpop.permute.xlu0 %5702
      %v5704 = vsel %vm894, %v5665, %v5667
      %v5705 = vsel %vm894, %v5667, %v5669
      %v5706 = vsel %vm894, %v5669, %v5671
      %v5707 = vsel %vm894, %v5671, %v5673
      %v5708 = vsel %vm894, %v5675, %v5677
      %v5709 = vsel %vm894, %v5677, %v5679
      %v5710 = vsel %vm894, %v5679, %v5681
      %v5711 = vsel %vm894, %v5681, %v5683
      %v5712 = vsel %vm894, %v5685, %v5687
      %v5713 = vsel %vm894, %v5687, %v5689
      %v5714 = vsel %vm894, %v5689, %v5691
      %v5715 = vsel %vm894, %v5691, %v5693
      %v5716 = vsel %vm894, %v5695, %v5697
      %v5717 = vsel %vm894, %v5697, %v5699
      %v5718 = vsel %vm894, %v5699, %v5701
      %v5719 = vsel %vm894, %v5701, %v5703
      %v5740 = vadd.f32 %v5579, %v5704
      %v5741 = vadd.f32 %v5580, %v5705
      %v5742 = vadd.f32 %v5581, %v5706
      %v5743 = vadd.f32 %v5582, %v5707
      %v5744 = vadd.f32 %v5583, %v5673
      %v5745 = vadd.f32 %v5584, %v5708
      %v5746 = vadd.f32 %v5585, %v5709
      %v5747 = vadd.f32 %v5586, %v5710
      %v5748 = vadd.f32 %v5587, %v5711
      %v5749 = vadd.f32 %v5588, %v5683
      %v5750 = vadd.f32 %v5589, %v5712
      %v5751 = vadd.f32 %v5590, %v5713
      %v5752 = vadd.f32 %v5591, %v5714
      %v5753 = vadd.f32 %v5592, %v5715
      %v5754 = vadd.f32 %v5593, %v5693
      %v5755 = vadd.f32 %v5594, %v5716
      %v5756 = vadd.f32 %v5595, %v5717
      %v5757 = vadd.f32 %v5596, %v5718
      %v5758 = vadd.f32 %v5597, %v5719
      %v5759 = vadd.f32 %v5598, %v5703
      %s5760 = scalar_lea.vmem %s13, 8
      %v5761 = vld [vmem:[%s5760] sm:$0xf]
      %v5763 = vlaneseq
      %v5764 = vshrl.u32 %v5763, 7
      %v5765 = vsub.s32 0, %v5764
      %v5766 = vrot.slane %v5761, %v5765
      %v5767 = vlaneseq
      %v5768 = vshrl.u32 %v5767, 7
      %v5769 = vsub.s32 1, %v5768
      %v5770 = vrot.slane %v5761, %v5769
      %v5771 = vlaneseq
      %v5772 = vshrl.u32 %v5771, 7
      %v5773 = vsub.s32 2, %v5772
      %v5774 = vrot.slane %v5761, %v5773
      %v5775 = vlaneseq
      %v5776 = vshrl.u32 %v5775, 7
      %v5777 = vsub.s32 3, %v5776
      %v5778 = vrot.slane %v5761, %v5777
      %5803 = vrot.lane.b32.xlu0 %v5740, 126
      %v5804 = vpop.permute.xlu0 %5803
      %5805 = vrot.lane.b32.xlu0 %v5741, 126
      %v5806 = vpop.permute.xlu0 %5805
      %5807 = vrot.lane.b32.xlu0 %v5742, 126
      %v5808 = vpop.permute.xlu0 %5807
      %5809 = vrot.lane.b32.xlu0 %v5743, 126
      %v5810 = vpop.permute.xlu0 %5809
      %5811 = vrot.lane.b32.xlu0 %v5744, 126
      %v5812 = vpop.permute.xlu0 %5811
      %5813 = vrot.lane.b32.xlu0 %v5745, 126
      %v5814 = vpop.permute.xlu0 %5813
      %5815 = vrot.lane.b32.xlu0 %v5746, 126
      %v5816 = vpop.permute.xlu0 %5815
      %5817 = vrot.lane.b32.xlu0 %v5747, 126
      %v5818 = vpop.permute.xlu0 %5817
      %5819 = vrot.lane.b32.xlu0 %v5748, 126
      %v5820 = vpop.permute.xlu0 %5819
      %5821 = vrot.lane.b32.xlu0 %v5749, 126
      %v5822 = vpop.permute.xlu0 %5821
      %5823 = vrot.lane.b32.xlu0 %v5750, 126
      %v5824 = vpop.permute.xlu0 %5823
      %5825 = vrot.lane.b32.xlu0 %v5751, 126
      %v5826 = vpop.permute.xlu0 %5825
      %5827 = vrot.lane.b32.xlu0 %v5752, 126
      %v5828 = vpop.permute.xlu0 %5827
      %5829 = vrot.lane.b32.xlu0 %v5753, 126
      %v5830 = vpop.permute.xlu0 %5829
      %5831 = vrot.lane.b32.xlu0 %v5754, 126
      %v5832 = vpop.permute.xlu0 %5831
      %5833 = vrot.lane.b32.xlu0 %v5755, 126
      %v5834 = vpop.permute.xlu0 %5833
      %5835 = vrot.lane.b32.xlu0 %v5756, 126
      %v5836 = vpop.permute.xlu0 %5835
      %5837 = vrot.lane.b32.xlu0 %v5757, 126
      %v5838 = vpop.permute.xlu0 %5837
      %5839 = vrot.lane.b32.xlu0 %v5758, 126
      %v5840 = vpop.permute.xlu0 %5839
      %5841 = vrot.lane.b32.xlu0 %v5759, 126
      %v5842 = vpop.permute.xlu0 %5841
      %v5843 = vsel %vm1390, %v5804, %v5806
      %v5844 = vsel %vm1390, %v5806, %v5808
      %v5845 = vsel %vm1390, %v5808, %v5810
      %v5846 = vsel %vm1390, %v5810, %v5812
      %v5847 = vsel %vm1390, %v5814, %v5816
      %v5848 = vsel %vm1390, %v5816, %v5818
      %v5849 = vsel %vm1390, %v5818, %v5820
      %v5850 = vsel %vm1390, %v5820, %v5822
      %v5851 = vsel %vm1390, %v5824, %v5826
      %v5852 = vsel %vm1390, %v5826, %v5828
      %v5853 = vsel %vm1390, %v5828, %v5830
      %v5854 = vsel %vm1390, %v5830, %v5832
      %v5855 = vsel %vm1390, %v5834, %v5836
      %v5856 = vsel %vm1390, %v5836, %v5838
      %v5857 = vsel %vm1390, %v5838, %v5840
      %v5858 = vsel %vm1390, %v5840, %v5842
      %v5875 = vmul.f32 %v5766, %v5843
      %v5876 = vmul.f32 %v5770, %v5844
      %v5877 = vmul.f32 %v5774, %v5845
      %v5878 = vmul.f32 %v5778, %v5846
      %v5879 = vmul.f32 %v5766, %v5847
      %v5880 = vmul.f32 %v5770, %v5848
      %v5881 = vmul.f32 %v5774, %v5849
      %v5882 = vmul.f32 %v5778, %v5850
      %v5883 = vmul.f32 %v5766, %v5851
      %v5884 = vmul.f32 %v5770, %v5852
      %v5885 = vmul.f32 %v5774, %v5853
      %v5886 = vmul.f32 %v5778, %v5854
      %v5887 = vmul.f32 %v5766, %v5855
      %v5888 = vmul.f32 %v5770, %v5856
      %v5889 = vmul.f32 %v5774, %v5857
      %v5890 = vmul.f32 %v5778, %v5858
      %v5891 = vadd.f32 %v5377, %v5875
      %v5892 = vadd.f32 %v5378, %v5876
      %v5893 = vadd.f32 %v5379, %v5877
      %v5894 = vadd.f32 %v5380, %v5878
      %v5895 = vadd.f32 %v5381, %v5879
      %v5896 = vadd.f32 %v5382, %v5880
      %v5897 = vadd.f32 %v5383, %v5881
      %v5898 = vadd.f32 %v5384, %v5882
      %v5899 = vadd.f32 %v5385, %v5883
      %v5900 = vadd.f32 %v5386, %v5884
      %v5901 = vadd.f32 %v5387, %v5885
      %v5902 = vadd.f32 %v5388, %v5886
      %v5903 = vadd.f32 %v5389, %v5887
      %v5904 = vadd.f32 %v5390, %v5888
      %v5905 = vadd.f32 %v5391, %v5889
      %v5906 = vadd.f32 %v5392, %v5890
      %s5907 = scalar_lea.vmem %s2, 32
      %v5908 = vld [vmem:[%s5907] sm:$0xff]
      %v5909 = vld [vmem:[%s5907 + $0x8] sm:$0xff]
      %v5910 = vld [vmem:[%s5907 + $0x10] sm:$0xff]
      %v5911 = vld [vmem:[%s5907 + $0x18] sm:$0xff]
      %5913 = vset.pattern.permute.xlu0 0
      %5914 = vperm.xlu0 %5913, %v5908
      %v5915 = vpop.permute.xlu0 %5914
      %5918 = vset.pattern.permute.xlu0 0
      %5919 = vperm.xlu0 %5918, %v5909
      %v5920 = vpop.permute.xlu0 %5919
      %5923 = vset.pattern.permute.xlu0 0
      %5924 = vperm.xlu0 %5923, %v5910
      %v5925 = vpop.permute.xlu0 %5924
      %5928 = vset.pattern.permute.xlu0 0
      %5929 = vperm.xlu0 %5928, %v5911
      %v5930 = vpop.permute.xlu0 %5929
      %v5932 = vadd.f32 %v5891, %v5915
      %v5933 = vadd.f32 %v5892, %v5915
      %v5934 = vadd.f32 %v5893, %v5915
      %v5935 = vadd.f32 %v5894, %v5915
      %v5936 = vadd.f32 %v5895, %v5920
      %v5937 = vadd.f32 %v5896, %v5920
      %v5938 = vadd.f32 %v5897, %v5920
      %v5939 = vadd.f32 %v5898, %v5920
      %v5940 = vadd.f32 %v5899, %v5925
      %v5941 = vadd.f32 %v5900, %v5925
      %v5942 = vadd.f32 %v5901, %v5925
      %v5943 = vadd.f32 %v5902, %v5925
      %v5944 = vadd.f32 %v5903, %v5930
      %v5945 = vadd.f32 %v5904, %v5930
      %v5946 = vadd.f32 %v5905, %v5930
      %v5947 = vadd.f32 %v5906, %v5930
      %v5948 = vmul.f32 %v5932, 0.70710677
      %v5949 = vmul.f32 %v5933, 0.70710677
      %v5950 = vmul.f32 %v5934, 0.70710677
      %v5951 = vmul.f32 %v5935, 0.70710677
      %v5952 = vmul.f32 %v5936, 0.70710677
      %v5953 = vmul.f32 %v5937, 0.70710677
      %v5954 = vmul.f32 %v5938, 0.70710677
      %v5955 = vmul.f32 %v5939, 0.70710677
      %v5956 = vmul.f32 %v5940, 0.70710677
      %v5957 = vmul.f32 %v5941, 0.70710677
      %v5958 = vmul.f32 %v5942, 0.70710677
      %v5959 = vmul.f32 %v5943, 0.70710677
      %v5960 = vmul.f32 %v5944, 0.70710677
      %v5961 = vmul.f32 %v5945, 0.70710677
      %v5962 = vmul.f32 %v5946, 0.70710677
      %v5963 = vmul.f32 %v5947, 0.70710677
      %v5964 = vand.u32 2147483647, %v5948
      %v5965 = vand.u32 2147483647, %v5949
      %v5966 = vand.u32 2147483647, %v5950
      %v5967 = vand.u32 2147483647, %v5951
      %v5968 = vand.u32 2147483647, %v5952
      %v5969 = vand.u32 2147483647, %v5953
      %v5970 = vand.u32 2147483647, %v5954
      %v5971 = vand.u32 2147483647, %v5955
      %v5972 = vand.u32 2147483647, %v5956
      %v5973 = vand.u32 2147483647, %v5957
      %v5974 = vand.u32 2147483647, %v5958
      %v5975 = vand.u32 2147483647, %v5959
      %v5976 = vand.u32 2147483647, %v5960
      %v5977 = vand.u32 2147483647, %v5961
      %v5978 = vand.u32 2147483647, %v5962
      %v5979 = vand.u32 2147483647, %v5963
      %v5980 = vmul.f32 %v5964, 0.3275911
      %v5981 = vmul.f32 %v5965, 0.3275911
      %v5982 = vmul.f32 %v5966, 0.3275911
      %v5983 = vmul.f32 %v5967, 0.3275911
      %v5984 = vmul.f32 %v5968, 0.3275911
      %v5985 = vmul.f32 %v5969, 0.3275911
      %v5986 = vmul.f32 %v5970, 0.3275911
      %v5987 = vmul.f32 %v5971, 0.3275911
      %v5988 = vmul.f32 %v5972, 0.3275911
      %v5989 = vmul.f32 %v5973, 0.3275911
      %v5990 = vmul.f32 %v5974, 0.3275911
      %v5991 = vmul.f32 %v5975, 0.3275911
      %v5992 = vmul.f32 %v5976, 0.3275911
      %v5993 = vmul.f32 %v5977, 0.3275911
      %v5994 = vmul.f32 %v5978, 0.3275911
      %v5995 = vmul.f32 %v5979, 0.3275911
      %v5996 = vadd.f32 %v5980, 1.0
      %v5997 = vadd.f32 %v5981, 1.0
      %v5998 = vadd.f32 %v5982, 1.0
      %v5999 = vadd.f32 %v5983, 1.0
      %v6000 = vadd.f32 %v5984, 1.0
      %v6001 = vadd.f32 %v5985, 1.0
      %v6002 = vadd.f32 %v5986, 1.0
      %v6003 = vadd.f32 %v5987, 1.0
      %v6004 = vadd.f32 %v5988, 1.0
      %v6005 = vadd.f32 %v5989, 1.0
      %v6006 = vadd.f32 %v5990, 1.0
      %v6007 = vadd.f32 %v5991, 1.0
      %v6008 = vadd.f32 %v5992, 1.0
      %v6009 = vadd.f32 %v5993, 1.0
      %v6010 = vadd.f32 %v5994, 1.0
      %v6011 = vadd.f32 %v5995, 1.0
      %v6012 = vrcp.pop %v5996
      %v6013 = vmul.f32 1.0, %v6012
      %v6014 = vrcp.pop %v5997
      %v6015 = vmul.f32 1.0, %v6014
      %v6016 = vrcp.pop %v5998
      %v6017 = vmul.f32 1.0, %v6016
      %v6018 = vrcp.pop %v5999
      %v6019 = vmul.f32 1.0, %v6018
      %v6020 = vrcp.pop %v6000
      %v6021 = vmul.f32 1.0, %v6020
      %v6022 = vrcp.pop %v6001
      %v6023 = vmul.f32 1.0, %v6022
      %v6024 = vrcp.pop %v6002
      %v6025 = vmul.f32 1.0, %v6024
      %v6026 = vrcp.pop %v6003
      %v6027 = vmul.f32 1.0, %v6026
      %v6028 = vrcp.pop %v6004
      %v6029 = vmul.f32 1.0, %v6028
      %v6030 = vrcp.pop %v6005
      %v6031 = vmul.f32 1.0, %v6030
      %v6032 = vrcp.pop %v6006
      %v6033 = vmul.f32 1.0, %v6032
      %v6034 = vrcp.pop %v6007
      %v6035 = vmul.f32 1.0, %v6034
      %v6036 = vrcp.pop %v6008
      %v6037 = vmul.f32 1.0, %v6036
      %v6038 = vrcp.pop %v6009
      %v6039 = vmul.f32 1.0, %v6038
      %v6040 = vrcp.pop %v6010
      %v6041 = vmul.f32 1.0, %v6040
      %v6042 = vrcp.pop %v6011
      %v6043 = vmul.f32 1.0, %v6042
      %v6044 = vmul.f32 %v6013, 1.0614054
      %v6045 = vmul.f32 %v6015, 1.0614054
      %v6046 = vmul.f32 %v6017, 1.0614054
      %v6047 = vmul.f32 %v6019, 1.0614054
      %v6048 = vmul.f32 %v6021, 1.0614054
      %v6049 = vmul.f32 %v6023, 1.0614054
      %v6050 = vmul.f32 %v6025, 1.0614054
      %v6051 = vmul.f32 %v6027, 1.0614054
      %v6052 = vmul.f32 %v6029, 1.0614054
      %v6053 = vmul.f32 %v6031, 1.0614054
      %v6054 = vmul.f32 %v6033, 1.0614054
      %v6055 = vmul.f32 %v6035, 1.0614054
      %v6056 = vmul.f32 %v6037, 1.0614054
      %v6057 = vmul.f32 %v6039, 1.0614054
      %v6058 = vmul.f32 %v6041, 1.0614054
      %v6059 = vmul.f32 %v6043, 1.0614054
      %v6060 = vadd.f32 %v6044, -1.4531521
      %v6061 = vadd.f32 %v6045, -1.4531521
      %v6062 = vadd.f32 %v6046, -1.4531521
      %v6063 = vadd.f32 %v6047, -1.4531521
      %v6064 = vadd.f32 %v6048, -1.4531521
      %v6065 = vadd.f32 %v6049, -1.4531521
      %v6066 = vadd.f32 %v6050, -1.4531521
      %v6067 = vadd.f32 %v6051, -1.4531521
      %v6068 = vadd.f32 %v6052, -1.4531521
      %v6069 = vadd.f32 %v6053, -1.4531521
      %v6070 = vadd.f32 %v6054, -1.4531521
      %v6071 = vadd.f32 %v6055, -1.4531521
      %v6072 = vadd.f32 %v6056, -1.4531521
      %v6073 = vadd.f32 %v6057, -1.4531521
      %v6074 = vadd.f32 %v6058, -1.4531521
      %v6075 = vadd.f32 %v6059, -1.4531521
      %v6076 = vmul.f32 %v6013, %v6060
      %v6077 = vmul.f32 %v6015, %v6061
      %v6078 = vmul.f32 %v6017, %v6062
      %v6079 = vmul.f32 %v6019, %v6063
      %v6080 = vmul.f32 %v6021, %v6064
      %v6081 = vmul.f32 %v6023, %v6065
      %v6082 = vmul.f32 %v6025, %v6066
      %v6083 = vmul.f32 %v6027, %v6067
      %v6084 = vmul.f32 %v6029, %v6068
      %v6085 = vmul.f32 %v6031, %v6069
      %v6086 = vmul.f32 %v6033, %v6070
      %v6087 = vmul.f32 %v6035, %v6071
      %v6088 = vmul.f32 %v6037, %v6072
      %v6089 = vmul.f32 %v6039, %v6073
      %v6090 = vmul.f32 %v6041, %v6074
      %v6091 = vmul.f32 %v6043, %v6075
      %v6092 = vadd.f32 %v6076, 1.4214138
      %v6093 = vadd.f32 %v6077, 1.4214138
      %v6094 = vadd.f32 %v6078, 1.4214138
      %v6095 = vadd.f32 %v6079, 1.4214138
      %v6096 = vadd.f32 %v6080, 1.4214138
      %v6097 = vadd.f32 %v6081, 1.4214138
      %v6098 = vadd.f32 %v6082, 1.4214138
      %v6099 = vadd.f32 %v6083, 1.4214138
      %v6100 = vadd.f32 %v6084, 1.4214138
      %v6101 = vadd.f32 %v6085, 1.4214138
      %v6102 = vadd.f32 %v6086, 1.4214138
      %v6103 = vadd.f32 %v6087, 1.4214138
      %v6104 = vadd.f32 %v6088, 1.4214138
      %v6105 = vadd.f32 %v6089, 1.4214138
      %v6106 = vadd.f32 %v6090, 1.4214138
      %v6107 = vadd.f32 %v6091, 1.4214138
      %v6108 = vmul.f32 %v6013, %v6092
      %v6109 = vmul.f32 %v6015, %v6093
      %v6110 = vmul.f32 %v6017, %v6094
      %v6111 = vmul.f32 %v6019, %v6095
      %v6112 = vmul.f32 %v6021, %v6096
      %v6113 = vmul.f32 %v6023, %v6097
      %v6114 = vmul.f32 %v6025, %v6098
      %v6115 = vmul.f32 %v6027, %v6099
      %v6116 = vmul.f32 %v6029, %v6100
      %v6117 = vmul.f32 %v6031, %v6101
      %v6118 = vmul.f32 %v6033, %v6102
      %v6119 = vmul.f32 %v6035, %v6103
      %v6120 = vmul.f32 %v6037, %v6104
      %v6121 = vmul.f32 %v6039, %v6105
      %v6122 = vmul.f32 %v6041, %v6106
      %v6123 = vmul.f32 %v6043, %v6107
      %v6124 = vadd.f32 %v6108, -0.28449672
      %v6125 = vadd.f32 %v6109, -0.28449672
      %v6126 = vadd.f32 %v6110, -0.28449672
      %v6127 = vadd.f32 %v6111, -0.28449672
      %v6128 = vadd.f32 %v6112, -0.28449672
      %v6129 = vadd.f32 %v6113, -0.28449672
      %v6130 = vadd.f32 %v6114, -0.28449672
      %v6131 = vadd.f32 %v6115, -0.28449672
      %v6132 = vadd.f32 %v6116, -0.28449672
      %v6133 = vadd.f32 %v6117, -0.28449672
      %v6134 = vadd.f32 %v6118, -0.28449672
      %v6135 = vadd.f32 %v6119, -0.28449672
      %v6136 = vadd.f32 %v6120, -0.28449672
      %v6137 = vadd.f32 %v6121, -0.28449672
      %v6138 = vadd.f32 %v6122, -0.28449672
      %v6139 = vadd.f32 %v6123, -0.28449672
      %v6140 = vmul.f32 %v6013, %v6124
      %v6141 = vmul.f32 %v6015, %v6125
      %v6142 = vmul.f32 %v6017, %v6126
      %v6143 = vmul.f32 %v6019, %v6127
      %v6144 = vmul.f32 %v6021, %v6128
      %v6145 = vmul.f32 %v6023, %v6129
      %v6146 = vmul.f32 %v6025, %v6130
      %v6147 = vmul.f32 %v6027, %v6131
      %v6148 = vmul.f32 %v6029, %v6132
      %v6149 = vmul.f32 %v6031, %v6133
      %v6150 = vmul.f32 %v6033, %v6134
      %v6151 = vmul.f32 %v6035, %v6135
      %v6152 = vmul.f32 %v6037, %v6136
      %v6153 = vmul.f32 %v6039, %v6137
      %v6154 = vmul.f32 %v6041, %v6138
      %v6155 = vmul.f32 %v6043, %v6139
      %v6156 = vadd.f32 %v6140, 0.2548296
      %v6157 = vadd.f32 %v6141, 0.2548296
      %v6158 = vadd.f32 %v6142, 0.2548296
      %v6159 = vadd.f32 %v6143, 0.2548296
      %v6160 = vadd.f32 %v6144, 0.2548296
      %v6161 = vadd.f32 %v6145, 0.2548296
      %v6162 = vadd.f32 %v6146, 0.2548296
      %v6163 = vadd.f32 %v6147, 0.2548296
      %v6164 = vadd.f32 %v6148, 0.2548296
      %v6165 = vadd.f32 %v6149, 0.2548296
      %v6166 = vadd.f32 %v6150, 0.2548296
      %v6167 = vadd.f32 %v6151, 0.2548296
      %v6168 = vadd.f32 %v6152, 0.2548296
      %v6169 = vadd.f32 %v6153, 0.2548296
      %v6170 = vadd.f32 %v6154, 0.2548296
      %v6171 = vadd.f32 %v6155, 0.2548296
      %v6172 = vmul.f32 %v6013, %v6156
      %v6173 = vmul.f32 %v6015, %v6157
      %v6174 = vmul.f32 %v6017, %v6158
      %v6175 = vmul.f32 %v6019, %v6159
      %v6176 = vmul.f32 %v6021, %v6160
      %v6177 = vmul.f32 %v6023, %v6161
      %v6178 = vmul.f32 %v6025, %v6162
      %v6179 = vmul.f32 %v6027, %v6163
      %v6180 = vmul.f32 %v6029, %v6164
      %v6181 = vmul.f32 %v6031, %v6165
      %v6182 = vmul.f32 %v6033, %v6166
      %v6183 = vmul.f32 %v6035, %v6167
      %v6184 = vmul.f32 %v6037, %v6168
      %v6185 = vmul.f32 %v6039, %v6169
      %v6186 = vmul.f32 %v6041, %v6170
      %v6187 = vmul.f32 %v6043, %v6171
      %v6188 = vsub.f32 0.0, %v5964
      %v6189 = vsub.f32 0.0, %v5965
      %v6190 = vsub.f32 0.0, %v5966
      %v6191 = vsub.f32 0.0, %v5967
      %v6192 = vsub.f32 0.0, %v5968
      %v6193 = vsub.f32 0.0, %v5969
      %v6194 = vsub.f32 0.0, %v5970
      %v6195 = vsub.f32 0.0, %v5971
      %v6196 = vsub.f32 0.0, %v5972
      %v6197 = vsub.f32 0.0, %v5973
      %v6198 = vsub.f32 0.0, %v5974
      %v6199 = vsub.f32 0.0, %v5975
      %v6200 = vsub.f32 0.0, %v5976
      %v6201 = vsub.f32 0.0, %v5977
      %v6202 = vsub.f32 0.0, %v5978
      %v6203 = vsub.f32 0.0, %v5979
      %v6204 = vmul.f32 %v6188, %v5964
      %v6205 = vmul.f32 %v6189, %v5965
      %v6206 = vmul.f32 %v6190, %v5966
      %v6207 = vmul.f32 %v6191, %v5967
      %v6208 = vmul.f32 %v6192, %v5968
      %v6209 = vmul.f32 %v6193, %v5969
      %v6210 = vmul.f32 %v6194, %v5970
      %v6211 = vmul.f32 %v6195, %v5971
      %v6212 = vmul.f32 %v6196, %v5972
      %v6213 = vmul.f32 %v6197, %v5973
      %v6214 = vmul.f32 %v6198, %v5974
      %v6215 = vmul.f32 %v6199, %v5975
      %v6216 = vmul.f32 %v6200, %v5976
      %v6217 = vmul.f32 %v6201, %v5977
      %v6218 = vmul.f32 %v6202, %v5978
      %v6219 = vmul.f32 %v6203, %v5979
      %v6220 = vmul.f32 %v6204, 1.442695
      %v6221 = vpow.pop %v6220
      %v6222 = vmul.f32 %v6205, 1.442695
      %v6223 = vpow.pop %v6222
      %v6224 = vmul.f32 %v6206, 1.442695
      %v6225 = vpow.pop %v6224
      %v6226 = vmul.f32 %v6207, 1.442695
      %v6227 = vpow.pop %v6226
      %v6228 = vmul.f32 %v6208, 1.442695
      %v6229 = vpow.pop %v6228
      %v6230 = vmul.f32 %v6209, 1.442695
      %v6231 = vpow.pop %v6230
      %v6232 = vmul.f32 %v6210, 1.442695
      %v6233 = vpow.pop %v6232
      %v6234 = vmul.f32 %v6211, 1.442695
      %v6235 = vpow.pop %v6234
      %v6236 = vmul.f32 %v6212, 1.442695
      %v6237 = vpow.pop %v6236
      %v6238 = vmul.f32 %v6213, 1.442695
      %v6239 = vpow.pop %v6238
      %v6240 = vmul.f32 %v6214, 1.442695
      %v6241 = vpow.pop %v6240
      %v6242 = vmul.f32 %v6215, 1.442695
      %v6243 = vpow.pop %v6242
      %v6244 = vmul.f32 %v6216, 1.442695
      %v6245 = vpow.pop %v6244
      %v6246 = vmul.f32 %v6217, 1.442695
      %v6247 = vpow.pop %v6246
      %v6248 = vmul.f32 %v6218, 1.442695
      %v6249 = vpow.pop %v6248
      %v6250 = vmul.f32 %v6219, 1.442695
      %v6251 = vpow.pop %v6250
      %v6252 = vmul.f32 %v6172, %v6221
      %v6253 = vmul.f32 %v6173, %v6223
      %v6254 = vmul.f32 %v6174, %v6225
      %v6255 = vmul.f32 %v6175, %v6227
      %v6256 = vmul.f32 %v6176, %v6229
      %v6257 = vmul.f32 %v6177, %v6231
      %v6258 = vmul.f32 %v6178, %v6233
      %v6259 = vmul.f32 %v6179, %v6235
      %v6260 = vmul.f32 %v6180, %v6237
      %v6261 = vmul.f32 %v6181, %v6239
      %v6262 = vmul.f32 %v6182, %v6241
      %v6263 = vmul.f32 %v6183, %v6243
      %v6264 = vmul.f32 %v6184, %v6245
      %v6265 = vmul.f32 %v6185, %v6247
      %v6266 = vmul.f32 %v6186, %v6249
      %v6267 = vmul.f32 %v6187, %v6251
      %v6268 = vsub.f32 1.0, %v6252
      %v6269 = vsub.f32 1.0, %v6253
      %v6270 = vsub.f32 1.0, %v6254
      %v6271 = vsub.f32 1.0, %v6255
      %v6272 = vsub.f32 1.0, %v6256
      %v6273 = vsub.f32 1.0, %v6257
      %v6274 = vsub.f32 1.0, %v6258
      %v6275 = vsub.f32 1.0, %v6259
      %v6276 = vsub.f32 1.0, %v6260
      %v6277 = vsub.f32 1.0, %v6261
      %v6278 = vsub.f32 1.0, %v6262
      %v6279 = vsub.f32 1.0, %v6263
      %v6280 = vsub.f32 1.0, %v6264
      %v6281 = vsub.f32 1.0, %v6265
      %v6282 = vsub.f32 1.0, %v6266
      %v6283 = vsub.f32 1.0, %v6267
      %vm6284 = vcmp.ge.f32.partialorder %v5948, 0.0
      %vm6285 = vcmp.ge.f32.partialorder %v5949, 0.0
      %vm6286 = vcmp.ge.f32.partialorder %v5950, 0.0
      %vm6287 = vcmp.ge.f32.partialorder %v5951, 0.0
      %vm6288 = vcmp.ge.f32.partialorder %v5952, 0.0
      %vm6289 = vcmp.ge.f32.partialorder %v5953, 0.0
      %vm6290 = vcmp.ge.f32.partialorder %v5954, 0.0
      %vm6291 = vcmp.ge.f32.partialorder %v5955, 0.0
      %vm6292 = vcmp.ge.f32.partialorder %v5956, 0.0
      %vm6293 = vcmp.ge.f32.partialorder %v5957, 0.0
      %vm6294 = vcmp.ge.f32.partialorder %v5958, 0.0
      %vm6295 = vcmp.ge.f32.partialorder %v5959, 0.0
      %vm6296 = vcmp.ge.f32.partialorder %v5960, 0.0
      %vm6297 = vcmp.ge.f32.partialorder %v5961, 0.0
      %vm6298 = vcmp.ge.f32.partialorder %v5962, 0.0
      %vm6299 = vcmp.ge.f32.partialorder %v5963, 0.0
      %v6300 = vsub.f32 0.0, %v6268
      %v6301 = vsub.f32 0.0, %v6269
      %v6302 = vsub.f32 0.0, %v6270
      %v6303 = vsub.f32 0.0, %v6271
      %v6304 = vsub.f32 0.0, %v6272
      %v6305 = vsub.f32 0.0, %v6273
      %v6306 = vsub.f32 0.0, %v6274
      %v6307 = vsub.f32 0.0, %v6275
      %v6308 = vsub.f32 0.0, %v6276
      %v6309 = vsub.f32 0.0, %v6277
      %v6310 = vsub.f32 0.0, %v6278
      %v6311 = vsub.f32 0.0, %v6279
      %v6312 = vsub.f32 0.0, %v6280
      %v6313 = vsub.f32 0.0, %v6281
      %v6314 = vsub.f32 0.0, %v6282
      %v6315 = vsub.f32 0.0, %v6283
      %v6316 = vsel %vm6284, %v6268, %v6300
      %v6317 = vsel %vm6285, %v6269, %v6301
      %v6318 = vsel %vm6286, %v6270, %v6302
      %v6319 = vsel %vm6287, %v6271, %v6303
      %v6320 = vsel %vm6288, %v6272, %v6304
      %v6321 = vsel %vm6289, %v6273, %v6305
      %v6322 = vsel %vm6290, %v6274, %v6306
      %v6323 = vsel %vm6291, %v6275, %v6307
      %v6324 = vsel %vm6292, %v6276, %v6308
      %v6325 = vsel %vm6293, %v6277, %v6309
      %v6326 = vsel %vm6294, %v6278, %v6310
      %v6327 = vsel %vm6295, %v6279, %v6311
      %v6328 = vsel %vm6296, %v6280, %v6312
      %v6329 = vsel %vm6297, %v6281, %v6313
      %v6330 = vsel %vm6298, %v6282, %v6314
      %v6331 = vsel %vm6299, %v6283, %v6315
      %v6332 = vmul.f32 %v5932, 0.5
      %v6333 = vmul.f32 %v5933, 0.5
      %v6334 = vmul.f32 %v5934, 0.5
      %v6335 = vmul.f32 %v5935, 0.5
      %v6336 = vmul.f32 %v5936, 0.5
      %v6337 = vmul.f32 %v5937, 0.5
      %v6338 = vmul.f32 %v5938, 0.5
      %v6339 = vmul.f32 %v5939, 0.5
      %v6340 = vmul.f32 %v5940, 0.5
      %v6341 = vmul.f32 %v5941, 0.5
      %v6342 = vmul.f32 %v5942, 0.5
      %v6343 = vmul.f32 %v5943, 0.5
      %v6344 = vmul.f32 %v5944, 0.5
      %v6345 = vmul.f32 %v5945, 0.5
      %v6346 = vmul.f32 %v5946, 0.5
      %v6347 = vmul.f32 %v5947, 0.5
      %v6348 = vadd.f32 %v6316, 1.0
      %v6349 = vadd.f32 %v6317, 1.0
      %v6350 = vadd.f32 %v6318, 1.0
      %v6351 = vadd.f32 %v6319, 1.0
      %v6352 = vadd.f32 %v6320, 1.0
      %v6353 = vadd.f32 %v6321, 1.0
      %v6354 = vadd.f32 %v6322, 1.0
      %v6355 = vadd.f32 %v6323, 1.0
      %v6356 = vadd.f32 %v6324, 1.0
      %v6357 = vadd.f32 %v6325, 1.0
      %v6358 = vadd.f32 %v6326, 1.0
      %v6359 = vadd.f32 %v6327, 1.0
      %v6360 = vadd.f32 %v6328, 1.0
      %v6361 = vadd.f32 %v6329, 1.0
      %v6362 = vadd.f32 %v6330, 1.0
      %v6363 = vadd.f32 %v6331, 1.0
      %v6364 = vmul.f32 %v6332, %v6348
      %v6365 = vmul.f32 %v6333, %v6349
      %v6366 = vmul.f32 %v6334, %v6350
      %v6367 = vmul.f32 %v6335, %v6351
      %v6368 = vmul.f32 %v6336, %v6352
      %v6369 = vmul.f32 %v6337, %v6353
      %v6370 = vmul.f32 %v6338, %v6354
      %v6371 = vmul.f32 %v6339, %v6355
      %v6372 = vmul.f32 %v6340, %v6356
      %v6373 = vmul.f32 %v6341, %v6357
      %v6374 = vmul.f32 %v6342, %v6358
      %v6375 = vmul.f32 %v6343, %v6359
      %v6376 = vmul.f32 %v6344, %v6360
      %v6377 = vmul.f32 %v6345, %v6361
      %v6378 = vmul.f32 %v6346, %v6362
      %v6379 = vmul.f32 %v6347, %v6363
      %v6380 = vld [vmem:[%s7] sm:$0xf]
      %v6381 = vpack.c.bf16 %v6368, %v6364
      %v6382 = vpack.c.bf16 %v6369, %v6365
      %v6383 = vpack.c.bf16 %v6370, %v6366
      %v6384 = vpack.c.bf16 %v6371, %v6367
      %v6385 = vpack.c.bf16 %v6376, %v6372
      %v6386 = vpack.c.bf16 %v6377, %v6373
      %v6387 = vpack.c.bf16 %v6378, %v6374
      %v6388 = vpack.c.bf16 %v6379, %v6375
      %s6389 = scalar_lea.vmem %s1, 104
      %v6390 = vld [vmem:[%s6389] sm:$0xff]
      %6392 = vset.pattern.permute.xlu0 0
      %6393 = vperm.xlu0 %6392, %v6390
      %v6394 = vpop.permute.xlu0 %6393
      %v6397 = vsel %vm934, %v6380, 0
      %6399 = vmatprep.subr.bf16.mxu0 %v6382
      %6400 = vmatpush1.bf16.msra.mxu0 %v6381
      %6401 = vmatprep.subr.bf16.mxu0 %v6386
      %6402 = vmatpush1.bf16.msra.mxu0 %v6385
      %6403 = vmatprep.subr.bf16.mxu0 0
      %6404 = vmatpush1.bf16.msra.mxu0 0
      %6405 = vmatprep.subr.bf16.mxu0 0
      %6406 = vmatpush1.bf16.msra.mxu0 0
      %6407 = vmatprep.subr.bf16.mxu0 0
      %6408 = vmatpush1.bf16.msra.mxu0 0
      %6409 = vmatprep.subr.bf16.mxu0 0
      %6410 = vmatpush1.bf16.msra.mxu0 0
      %6411 = vmatprep.subr.bf16.mxu0 0
      %6412 = vmatpush1.bf16.msra.mxu0 0
      %6413 = vmatprep.subr.bf16.mxu0 0
      %6414 = vmatpush1.bf16.msra.mxu0 0
      %6415 = vmatprep.subr.bf16.mxu0 0
      %6416 = vmatpush1.bf16.msra.mxu0 0
      %6417 = vmatprep.subr.bf16.mxu0 0
      %6418 = vmatpush1.bf16.msra.mxu0 0
      %6419 = vmatprep.subr.bf16.mxu0 0
      %6420 = vmatpush1.bf16.msra.mxu0 0
      %6421 = vmatprep.subr.bf16.mxu0 0
      %6422 = vmatpush1.bf16.msra.mxu0 0
      %6423 = vmatprep.subr.bf16.mxu0 0
      %6424 = vmatpush1.bf16.msra.mxu0 0
      %6425 = vmatprep.subr.bf16.mxu0 0
      %6426 = vmatpush1.bf16.msra.mxu0 0
      %6427 = vmatprep.subr.bf16.mxu0 0
      %6428 = vmatpush1.bf16.msra.mxu0 0
      %6429 = vmatprep.subr.bf16.mxu0 0
      %6430 = vmatpush1.bf16.msra.mxu0 0
      %6431 = vmatprep.mubr.bf16.mxu0 0
      %6432 = vmatmul.mubr.bf16.gmra.mrb[0].mxu0 %v6397
      %v6433 = vpop.f32.mrb[0].mxu0
      %v6434 = vadd.f32 %v6394, %v6433
      %v6435 = vpop.f32.mrb[0].mxu0
      %v6436 = vadd.f32 %v6394, %v6435
      %v6437 = vpop.f32.mrb[0].mxu0
      %v6438 = vpop.f32.mrb[0].mxu0
      %6439 = vdwg.mxu0
      %6440 = vmatprep.subr.bf16.mxu0 %v6384
      %6441 = vmatpush1.bf16.msra.mxu0 %v6383
      %6442 = vmatprep.subr.bf16.mxu0 %v6388
      %6443 = vmatpush1.bf16.msra.mxu0 %v6387
      %6444 = vmatprep.subr.bf16.mxu0 0
      %6445 = vmatpush1.bf16.msra.mxu0 0
      %6446 = vmatprep.subr.bf16.mxu0 0
      %6447 = vmatpush1.bf16.msra.mxu0 0
      %6448 = vmatprep.subr.bf16.mxu0 0
      %6449 = vmatpush1.bf16.msra.mxu0 0
      %6450 = vmatprep.subr.bf16.mxu0 0
      %6451 = vmatpush1.bf16.msra.mxu0 0
      %6452 = vmatprep.subr.bf16.mxu0 0
      %6453 = vmatpush1.bf16.msra.mxu0 0
      %6454 = vmatprep.subr.bf16.mxu0 0
      %6455 = vmatpush1.bf16.msra.mxu0 0
      %6456 = vmatprep.subr.bf16.mxu0 0
      %6457 = vmatpush1.bf16.msra.mxu0 0
      %6458 = vmatprep.subr.bf16.mxu0 0
      %6459 = vmatpush1.bf16.msra.mxu0 0
      %6460 = vmatprep.subr.bf16.mxu0 0
      %6461 = vmatpush1.bf16.msra.mxu0 0
      %6462 = vmatprep.subr.bf16.mxu0 0
      %6463 = vmatpush1.bf16.msra.mxu0 0
      %6464 = vmatprep.subr.bf16.mxu0 0
      %6465 = vmatpush1.bf16.msra.mxu0 0
      %6466 = vmatprep.subr.bf16.mxu0 0
      %6467 = vmatpush1.bf16.msra.mxu0 0
      %6468 = vmatprep.subr.bf16.mxu0 0
      %6469 = vmatpush1.bf16.msra.mxu0 0
      %6470 = vmatprep.subr.bf16.mxu0 0
      %6471 = vmatpush1.bf16.msra.mxu0 0
      %6472 = vmatprep.mubr.bf16.mxu0 0
      %6473 = vmatmul.mubr.bf16.gmra.mrb[0].mxu0 %v6397
      %v6474 = vpop.f32.mrb[0].mxu0
      %v6475 = vadd.f32 %v6394, %v6474
      %v6476 = vpop.f32.mrb[0].mxu0
      %v6477 = vadd.f32 %v6394, %v6476
      %v6478 = vpop.f32.mrb[0].mxu0
      %v6479 = vpop.f32.mrb[0].mxu0
      %6480 = vdwg.mxu0
      %s6481 = scalar_lea.vmem %s1, 80
      %v6482 = vld [vmem:[%s6481] sm:$0xff]
      %6484 = vset.pattern.permute.xlu0 0
      %6485 = vperm.xlu0 %6484, %v6482
      %v6486 = vpop.permute.xlu0 %6485
      %v6488 = vmul.f32 %v6486, %v6434
      %v6489 = vmul.f32 %v6486, %v6436
      %v6490 = vmul.f32 %v6486, %v6475
      %v6491 = vmul.f32 %v6486, %v6477
      %v6492 = vadd.f32 %v4156, %v6488
      %v6493 = vadd.f32 %v4157, %v6489
      %v6494 = vadd.f32 %v4158, %v6490
      %v6495 = vadd.f32 %v4159, %v6491
      %v6496 = vadd.f32 %v532, %v532
      %v6497 = vadd.f32 %v533, %v533
      %v6498 = vadd.f32 %v534, %v534
      %v6499 = vadd.f32 %v535, %v535
      %v6500 = vadd.f32 %v6496, %v6492
      %v6501 = vadd.f32 %v6497, %v6493
      %v6502 = vadd.f32 %v6498, %v6494
      %v6503 = vadd.f32 %v6499, %v6495
      %s6504 = scalar_lea.vmem %s1, 112
      %v6505 = vld [vmem:[%s6504] sm:$0xff]
      %s6506 = scalar_lea.vmem %s1, 120
      %v6507 = vld [vmem:[%s6506] sm:$0xff]
      %v6508 = vadd.f32 %v6500, %v6501
      %v6509 = vadd.f32 %v6508, %v6502
      %v6510 = vadd.f32 %v6509, %v6503
      %6511 = vadd.xlane.f32.xlu0 %v6510
      %v6512 = vpop.xlane.xlu0 %6511
      %v6513 = vrot.slane %v6512, 4
      %v6514 = vadd.f32 %v6512, %v6513
      %v6515 = vrot.slane %v6514, 2
      %v6516 = vadd.f32 %v6514, %v6515
      %v6517 = vrot.slane %v6516, 1
      %v6518 = vadd.f32 %v6516, %v6517
      %s6519 = vtos %v6518
      %v6520 = vstv %s6519
      %v6521 = vmul.f32 %v6520, 0.00024414063
      %v6522 = vsub.f32 %v6500, %v6521
      %v6523 = vsub.f32 %v6501, %v6521
      %v6524 = vsub.f32 %v6502, %v6521
      %v6525 = vsub.f32 %v6503, %v6521
      %v6526 = vmul.f32 %v6522, %v6522
      %v6527 = vmul.f32 %v6523, %v6523
      %v6528 = vmul.f32 %v6524, %v6524
      %v6529 = vmul.f32 %v6525, %v6525
      %v6530 = vadd.f32 %v6526, %v6527
      %v6531 = vadd.f32 %v6530, %v6528
      %v6532 = vadd.f32 %v6531, %v6529
      %6533 = vadd.xlane.f32.xlu0 %v6532
      %v6534 = vpop.xlane.xlu0 %6533
      %v6535 = vrot.slane %v6534, 4
      %v6536 = vadd.f32 %v6534, %v6535
      %v6537 = vrot.slane %v6536, 2
      %v6538 = vadd.f32 %v6536, %v6537
      %v6539 = vrot.slane %v6538, 1
      %v6540 = vadd.f32 %v6538, %v6539
      %s6541 = vtos %v6540
      %v6542 = vstv %s6541
      %v6543 = vmul.f32 %v6542, 0.00024414063
      %v6544 = vadd.f32 %v6543, 1e-05
      %v6545 = vrsqrt.pop %v6544
      %v6546 = vmul.f32 %v6522, %v6545
      %v6547 = vmul.f32 %v6523, %v6545
      %v6548 = vmul.f32 %v6524, %v6545
      %v6549 = vmul.f32 %v6525, %v6545
      %6551 = vset.pattern.permute.xlu0 0
      %6552 = vperm.xlu0 %6551, %v6505
      %v6553 = vpop.permute.xlu0 %6552
      %v6555 = vmul.f32 %v6546, %v6553
      %v6556 = vmul.f32 %v6547, %v6553
      %v6557 = vmul.f32 %v6548, %v6553
      %v6558 = vmul.f32 %v6549, %v6553
      %6560 = vset.pattern.permute.xlu0 0
      %6561 = vperm.xlu0 %6560, %v6507
      %v6562 = vpop.permute.xlu0 %6561
      %v6564 = vadd.f32 %v6555, %v6562
      %v6565 = vadd.f32 %v6556, %v6562
      %v6566 = vadd.f32 %v6557, %v6562
      %v6567 = vadd.f32 %v6558, %v6562
      %6568 = vst [vmem:[%s467] sm:$0xff] %v6564
      %6569 = vst [vmem:[%s467 + $0x8] sm:$0xff] %v6565
      %6570 = vst [vmem:[%s467 + $0x10] sm:$0xff] %v6566
      %6571 = vst [vmem:[%s467 + $0x18] sm:$0xff] %v6567
      %p6572 = scmp.lt.s32.totalorder %s25, 3
      %s6573 = scalar_select %p6572, %s25, 3
      %s6574 = smul.addr %s6573, 4
      %s6575 = smul.addr %s6574, 8
      %s6576 = scalar_lea.vmem %s14, %s6575
      // Predicated region
      $region77: #{ciatt_patch_block_forward.3} parent=75 // pred_check
        %p6577 = pneg %p342
      $region78: #{ciatt_patch_block_forward.3} parent=75 // pred_check_branch
        %6579 = sbr.rel (%p6577) target = $region80
      $region79: #{ciatt_patch_block_forward.3} parent=75 // pred_region
        _
      $region80: #{ciatt_patch_block_forward.3} parent=75 // pred_fallthru
        _
    $region76: #{ciatt_patch_block_forward.3} parent=5 // pred_fallthru
      _
    %p6580 = scmp.le.s32.totalorder 2, %s20
    // Predicated region
    $region81: #{ciatt_patch_block_forward.3} parent=5 // pred_check
      %p6581 = pneg %p6580
    $region82: #{ciatt_patch_block_forward.3} parent=5 // pred_check_branch
      %6583 = sbr.rel (%p6581) target = $region84
    $region83: #{ciatt_patch_block_forward.3} parent=5 // pred_region
      %s6584 = ssub.s32 %s20, 2
      // Predicated region
      $region85: #{ciatt_patch_block_forward.3} parent=83 // pred_check
        %p6585 = pneg %p348
      $region86: #{ciatt_patch_block_forward.3} parent=83 // pred_check_branch
        %6587 = sbr.rel (%p6585) target = $region88
      $region87: #{ciatt_patch_block_forward.3} parent=83 // pred_region
        %p6588 = scmp.lt.s32.totalorder %s26, 3
        %s6589 = scalar_select %p6588, %s26, 3
        %s6590 = smul.addr %s6589, 4
        %s6591 = smul.addr %s6590, 8
        %s6592 = scalar_lea.vmem %s14, %s6591
      $region88: #{ciatt_patch_block_forward.3} parent=83 // pred_fallthru
        _
    $region84: #{ciatt_patch_block_forward.3} parent=5 // pred_fallthru
      _
  $region6: #{ciatt_patch_block_forward.3} parent=0 // loop_footer
    %s24 = sadd.s32 1, %s20
  $region7: #{ciatt_patch_block_forward.3} parent=0 // loop_footer_branch
    %19 = sbr.rel target = $region3
  $region8: #{ciatt_patch_block_forward.3} parent=0 // loop_exit
    _

</llo_original>
